<compile_context>
chip_gen: v7x
topology: tpu7x:2x2x1
jax: 0.10.0
libtpu: 0.0.40
codegen_flags: <defaults>
</compile_context>

<pallas_src>
import jax
import jax.numpy as jnp
from jax.experimental import pallas as pl
from jax.experimental.pallas import tpu as pltpu

EPS = 1e-5
LEAKY_SLOPE = 0.01
CIN_ALIGN = 8  # pad conv0's input channels 3 -> 8

# (name, cin, cout, kernel, stride, bn+leaky_relu)
LAYER_CFG = [
    ("conv0", 3, 8, 3, 1, True),
    ("conv1", 8, 8, 3, 1, True),
    ("conv2", 8, 16, 5, 2, True),
    ("conv3", 16, 16, 3, 1, True),
    ("conv4", 16, 16, 3, 1, True),
    ("conv5", 16, 32, 5, 2, True),
    ("conv6", 32, 32, 3, 1, True),
    ("feature", 32, 32, 3, 1, False),   # plain Conv2d with bias, no BN/act
]


def _round_up(x, m):
    return ((x + m - 1) // m) * m


def _layer_meta():
    """Static per-layer metadata incl. row offsets into the packed weight slab."""
    metas, row = [], 0
    for (_name, cin, cout, k, stride, act) in LAYER_CFG:
        cinp = _round_up(cin, CIN_ALIGN)
        metas.append(dict(cin=cinp, cout=cout, k=k, stride=stride,
                          pad=(k - 1) // 2, act=act, row=row,
                          kdim=k * k * cinp))
        row += cout
    return metas, row


# ----------------------------------------------------------------------------
# In-kernel helpers (traced inside the Pallas kernel; everything stays in VMEM)
# ----------------------------------------------------------------------------
def _flat_yx(h, w):
    """Row / column index of every flattened-spatial lane, as (1, h*w) int32."""
    q = jax.lax.broadcasted_iota(jnp.int32, (1, h * w), 1)
    if w & (w - 1) == 0:                       # power-of-two width: shift/mask
        sh = int(w).bit_length() - 1
        return q >> sh, q & (w - 1)
    # TODO(synk): non power-of-two widths rely on vector s32 div lowering.
    yy = q // w
    return yy, q - yy * w


def _downsample2(x, h, w):
    """Exact stride-2 selection (keep even rows & even columns) on (C, h*w)."""
    c = x.shape[0]
    ho, wo = h // 2, w // 2
    # Even columns: pair adjacent lanes, keep element 0 (w is even, so flat
    # parity == column parity).
    x = x.reshape(c, h * wo, 2)[:, :, 0]                  # (c, h*wo)
    # Even rows: keep alternating row-blocks of width wo (static lane slices).
    rows = [jax.lax.slice_in_dim(x, (2 * r) * wo, (2 * r) * wo + wo, axis=1)
            for r in range(ho)]
    return jnp.concatenate(rows, axis=1)                  # (c, ho*wo)


def _make_kernel(H, W, metas):
    n_layers = len(metas)

    def kernel(x_ref, w_ref, s_ref, o_ref):
        x = x_ref[0]                                      # (cin0, H*W) bf16
        h, w = H, W
        for li, m in enumerate(metas):
            k, pad = m["k"], m["pad"]
            cout, row, kdim = m["cout"], m["row"], m["kdim"]
            yy, xx = _flat_yx(h, w)
            row_ok = {oy: (yy >= -oy) & (yy < h - oy) for oy in range(-pad, pad + 1)}
            col_ok = {ox: (xx >= -ox) & (xx < w - ox) for ox in range(-pad, pad + 1)}

            # im2col: k*k lane-rolled, boundary-masked copies stacked on sublanes.
            blocks = []
            for di in range(k):
                for dj in range(k):
                    oy, ox = di - pad, dj - pad
                    off = oy * w + ox
                    win = x if off == 0 else jnp.roll(x, -off, axis=1)
                    if oy == 0 and ox == 0:
                        blocks.append(win)
                    else:
                        ok = row_ok[oy] & col_ok[ox]
                        blocks.append(jnp.where(ok, win, jnp.zeros_like(win)))
            cols = jnp.concatenate(blocks, axis=0)        # (kdim, h*w) bf16

            wmat = w_ref[row:row + cout, 0:kdim].astype(jnp.bfloat16)
            acc = jnp.dot(wmat, cols, preferred_element_type=jnp.float32)
            y = acc + s_ref[0:cout, li:li + 1]            # (cout, h*w) f32
            if m["act"]:
                y = jnp.where(y >= 0.0, y, LEAKY_SLOPE * y)

            if li == n_layers - 1:
                o_ref[0] = y                              # (32, H/4*W/4) f32
            else:
                x = y.astype(jnp.bfloat16)                # single bf16 cast/layer
                if m["stride"] == 2:
                    x = _downsample2(x, h, w)
                    h, w = h // 2, w // 2

    return kernel


# ----------------------------------------------------------------------------
# Host-side glue
# ----------------------------------------------------------------------------
def init_params(key):
    """Synthetic params. Returns (packed kernel params, per-layer reference params)."""
    metas, rows = _layer_meta()
    kmax = max(m["kdim"] for m in metas)
    w_packed = jnp.zeros((rows, kmax), jnp.float32)
    shifts = jnp.zeros((32, len(metas)), jnp.float32)
    ref_layers = []

    for li, (m, (_name, cin, cout, k, stride, bn_act)) in enumerate(zip(metas, LAYER_CFG)):
        key, kw_, kg, kb, km, kv, kbias = jax.random.split(key, 7)
        fan_in = k * k * cin
        w_pt = jax.random.normal(kw_, (cout, cin, k, k), jnp.float32) * (2.0 / fan_in) ** 0.5
        if bn_act:
            gamma = 1.0 + 0.1 * jax.random.normal(kg, (cout,), jnp.float32)
            beta = 0.1 * jax.random.normal(kb, (cout,), jnp.float32)
            mean = 0.1 * jax.random.normal(km, (cout,), jnp.float32)
            var = jnp.abs(jax.random.normal(kv, (cout,), jnp.float32)) + 0.5
            scale = gamma / jnp.sqrt(var + EPS)
            shift = beta - mean * scale
        else:
            scale = jnp.ones((cout,), jnp.float32)
            shift = 0.1 * jax.random.normal(kbias, (cout,), jnp.float32)

        # Fold BN scale into the weights; round to bf16 once so kernel and the
        # f32 reference share exactly the same effective weights.
        w_folded = (w_pt * scale[:, None, None, None]).astype(jnp.bfloat16).astype(jnp.float32)
        ref_layers.append((w_folded, shift, k, stride, (k - 1) // 2, bn_act))

        # Kernel layout: (Cout,Cin,kh,kw) -> (Cout,kh,kw,Cin) -> pad Cin -> (Cout, k*k*Cinp).
        w_k = jnp.transpose(w_folded, (0, 2, 3, 1))
        cinp = m["cin"]
        if cin < cinp:
            w_k = jnp.pad(w_k, ((0, 0), (0, 0), (0, 0), (0, cinp - cin)))
        w_k = w_k.reshape(cout, m["kdim"])
        w_packed = w_packed.at[m["row"]:m["row"] + cout, 0:m["kdim"]].set(w_k)
        shifts = shifts.at[0:cout, li].set(shift)

    return {"w": w_packed, "shift": shifts}, ref_layers


def feature_net(x_nchw, params):
    """FeatureNet forward: NCHW in, NCHW out (32 channels at H/4 x W/4)."""
    metas, _rows = _layer_meta()
    B, C, H, W = x_nchw.shape
    assert H % 4 == 0 and W % 4 == 0, "spatial dims must be divisible by 4"
    cin0 = metas[0]["cin"]
    cout = metas[-1]["cout"]
    Ho, Wo = H // 4, W // 4

    x = x_nchw
    if C < cin0:                                   # conv0: pad RGB 3 -> 8 channels
        x = jnp.pad(x, ((0, 0), (0, cin0 - C), (0, 0), (0, 0)))
    x = x.reshape(B, cin0, H * W).astype(jnp.bfloat16)   # channels-on-sublanes, spatial-on-lanes

    w, s = params["w"], params["shift"]
    out = pl.pallas_call(
        _make_kernel(H, W, metas),
        out_shape=jax.ShapeDtypeStruct((B, cout, Ho * Wo), jnp.float32),
        grid_spec=pltpu.PrefetchScalarGridSpec(
            num_scalar_prefetch=0,
            grid=(B,),
            in_specs=[
                pl.BlockSpec((1, cin0, H * W), lambda b: (b, 0, 0)),
                pl.BlockSpec(w.shape, lambda b: (0, 0)),
                pl.BlockSpec(s.shape, lambda b: (0, 0)),
            ],
            out_specs=pl.BlockSpec((1, cout, Ho * Wo), lambda b: (b, 0, 0)),
        ),
        compiler_params=pltpu.CompilerParams(
            dimension_semantics=("parallel",),
            vmem_limit_bytes=48 * 1024 * 1024,
        ),
    )(x, w, s)

    return out.reshape(B, cout, Ho, Wo)            # NCHW-flat -> NCHW (no transpose)


def _reference_forward(x_nchw, ref_layers):
    """Pure-JAX reference (f32 convs with the same bf16-rounded weights)."""
    act = x_nchw.astype(jnp.bfloat16).astype(jnp.float32)
    for (wt, shift, k, stride, pad, bn_act) in ref_layers:
        act = jax.lax.conv_general_dilated(
            act, wt, window_strides=(stride, stride),
            padding=((pad, pad), (pad, pad)),
            dimension_numbers=("NCHW", "OIHW", "NCHW"),
            precision=jax.lax.Precision.HIGHEST)
        act = act + shift.reshape(1, -1, 1, 1)
        if bn_act:
            act = jnp.where(act >= 0.0, act, LEAKY_SLOPE * act)
    return act


if __name__ == "__main__":
    key = jax.random.PRNGKey(0)
    key, kx = jax.random.split(key)
    # RGB image batch, consistent with the module: B=2, 3 channels, 16x16.
    x = jax.random.normal(kx, (2, 3, 16, 16), jnp.float32)
    params, ref_layers = init_params(key)

    out = jax.jit(feature_net)(x, params)
    out = jax.block_until_ready(out)

    assert out.shape == (2, 32, 4, 4), out.shape       # 32 channels at H/4 x W/4
    assert bool(jnp.all(jnp.isfinite(out)))

    ref = _reference_forward(x, ref_layers)
    err = float(jnp.max(jnp.abs(out - ref)) / (jnp.max(jnp.abs(ref)) + 1e-6))
    assert err < 0.1, f"kernel/reference mismatch: normalized max err {err}"
    print("KERNEL_OK")
</pallas_src>

<mosaic_0001>
module attributes {stable_mosaic.version = 11 : i64} {
  func.func @kernel(%arg0: i32, %arg1: memref<1x8x256xbf16, #tpu.memory_space<vmem>>, %arg2: memref<160x400xf32, #tpu.memory_space<vmem>>, %arg3: memref<32x8xf32, #tpu.memory_space<vmem>>, %arg4: memref<1x32x16xf32, #tpu.memory_space<vmem>>) attributes {dimension_semantics = [#tpu.dimension_semantics<parallel>], iteration_bounds = array<i64: 2>, scalar_prefetch = 0 : i64, scratch_operands = 0 : i64, tpu.core_type = #tpu.core_type<tc>, window_params = [{transform_indices = @transform_0, window_bounds = array<i64: 1, 8, 256>}, {pipeline_mode = #tpu.pipeline_mode<synchronous>, transform_indices = @transform_1, window_bounds = array<i64: 160, 400>}, {pipeline_mode = #tpu.pipeline_mode<synchronous>, transform_indices = @transform_2, window_bounds = array<i64: 32, 8>}, {transform_indices = @transform_3, window_bounds = array<i64: 1, 32, 16>}]} {
    %c0 = arith.constant 0 : index
    %c0_0 = arith.constant 0 : index
    %c0_1 = arith.constant 0 : index
    %0 = vector.load %arg1[%c0, %c0_0, %c0_1] : memref<1x8x256xbf16, #tpu.memory_space<vmem>>, vector<1x8x256xbf16>
    %1 = vector.shape_cast %0 : vector<1x8x256xbf16> to vector<8x256xbf16>
    %2 = tpu.iota {dimensions = array<i32: 1>} : vector<1x256xi32>
    %c4_i32 = arith.constant 4 : i32
    %3 = vector.broadcast %c4_i32 : i32 to vector<1x256xi32>
    %4 = arith.shrsi %2, %3 : vector<1x256xi32>
    %c15_i32 = arith.constant 15 : i32
    %5 = vector.broadcast %c15_i32 : i32 to vector<1x256xi32>
    %6 = arith.andi %2, %5 : vector<1x256xi32>
    %c1_i32 = arith.constant 1 : i32
    %7 = vector.broadcast %c1_i32 : i32 to vector<1x256xi32>
    %8 = arith.cmpi sge, %4, %7 : vector<1x256xi32>
    %c17_i32 = arith.constant 17 : i32
    %9 = vector.broadcast %c17_i32 : i32 to vector<1x256xi32>
    %10 = arith.cmpi slt, %4, %9 : vector<1x256xi32>
    %11 = arith.andi %8, %10 : vector<1x256xi1>
    %c0_i32 = arith.constant 0 : i32
    %12 = vector.broadcast %c0_i32 : i32 to vector<1x256xi32>
    %13 = arith.cmpi sge, %4, %12 : vector<1x256xi32>
    %c16_i32 = arith.constant 16 : i32
    %14 = vector.broadcast %c16_i32 : i32 to vector<1x256xi32>
    %15 = arith.cmpi slt, %4, %14 : vector<1x256xi32>
    %16 = arith.andi %13, %15 : vector<1x256xi1>
    %c-1_i32 = arith.constant -1 : i32
    %17 = vector.broadcast %c-1_i32 : i32 to vector<1x256xi32>
    %18 = arith.cmpi sge, %4, %17 : vector<1x256xi32>
    %c15_i32_2 = arith.constant 15 : i32
    %19 = vector.broadcast %c15_i32_2 : i32 to vector<1x256xi32>
    %20 = arith.cmpi slt, %4, %19 : vector<1x256xi32>
    %21 = arith.andi %18, %20 : vector<1x256xi1>
    %c1_i32_3 = arith.constant 1 : i32
    %22 = vector.broadcast %c1_i32_3 : i32 to vector<1x256xi32>
    %23 = arith.cmpi sge, %6, %22 : vector<1x256xi32>
    %c17_i32_4 = arith.constant 17 : i32
    %24 = vector.broadcast %c17_i32_4 : i32 to vector<1x256xi32>
    %25 = arith.cmpi slt, %6, %24 : vector<1x256xi32>
    %26 = arith.andi %23, %25 : vector<1x256xi1>
    %c0_i32_5 = arith.constant 0 : i32
    %27 = vector.broadcast %c0_i32_5 : i32 to vector<1x256xi32>
    %28 = arith.cmpi sge, %6, %27 : vector<1x256xi32>
    %c16_i32_6 = arith.constant 16 : i32
    %29 = vector.broadcast %c16_i32_6 : i32 to vector<1x256xi32>
    %30 = arith.cmpi slt, %6, %29 : vector<1x256xi32>
    %31 = arith.andi %28, %30 : vector<1x256xi1>
    %c-1_i32_7 = arith.constant -1 : i32
    %32 = vector.broadcast %c-1_i32_7 : i32 to vector<1x256xi32>
    %33 = arith.cmpi sge, %6, %32 : vector<1x256xi32>
    %c15_i32_8 = arith.constant 15 : i32
    %34 = vector.broadcast %c15_i32_8 : i32 to vector<1x256xi32>
    %35 = arith.cmpi slt, %6, %34 : vector<1x256xi32>
    %36 = arith.andi %33, %35 : vector<1x256xi1>
    %37 = vector.extract_strided_slice %1 {offsets = [0, 239], sizes = [8, 17], strides = [1, 1]} : vector<8x256xbf16> to vector<8x17xbf16>
    %38 = vector.extract_strided_slice %1 {offsets = [0, 0], sizes = [8, 239], strides = [1, 1]} : vector<8x256xbf16> to vector<8x239xbf16>
    %39 = tpu.concatenate %37, %38 in 1 : vector<8x17xbf16>, vector<8x239xbf16> -> vector<8x256xbf16>
    %40 = arith.andi %11, %26 : vector<1x256xi1>
    %cst = arith.constant 0.000000e+00 : bf16
    %41 = vector.broadcast %cst : bf16 to vector<8x256xbf16>
    %42 = vector.shape_cast %40 : vector<1x256xi1> to vector<1x256xi1>
    %43 = vector.broadcast %42 : vector<1x256xi1> to vector<8x256xi1>
    %44 = arith.select %43, %39, %41 : vector<8x256xi1>, vector<8x256xbf16>
    %45 = vector.extract_strided_slice %1 {offsets = [0, 240], sizes = [8, 16], strides = [1, 1]} : vector<8x256xbf16> to vector<8x16xbf16>
    %46 = vector.extract_strided_slice %1 {offsets = [0, 0], sizes = [8, 240], strides = [1, 1]} : vector<8x256xbf16> to vector<8x240xbf16>
    %47 = tpu.concatenate %45, %46 in 1 : vector<8x16xbf16>, vector<8x240xbf16> -> vector<8x256xbf16>
    %48 = arith.andi %11, %31 : vector<1x256xi1>
    %cst_9 = arith.constant 0.000000e+00 : bf16
    %49 = vector.broadcast %cst_9 : bf16 to vector<8x256xbf16>
    %50 = vector.shape_cast %48 : vector<1x256xi1> to vector<1x256xi1>
    %51 = vector.broadcast %50 : vector<1x256xi1> to vector<8x256xi1>
    %52 = arith.select %51, %47, %49 : vector<8x256xi1>, vector<8x256xbf16>
    %53 = vector.extract_strided_slice %1 {offsets = [0, 241], sizes = [8, 15], strides = [1, 1]} : vector<8x256xbf16> to vector<8x15xbf16>
    %54 = vector.extract_strided_slice %1 {offsets = [0, 0], sizes = [8, 241], strides = [1, 1]} : vector<8x256xbf16> to vector<8x241xbf16>
    %55 = tpu.concatenate %53, %54 in 1 : vector<8x15xbf16>, vector<8x241xbf16> -> vector<8x256xbf16>
    %56 = arith.andi %11, %36 : vector<1x256xi1>
    %cst_10 = arith.constant 0.000000e+00 : bf16
    %57 = vector.broadcast %cst_10 : bf16 to vector<8x256xbf16>
    %58 = vector.shape_cast %56 : vector<1x256xi1> to vector<1x256xi1>
    %59 = vector.broadcast %58 : vector<1x256xi1> to vector<8x256xi1>
    %60 = arith.select %59, %55, %57 : vector<8x256xi1>, vector<8x256xbf16>
    %61 = vector.extract_strided_slice %1 {offsets = [0, 255], sizes = [8, 1], strides = [1, 1]} : vector<8x256xbf16> to vector<8x1xbf16>
    %62 = vector.extract_strided_slice %1 {offsets = [0, 0], sizes = [8, 255], strides = [1, 1]} : vector<8x256xbf16> to vector<8x255xbf16>
    %63 = tpu.concatenate %61, %62 in 1 : vector<8x1xbf16>, vector<8x255xbf16> -> vector<8x256xbf16>
    %64 = arith.andi %16, %26 : vector<1x256xi1>
    %cst_11 = arith.constant 0.000000e+00 : bf16
    %65 = vector.broadcast %cst_11 : bf16 to vector<8x256xbf16>
    %66 = vector.shape_cast %64 : vector<1x256xi1> to vector<1x256xi1>
    %67 = vector.broadcast %66 : vector<1x256xi1> to vector<8x256xi1>
    %68 = arith.select %67, %63, %65 : vector<8x256xi1>, vector<8x256xbf16>
    %69 = vector.extract_strided_slice %1 {offsets = [0, 1], sizes = [8, 255], strides = [1, 1]} : vector<8x256xbf16> to vector<8x255xbf16>
    %70 = vector.extract_strided_slice %1 {offsets = [0, 0], sizes = [8, 1], strides = [1, 1]} : vector<8x256xbf16> to vector<8x1xbf16>
    %71 = tpu.concatenate %69, %70 in 1 : vector<8x255xbf16>, vector<8x1xbf16> -> vector<8x256xbf16>
    %72 = arith.andi %16, %36 : vector<1x256xi1>
    %cst_12 = arith.constant 0.000000e+00 : bf16
    %73 = vector.broadcast %cst_12 : bf16 to vector<8x256xbf16>
    %74 = vector.shape_cast %72 : vector<1x256xi1> to vector<1x256xi1>
    %75 = vector.broadcast %74 : vector<1x256xi1> to vector<8x256xi1>
    %76 = arith.select %75, %71, %73 : vector<8x256xi1>, vector<8x256xbf16>
    %77 = vector.extract_strided_slice %1 {offsets = [0, 15], sizes = [8, 241], strides = [1, 1]} : vector<8x256xbf16> to vector<8x241xbf16>
    %78 = vector.extract_strided_slice %1 {offsets = [0, 0], sizes = [8, 15], strides = [1, 1]} : vector<8x256xbf16> to vector<8x15xbf16>
    %79 = tpu.concatenate %77, %78 in 1 : vector<8x241xbf16>, vector<8x15xbf16> -> vector<8x256xbf16>
    %80 = arith.andi %21, %26 : vector<1x256xi1>
    %cst_13 = arith.constant 0.000000e+00 : bf16
    %81 = vector.broadcast %cst_13 : bf16 to vector<8x256xbf16>
    %82 = vector.shape_cast %80 : vector<1x256xi1> to vector<1x256xi1>
    %83 = vector.broadcast %82 : vector<1x256xi1> to vector<8x256xi1>
    %84 = arith.select %83, %79, %81 : vector<8x256xi1>, vector<8x256xbf16>
    %85 = vector.extract_strided_slice %1 {offsets = [0, 16], sizes = [8, 240], strides = [1, 1]} : vector<8x256xbf16> to vector<8x240xbf16>
    %86 = vector.extract_strided_slice %1 {offsets = [0, 0], sizes = [8, 16], strides = [1, 1]} : vector<8x256xbf16> to vector<8x16xbf16>
    %87 = tpu.concatenate %85, %86 in 1 : vector<8x240xbf16>, vector<8x16xbf16> -> vector<8x256xbf16>
    %88 = arith.andi %21, %31 : vector<1x256xi1>
    %cst_14 = arith.constant 0.000000e+00 : bf16
    %89 = vector.broadcast %cst_14 : bf16 to vector<8x256xbf16>
    %90 = vector.shape_cast %88 : vector<1x256xi1> to vector<1x256xi1>
    %91 = vector.broadcast %90 : vector<1x256xi1> to vector<8x256xi1>
    %92 = arith.select %91, %87, %89 : vector<8x256xi1>, vector<8x256xbf16>
    %93 = vector.extract_strided_slice %1 {offsets = [0, 17], sizes = [8, 239], strides = [1, 1]} : vector<8x256xbf16> to vector<8x239xbf16>
    %94 = vector.extract_strided_slice %1 {offsets = [0, 0], sizes = [8, 17], strides = [1, 1]} : vector<8x256xbf16> to vector<8x17xbf16>
    %95 = tpu.concatenate %93, %94 in 1 : vector<8x239xbf16>, vector<8x17xbf16> -> vector<8x256xbf16>
    %96 = arith.andi %21, %36 : vector<1x256xi1>
    %cst_15 = arith.constant 0.000000e+00 : bf16
    %97 = vector.broadcast %cst_15 : bf16 to vector<8x256xbf16>
    %98 = vector.shape_cast %96 : vector<1x256xi1> to vector<1x256xi1>
    %99 = vector.broadcast %98 : vector<1x256xi1> to vector<8x256xi1>
    %100 = arith.select %99, %95, %97 : vector<8x256xi1>, vector<8x256xbf16>
    %101 = tpu.concatenate %44, %52, %60, %68, %1, %76, %84, %92, %100 in 0 : vector<8x256xbf16>, vector<8x256xbf16>, vector<8x256xbf16>, vector<8x256xbf16>, vector<8x256xbf16>, vector<8x256xbf16>, vector<8x256xbf16>, vector<8x256xbf16>, vector<8x256xbf16> -> vector<72x256xbf16>
    %c0_16 = arith.constant 0 : index
    %c0_17 = arith.constant 0 : index
    %102 = vector.load %arg2[%c0_16, %c0_17] : memref<160x400xf32, #tpu.memory_space<vmem>>, vector<8x72xf32>
    %103 = arith.truncf %102 : vector<8x72xf32> to vector<8x72xbf16>
    %cst_18 = arith.constant dense<0.000000e+00> : vector<8x256xf32>
    %104 = tpu.matmul %103, %101, %cst_18 {dimension_numbers = #tpu.dot_dimension_numbers<[1], [0], [0], [1], [0, 0, 1, 1], [], []>} : vector<8x72xbf16>, vector<72x256xbf16>, vector<8x256xf32> -> vector<8x256xf32>
    %c0_19 = arith.constant 0 : index
    %c0_20 = arith.constant 0 : index
    %105 = vector.load %arg3[%c0_19, %c0_20] : memref<32x8xf32, #tpu.memory_space<vmem>>, vector<8x1xf32>
    %106 = vector.broadcast %105 : vector<8x1xf32> to vector<8x256xf32>
    %107 = arith.addf %104, %106 : vector<8x256xf32>
    %cst_21 = arith.constant 0.000000e+00 : f32
    %108 = vector.broadcast %cst_21 : f32 to vector<8x256xf32>
    %109 = arith.cmpf oge, %107, %108 : vector<8x256xf32>
    %cst_22 = arith.constant 0.00999999977 : f32
    %110 = vector.broadcast %cst_22 : f32 to vector<8x256xf32>
    %111 = arith.mulf %110, %107 : vector<8x256xf32>
    %112 = arith.select %109, %107, %111 : vector<8x256xi1>, vector<8x256xf32>
    %113 = arith.truncf %112 : vector<8x256xf32> to vector<8x256xbf16>
    %114 = tpu.iota {dimensions = array<i32: 1>} : vector<1x256xi32>
    %c4_i32_23 = arith.constant 4 : i32
    %115 = vector.broadcast %c4_i32_23 : i32 to vector<1x256xi32>
    %116 = arith.shrsi %114, %115 : vector<1x256xi32>
    %c15_i32_24 = arith.constant 15 : i32
    %117 = vector.broadcast %c15_i32_24 : i32 to vector<1x256xi32>
    %118 = arith.andi %114, %117 : vector<1x256xi32>
    %c1_i32_25 = arith.constant 1 : i32
    %119 = vector.broadcast %c1_i32_25 : i32 to vector<1x256xi32>
    %120 = arith.cmpi sge, %116, %119 : vector<1x256xi32>
    %c17_i32_26 = arith.constant 17 : i32
    %121 = vector.broadcast %c17_i32_26 : i32 to vector<1x256xi32>
    %122 = arith.cmpi slt, %116, %121 : vector<1x256xi32>
    %123 = arith.andi %120, %122 : vector<1x256xi1>
    %c0_i32_27 = arith.constant 0 : i32
    %124 = vector.broadcast %c0_i32_27 : i32 to vector<1x256xi32>
    %125 = arith.cmpi sge, %116, %124 : vector<1x256xi32>
    %c16_i32_28 = arith.constant 16 : i32
    %126 = vector.broadcast %c16_i32_28 : i32 to vector<1x256xi32>
    %127 = arith.cmpi slt, %116, %126 : vector<1x256xi32>
    %128 = arith.andi %125, %127 : vector<1x256xi1>
    %c-1_i32_29 = arith.constant -1 : i32
    %129 = vector.broadcast %c-1_i32_29 : i32 to vector<1x256xi32>
    %130 = arith.cmpi sge, %116, %129 : vector<1x256xi32>
    %c15_i32_30 = arith.constant 15 : i32
    %131 = vector.broadcast %c15_i32_30 : i32 to vector<1x256xi32>
    %132 = arith.cmpi slt, %116, %131 : vector<1x256xi32>
    %133 = arith.andi %130, %132 : vector<1x256xi1>
    %c1_i32_31 = arith.constant 1 : i32
    %134 = vector.broadcast %c1_i32_31 : i32 to vector<1x256xi32>
    %135 = arith.cmpi sge, %118, %134 : vector<1x256xi32>
    %c17_i32_32 = arith.constant 17 : i32
    %136 = vector.broadcast %c17_i32_32 : i32 to vector<1x256xi32>
    %137 = arith.cmpi slt, %118, %136 : vector<1x256xi32>
    %138 = arith.andi %135, %137 : vector<1x256xi1>
    %c0_i32_33 = arith.constant 0 : i32
    %139 = vector.broadcast %c0_i32_33 : i32 to vector<1x256xi32>
    %140 = arith.cmpi sge, %118, %139 : vector<1x256xi32>
    %c16_i32_34 = arith.constant 16 : i32
    %141 = vector.broadcast %c16_i32_34 : i32 to vector<1x256xi32>
    %142 = arith.cmpi slt, %118, %141 : vector<1x256xi32>
    %143 = arith.andi %140, %142 : vector<1x256xi1>
    %c-1_i32_35 = arith.constant -1 : i32
    %144 = vector.broadcast %c-1_i32_35 : i32 to vector<1x256xi32>
    %145 = arith.cmpi sge, %118, %144 : vector<1x256xi32>
    %c15_i32_36 = arith.constant 15 : i32
    %146 = vector.broadcast %c15_i32_36 : i32 to vector<1x256xi32>
    %147 = arith.cmpi slt, %118, %146 : vector<1x256xi32>
    %148 = arith.andi %145, %147 : vector<1x256xi1>
    %149 = vector.extract_strided_slice %113 {offsets = [0, 239], sizes = [8, 17], strides = [1, 1]} : vector<8x256xbf16> to vector<8x17xbf16>
    %150 = vector.extract_strided_slice %113 {offsets = [0, 0], sizes = [8, 239], strides = [1, 1]} : vector<8x256xbf16> to vector<8x239xbf16>
    %151 = tpu.concatenate %149, %150 in 1 : vector<8x17xbf16>, vector<8x239xbf16> -> vector<8x256xbf16>
    %152 = arith.andi %123, %138 : vector<1x256xi1>
    %cst_37 = arith.constant 0.000000e+00 : bf16
    %153 = vector.broadcast %cst_37 : bf16 to vector<8x256xbf16>
    %154 = vector.shape_cast %152 : vector<1x256xi1> to vector<1x256xi1>
    %155 = vector.broadcast %154 : vector<1x256xi1> to vector<8x256xi1>
    %156 = arith.select %155, %151, %153 : vector<8x256xi1>, vector<8x256xbf16>
    %157 = vector.extract_strided_slice %113 {offsets = [0, 240], sizes = [8, 16], strides = [1, 1]} : vector<8x256xbf16> to vector<8x16xbf16>
    %158 = vector.extract_strided_slice %113 {offsets = [0, 0], sizes = [8, 240], strides = [1, 1]} : vector<8x256xbf16> to vector<8x240xbf16>
    %159 = tpu.concatenate %157, %158 in 1 : vector<8x16xbf16>, vector<8x240xbf16> -> vector<8x256xbf16>
    %160 = arith.andi %123, %143 : vector<1x256xi1>
    %cst_38 = arith.constant 0.000000e+00 : bf16
    %161 = vector.broadcast %cst_38 : bf16 to vector<8x256xbf16>
    %162 = vector.shape_cast %160 : vector<1x256xi1> to vector<1x256xi1>
    %163 = vector.broadcast %162 : vector<1x256xi1> to vector<8x256xi1>
    %164 = arith.select %163, %159, %161 : vector<8x256xi1>, vector<8x256xbf16>
    %165 = vector.extract_strided_slice %113 {offsets = [0, 241], sizes = [8, 15], strides = [1, 1]} : vector<8x256xbf16> to vector<8x15xbf16>
    %166 = vector.extract_strided_slice %113 {offsets = [0, 0], sizes = [8, 241], strides = [1, 1]} : vector<8x256xbf16> to vector<8x241xbf16>
    %167 = tpu.concatenate %165, %166 in 1 : vector<8x15xbf16>, vector<8x241xbf16> -> vector<8x256xbf16>
    %168 = arith.andi %123, %148 : vector<1x256xi1>
    %cst_39 = arith.constant 0.000000e+00 : bf16
    %169 = vector.broadcast %cst_39 : bf16 to vector<8x256xbf16>
    %170 = vector.shape_cast %168 : vector<1x256xi1> to vector<1x256xi1>
    %171 = vector.broadcast %170 : vector<1x256xi1> to vector<8x256xi1>
    %172 = arith.select %171, %167, %169 : vector<8x256xi1>, vector<8x256xbf16>
    %173 = vector.extract_strided_slice %113 {offsets = [0, 255], sizes = [8, 1], strides = [1, 1]} : vector<8x256xbf16> to vector<8x1xbf16>
    %174 = vector.extract_strided_slice %113 {offsets = [0, 0], sizes = [8, 255], strides = [1, 1]} : vector<8x256xbf16> to vector<8x255xbf16>
    %175 = tpu.concatenate %173, %174 in 1 : vector<8x1xbf16>, vector<8x255xbf16> -> vector<8x256xbf16>
    %176 = arith.andi %128, %138 : vector<1x256xi1>
    %cst_40 = arith.constant 0.000000e+00 : bf16
    %177 = vector.broadcast %cst_40 : bf16 to vector<8x256xbf16>
    %178 = vector.shape_cast %176 : vector<1x256xi1> to vector<1x256xi1>
    %179 = vector.broadcast %178 : vector<1x256xi1> to vector<8x256xi1>
    %180 = arith.select %179, %175, %177 : vector<8x256xi1>, vector<8x256xbf16>
    %181 = vector.extract_strided_slice %113 {offsets = [0, 1], sizes = [8, 255], strides = [1, 1]} : vector<8x256xbf16> to vector<8x255xbf16>
    %182 = vector.extract_strided_slice %113 {offsets = [0, 0], sizes = [8, 1], strides = [1, 1]} : vector<8x256xbf16> to vector<8x1xbf16>
    %183 = tpu.concatenate %181, %182 in 1 : vector<8x255xbf16>, vector<8x1xbf16> -> vector<8x256xbf16>
    %184 = arith.andi %128, %148 : vector<1x256xi1>
    %cst_41 = arith.constant 0.000000e+00 : bf16
    %185 = vector.broadcast %cst_41 : bf16 to vector<8x256xbf16>
    %186 = vector.shape_cast %184 : vector<1x256xi1> to vector<1x256xi1>
    %187 = vector.broadcast %186 : vector<1x256xi1> to vector<8x256xi1>
    %188 = arith.select %187, %183, %185 : vector<8x256xi1>, vector<8x256xbf16>
    %189 = vector.extract_strided_slice %113 {offsets = [0, 15], sizes = [8, 241], strides = [1, 1]} : vector<8x256xbf16> to vector<8x241xbf16>
    %190 = vector.extract_strided_slice %113 {offsets = [0, 0], sizes = [8, 15], strides = [1, 1]} : vector<8x256xbf16> to vector<8x15xbf16>
    %191 = tpu.concatenate %189, %190 in 1 : vector<8x241xbf16>, vector<8x15xbf16> -> vector<8x256xbf16>
    %192 = arith.andi %133, %138 : vector<1x256xi1>
    %cst_42 = arith.constant 0.000000e+00 : bf16
    %193 = vector.broadcast %cst_42 : bf16 to vector<8x256xbf16>
    %194 = vector.shape_cast %192 : vector<1x256xi1> to vector<1x256xi1>
    %195 = vector.broadcast %194 : vector<1x256xi1> to vector<8x256xi1>
    %196 = arith.select %195, %191, %193 : vector<8x256xi1>, vector<8x256xbf16>
    %197 = vector.extract_strided_slice %113 {offsets = [0, 16], sizes = [8, 240], strides = [1, 1]} : vector<8x256xbf16> to vector<8x240xbf16>
    %198 = vector.extract_strided_slice %113 {offsets = [0, 0], sizes = [8, 16], strides = [1, 1]} : vector<8x256xbf16> to vector<8x16xbf16>
    %199 = tpu.concatenate %197, %198 in 1 : vector<8x240xbf16>, vector<8x16xbf16> -> vector<8x256xbf16>
    %200 = arith.andi %133, %143 : vector<1x256xi1>
    %cst_43 = arith.constant 0.000000e+00 : bf16
    %201 = vector.broadcast %cst_43 : bf16 to vector<8x256xbf16>
    %202 = vector.shape_cast %200 : vector<1x256xi1> to vector<1x256xi1>
    %203 = vector.broadcast %202 : vector<1x256xi1> to vector<8x256xi1>
    %204 = arith.select %203, %199, %201 : vector<8x256xi1>, vector<8x256xbf16>
    %205 = vector.extract_strided_slice %113 {offsets = [0, 17], sizes = [8, 239], strides = [1, 1]} : vector<8x256xbf16> to vector<8x239xbf16>
    %206 = vector.extract_strided_slice %113 {offsets = [0, 0], sizes = [8, 17], strides = [1, 1]} : vector<8x256xbf16> to vector<8x17xbf16>
    %207 = tpu.concatenate %205, %206 in 1 : vector<8x239xbf16>, vector<8x17xbf16> -> vector<8x256xbf16>
    %208 = arith.andi %133, %148 : vector<1x256xi1>
    %cst_44 = arith.constant 0.000000e+00 : bf16
    %209 = vector.broadcast %cst_44 : bf16 to vector<8x256xbf16>
    %210 = vector.shape_cast %208 : vector<1x256xi1> to vector<1x256xi1>
    %211 = vector.broadcast %210 : vector<1x256xi1> to vector<8x256xi1>
    %212 = arith.select %211, %207, %209 : vector<8x256xi1>, vector<8x256xbf16>
    %213 = tpu.concatenate %156, %164, %172, %180, %113, %188, %196, %204, %212 in 0 : vector<8x256xbf16>, vector<8x256xbf16>, vector<8x256xbf16>, vector<8x256xbf16>, vector<8x256xbf16>, vector<8x256xbf16>, vector<8x256xbf16>, vector<8x256xbf16>, vector<8x256xbf16> -> vector<72x256xbf16>
    %c8 = arith.constant 8 : index
    %c0_45 = arith.constant 0 : index
    %214 = vector.load %arg2[%c8, %c0_45] : memref<160x400xf32, #tpu.memory_space<vmem>>, vector<8x72xf32>
    %215 = arith.truncf %214 : vector<8x72xf32> to vector<8x72xbf16>
    %cst_46 = arith.constant dense<0.000000e+00> : vector<8x256xf32>
    %216 = tpu.matmul %215, %213, %cst_46 {dimension_numbers = #tpu.dot_dimension_numbers<[1], [0], [0], [1], [0, 0, 1, 1], [], []>} : vector<8x72xbf16>, vector<72x256xbf16>, vector<8x256xf32> -> vector<8x256xf32>
    %c0_47 = arith.constant 0 : index
    %c1 = arith.constant 1 : index
    %217 = vector.load %arg3[%c0_47, %c1] : memref<32x8xf32, #tpu.memory_space<vmem>>, vector<8x1xf32>
    %218 = vector.broadcast %217 : vector<8x1xf32> to vector<8x256xf32>
    %219 = arith.addf %216, %218 : vector<8x256xf32>
    %cst_48 = arith.constant 0.000000e+00 : f32
    %220 = vector.broadcast %cst_48 : f32 to vector<8x256xf32>
    %221 = arith.cmpf oge, %219, %220 : vector<8x256xf32>
    %cst_49 = arith.constant 0.00999999977 : f32
    %222 = vector.broadcast %cst_49 : f32 to vector<8x256xf32>
    %223 = arith.mulf %222, %219 : vector<8x256xf32>
    %224 = arith.select %221, %219, %223 : vector<8x256xi1>, vector<8x256xf32>
    %225 = arith.truncf %224 : vector<8x256xf32> to vector<8x256xbf16>
    %226 = tpu.iota {dimensions = array<i32: 1>} : vector<1x256xi32>
    %c4_i32_50 = arith.constant 4 : i32
    %227 = vector.broadcast %c4_i32_50 : i32 to vector<1x256xi32>
    %228 = arith.shrsi %226, %227 : vector<1x256xi32>
    %c15_i32_51 = arith.constant 15 : i32
    %229 = vector.broadcast %c15_i32_51 : i32 to vector<1x256xi32>
    %230 = arith.andi %226, %229 : vector<1x256xi32>
    %c2_i32 = arith.constant 2 : i32
    %231 = vector.broadcast %c2_i32 : i32 to vector<1x256xi32>
    %232 = arith.cmpi sge, %228, %231 : vector<1x256xi32>
    %c18_i32 = arith.constant 18 : i32
    %233 = vector.broadcast %c18_i32 : i32 to vector<1x256xi32>
    %234 = arith.cmpi slt, %228, %233 : vector<1x256xi32>
    %235 = arith.andi %232, %234 : vector<1x256xi1>
    %c1_i32_52 = arith.constant 1 : i32
    %236 = vector.broadcast %c1_i32_52 : i32 to vector<1x256xi32>
    %237 = arith.cmpi sge, %228, %236 : vector<1x256xi32>
    %c17_i32_53 = arith.constant 17 : i32
    %238 = vector.broadcast %c17_i32_53 : i32 to vector<1x256xi32>
    %239 = arith.cmpi slt, %228, %238 : vector<1x256xi32>
    %240 = arith.andi %237, %239 : vector<1x256xi1>
    %c0_i32_54 = arith.constant 0 : i32
    %241 = vector.broadcast %c0_i32_54 : i32 to vector<1x256xi32>
    %242 = arith.cmpi sge, %228, %241 : vector<1x256xi32>
    %c16_i32_55 = arith.constant 16 : i32
    %243 = vector.broadcast %c16_i32_55 : i32 to vector<1x256xi32>
    %244 = arith.cmpi slt, %228, %243 : vector<1x256xi32>
    %245 = arith.andi %242, %244 : vector<1x256xi1>
    %c-1_i32_56 = arith.constant -1 : i32
    %246 = vector.broadcast %c-1_i32_56 : i32 to vector<1x256xi32>
    %247 = arith.cmpi sge, %228, %246 : vector<1x256xi32>
    %c15_i32_57 = arith.constant 15 : i32
    %248 = vector.broadcast %c15_i32_57 : i32 to vector<1x256xi32>
    %249 = arith.cmpi slt, %228, %248 : vector<1x256xi32>
    %250 = arith.andi %247, %249 : vector<1x256xi1>
    %c-2_i32 = arith.constant -2 : i32
    %251 = vector.broadcast %c-2_i32 : i32 to vector<1x256xi32>
    %252 = arith.cmpi sge, %228, %251 : vector<1x256xi32>
    %c14_i32 = arith.constant 14 : i32
    %253 = vector.broadcast %c14_i32 : i32 to vector<1x256xi32>
    %254 = arith.cmpi slt, %228, %253 : vector<1x256xi32>
    %255 = arith.andi %252, %254 : vector<1x256xi1>
    %c2_i32_58 = arith.constant 2 : i32
    %256 = vector.broadcast %c2_i32_58 : i32 to vector<1x256xi32>
    %257 = arith.cmpi sge, %230, %256 : vector<1x256xi32>
    %c18_i32_59 = arith.constant 18 : i32
    %258 = vector.broadcast %c18_i32_59 : i32 to vector<1x256xi32>
    %259 = arith.cmpi slt, %230, %258 : vector<1x256xi32>
    %260 = arith.andi %257, %259 : vector<1x256xi1>
    %c1_i32_60 = arith.constant 1 : i32
    %261 = vector.broadcast %c1_i32_60 : i32 to vector<1x256xi32>
    %262 = arith.cmpi sge, %230, %261 : vector<1x256xi32>
    %c17_i32_61 = arith.constant 17 : i32
    %263 = vector.broadcast %c17_i32_61 : i32 to vector<1x256xi32>
    %264 = arith.cmpi slt, %230, %263 : vector<1x256xi32>
    %265 = arith.andi %262, %264 : vector<1x256xi1>
    %c0_i32_62 = arith.constant 0 : i32
    %266 = vector.broadcast %c0_i32_62 : i32 to vector<1x256xi32>
    %267 = arith.cmpi sge, %230, %266 : vector<1x256xi32>
    %c16_i32_63 = arith.constant 16 : i32
    %268 = vector.broadcast %c16_i32_63 : i32 to vector<1x256xi32>
    %269 = arith.cmpi slt, %230, %268 : vector<1x256xi32>
    %270 = arith.andi %267, %269 : vector<1x256xi1>
    %c-1_i32_64 = arith.constant -1 : i32
    %271 = vector.broadcast %c-1_i32_64 : i32 to vector<1x256xi32>
    %272 = arith.cmpi sge, %230, %271 : vector<1x256xi32>
    %c15_i32_65 = arith.constant 15 : i32
    %273 = vector.broadcast %c15_i32_65 : i32 to vector<1x256xi32>
    %274 = arith.cmpi slt, %230, %273 : vector<1x256xi32>
    %275 = arith.andi %272, %274 : vector<1x256xi1>
    %c-2_i32_66 = arith.constant -2 : i32
    %276 = vector.broadcast %c-2_i32_66 : i32 to vector<1x256xi32>
    %277 = arith.cmpi sge, %230, %276 : vector<1x256xi32>
    %c14_i32_67 = arith.constant 14 : i32
    %278 = vector.broadcast %c14_i32_67 : i32 to vector<1x256xi32>
    %279 = arith.cmpi slt, %230, %278 : vector<1x256xi32>
    %280 = arith.andi %277, %279 : vector<1x256xi1>
    %281 = vector.extract_strided_slice %225 {offsets = [0, 222], sizes = [8, 34], strides = [1, 1]} : vector<8x256xbf16> to vector<8x34xbf16>
    %282 = vector.extract_strided_slice %225 {offsets = [0, 0], sizes = [8, 222], strides = [1, 1]} : vector<8x256xbf16> to vector<8x222xbf16>
    %283 = tpu.concatenate %281, %282 in 1 : vector<8x34xbf16>, vector<8x222xbf16> -> vector<8x256xbf16>
    %284 = arith.andi %235, %260 : vector<1x256xi1>
    %cst_68 = arith.constant 0.000000e+00 : bf16
    %285 = vector.broadcast %cst_68 : bf16 to vector<8x256xbf16>
    %286 = vector.shape_cast %284 : vector<1x256xi1> to vector<1x256xi1>
    %287 = vector.broadcast %286 : vector<1x256xi1> to vector<8x256xi1>
    %288 = arith.select %287, %283, %285 : vector<8x256xi1>, vector<8x256xbf16>
    %289 = vector.extract_strided_slice %225 {offsets = [0, 223], sizes = [8, 33], strides = [1, 1]} : vector<8x256xbf16> to vector<8x33xbf16>
    %290 = vector.extract_strided_slice %225 {offsets = [0, 0], sizes = [8, 223], strides = [1, 1]} : vector<8x256xbf16> to vector<8x223xbf16>
    %291 = tpu.concatenate %289, %290 in 1 : vector<8x33xbf16>, vector<8x223xbf16> -> vector<8x256xbf16>
    %292 = arith.andi %235, %265 : vector<1x256xi1>
    %cst_69 = arith.constant 0.000000e+00 : bf16
    %293 = vector.broadcast %cst_69 : bf16 to vector<8x256xbf16>
    %294 = vector.shape_cast %292 : vector<1x256xi1> to vector<1x256xi1>
    %295 = vector.broadcast %294 : vector<1x256xi1> to vector<8x256xi1>
    %296 = arith.select %295, %291, %293 : vector<8x256xi1>, vector<8x256xbf16>
    %297 = vector.extract_strided_slice %225 {offsets = [0, 224], sizes = [8, 32], strides = [1, 1]} : vector<8x256xbf16> to vector<8x32xbf16>
    %298 = vector.extract_strided_slice %225 {offsets = [0, 0], sizes = [8, 224], strides = [1, 1]} : vector<8x256xbf16> to vector<8x224xbf16>
    %299 = tpu.concatenate %297, %298 in 1 : vector<8x32xbf16>, vector<8x224xbf16> -> vector<8x256xbf16>
    %300 = arith.andi %235, %270 : vector<1x256xi1>
    %cst_70 = arith.constant 0.000000e+00 : bf16
    %301 = vector.broadcast %cst_70 : bf16 to vector<8x256xbf16>
    %302 = vector.shape_cast %300 : vector<1x256xi1> to vector<1x256xi1>
    %303 = vector.broadcast %302 : vector<1x256xi1> to vector<8x256xi1>
    %304 = arith.select %303, %299, %301 : vector<8x256xi1>, vector<8x256xbf16>
    %305 = vector.extract_strided_slice %225 {offsets = [0, 225], sizes = [8, 31], strides = [1, 1]} : vector<8x256xbf16> to vector<8x31xbf16>
    %306 = vector.extract_strided_slice %225 {offsets = [0, 0], sizes = [8, 225], strides = [1, 1]} : vector<8x256xbf16> to vector<8x225xbf16>
    %307 = tpu.concatenate %305, %306 in 1 : vector<8x31xbf16>, vector<8x225xbf16> -> vector<8x256xbf16>
    %308 = arith.andi %235, %275 : vector<1x256xi1>
    %cst_71 = arith.constant 0.000000e+00 : bf16
    %309 = vector.broadcast %cst_71 : bf16 to vector<8x256xbf16>
    %310 = vector.shape_cast %308 : vector<1x256xi1> to vector<1x256xi1>
    %311 = vector.broadcast %310 : vector<1x256xi1> to vector<8x256xi1>
    %312 = arith.select %311, %307, %309 : vector<8x256xi1>, vector<8x256xbf16>
    %313 = vector.extract_strided_slice %225 {offsets = [0, 226], sizes = [8, 30], strides = [1, 1]} : vector<8x256xbf16> to vector<8x30xbf16>
    %314 = vector.extract_strided_slice %225 {offsets = [0, 0], sizes = [8, 226], strides = [1, 1]} : vector<8x256xbf16> to vector<8x226xbf16>
    %315 = tpu.concatenate %313, %314 in 1 : vector<8x30xbf16>, vector<8x226xbf16> -> vector<8x256xbf16>
    %316 = arith.andi %235, %280 : vector<1x256xi1>
    %cst_72 = arith.constant 0.000000e+00 : bf16
    %317 = vector.broadcast %cst_72 : bf16 to vector<8x256xbf16>
    %318 = vector.shape_cast %316 : vector<1x256xi1> to vector<1x256xi1>
    %319 = vector.broadcast %318 : vector<1x256xi1> to vector<8x256xi1>
    %320 = arith.select %319, %315, %317 : vector<8x256xi1>, vector<8x256xbf16>
    %321 = vector.extract_strided_slice %225 {offsets = [0, 238], sizes = [8, 18], strides = [1, 1]} : vector<8x256xbf16> to vector<8x18xbf16>
    %322 = vector.extract_strided_slice %225 {offsets = [0, 0], sizes = [8, 238], strides = [1, 1]} : vector<8x256xbf16> to vector<8x238xbf16>
    %323 = tpu.concatenate %321, %322 in 1 : vector<8x18xbf16>, vector<8x238xbf16> -> vector<8x256xbf16>
    %324 = arith.andi %240, %260 : vector<1x256xi1>
    %cst_73 = arith.constant 0.000000e+00 : bf16
    %325 = vector.broadcast %cst_73 : bf16 to vector<8x256xbf16>
    %326 = vector.shape_cast %324 : vector<1x256xi1> to vector<1x256xi1>
    %327 = vector.broadcast %326 : vector<1x256xi1> to vector<8x256xi1>
    %328 = arith.select %327, %323, %325 : vector<8x256xi1>, vector<8x256xbf16>
    %329 = vector.extract_strided_slice %225 {offsets = [0, 239], sizes = [8, 17], strides = [1, 1]} : vector<8x256xbf16> to vector<8x17xbf16>
    %330 = vector.extract_strided_slice %225 {offsets = [0, 0], sizes = [8, 239], strides = [1, 1]} : vector<8x256xbf16> to vector<8x239xbf16>
    %331 = tpu.concatenate %329, %330 in 1 : vector<8x17xbf16>, vector<8x239xbf16> -> vector<8x256xbf16>
    %332 = arith.andi %240, %265 : vector<1x256xi1>
    %cst_74 = arith.constant 0.000000e+00 : bf16
    %333 = vector.broadcast %cst_74 : bf16 to vector<8x256xbf16>
    %334 = vector.shape_cast %332 : vector<1x256xi1> to vector<1x256xi1>
    %335 = vector.broadcast %334 : vector<1x256xi1> to vector<8x256xi1>
    %336 = arith.select %335, %331, %333 : vector<8x256xi1>, vector<8x256xbf16>
    %337 = vector.extract_strided_slice %225 {offsets = [0, 240], sizes = [8, 16], strides = [1, 1]} : vector<8x256xbf16> to vector<8x16xbf16>
    %338 = vector.extract_strided_slice %225 {offsets = [0, 0], sizes = [8, 240], strides = [1, 1]} : vector<8x256xbf16> to vector<8x240xbf16>
    %339 = tpu.concatenate %337, %338 in 1 : vector<8x16xbf16>, vector<8x240xbf16> -> vector<8x256xbf16>
    %340 = arith.andi %240, %270 : vector<1x256xi1>
    %cst_75 = arith.constant 0.000000e+00 : bf16
    %341 = vector.broadcast %cst_75 : bf16 to vector<8x256xbf16>
    %342 = vector.shape_cast %340 : vector<1x256xi1> to vector<1x256xi1>
    %343 = vector.broadcast %342 : vector<1x256xi1> to vector<8x256xi1>
    %344 = arith.select %343, %339, %341 : vector<8x256xi1>, vector<8x256xbf16>
    %345 = vector.extract_strided_slice %225 {offsets = [0, 241], sizes = [8, 15], strides = [1, 1]} : vector<8x256xbf16> to vector<8x15xbf16>
    %346 = vector.extract_strided_slice %225 {offsets = [0, 0], sizes = [8, 241], strides = [1, 1]} : vector<8x256xbf16> to vector<8x241xbf16>
    %347 = tpu.concatenate %345, %346 in 1 : vector<8x15xbf16>, vector<8x241xbf16> -> vector<8x256xbf16>
    %348 = arith.andi %240, %275 : vector<1x256xi1>
    %cst_76 = arith.constant 0.000000e+00 : bf16
    %349 = vector.broadcast %cst_76 : bf16 to vector<8x256xbf16>
    %350 = vector.shape_cast %348 : vector<1x256xi1> to vector<1x256xi1>
    %351 = vector.broadcast %350 : vector<1x256xi1> to vector<8x256xi1>
    %352 = arith.select %351, %347, %349 : vector<8x256xi1>, vector<8x256xbf16>
    %353 = vector.extract_strided_slice %225 {offsets = [0, 242], sizes = [8, 14], strides = [1, 1]} : vector<8x256xbf16> to vector<8x14xbf16>
    %354 = vector.extract_strided_slice %225 {offsets = [0, 0], sizes = [8, 242], strides = [1, 1]} : vector<8x256xbf16> to vector<8x242xbf16>
    %355 = tpu.concatenate %353, %354 in 1 : vector<8x14xbf16>, vector<8x242xbf16> -> vector<8x256xbf16>
    %356 = arith.andi %240, %280 : vector<1x256xi1>
    %cst_77 = arith.constant 0.000000e+00 : bf16
    %357 = vector.broadcast %cst_77 : bf16 to vector<8x256xbf16>
    %358 = vector.shape_cast %356 : vector<1x256xi1> to vector<1x256xi1>
    %359 = vector.broadcast %358 : vector<1x256xi1> to vector<8x256xi1>
    %360 = arith.select %359, %355, %357 : vector<8x256xi1>, vector<8x256xbf16>
    %361 = vector.extract_strided_slice %225 {offsets = [0, 254], sizes = [8, 2], strides = [1, 1]} : vector<8x256xbf16> to vector<8x2xbf16>
    %362 = vector.extract_strided_slice %225 {offsets = [0, 0], sizes = [8, 254], strides = [1, 1]} : vector<8x256xbf16> to vector<8x254xbf16>
    %363 = tpu.concatenate %361, %362 in 1 : vector<8x2xbf16>, vector<8x254xbf16> -> vector<8x256xbf16>
    %364 = arith.andi %245, %260 : vector<1x256xi1>
    %cst_78 = arith.constant 0.000000e+00 : bf16
    %365 = vector.broadcast %cst_78 : bf16 to vector<8x256xbf16>
    %366 = vector.shape_cast %364 : vector<1x256xi1> to vector<1x256xi1>
    %367 = vector.broadcast %366 : vector<1x256xi1> to vector<8x256xi1>
    %368 = arith.select %367, %363, %365 : vector<8x256xi1>, vector<8x256xbf16>
    %369 = vector.extract_strided_slice %225 {offsets = [0, 255], sizes = [8, 1], strides = [1, 1]} : vector<8x256xbf16> to vector<8x1xbf16>
    %370 = vector.extract_strided_slice %225 {offsets = [0, 0], sizes = [8, 255], strides = [1, 1]} : vector<8x256xbf16> to vector<8x255xbf16>
    %371 = tpu.concatenate %369, %370 in 1 : vector<8x1xbf16>, vector<8x255xbf16> -> vector<8x256xbf16>
    %372 = arith.andi %245, %265 : vector<1x256xi1>
    %cst_79 = arith.constant 0.000000e+00 : bf16
    %373 = vector.broadcast %cst_79 : bf16 to vector<8x256xbf16>
    %374 = vector.shape_cast %372 : vector<1x256xi1> to vector<1x256xi1>
    %375 = vector.broadcast %374 : vector<1x256xi1> to vector<8x256xi1>
    %376 = arith.select %375, %371, %373 : vector<8x256xi1>, vector<8x256xbf16>
    %377 = vector.extract_strided_slice %225 {offsets = [0, 1], sizes = [8, 255], strides = [1, 1]} : vector<8x256xbf16> to vector<8x255xbf16>
    %378 = vector.extract_strided_slice %225 {offsets = [0, 0], sizes = [8, 1], strides = [1, 1]} : vector<8x256xbf16> to vector<8x1xbf16>
    %379 = tpu.concatenate %377, %378 in 1 : vector<8x255xbf16>, vector<8x1xbf16> -> vector<8x256xbf16>
    %380 = arith.andi %245, %275 : vector<1x256xi1>
    %cst_80 = arith.constant 0.000000e+00 : bf16
    %381 = vector.broadcast %cst_80 : bf16 to vector<8x256xbf16>
    %382 = vector.shape_cast %380 : vector<1x256xi1> to vector<1x256xi1>
    %383 = vector.broadcast %382 : vector<1x256xi1> to vector<8x256xi1>
    %384 = arith.select %383, %379, %381 : vector<8x256xi1>, vector<8x256xbf16>
    %385 = vector.extract_strided_slice %225 {offsets = [0, 2], sizes = [8, 254], strides = [1, 1]} : vector<8x256xbf16> to vector<8x254xbf16>
    %386 = vector.extract_strided_slice %225 {offsets = [0, 0], sizes = [8, 2], strides = [1, 1]} : vector<8x256xbf16> to vector<8x2xbf16>
    %387 = tpu.concatenate %385, %386 in 1 : vector<8x254xbf16>, vector<8x2xbf16> -> vector<8x256xbf16>
    %388 = arith.andi %245, %280 : vector<1x256xi1>
    %cst_81 = arith.constant 0.000000e+00 : bf16
    %389 = vector.broadcast %cst_81 : bf16 to vector<8x256xbf16>
    %390 = vector.shape_cast %388 : vector<1x256xi1> to vector<1x256xi1>
    %391 = vector.broadcast %390 : vector<1x256xi1> to vector<8x256xi1>
    %392 = arith.select %391, %387, %389 : vector<8x256xi1>, vector<8x256xbf16>
    %393 = vector.extract_strided_slice %225 {offsets = [0, 14], sizes = [8, 242], strides = [1, 1]} : vector<8x256xbf16> to vector<8x242xbf16>
    %394 = vector.extract_strided_slice %225 {offsets = [0, 0], sizes = [8, 14], strides = [1, 1]} : vector<8x256xbf16> to vector<8x14xbf16>
    %395 = tpu.concatenate %393, %394 in 1 : vector<8x242xbf16>, vector<8x14xbf16> -> vector<8x256xbf16>
    %396 = arith.andi %250, %260 : vector<1x256xi1>
    %cst_82 = arith.constant 0.000000e+00 : bf16
    %397 = vector.broadcast %cst_82 : bf16 to vector<8x256xbf16>
    %398 = vector.shape_cast %396 : vector<1x256xi1> to vector<1x256xi1>
    %399 = vector.broadcast %398 : vector<1x256xi1> to vector<8x256xi1>
    %400 = arith.select %399, %395, %397 : vector<8x256xi1>, vector<8x256xbf16>
    %401 = vector.extract_strided_slice %225 {offsets = [0, 15], sizes = [8, 241], strides = [1, 1]} : vector<8x256xbf16> to vector<8x241xbf16>
    %402 = vector.extract_strided_slice %225 {offsets = [0, 0], sizes = [8, 15], strides = [1, 1]} : vector<8x256xbf16> to vector<8x15xbf16>
    %403 = tpu.concatenate %401, %402 in 1 : vector<8x241xbf16>, vector<8x15xbf16> -> vector<8x256xbf16>
    %404 = arith.andi %250, %265 : vector<1x256xi1>
    %cst_83 = arith.constant 0.000000e+00 : bf16
    %405 = vector.broadcast %cst_83 : bf16 to vector<8x256xbf16>
    %406 = vector.shape_cast %404 : vector<1x256xi1> to vector<1x256xi1>
    %407 = vector.broadcast %406 : vector<1x256xi1> to vector<8x256xi1>
    %408 = arith.select %407, %403, %405 : vector<8x256xi1>, vector<8x256xbf16>
    %409 = vector.extract_strided_slice %225 {offsets = [0, 16], sizes = [8, 240], strides = [1, 1]} : vector<8x256xbf16> to vector<8x240xbf16>
    %410 = vector.extract_strided_slice %225 {offsets = [0, 0], sizes = [8, 16], strides = [1, 1]} : vector<8x256xbf16> to vector<8x16xbf16>
    %411 = tpu.concatenate %409, %410 in 1 : vector<8x240xbf16>, vector<8x16xbf16> -> vector<8x256xbf16>
    %412 = arith.andi %250, %270 : vector<1x256xi1>
    %cst_84 = arith.constant 0.000000e+00 : bf16
    %413 = vector.broadcast %cst_84 : bf16 to vector<8x256xbf16>
    %414 = vector.shape_cast %412 : vector<1x256xi1> to vector<1x256xi1>
    %415 = vector.broadcast %414 : vector<1x256xi1> to vector<8x256xi1>
    %416 = arith.select %415, %411, %413 : vector<8x256xi1>, vector<8x256xbf16>
    %417 = vector.extract_strided_slice %225 {offsets = [0, 17], sizes = [8, 239], strides = [1, 1]} : vector<8x256xbf16> to vector<8x239xbf16>
    %418 = vector.extract_strided_slice %225 {offsets = [0, 0], sizes = [8, 17], strides = [1, 1]} : vector<8x256xbf16> to vector<8x17xbf16>
    %419 = tpu.concatenate %417, %418 in 1 : vector<8x239xbf16>, vector<8x17xbf16> -> vector<8x256xbf16>
    %420 = arith.andi %250, %275 : vector<1x256xi1>
    %cst_85 = arith.constant 0.000000e+00 : bf16
    %421 = vector.broadcast %cst_85 : bf16 to vector<8x256xbf16>
    %422 = vector.shape_cast %420 : vector<1x256xi1> to vector<1x256xi1>
    %423 = vector.broadcast %422 : vector<1x256xi1> to vector<8x256xi1>
    %424 = arith.select %423, %419, %421 : vector<8x256xi1>, vector<8x256xbf16>
    %425 = vector.extract_strided_slice %225 {offsets = [0, 18], sizes = [8, 238], strides = [1, 1]} : vector<8x256xbf16> to vector<8x238xbf16>
    %426 = vector.extract_strided_slice %225 {offsets = [0, 0], sizes = [8, 18], strides = [1, 1]} : vector<8x256xbf16> to vector<8x18xbf16>
    %427 = tpu.concatenate %425, %426 in 1 : vector<8x238xbf16>, vector<8x18xbf16> -> vector<8x256xbf16>
    %428 = arith.andi %250, %280 : vector<1x256xi1>
    %cst_86 = arith.constant 0.000000e+00 : bf16
    %429 = vector.broadcast %cst_86 : bf16 to vector<8x256xbf16>
    %430 = vector.shape_cast %428 : vector<1x256xi1> to vector<1x256xi1>
    %431 = vector.broadcast %430 : vector<1x256xi1> to vector<8x256xi1>
    %432 = arith.select %431, %427, %429 : vector<8x256xi1>, vector<8x256xbf16>
    %433 = vector.extract_strided_slice %225 {offsets = [0, 30], sizes = [8, 226], strides = [1, 1]} : vector<8x256xbf16> to vector<8x226xbf16>
    %434 = vector.extract_strided_slice %225 {offsets = [0, 0], sizes = [8, 30], strides = [1, 1]} : vector<8x256xbf16> to vector<8x30xbf16>
    %435 = tpu.concatenate %433, %434 in 1 : vector<8x226xbf16>, vector<8x30xbf16> -> vector<8x256xbf16>
    %436 = arith.andi %255, %260 : vector<1x256xi1>
    %cst_87 = arith.constant 0.000000e+00 : bf16
    %437 = vector.broadcast %cst_87 : bf16 to vector<8x256xbf16>
    %438 = vector.shape_cast %436 : vector<1x256xi1> to vector<1x256xi1>
    %439 = vector.broadcast %438 : vector<1x256xi1> to vector<8x256xi1>
    %440 = arith.select %439, %435, %437 : vector<8x256xi1>, vector<8x256xbf16>
    %441 = vector.extract_strided_slice %225 {offsets = [0, 31], sizes = [8, 225], strides = [1, 1]} : vector<8x256xbf16> to vector<8x225xbf16>
    %442 = vector.extract_strided_slice %225 {offsets = [0, 0], sizes = [8, 31], strides = [1, 1]} : vector<8x256xbf16> to vector<8x31xbf16>
    %443 = tpu.concatenate %441, %442 in 1 : vector<8x225xbf16>, vector<8x31xbf16> -> vector<8x256xbf16>
    %444 = arith.andi %255, %265 : vector<1x256xi1>
    %cst_88 = arith.constant 0.000000e+00 : bf16
    %445 = vector.broadcast %cst_88 : bf16 to vector<8x256xbf16>
    %446 = vector.shape_cast %444 : vector<1x256xi1> to vector<1x256xi1>
    %447 = vector.broadcast %446 : vector<1x256xi1> to vector<8x256xi1>
    %448 = arith.select %447, %443, %445 : vector<8x256xi1>, vector<8x256xbf16>
    %449 = vector.extract_strided_slice %225 {offsets = [0, 32], sizes = [8, 224], strides = [1, 1]} : vector<8x256xbf16> to vector<8x224xbf16>
    %450 = vector.extract_strided_slice %225 {offsets = [0, 0], sizes = [8, 32], strides = [1, 1]} : vector<8x256xbf16> to vector<8x32xbf16>
    %451 = tpu.concatenate %449, %450 in 1 : vector<8x224xbf16>, vector<8x32xbf16> -> vector<8x256xbf16>
    %452 = arith.andi %255, %270 : vector<1x256xi1>
    %cst_89 = arith.constant 0.000000e+00 : bf16
    %453 = vector.broadcast %cst_89 : bf16 to vector<8x256xbf16>
    %454 = vector.shape_cast %452 : vector<1x256xi1> to vector<1x256xi1>
    %455 = vector.broadcast %454 : vector<1x256xi1> to vector<8x256xi1>
    %456 = arith.select %455, %451, %453 : vector<8x256xi1>, vector<8x256xbf16>
    %457 = vector.extract_strided_slice %225 {offsets = [0, 33], sizes = [8, 223], strides = [1, 1]} : vector<8x256xbf16> to vector<8x223xbf16>
    %458 = vector.extract_strided_slice %225 {offsets = [0, 0], sizes = [8, 33], strides = [1, 1]} : vector<8x256xbf16> to vector<8x33xbf16>
    %459 = tpu.concatenate %457, %458 in 1 : vector<8x223xbf16>, vector<8x33xbf16> -> vector<8x256xbf16>
    %460 = arith.andi %255, %275 : vector<1x256xi1>
    %cst_90 = arith.constant 0.000000e+00 : bf16
    %461 = vector.broadcast %cst_90 : bf16 to vector<8x256xbf16>
    %462 = vector.shape_cast %460 : vector<1x256xi1> to vector<1x256xi1>
    %463 = vector.broadcast %462 : vector<1x256xi1> to vector<8x256xi1>
    %464 = arith.select %463, %459, %461 : vector<8x256xi1>, vector<8x256xbf16>
    %465 = vector.extract_strided_slice %225 {offsets = [0, 34], sizes = [8, 222], strides = [1, 1]} : vector<8x256xbf16> to vector<8x222xbf16>
    %466 = vector.extract_strided_slice %225 {offsets = [0, 0], sizes = [8, 34], strides = [1, 1]} : vector<8x256xbf16> to vector<8x34xbf16>
    %467 = tpu.concatenate %465, %466 in 1 : vector<8x222xbf16>, vector<8x34xbf16> -> vector<8x256xbf16>
    %468 = arith.andi %255, %280 : vector<1x256xi1>
    %cst_91 = arith.constant 0.000000e+00 : bf16
    %469 = vector.broadcast %cst_91 : bf16 to vector<8x256xbf16>
    %470 = vector.shape_cast %468 : vector<1x256xi1> to vector<1x256xi1>
    %471 = vector.broadcast %470 : vector<1x256xi1> to vector<8x256xi1>
    %472 = arith.select %471, %467, %469 : vector<8x256xi1>, vector<8x256xbf16>
    %473 = tpu.concatenate %288, %296, %304, %312, %320, %328, %336, %344, %352, %360, %368, %376, %225, %384, %392, %400 in 0 : vector<8x256xbf16>, vector<8x256xbf16>, vector<8x256xbf16>, vector<8x256xbf16>, vector<8x256xbf16>, vector<8x256xbf16>, vector<8x256xbf16>, vector<8x256xbf16>, vector<8x256xbf16>, vector<8x256xbf16>, vector<8x256xbf16>, vector<8x256xbf16>, vector<8x256xbf16>, vector<8x256xbf16>, vector<8x256xbf16>, vector<8x256xbf16> -> vector<128x256xbf16>
    %474 = tpu.concatenate %408, %416, %424, %432, %440, %448, %456, %464, %472 in 0 : vector<8x256xbf16>, vector<8x256xbf16>, vector<8x256xbf16>, vector<8x256xbf16>, vector<8x256xbf16>, vector<8x256xbf16>, vector<8x256xbf16>, vector<8x256xbf16>, vector<8x256xbf16> -> vector<72x256xbf16>
    %475 = tpu.concatenate %473, %474 in 0 : vector<128x256xbf16>, vector<72x256xbf16> -> vector<200x256xbf16>
    %c16 = arith.constant 16 : index
    %c0_92 = arith.constant 0 : index
    %476 = vector.load %arg2[%c16, %c0_92] : memref<160x400xf32, #tpu.memory_space<vmem>>, vector<16x200xf32>
    %477 = arith.truncf %476 : vector<16x200xf32> to vector<16x200xbf16>
    %cst_93 = arith.constant dense<0.000000e+00> : vector<16x256xf32>
    %478 = tpu.matmul %477, %475, %cst_93 {dimension_numbers = #tpu.dot_dimension_numbers<[1], [0], [0], [1], [0, 0, 1, 1], [], []>} : vector<16x200xbf16>, vector<200x256xbf16>, vector<16x256xf32> -> vector<16x256xf32>
    %c0_94 = arith.constant 0 : index
    %c2 = arith.constant 2 : index
    %479 = vector.load %arg3[%c0_94, %c2] : memref<32x8xf32, #tpu.memory_space<vmem>>, vector<16x1xf32>
    %480 = vector.broadcast %479 : vector<16x1xf32> to vector<16x256xf32>
    %481 = arith.addf %478, %480 : vector<16x256xf32>
    %cst_95 = arith.constant 0.000000e+00 : f32
    %482 = vector.broadcast %cst_95 : f32 to vector<16x256xf32>
    %483 = arith.cmpf oge, %481, %482 : vector<16x256xf32>
    %cst_96 = arith.constant 0.00999999977 : f32
    %484 = vector.broadcast %cst_96 : f32 to vector<16x256xf32>
    %485 = arith.mulf %484, %481 : vector<16x256xf32>
    %486 = arith.select %483, %481, %485 : vector<16x256xi1>, vector<16x256xf32>
    %487 = arith.truncf %486 : vector<16x256xf32> to vector<16x256xbf16>
    %488 = vector.shape_cast %487 : vector<16x256xbf16> to vector<16x128x2xbf16>
    %489 = vector.extract_strided_slice %488 {offsets = [0, 0, 0], sizes = [16, 128, 1], strides = [1, 1, 1]} : vector<16x128x2xbf16> to vector<16x128x1xbf16>
    %490 = vector.shape_cast %489 : vector<16x128x1xbf16> to vector<16x128xbf16>
    %491 = vector.extract_strided_slice %490 {offsets = [0, 0], sizes = [16, 8], strides = [1, 1]} : vector<16x128xbf16> to vector<16x8xbf16>
    %492 = vector.extract_strided_slice %490 {offsets = [0, 16], sizes = [16, 8], strides = [1, 1]} : vector<16x128xbf16> to vector<16x8xbf16>
    %493 = vector.extract_strided_slice %490 {offsets = [0, 32], sizes = [16, 8], strides = [1, 1]} : vector<16x128xbf16> to vector<16x8xbf16>
    %494 = vector.extract_strided_slice %490 {offsets = [0, 48], sizes = [16, 8], strides = [1, 1]} : vector<16x128xbf16> to vector<16x8xbf16>
    %495 = vector.extract_strided_slice %490 {offsets = [0, 64], sizes = [16, 8], strides = [1, 1]} : vector<16x128xbf16> to vector<16x8xbf16>
    %496 = vector.extract_strided_slice %490 {offsets = [0, 80], sizes = [16, 8], strides = [1, 1]} : vector<16x128xbf16> to vector<16x8xbf16>
    %497 = vector.extract_strided_slice %490 {offsets = [0, 96], sizes = [16, 8], strides = [1, 1]} : vector<16x128xbf16> to vector<16x8xbf16>
    %498 = vector.extract_strided_slice %490 {offsets = [0, 112], sizes = [16, 8], strides = [1, 1]} : vector<16x128xbf16> to vector<16x8xbf16>
    %499 = tpu.concatenate %491, %492, %493, %494, %495, %496, %497, %498 in 1 : vector<16x8xbf16>, vector<16x8xbf16>, vector<16x8xbf16>, vector<16x8xbf16>, vector<16x8xbf16>, vector<16x8xbf16>, vector<16x8xbf16>, vector<16x8xbf16> -> vector<16x64xbf16>
    %500 = tpu.iota {dimensions = array<i32: 1>} : vector<1x64xi32>
    %c3_i32 = arith.constant 3 : i32
    %501 = vector.broadcast %c3_i32 : i32 to vector<1x64xi32>
    %502 = arith.shrsi %500, %501 : vector<1x64xi32>
    %c7_i32 = arith.constant 7 : i32
    %503 = vector.broadcast %c7_i32 : i32 to vector<1x64xi32>
    %504 = arith.andi %500, %503 : vector<1x64xi32>
    %c1_i32_97 = arith.constant 1 : i32
    %505 = vector.broadcast %c1_i32_97 : i32 to vector<1x64xi32>
    %506 = arith.cmpi sge, %502, %505 : vector<1x64xi32>
    %c9_i32 = arith.constant 9 : i32
    %507 = vector.broadcast %c9_i32 : i32 to vector<1x64xi32>
    %508 = arith.cmpi slt, %502, %507 : vector<1x64xi32>
    %509 = arith.andi %506, %508 : vector<1x64xi1>
    %c0_i32_98 = arith.constant 0 : i32
    %510 = vector.broadcast %c0_i32_98 : i32 to vector<1x64xi32>
    %511 = arith.cmpi sge, %502, %510 : vector<1x64xi32>
    %c8_i32 = arith.constant 8 : i32
    %512 = vector.broadcast %c8_i32 : i32 to vector<1x64xi32>
    %513 = arith.cmpi slt, %502, %512 : vector<1x64xi32>
    %514 = arith.andi %511, %513 : vector<1x64xi1>
    %c-1_i32_99 = arith.constant -1 : i32
    %515 = vector.broadcast %c-1_i32_99 : i32 to vector<1x64xi32>
    %516 = arith.cmpi sge, %502, %515 : vector<1x64xi32>
    %c7_i32_100 = arith.constant 7 : i32
    %517 = vector.broadcast %c7_i32_100 : i32 to vector<1x64xi32>
    %518 = arith.cmpi slt, %502, %517 : vector<1x64xi32>
    %519 = arith.andi %516, %518 : vector<1x64xi1>
    %c1_i32_101 = arith.constant 1 : i32
    %520 = vector.broadcast %c1_i32_101 : i32 to vector<1x64xi32>
    %521 = arith.cmpi sge, %504, %520 : vector<1x64xi32>
    %c9_i32_102 = arith.constant 9 : i32
    %522 = vector.broadcast %c9_i32_102 : i32 to vector<1x64xi32>
    %523 = arith.cmpi slt, %504, %522 : vector<1x64xi32>
    %524 = arith.andi %521, %523 : vector<1x64xi1>
    %c0_i32_103 = arith.constant 0 : i32
    %525 = vector.broadcast %c0_i32_103 : i32 to vector<1x64xi32>
    %526 = arith.cmpi sge, %504, %525 : vector<1x64xi32>
    %c8_i32_104 = arith.constant 8 : i32
    %527 = vector.broadcast %c8_i32_104 : i32 to vector<1x64xi32>
    %528 = arith.cmpi slt, %504, %527 : vector<1x64xi32>
    %529 = arith.andi %526, %528 : vector<1x64xi1>
    %c-1_i32_105 = arith.constant -1 : i32
    %530 = vector.broadcast %c-1_i32_105 : i32 to vector<1x64xi32>
    %531 = arith.cmpi sge, %504, %530 : vector<1x64xi32>
    %c7_i32_106 = arith.constant 7 : i32
    %532 = vector.broadcast %c7_i32_106 : i32 to vector<1x64xi32>
    %533 = arith.cmpi slt, %504, %532 : vector<1x64xi32>
    %534 = arith.andi %531, %533 : vector<1x64xi1>
    %535 = vector.extract_strided_slice %499 {offsets = [0, 55], sizes = [16, 9], strides = [1, 1]} : vector<16x64xbf16> to vector<16x9xbf16>
    %536 = vector.extract_strided_slice %499 {offsets = [0, 0], sizes = [16, 55], strides = [1, 1]} : vector<16x64xbf16> to vector<16x55xbf16>
    %537 = tpu.concatenate %535, %536 in 1 : vector<16x9xbf16>, vector<16x55xbf16> -> vector<16x64xbf16>
    %538 = arith.andi %509, %524 : vector<1x64xi1>
    %cst_107 = arith.constant 0.000000e+00 : bf16
    %539 = vector.broadcast %cst_107 : bf16 to vector<16x64xbf16>
    %540 = vector.shape_cast %538 : vector<1x64xi1> to vector<1x64xi1>
    %541 = vector.broadcast %540 : vector<1x64xi1> to vector<16x64xi1>
    %542 = arith.select %541, %537, %539 : vector<16x64xi1>, vector<16x64xbf16>
    %543 = vector.extract_strided_slice %499 {offsets = [0, 56], sizes = [16, 8], strides = [1, 1]} : vector<16x64xbf16> to vector<16x8xbf16>
    %544 = vector.extract_strided_slice %499 {offsets = [0, 0], sizes = [16, 56], strides = [1, 1]} : vector<16x64xbf16> to vector<16x56xbf16>
    %545 = tpu.concatenate %543, %544 in 1 : vector<16x8xbf16>, vector<16x56xbf16> -> vector<16x64xbf16>
    %546 = arith.andi %509, %529 : vector<1x64xi1>
    %cst_108 = arith.constant 0.000000e+00 : bf16
    %547 = vector.broadcast %cst_108 : bf16 to vector<16x64xbf16>
    %548 = vector.shape_cast %546 : vector<1x64xi1> to vector<1x64xi1>
    %549 = vector.broadcast %548 : vector<1x64xi1> to vector<16x64xi1>
    %550 = arith.select %549, %545, %547 : vector<16x64xi1>, vector<16x64xbf16>
    %551 = vector.extract_strided_slice %499 {offsets = [0, 57], sizes = [16, 7], strides = [1, 1]} : vector<16x64xbf16> to vector<16x7xbf16>
    %552 = vector.extract_strided_slice %499 {offsets = [0, 0], sizes = [16, 57], strides = [1, 1]} : vector<16x64xbf16> to vector<16x57xbf16>
    %553 = tpu.concatenate %551, %552 in 1 : vector<16x7xbf16>, vector<16x57xbf16> -> vector<16x64xbf16>
    %554 = arith.andi %509, %534 : vector<1x64xi1>
    %cst_109 = arith.constant 0.000000e+00 : bf16
    %555 = vector.broadcast %cst_109 : bf16 to vector<16x64xbf16>
    %556 = vector.shape_cast %554 : vector<1x64xi1> to vector<1x64xi1>
    %557 = vector.broadcast %556 : vector<1x64xi1> to vector<16x64xi1>
    %558 = arith.select %557, %553, %555 : vector<16x64xi1>, vector<16x64xbf16>
    %559 = vector.extract_strided_slice %499 {offsets = [0, 63], sizes = [16, 1], strides = [1, 1]} : vector<16x64xbf16> to vector<16x1xbf16>
    %560 = vector.extract_strided_slice %499 {offsets = [0, 0], sizes = [16, 63], strides = [1, 1]} : vector<16x64xbf16> to vector<16x63xbf16>
    %561 = tpu.concatenate %559, %560 in 1 : vector<16x1xbf16>, vector<16x63xbf16> -> vector<16x64xbf16>
    %562 = arith.andi %514, %524 : vector<1x64xi1>
    %cst_110 = arith.constant 0.000000e+00 : bf16
    %563 = vector.broadcast %cst_110 : bf16 to vector<16x64xbf16>
    %564 = vector.shape_cast %562 : vector<1x64xi1> to vector<1x64xi1>
    %565 = vector.broadcast %564 : vector<1x64xi1> to vector<16x64xi1>
    %566 = arith.select %565, %561, %563 : vector<16x64xi1>, vector<16x64xbf16>
    %567 = vector.extract_strided_slice %499 {offsets = [0, 1], sizes = [16, 63], strides = [1, 1]} : vector<16x64xbf16> to vector<16x63xbf16>
    %568 = vector.extract_strided_slice %499 {offsets = [0, 0], sizes = [16, 1], strides = [1, 1]} : vector<16x64xbf16> to vector<16x1xbf16>
    %569 = tpu.concatenate %567, %568 in 1 : vector<16x63xbf16>, vector<16x1xbf16> -> vector<16x64xbf16>
    %570 = arith.andi %514, %534 : vector<1x64xi1>
    %cst_111 = arith.constant 0.000000e+00 : bf16
    %571 = vector.broadcast %cst_111 : bf16 to vector<16x64xbf16>
    %572 = vector.shape_cast %570 : vector<1x64xi1> to vector<1x64xi1>
    %573 = vector.broadcast %572 : vector<1x64xi1> to vector<16x64xi1>
    %574 = arith.select %573, %569, %571 : vector<16x64xi1>, vector<16x64xbf16>
    %575 = vector.extract_strided_slice %499 {offsets = [0, 7], sizes = [16, 57], strides = [1, 1]} : vector<16x64xbf16> to vector<16x57xbf16>
    %576 = vector.extract_strided_slice %499 {offsets = [0, 0], sizes = [16, 7], strides = [1, 1]} : vector<16x64xbf16> to vector<16x7xbf16>
    %577 = tpu.concatenate %575, %576 in 1 : vector<16x57xbf16>, vector<16x7xbf16> -> vector<16x64xbf16>
    %578 = arith.andi %519, %524 : vector<1x64xi1>
    %cst_112 = arith.constant 0.000000e+00 : bf16
    %579 = vector.broadcast %cst_112 : bf16 to vector<16x64xbf16>
    %580 = vector.shape_cast %578 : vector<1x64xi1> to vector<1x64xi1>
    %581 = vector.broadcast %580 : vector<1x64xi1> to vector<16x64xi1>
    %582 = arith.select %581, %577, %579 : vector<16x64xi1>, vector<16x64xbf16>
    %583 = vector.extract_strided_slice %499 {offsets = [0, 8], sizes = [16, 56], strides = [1, 1]} : vector<16x64xbf16> to vector<16x56xbf16>
    %584 = vector.extract_strided_slice %499 {offsets = [0, 0], sizes = [16, 8], strides = [1, 1]} : vector<16x64xbf16> to vector<16x8xbf16>
    %585 = tpu.concatenate %583, %584 in 1 : vector<16x56xbf16>, vector<16x8xbf16> -> vector<16x64xbf16>
    %586 = arith.andi %519, %529 : vector<1x64xi1>
    %cst_113 = arith.constant 0.000000e+00 : bf16
    %587 = vector.broadcast %cst_113 : bf16 to vector<16x64xbf16>
    %588 = vector.shape_cast %586 : vector<1x64xi1> to vector<1x64xi1>
    %589 = vector.broadcast %588 : vector<1x64xi1> to vector<16x64xi1>
    %590 = arith.select %589, %585, %587 : vector<16x64xi1>, vector<16x64xbf16>
    %591 = vector.extract_strided_slice %499 {offsets = [0, 9], sizes = [16, 55], strides = [1, 1]} : vector<16x64xbf16> to vector<16x55xbf16>
    %592 = vector.extract_strided_slice %499 {offsets = [0, 0], sizes = [16, 9], strides = [1, 1]} : vector<16x64xbf16> to vector<16x9xbf16>
    %593 = tpu.concatenate %591, %592 in 1 : vector<16x55xbf16>, vector<16x9xbf16> -> vector<16x64xbf16>
    %594 = arith.andi %519, %534 : vector<1x64xi1>
    %cst_114 = arith.constant 0.000000e+00 : bf16
    %595 = vector.broadcast %cst_114 : bf16 to vector<16x64xbf16>
    %596 = vector.shape_cast %594 : vector<1x64xi1> to vector<1x64xi1>
    %597 = vector.broadcast %596 : vector<1x64xi1> to vector<16x64xi1>
    %598 = arith.select %597, %593, %595 : vector<16x64xi1>, vector<16x64xbf16>
    %599 = tpu.concatenate %542, %550, %558, %566, %499, %574, %582, %590, %598 in 0 : vector<16x64xbf16>, vector<16x64xbf16>, vector<16x64xbf16>, vector<16x64xbf16>, vector<16x64xbf16>, vector<16x64xbf16>, vector<16x64xbf16>, vector<16x64xbf16>, vector<16x64xbf16> -> vector<144x64xbf16>
    %c32 = arith.constant 32 : index
    %c0_115 = arith.constant 0 : index
    %600 = vector.load %arg2[%c32, %c0_115] : memref<160x400xf32, #tpu.memory_space<vmem>>, vector<16x144xf32>
    %601 = arith.truncf %600 : vector<16x144xf32> to vector<16x144xbf16>
    %cst_116 = arith.constant dense<0.000000e+00> : vector<16x64xf32>
    %602 = tpu.matmul %601, %599, %cst_116 {dimension_numbers = #tpu.dot_dimension_numbers<[1], [0], [0], [1], [0, 0, 1, 1], [], []>} : vector<16x144xbf16>, vector<144x64xbf16>, vector<16x64xf32> -> vector<16x64xf32>
    %c0_117 = arith.constant 0 : index
    %c3 = arith.constant 3 : index
    %603 = vector.load %arg3[%c0_117, %c3] : memref<32x8xf32, #tpu.memory_space<vmem>>, vector<16x1xf32>
    %604 = vector.broadcast %603 : vector<16x1xf32> to vector<16x64xf32>
    %605 = arith.addf %602, %604 : vector<16x64xf32>
    %cst_118 = arith.constant 0.000000e+00 : f32
    %606 = vector.broadcast %cst_118 : f32 to vector<16x64xf32>
    %607 = arith.cmpf oge, %605, %606 : vector<16x64xf32>
    %cst_119 = arith.constant 0.00999999977 : f32
    %608 = vector.broadcast %cst_119 : f32 to vector<16x64xf32>
    %609 = arith.mulf %608, %605 : vector<16x64xf32>
    %610 = arith.select %607, %605, %609 : vector<16x64xi1>, vector<16x64xf32>
    %611 = arith.truncf %610 : vector<16x64xf32> to vector<16x64xbf16>
    %612 = tpu.iota {dimensions = array<i32: 1>} : vector<1x64xi32>
    %c3_i32_120 = arith.constant 3 : i32
    %613 = vector.broadcast %c3_i32_120 : i32 to vector<1x64xi32>
    %614 = arith.shrsi %612, %613 : vector<1x64xi32>
    %c7_i32_121 = arith.constant 7 : i32
    %615 = vector.broadcast %c7_i32_121 : i32 to vector<1x64xi32>
    %616 = arith.andi %612, %615 : vector<1x64xi32>
    %c1_i32_122 = arith.constant 1 : i32
    %617 = vector.broadcast %c1_i32_122 : i32 to vector<1x64xi32>
    %618 = arith.cmpi sge, %614, %617 : vector<1x64xi32>
    %c9_i32_123 = arith.constant 9 : i32
    %619 = vector.broadcast %c9_i32_123 : i32 to vector<1x64xi32>
    %620 = arith.cmpi slt, %614, %619 : vector<1x64xi32>
    %621 = arith.andi %618, %620 : vector<1x64xi1>
    %c0_i32_124 = arith.constant 0 : i32
    %622 = vector.broadcast %c0_i32_124 : i32 to vector<1x64xi32>
    %623 = arith.cmpi sge, %614, %622 : vector<1x64xi32>
    %c8_i32_125 = arith.constant 8 : i32
    %624 = vector.broadcast %c8_i32_125 : i32 to vector<1x64xi32>
    %625 = arith.cmpi slt, %614, %624 : vector<1x64xi32>
    %626 = arith.andi %623, %625 : vector<1x64xi1>
    %c-1_i32_126 = arith.constant -1 : i32
    %627 = vector.broadcast %c-1_i32_126 : i32 to vector<1x64xi32>
    %628 = arith.cmpi sge, %614, %627 : vector<1x64xi32>
    %c7_i32_127 = arith.constant 7 : i32
    %629 = vector.broadcast %c7_i32_127 : i32 to vector<1x64xi32>
    %630 = arith.cmpi slt, %614, %629 : vector<1x64xi32>
    %631 = arith.andi %628, %630 : vector<1x64xi1>
    %c1_i32_128 = arith.constant 1 : i32
    %632 = vector.broadcast %c1_i32_128 : i32 to vector<1x64xi32>
    %633 = arith.cmpi sge, %616, %632 : vector<1x64xi32>
    %c9_i32_129 = arith.constant 9 : i32
    %634 = vector.broadcast %c9_i32_129 : i32 to vector<1x64xi32>
    %635 = arith.cmpi slt, %616, %634 : vector<1x64xi32>
    %636 = arith.andi %633, %635 : vector<1x64xi1>
    %c0_i32_130 = arith.constant 0 : i32
    %637 = vector.broadcast %c0_i32_130 : i32 to vector<1x64xi32>
    %638 = arith.cmpi sge, %616, %637 : vector<1x64xi32>
    %c8_i32_131 = arith.constant 8 : i32
    %639 = vector.broadcast %c8_i32_131 : i32 to vector<1x64xi32>
    %640 = arith.cmpi slt, %616, %639 : vector<1x64xi32>
    %641 = arith.andi %638, %640 : vector<1x64xi1>
    %c-1_i32_132 = arith.constant -1 : i32
    %642 = vector.broadcast %c-1_i32_132 : i32 to vector<1x64xi32>
    %643 = arith.cmpi sge, %616, %642 : vector<1x64xi32>
    %c7_i32_133 = arith.constant 7 : i32
    %644 = vector.broadcast %c7_i32_133 : i32 to vector<1x64xi32>
    %645 = arith.cmpi slt, %616, %644 : vector<1x64xi32>
    %646 = arith.andi %643, %645 : vector<1x64xi1>
    %647 = vector.extract_strided_slice %611 {offsets = [0, 55], sizes = [16, 9], strides = [1, 1]} : vector<16x64xbf16> to vector<16x9xbf16>
    %648 = vector.extract_strided_slice %611 {offsets = [0, 0], sizes = [16, 55], strides = [1, 1]} : vector<16x64xbf16> to vector<16x55xbf16>
    %649 = tpu.concatenate %647, %648 in 1 : vector<16x9xbf16>, vector<16x55xbf16> -> vector<16x64xbf16>
    %650 = arith.andi %621, %636 : vector<1x64xi1>
    %cst_134 = arith.constant 0.000000e+00 : bf16
    %651 = vector.broadcast %cst_134 : bf16 to vector<16x64xbf16>
    %652 = vector.shape_cast %650 : vector<1x64xi1> to vector<1x64xi1>
    %653 = vector.broadcast %652 : vector<1x64xi1> to vector<16x64xi1>
    %654 = arith.select %653, %649, %651 : vector<16x64xi1>, vector<16x64xbf16>
    %655 = vector.extract_strided_slice %611 {offsets = [0, 56], sizes = [16, 8], strides = [1, 1]} : vector<16x64xbf16> to vector<16x8xbf16>
    %656 = vector.extract_strided_slice %611 {offsets = [0, 0], sizes = [16, 56], strides = [1, 1]} : vector<16x64xbf16> to vector<16x56xbf16>
    %657 = tpu.concatenate %655, %656 in 1 : vector<16x8xbf16>, vector<16x56xbf16> -> vector<16x64xbf16>
    %658 = arith.andi %621, %641 : vector<1x64xi1>
    %cst_135 = arith.constant 0.000000e+00 : bf16
    %659 = vector.broadcast %cst_135 : bf16 to vector<16x64xbf16>
    %660 = vector.shape_cast %658 : vector<1x64xi1> to vector<1x64xi1>
    %661 = vector.broadcast %660 : vector<1x64xi1> to vector<16x64xi1>
    %662 = arith.select %661, %657, %659 : vector<16x64xi1>, vector<16x64xbf16>
    %663 = vector.extract_strided_slice %611 {offsets = [0, 57], sizes = [16, 7], strides = [1, 1]} : vector<16x64xbf16> to vector<16x7xbf16>
    %664 = vector.extract_strided_slice %611 {offsets = [0, 0], sizes = [16, 57], strides = [1, 1]} : vector<16x64xbf16> to vector<16x57xbf16>
    %665 = tpu.concatenate %663, %664 in 1 : vector<16x7xbf16>, vector<16x57xbf16> -> vector<16x64xbf16>
    %666 = arith.andi %621, %646 : vector<1x64xi1>
    %cst_136 = arith.constant 0.000000e+00 : bf16
    %667 = vector.broadcast %cst_136 : bf16 to vector<16x64xbf16>
    %668 = vector.shape_cast %666 : vector<1x64xi1> to vector<1x64xi1>
    %669 = vector.broadcast %668 : vector<1x64xi1> to vector<16x64xi1>
    %670 = arith.select %669, %665, %667 : vector<16x64xi1>, vector<16x64xbf16>
    %671 = vector.extract_strided_slice %611 {offsets = [0, 63], sizes = [16, 1], strides = [1, 1]} : vector<16x64xbf16> to vector<16x1xbf16>
    %672 = vector.extract_strided_slice %611 {offsets = [0, 0], sizes = [16, 63], strides = [1, 1]} : vector<16x64xbf16> to vector<16x63xbf16>
    %673 = tpu.concatenate %671, %672 in 1 : vector<16x1xbf16>, vector<16x63xbf16> -> vector<16x64xbf16>
    %674 = arith.andi %626, %636 : vector<1x64xi1>
    %cst_137 = arith.constant 0.000000e+00 : bf16
    %675 = vector.broadcast %cst_137 : bf16 to vector<16x64xbf16>
    %676 = vector.shape_cast %674 : vector<1x64xi1> to vector<1x64xi1>
    %677 = vector.broadcast %676 : vector<1x64xi1> to vector<16x64xi1>
    %678 = arith.select %677, %673, %675 : vector<16x64xi1>, vector<16x64xbf16>
    %679 = vector.extract_strided_slice %611 {offsets = [0, 1], sizes = [16, 63], strides = [1, 1]} : vector<16x64xbf16> to vector<16x63xbf16>
    %680 = vector.extract_strided_slice %611 {offsets = [0, 0], sizes = [16, 1], strides = [1, 1]} : vector<16x64xbf16> to vector<16x1xbf16>
    %681 = tpu.concatenate %679, %680 in 1 : vector<16x63xbf16>, vector<16x1xbf16> -> vector<16x64xbf16>
    %682 = arith.andi %626, %646 : vector<1x64xi1>
    %cst_138 = arith.constant 0.000000e+00 : bf16
    %683 = vector.broadcast %cst_138 : bf16 to vector<16x64xbf16>
    %684 = vector.shape_cast %682 : vector<1x64xi1> to vector<1x64xi1>
    %685 = vector.broadcast %684 : vector<1x64xi1> to vector<16x64xi1>
    %686 = arith.select %685, %681, %683 : vector<16x64xi1>, vector<16x64xbf16>
    %687 = vector.extract_strided_slice %611 {offsets = [0, 7], sizes = [16, 57], strides = [1, 1]} : vector<16x64xbf16> to vector<16x57xbf16>
    %688 = vector.extract_strided_slice %611 {offsets = [0, 0], sizes = [16, 7], strides = [1, 1]} : vector<16x64xbf16> to vector<16x7xbf16>
    %689 = tpu.concatenate %687, %688 in 1 : vector<16x57xbf16>, vector<16x7xbf16> -> vector<16x64xbf16>
    %690 = arith.andi %631, %636 : vector<1x64xi1>
    %cst_139 = arith.constant 0.000000e+00 : bf16
    %691 = vector.broadcast %cst_139 : bf16 to vector<16x64xbf16>
    %692 = vector.shape_cast %690 : vector<1x64xi1> to vector<1x64xi1>
    %693 = vector.broadcast %692 : vector<1x64xi1> to vector<16x64xi1>
    %694 = arith.select %693, %689, %691 : vector<16x64xi1>, vector<16x64xbf16>
    %695 = vector.extract_strided_slice %611 {offsets = [0, 8], sizes = [16, 56], strides = [1, 1]} : vector<16x64xbf16> to vector<16x56xbf16>
    %696 = vector.extract_strided_slice %611 {offsets = [0, 0], sizes = [16, 8], strides = [1, 1]} : vector<16x64xbf16> to vector<16x8xbf16>
    %697 = tpu.concatenate %695, %696 in 1 : vector<16x56xbf16>, vector<16x8xbf16> -> vector<16x64xbf16>
    %698 = arith.andi %631, %641 : vector<1x64xi1>
    %cst_140 = arith.constant 0.000000e+00 : bf16
    %699 = vector.broadcast %cst_140 : bf16 to vector<16x64xbf16>
    %700 = vector.shape_cast %698 : vector<1x64xi1> to vector<1x64xi1>
    %701 = vector.broadcast %700 : vector<1x64xi1> to vector<16x64xi1>
    %702 = arith.select %701, %697, %699 : vector<16x64xi1>, vector<16x64xbf16>
    %703 = vector.extract_strided_slice %611 {offsets = [0, 9], sizes = [16, 55], strides = [1, 1]} : vector<16x64xbf16> to vector<16x55xbf16>
    %704 = vector.extract_strided_slice %611 {offsets = [0, 0], sizes = [16, 9], strides = [1, 1]} : vector<16x64xbf16> to vector<16x9xbf16>
    %705 = tpu.concatenate %703, %704 in 1 : vector<16x55xbf16>, vector<16x9xbf16> -> vector<16x64xbf16>
    %706 = arith.andi %631, %646 : vector<1x64xi1>
    %cst_141 = arith.constant 0.000000e+00 : bf16
    %707 = vector.broadcast %cst_141 : bf16 to vector<16x64xbf16>
    %708 = vector.shape_cast %706 : vector<1x64xi1> to vector<1x64xi1>
    %709 = vector.broadcast %708 : vector<1x64xi1> to vector<16x64xi1>
    %710 = arith.select %709, %705, %707 : vector<16x64xi1>, vector<16x64xbf16>
    %711 = tpu.concatenate %654, %662, %670, %678, %611, %686, %694, %702, %710 in 0 : vector<16x64xbf16>, vector<16x64xbf16>, vector<16x64xbf16>, vector<16x64xbf16>, vector<16x64xbf16>, vector<16x64xbf16>, vector<16x64xbf16>, vector<16x64xbf16>, vector<16x64xbf16> -> vector<144x64xbf16>
    %c48 = arith.constant 48 : index
    %c0_142 = arith.constant 0 : index
    %712 = vector.load %arg2[%c48, %c0_142] : memref<160x400xf32, #tpu.memory_space<vmem>>, vector<16x144xf32>
    %713 = arith.truncf %712 : vector<16x144xf32> to vector<16x144xbf16>
    %cst_143 = arith.constant dense<0.000000e+00> : vector<16x64xf32>
    %714 = tpu.matmul %713, %711, %cst_143 {dimension_numbers = #tpu.dot_dimension_numbers<[1], [0], [0], [1], [0, 0, 1, 1], [], []>} : vector<16x144xbf16>, vector<144x64xbf16>, vector<16x64xf32> -> vector<16x64xf32>
    %c0_144 = arith.constant 0 : index
    %c4 = arith.constant 4 : index
    %715 = vector.load %arg3[%c0_144, %c4] : memref<32x8xf32, #tpu.memory_space<vmem>>, vector<16x1xf32>
    %716 = vector.broadcast %715 : vector<16x1xf32> to vector<16x64xf32>
    %717 = arith.addf %714, %716 : vector<16x64xf32>
    %cst_145 = arith.constant 0.000000e+00 : f32
    %718 = vector.broadcast %cst_145 : f32 to vector<16x64xf32>
    %719 = arith.cmpf oge, %717, %718 : vector<16x64xf32>
    %cst_146 = arith.constant 0.00999999977 : f32
    %720 = vector.broadcast %cst_146 : f32 to vector<16x64xf32>
    %721 = arith.mulf %720, %717 : vector<16x64xf32>
    %722 = arith.select %719, %717, %721 : vector<16x64xi1>, vector<16x64xf32>
    %723 = arith.truncf %722 : vector<16x64xf32> to vector<16x64xbf16>
    %724 = tpu.iota {dimensions = array<i32: 1>} : vector<1x64xi32>
    %c3_i32_147 = arith.constant 3 : i32
    %725 = vector.broadcast %c3_i32_147 : i32 to vector<1x64xi32>
    %726 = arith.shrsi %724, %725 : vector<1x64xi32>
    %c7_i32_148 = arith.constant 7 : i32
    %727 = vector.broadcast %c7_i32_148 : i32 to vector<1x64xi32>
    %728 = arith.andi %724, %727 : vector<1x64xi32>
    %c2_i32_149 = arith.constant 2 : i32
    %729 = vector.broadcast %c2_i32_149 : i32 to vector<1x64xi32>
    %730 = arith.cmpi sge, %726, %729 : vector<1x64xi32>
    %c10_i32 = arith.constant 10 : i32
    %731 = vector.broadcast %c10_i32 : i32 to vector<1x64xi32>
    %732 = arith.cmpi slt, %726, %731 : vector<1x64xi32>
    %733 = arith.andi %730, %732 : vector<1x64xi1>
    %c1_i32_150 = arith.constant 1 : i32
    %734 = vector.broadcast %c1_i32_150 : i32 to vector<1x64xi32>
    %735 = arith.cmpi sge, %726, %734 : vector<1x64xi32>
    %c9_i32_151 = arith.constant 9 : i32
    %736 = vector.broadcast %c9_i32_151 : i32 to vector<1x64xi32>
    %737 = arith.cmpi slt, %726, %736 : vector<1x64xi32>
    %738 = arith.andi %735, %737 : vector<1x64xi1>
    %c0_i32_152 = arith.constant 0 : i32
    %739 = vector.broadcast %c0_i32_152 : i32 to vector<1x64xi32>
    %740 = arith.cmpi sge, %726, %739 : vector<1x64xi32>
    %c8_i32_153 = arith.constant 8 : i32
    %741 = vector.broadcast %c8_i32_153 : i32 to vector<1x64xi32>
    %742 = arith.cmpi slt, %726, %741 : vector<1x64xi32>
    %743 = arith.andi %740, %742 : vector<1x64xi1>
    %c-1_i32_154 = arith.constant -1 : i32
    %744 = vector.broadcast %c-1_i32_154 : i32 to vector<1x64xi32>
    %745 = arith.cmpi sge, %726, %744 : vector<1x64xi32>
    %c7_i32_155 = arith.constant 7 : i32
    %746 = vector.broadcast %c7_i32_155 : i32 to vector<1x64xi32>
    %747 = arith.cmpi slt, %726, %746 : vector<1x64xi32>
    %748 = arith.andi %745, %747 : vector<1x64xi1>
    %c-2_i32_156 = arith.constant -2 : i32
    %749 = vector.broadcast %c-2_i32_156 : i32 to vector<1x64xi32>
    %750 = arith.cmpi sge, %726, %749 : vector<1x64xi32>
    %c6_i32 = arith.constant 6 : i32
    %751 = vector.broadcast %c6_i32 : i32 to vector<1x64xi32>
    %752 = arith.cmpi slt, %726, %751 : vector<1x64xi32>
    %753 = arith.andi %750, %752 : vector<1x64xi1>
    %c2_i32_157 = arith.constant 2 : i32
    %754 = vector.broadcast %c2_i32_157 : i32 to vector<1x64xi32>
    %755 = arith.cmpi sge, %728, %754 : vector<1x64xi32>
    %c10_i32_158 = arith.constant 10 : i32
    %756 = vector.broadcast %c10_i32_158 : i32 to vector<1x64xi32>
    %757 = arith.cmpi slt, %728, %756 : vector<1x64xi32>
    %758 = arith.andi %755, %757 : vector<1x64xi1>
    %c1_i32_159 = arith.constant 1 : i32
    %759 = vector.broadcast %c1_i32_159 : i32 to vector<1x64xi32>
    %760 = arith.cmpi sge, %728, %759 : vector<1x64xi32>
    %c9_i32_160 = arith.constant 9 : i32
    %761 = vector.broadcast %c9_i32_160 : i32 to vector<1x64xi32>
    %762 = arith.cmpi slt, %728, %761 : vector<1x64xi32>
    %763 = arith.andi %760, %762 : vector<1x64xi1>
    %c0_i32_161 = arith.constant 0 : i32
    %764 = vector.broadcast %c0_i32_161 : i32 to vector<1x64xi32>
    %765 = arith.cmpi sge, %728, %764 : vector<1x64xi32>
    %c8_i32_162 = arith.constant 8 : i32
    %766 = vector.broadcast %c8_i32_162 : i32 to vector<1x64xi32>
    %767 = arith.cmpi slt, %728, %766 : vector<1x64xi32>
    %768 = arith.andi %765, %767 : vector<1x64xi1>
    %c-1_i32_163 = arith.constant -1 : i32
    %769 = vector.broadcast %c-1_i32_163 : i32 to vector<1x64xi32>
    %770 = arith.cmpi sge, %728, %769 : vector<1x64xi32>
    %c7_i32_164 = arith.constant 7 : i32
    %771 = vector.broadcast %c7_i32_164 : i32 to vector<1x64xi32>
    %772 = arith.cmpi slt, %728, %771 : vector<1x64xi32>
    %773 = arith.andi %770, %772 : vector<1x64xi1>
    %c-2_i32_165 = arith.constant -2 : i32
    %774 = vector.broadcast %c-2_i32_165 : i32 to vector<1x64xi32>
    %775 = arith.cmpi sge, %728, %774 : vector<1x64xi32>
    %c6_i32_166 = arith.constant 6 : i32
    %776 = vector.broadcast %c6_i32_166 : i32 to vector<1x64xi32>
    %777 = arith.cmpi slt, %728, %776 : vector<1x64xi32>
    %778 = arith.andi %775, %777 : vector<1x64xi1>
    %779 = vector.extract_strided_slice %723 {offsets = [0, 46], sizes = [16, 18], strides = [1, 1]} : vector<16x64xbf16> to vector<16x18xbf16>
    %780 = vector.extract_strided_slice %723 {offsets = [0, 0], sizes = [16, 46], strides = [1, 1]} : vector<16x64xbf16> to vector<16x46xbf16>
    %781 = tpu.concatenate %779, %780 in 1 : vector<16x18xbf16>, vector<16x46xbf16> -> vector<16x64xbf16>
    %782 = arith.andi %733, %758 : vector<1x64xi1>
    %cst_167 = arith.constant 0.000000e+00 : bf16
    %783 = vector.broadcast %cst_167 : bf16 to vector<16x64xbf16>
    %784 = vector.shape_cast %782 : vector<1x64xi1> to vector<1x64xi1>
    %785 = vector.broadcast %784 : vector<1x64xi1> to vector<16x64xi1>
    %786 = arith.select %785, %781, %783 : vector<16x64xi1>, vector<16x64xbf16>
    %787 = vector.extract_strided_slice %723 {offsets = [0, 47], sizes = [16, 17], strides = [1, 1]} : vector<16x64xbf16> to vector<16x17xbf16>
    %788 = vector.extract_strided_slice %723 {offsets = [0, 0], sizes = [16, 47], strides = [1, 1]} : vector<16x64xbf16> to vector<16x47xbf16>
    %789 = tpu.concatenate %787, %788 in 1 : vector<16x17xbf16>, vector<16x47xbf16> -> vector<16x64xbf16>
    %790 = arith.andi %733, %763 : vector<1x64xi1>
    %cst_168 = arith.constant 0.000000e+00 : bf16
    %791 = vector.broadcast %cst_168 : bf16 to vector<16x64xbf16>
    %792 = vector.shape_cast %790 : vector<1x64xi1> to vector<1x64xi1>
    %793 = vector.broadcast %792 : vector<1x64xi1> to vector<16x64xi1>
    %794 = arith.select %793, %789, %791 : vector<16x64xi1>, vector<16x64xbf16>
    %795 = vector.extract_strided_slice %723 {offsets = [0, 48], sizes = [16, 16], strides = [1, 1]} : vector<16x64xbf16> to vector<16x16xbf16>
    %796 = vector.extract_strided_slice %723 {offsets = [0, 0], sizes = [16, 48], strides = [1, 1]} : vector<16x64xbf16> to vector<16x48xbf16>
    %797 = tpu.concatenate %795, %796 in 1 : vector<16x16xbf16>, vector<16x48xbf16> -> vector<16x64xbf16>
    %798 = arith.andi %733, %768 : vector<1x64xi1>
    %cst_169 = arith.constant 0.000000e+00 : bf16
    %799 = vector.broadcast %cst_169 : bf16 to vector<16x64xbf16>
    %800 = vector.shape_cast %798 : vector<1x64xi1> to vector<1x64xi1>
    %801 = vector.broadcast %800 : vector<1x64xi1> to vector<16x64xi1>
    %802 = arith.select %801, %797, %799 : vector<16x64xi1>, vector<16x64xbf16>
    %803 = vector.extract_strided_slice %723 {offsets = [0, 49], sizes = [16, 15], strides = [1, 1]} : vector<16x64xbf16> to vector<16x15xbf16>
    %804 = vector.extract_strided_slice %723 {offsets = [0, 0], sizes = [16, 49], strides = [1, 1]} : vector<16x64xbf16> to vector<16x49xbf16>
    %805 = tpu.concatenate %803, %804 in 1 : vector<16x15xbf16>, vector<16x49xbf16> -> vector<16x64xbf16>
    %806 = arith.andi %733, %773 : vector<1x64xi1>
    %cst_170 = arith.constant 0.000000e+00 : bf16
    %807 = vector.broadcast %cst_170 : bf16 to vector<16x64xbf16>
    %808 = vector.shape_cast %806 : vector<1x64xi1> to vector<1x64xi1>
    %809 = vector.broadcast %808 : vector<1x64xi1> to vector<16x64xi1>
    %810 = arith.select %809, %805, %807 : vector<16x64xi1>, vector<16x64xbf16>
    %811 = vector.extract_strided_slice %723 {offsets = [0, 50], sizes = [16, 14], strides = [1, 1]} : vector<16x64xbf16> to vector<16x14xbf16>
    %812 = vector.extract_strided_slice %723 {offsets = [0, 0], sizes = [16, 50], strides = [1, 1]} : vector<16x64xbf16> to vector<16x50xbf16>
    %813 = tpu.concatenate %811, %812 in 1 : vector<16x14xbf16>, vector<16x50xbf16> -> vector<16x64xbf16>
    %814 = arith.andi %733, %778 : vector<1x64xi1>
    %cst_171 = arith.constant 0.000000e+00 : bf16
    %815 = vector.broadcast %cst_171 : bf16 to vector<16x64xbf16>
    %816 = vector.shape_cast %814 : vector<1x64xi1> to vector<1x64xi1>
    %817 = vector.broadcast %816 : vector<1x64xi1> to vector<16x64xi1>
    %818 = arith.select %817, %813, %815 : vector<16x64xi1>, vector<16x64xbf16>
    %819 = vector.extract_strided_slice %723 {offsets = [0, 54], sizes = [16, 10], strides = [1, 1]} : vector<16x64xbf16> to vector<16x10xbf16>
    %820 = vector.extract_strided_slice %723 {offsets = [0, 0], sizes = [16, 54], strides = [1, 1]} : vector<16x64xbf16> to vector<16x54xbf16>
    %821 = tpu.concatenate %819, %820 in 1 : vector<16x10xbf16>, vector<16x54xbf16> -> vector<16x64xbf16>
    %822 = arith.andi %738, %758 : vector<1x64xi1>
    %cst_172 = arith.constant 0.000000e+00 : bf16
    %823 = vector.broadcast %cst_172 : bf16 to vector<16x64xbf16>
    %824 = vector.shape_cast %822 : vector<1x64xi1> to vector<1x64xi1>
    %825 = vector.broadcast %824 : vector<1x64xi1> to vector<16x64xi1>
    %826 = arith.select %825, %821, %823 : vector<16x64xi1>, vector<16x64xbf16>
    %827 = vector.extract_strided_slice %723 {offsets = [0, 55], sizes = [16, 9], strides = [1, 1]} : vector<16x64xbf16> to vector<16x9xbf16>
    %828 = vector.extract_strided_slice %723 {offsets = [0, 0], sizes = [16, 55], strides = [1, 1]} : vector<16x64xbf16> to vector<16x55xbf16>
    %829 = tpu.concatenate %827, %828 in 1 : vector<16x9xbf16>, vector<16x55xbf16> -> vector<16x64xbf16>
    %830 = arith.andi %738, %763 : vector<1x64xi1>
    %cst_173 = arith.constant 0.000000e+00 : bf16
    %831 = vector.broadcast %cst_173 : bf16 to vector<16x64xbf16>
    %832 = vector.shape_cast %830 : vector<1x64xi1> to vector<1x64xi1>
    %833 = vector.broadcast %832 : vector<1x64xi1> to vector<16x64xi1>
    %834 = arith.select %833, %829, %831 : vector<16x64xi1>, vector<16x64xbf16>
    %835 = vector.extract_strided_slice %723 {offsets = [0, 56], sizes = [16, 8], strides = [1, 1]} : vector<16x64xbf16> to vector<16x8xbf16>
    %836 = vector.extract_strided_slice %723 {offsets = [0, 0], sizes = [16, 56], strides = [1, 1]} : vector<16x64xbf16> to vector<16x56xbf16>
    %837 = tpu.concatenate %835, %836 in 1 : vector<16x8xbf16>, vector<16x56xbf16> -> vector<16x64xbf16>
    %838 = arith.andi %738, %768 : vector<1x64xi1>
    %cst_174 = arith.constant 0.000000e+00 : bf16
    %839 = vector.broadcast %cst_174 : bf16 to vector<16x64xbf16>
    %840 = vector.shape_cast %838 : vector<1x64xi1> to vector<1x64xi1>
    %841 = vector.broadcast %840 : vector<1x64xi1> to vector<16x64xi1>
    %842 = arith.select %841, %837, %839 : vector<16x64xi1>, vector<16x64xbf16>
    %843 = vector.extract_strided_slice %723 {offsets = [0, 57], sizes = [16, 7], strides = [1, 1]} : vector<16x64xbf16> to vector<16x7xbf16>
    %844 = vector.extract_strided_slice %723 {offsets = [0, 0], sizes = [16, 57], strides = [1, 1]} : vector<16x64xbf16> to vector<16x57xbf16>
    %845 = tpu.concatenate %843, %844 in 1 : vector<16x7xbf16>, vector<16x57xbf16> -> vector<16x64xbf16>
    %846 = arith.andi %738, %773 : vector<1x64xi1>
    %cst_175 = arith.constant 0.000000e+00 : bf16
    %847 = vector.broadcast %cst_175 : bf16 to vector<16x64xbf16>
    %848 = vector.shape_cast %846 : vector<1x64xi1> to vector<1x64xi1>
    %849 = vector.broadcast %848 : vector<1x64xi1> to vector<16x64xi1>
    %850 = arith.select %849, %845, %847 : vector<16x64xi1>, vector<16x64xbf16>
    %851 = vector.extract_strided_slice %723 {offsets = [0, 58], sizes = [16, 6], strides = [1, 1]} : vector<16x64xbf16> to vector<16x6xbf16>
    %852 = vector.extract_strided_slice %723 {offsets = [0, 0], sizes = [16, 58], strides = [1, 1]} : vector<16x64xbf16> to vector<16x58xbf16>
    %853 = tpu.concatenate %851, %852 in 1 : vector<16x6xbf16>, vector<16x58xbf16> -> vector<16x64xbf16>
    %854 = arith.andi %738, %778 : vector<1x64xi1>
    %cst_176 = arith.constant 0.000000e+00 : bf16
    %855 = vector.broadcast %cst_176 : bf16 to vector<16x64xbf16>
    %856 = vector.shape_cast %854 : vector<1x64xi1> to vector<1x64xi1>
    %857 = vector.broadcast %856 : vector<1x64xi1> to vector<16x64xi1>
    %858 = arith.select %857, %853, %855 : vector<16x64xi1>, vector<16x64xbf16>
    %859 = vector.extract_strided_slice %723 {offsets = [0, 62], sizes = [16, 2], strides = [1, 1]} : vector<16x64xbf16> to vector<16x2xbf16>
    %860 = vector.extract_strided_slice %723 {offsets = [0, 0], sizes = [16, 62], strides = [1, 1]} : vector<16x64xbf16> to vector<16x62xbf16>
    %861 = tpu.concatenate %859, %860 in 1 : vector<16x2xbf16>, vector<16x62xbf16> -> vector<16x64xbf16>
    %862 = arith.andi %743, %758 : vector<1x64xi1>
    %cst_177 = arith.constant 0.000000e+00 : bf16
    %863 = vector.broadcast %cst_177 : bf16 to vector<16x64xbf16>
    %864 = vector.shape_cast %862 : vector<1x64xi1> to vector<1x64xi1>
    %865 = vector.broadcast %864 : vector<1x64xi1> to vector<16x64xi1>
    %866 = arith.select %865, %861, %863 : vector<16x64xi1>, vector<16x64xbf16>
    %867 = vector.extract_strided_slice %723 {offsets = [0, 63], sizes = [16, 1], strides = [1, 1]} : vector<16x64xbf16> to vector<16x1xbf16>
    %868 = vector.extract_strided_slice %723 {offsets = [0, 0], sizes = [16, 63], strides = [1, 1]} : vector<16x64xbf16> to vector<16x63xbf16>
    %869 = tpu.concatenate %867, %868 in 1 : vector<16x1xbf16>, vector<16x63xbf16> -> vector<16x64xbf16>
    %870 = arith.andi %743, %763 : vector<1x64xi1>
    %cst_178 = arith.constant 0.000000e+00 : bf16
    %871 = vector.broadcast %cst_178 : bf16 to vector<16x64xbf16>
    %872 = vector.shape_cast %870 : vector<1x64xi1> to vector<1x64xi1>
    %873 = vector.broadcast %872 : vector<1x64xi1> to vector<16x64xi1>
    %874 = arith.select %873, %869, %871 : vector<16x64xi1>, vector<16x64xbf16>
    %875 = vector.extract_strided_slice %723 {offsets = [0, 1], sizes = [16, 63], strides = [1, 1]} : vector<16x64xbf16> to vector<16x63xbf16>
    %876 = vector.extract_strided_slice %723 {offsets = [0, 0], sizes = [16, 1], strides = [1, 1]} : vector<16x64xbf16> to vector<16x1xbf16>
    %877 = tpu.concatenate %875, %876 in 1 : vector<16x63xbf16>, vector<16x1xbf16> -> vector<16x64xbf16>
    %878 = arith.andi %743, %773 : vector<1x64xi1>
    %cst_179 = arith.constant 0.000000e+00 : bf16
    %879 = vector.broadcast %cst_179 : bf16 to vector<16x64xbf16>
    %880 = vector.shape_cast %878 : vector<1x64xi1> to vector<1x64xi1>
    %881 = vector.broadcast %880 : vector<1x64xi1> to vector<16x64xi1>
    %882 = arith.select %881, %877, %879 : vector<16x64xi1>, vector<16x64xbf16>
    %883 = vector.extract_strided_slice %723 {offsets = [0, 2], sizes = [16, 62], strides = [1, 1]} : vector<16x64xbf16> to vector<16x62xbf16>
    %884 = vector.extract_strided_slice %723 {offsets = [0, 0], sizes = [16, 2], strides = [1, 1]} : vector<16x64xbf16> to vector<16x2xbf16>
    %885 = tpu.concatenate %883, %884 in 1 : vector<16x62xbf16>, vector<16x2xbf16> -> vector<16x64xbf16>
    %886 = arith.andi %743, %778 : vector<1x64xi1>
    %cst_180 = arith.constant 0.000000e+00 : bf16
    %887 = vector.broadcast %cst_180 : bf16 to vector<16x64xbf16>
    %888 = vector.shape_cast %886 : vector<1x64xi1> to vector<1x64xi1>
    %889 = vector.broadcast %888 : vector<1x64xi1> to vector<16x64xi1>
    %890 = arith.select %889, %885, %887 : vector<16x64xi1>, vector<16x64xbf16>
    %891 = vector.extract_strided_slice %723 {offsets = [0, 6], sizes = [16, 58], strides = [1, 1]} : vector<16x64xbf16> to vector<16x58xbf16>
    %892 = vector.extract_strided_slice %723 {offsets = [0, 0], sizes = [16, 6], strides = [1, 1]} : vector<16x64xbf16> to vector<16x6xbf16>
    %893 = tpu.concatenate %891, %892 in 1 : vector<16x58xbf16>, vector<16x6xbf16> -> vector<16x64xbf16>
    %894 = arith.andi %748, %758 : vector<1x64xi1>
    %cst_181 = arith.constant 0.000000e+00 : bf16
    %895 = vector.broadcast %cst_181 : bf16 to vector<16x64xbf16>
    %896 = vector.shape_cast %894 : vector<1x64xi1> to vector<1x64xi1>
    %897 = vector.broadcast %896 : vector<1x64xi1> to vector<16x64xi1>
    %898 = arith.select %897, %893, %895 : vector<16x64xi1>, vector<16x64xbf16>
    %899 = vector.extract_strided_slice %723 {offsets = [0, 7], sizes = [16, 57], strides = [1, 1]} : vector<16x64xbf16> to vector<16x57xbf16>
    %900 = vector.extract_strided_slice %723 {offsets = [0, 0], sizes = [16, 7], strides = [1, 1]} : vector<16x64xbf16> to vector<16x7xbf16>
    %901 = tpu.concatenate %899, %900 in 1 : vector<16x57xbf16>, vector<16x7xbf16> -> vector<16x64xbf16>
    %902 = arith.andi %748, %763 : vector<1x64xi1>
    %cst_182 = arith.constant 0.000000e+00 : bf16
    %903 = vector.broadcast %cst_182 : bf16 to vector<16x64xbf16>
    %904 = vector.shape_cast %902 : vector<1x64xi1> to vector<1x64xi1>
    %905 = vector.broadcast %904 : vector<1x64xi1> to vector<16x64xi1>
    %906 = arith.select %905, %901, %903 : vector<16x64xi1>, vector<16x64xbf16>
    %907 = vector.extract_strided_slice %723 {offsets = [0, 8], sizes = [16, 56], strides = [1, 1]} : vector<16x64xbf16> to vector<16x56xbf16>
    %908 = vector.extract_strided_slice %723 {offsets = [0, 0], sizes = [16, 8], strides = [1, 1]} : vector<16x64xbf16> to vector<16x8xbf16>
    %909 = tpu.concatenate %907, %908 in 1 : vector<16x56xbf16>, vector<16x8xbf16> -> vector<16x64xbf16>
    %910 = arith.andi %748, %768 : vector<1x64xi1>
    %cst_183 = arith.constant 0.000000e+00 : bf16
    %911 = vector.broadcast %cst_183 : bf16 to vector<16x64xbf16>
    %912 = vector.shape_cast %910 : vector<1x64xi1> to vector<1x64xi1>
    %913 = vector.broadcast %912 : vector<1x64xi1> to vector<16x64xi1>
    %914 = arith.select %913, %909, %911 : vector<16x64xi1>, vector<16x64xbf16>
    %915 = vector.extract_strided_slice %723 {offsets = [0, 9], sizes = [16, 55], strides = [1, 1]} : vector<16x64xbf16> to vector<16x55xbf16>
    %916 = vector.extract_strided_slice %723 {offsets = [0, 0], sizes = [16, 9], strides = [1, 1]} : vector<16x64xbf16> to vector<16x9xbf16>
    %917 = tpu.concatenate %915, %916 in 1 : vector<16x55xbf16>, vector<16x9xbf16> -> vector<16x64xbf16>
    %918 = arith.andi %748, %773 : vector<1x64xi1>
    %cst_184 = arith.constant 0.000000e+00 : bf16
    %919 = vector.broadcast %cst_184 : bf16 to vector<16x64xbf16>
    %920 = vector.shape_cast %918 : vector<1x64xi1> to vector<1x64xi1>
    %921 = vector.broadcast %920 : vector<1x64xi1> to vector<16x64xi1>
    %922 = arith.select %921, %917, %919 : vector<16x64xi1>, vector<16x64xbf16>
    %923 = vector.extract_strided_slice %723 {offsets = [0, 10], sizes = [16, 54], strides = [1, 1]} : vector<16x64xbf16> to vector<16x54xbf16>
    %924 = vector.extract_strided_slice %723 {offsets = [0, 0], sizes = [16, 10], strides = [1, 1]} : vector<16x64xbf16> to vector<16x10xbf16>
    %925 = tpu.concatenate %923, %924 in 1 : vector<16x54xbf16>, vector<16x10xbf16> -> vector<16x64xbf16>
    %926 = arith.andi %748, %778 : vector<1x64xi1>
    %cst_185 = arith.constant 0.000000e+00 : bf16
    %927 = vector.broadcast %cst_185 : bf16 to vector<16x64xbf16>
    %928 = vector.shape_cast %926 : vector<1x64xi1> to vector<1x64xi1>
    %929 = vector.broadcast %928 : vector<1x64xi1> to vector<16x64xi1>
    %930 = arith.select %929, %925, %927 : vector<16x64xi1>, vector<16x64xbf16>
    %931 = vector.extract_strided_slice %723 {offsets = [0, 14], sizes = [16, 50], strides = [1, 1]} : vector<16x64xbf16> to vector<16x50xbf16>
    %932 = vector.extract_strided_slice %723 {offsets = [0, 0], sizes = [16, 14], strides = [1, 1]} : vector<16x64xbf16> to vector<16x14xbf16>
    %933 = tpu.concatenate %931, %932 in 1 : vector<16x50xbf16>, vector<16x14xbf16> -> vector<16x64xbf16>
    %934 = arith.andi %753, %758 : vector<1x64xi1>
    %cst_186 = arith.constant 0.000000e+00 : bf16
    %935 = vector.broadcast %cst_186 : bf16 to vector<16x64xbf16>
    %936 = vector.shape_cast %934 : vector<1x64xi1> to vector<1x64xi1>
    %937 = vector.broadcast %936 : vector<1x64xi1> to vector<16x64xi1>
    %938 = arith.select %937, %933, %935 : vector<16x64xi1>, vector<16x64xbf16>
    %939 = vector.extract_strided_slice %723 {offsets = [0, 15], sizes = [16, 49], strides = [1, 1]} : vector<16x64xbf16> to vector<16x49xbf16>
    %940 = vector.extract_strided_slice %723 {offsets = [0, 0], sizes = [16, 15], strides = [1, 1]} : vector<16x64xbf16> to vector<16x15xbf16>
    %941 = tpu.concatenate %939, %940 in 1 : vector<16x49xbf16>, vector<16x15xbf16> -> vector<16x64xbf16>
    %942 = arith.andi %753, %763 : vector<1x64xi1>
    %cst_187 = arith.constant 0.000000e+00 : bf16
    %943 = vector.broadcast %cst_187 : bf16 to vector<16x64xbf16>
    %944 = vector.shape_cast %942 : vector<1x64xi1> to vector<1x64xi1>
    %945 = vector.broadcast %944 : vector<1x64xi1> to vector<16x64xi1>
    %946 = arith.select %945, %941, %943 : vector<16x64xi1>, vector<16x64xbf16>
    %947 = vector.extract_strided_slice %723 {offsets = [0, 16], sizes = [16, 48], strides = [1, 1]} : vector<16x64xbf16> to vector<16x48xbf16>
    %948 = vector.extract_strided_slice %723 {offsets = [0, 0], sizes = [16, 16], strides = [1, 1]} : vector<16x64xbf16> to vector<16x16xbf16>
    %949 = tpu.concatenate %947, %948 in 1 : vector<16x48xbf16>, vector<16x16xbf16> -> vector<16x64xbf16>
    %950 = arith.andi %753, %768 : vector<1x64xi1>
    %cst_188 = arith.constant 0.000000e+00 : bf16
    %951 = vector.broadcast %cst_188 : bf16 to vector<16x64xbf16>
    %952 = vector.shape_cast %950 : vector<1x64xi1> to vector<1x64xi1>
    %953 = vector.broadcast %952 : vector<1x64xi1> to vector<16x64xi1>
    %954 = arith.select %953, %949, %951 : vector<16x64xi1>, vector<16x64xbf16>
    %955 = vector.extract_strided_slice %723 {offsets = [0, 17], sizes = [16, 47], strides = [1, 1]} : vector<16x64xbf16> to vector<16x47xbf16>
    %956 = vector.extract_strided_slice %723 {offsets = [0, 0], sizes = [16, 17], strides = [1, 1]} : vector<16x64xbf16> to vector<16x17xbf16>
    %957 = tpu.concatenate %955, %956 in 1 : vector<16x47xbf16>, vector<16x17xbf16> -> vector<16x64xbf16>
    %958 = arith.andi %753, %773 : vector<1x64xi1>
    %cst_189 = arith.constant 0.000000e+00 : bf16
    %959 = vector.broadcast %cst_189 : bf16 to vector<16x64xbf16>
    %960 = vector.shape_cast %958 : vector<1x64xi1> to vector<1x64xi1>
    %961 = vector.broadcast %960 : vector<1x64xi1> to vector<16x64xi1>
    %962 = arith.select %961, %957, %959 : vector<16x64xi1>, vector<16x64xbf16>
    %963 = vector.extract_strided_slice %723 {offsets = [0, 18], sizes = [16, 46], strides = [1, 1]} : vector<16x64xbf16> to vector<16x46xbf16>
    %964 = vector.extract_strided_slice %723 {offsets = [0, 0], sizes = [16, 18], strides = [1, 1]} : vector<16x64xbf16> to vector<16x18xbf16>
    %965 = tpu.concatenate %963, %964 in 1 : vector<16x46xbf16>, vector<16x18xbf16> -> vector<16x64xbf16>
    %966 = arith.andi %753, %778 : vector<1x64xi1>
    %cst_190 = arith.constant 0.000000e+00 : bf16
    %967 = vector.broadcast %cst_190 : bf16 to vector<16x64xbf16>
    %968 = vector.shape_cast %966 : vector<1x64xi1> to vector<1x64xi1>
    %969 = vector.broadcast %968 : vector<1x64xi1> to vector<16x64xi1>
    %970 = arith.select %969, %965, %967 : vector<16x64xi1>, vector<16x64xbf16>
    %971 = tpu.concatenate %786, %794, %802, %810, %818, %826, %834, %842, %850, %858, %866, %874, %723, %882, %890, %898 in 0 : vector<16x64xbf16>, vector<16x64xbf16>, vector<16x64xbf16>, vector<16x64xbf16>, vector<16x64xbf16>, vector<16x64xbf16>, vector<16x64xbf16>, vector<16x64xbf16>, vector<16x64xbf16>, vector<16x64xbf16>, vector<16x64xbf16>, vector<16x64xbf16>, vector<16x64xbf16>, vector<16x64xbf16>, vector<16x64xbf16>, vector<16x64xbf16> -> vector<256x64xbf16>
    %972 = tpu.concatenate %906, %914, %922, %930, %938, %946, %954, %962, %970 in 0 : vector<16x64xbf16>, vector<16x64xbf16>, vector<16x64xbf16>, vector<16x64xbf16>, vector<16x64xbf16>, vector<16x64xbf16>, vector<16x64xbf16>, vector<16x64xbf16>, vector<16x64xbf16> -> vector<144x64xbf16>
    %973 = tpu.concatenate %971, %972 in 0 : vector<256x64xbf16>, vector<144x64xbf16> -> vector<400x64xbf16>
    %c64 = arith.constant 64 : index
    %c0_191 = arith.constant 0 : index
    %974 = vector.load %arg2[%c64, %c0_191] : memref<160x400xf32, #tpu.memory_space<vmem>>, vector<32x400xf32>
    %975 = arith.truncf %974 : vector<32x400xf32> to vector<32x400xbf16>
    %cst_192 = arith.constant dense<0.000000e+00> : vector<32x64xf32>
    %976 = tpu.matmul %975, %973, %cst_192 {dimension_numbers = #tpu.dot_dimension_numbers<[1], [0], [0], [1], [0, 0, 1, 1], [], []>} : vector<32x400xbf16>, vector<400x64xbf16>, vector<32x64xf32> -> vector<32x64xf32>
    %c0_193 = arith.constant 0 : index
    %c5 = arith.constant 5 : index
    %977 = vector.load %arg3[%c0_193, %c5] : memref<32x8xf32, #tpu.memory_space<vmem>>, vector<32x1xf32>
    %978 = vector.broadcast %977 : vector<32x1xf32> to vector<32x64xf32>
    %979 = arith.addf %976, %978 : vector<32x64xf32>
    %cst_194 = arith.constant 0.000000e+00 : f32
    %980 = vector.broadcast %cst_194 : f32 to vector<32x64xf32>
    %981 = arith.cmpf oge, %979, %980 : vector<32x64xf32>
    %cst_195 = arith.constant 0.00999999977 : f32
    %982 = vector.broadcast %cst_195 : f32 to vector<32x64xf32>
    %983 = arith.mulf %982, %979 : vector<32x64xf32>
    %984 = arith.select %981, %979, %983 : vector<32x64xi1>, vector<32x64xf32>
    %985 = arith.truncf %984 : vector<32x64xf32> to vector<32x64xbf16>
    %986 = vector.shape_cast %985 : vector<32x64xbf16> to vector<32x32x2xbf16>
    %987 = vector.extract_strided_slice %986 {offsets = [0, 0, 0], sizes = [32, 32, 1], strides = [1, 1, 1]} : vector<32x32x2xbf16> to vector<32x32x1xbf16>
    %988 = vector.shape_cast %987 : vector<32x32x1xbf16> to vector<32x32xbf16>
    %989 = vector.extract_strided_slice %988 {offsets = [0, 0], sizes = [32, 4], strides = [1, 1]} : vector<32x32xbf16> to vector<32x4xbf16>
    %990 = vector.extract_strided_slice %988 {offsets = [0, 8], sizes = [32, 4], strides = [1, 1]} : vector<32x32xbf16> to vector<32x4xbf16>
    %991 = vector.extract_strided_slice %988 {offsets = [0, 16], sizes = [32, 4], strides = [1, 1]} : vector<32x32xbf16> to vector<32x4xbf16>
    %992 = vector.extract_strided_slice %988 {offsets = [0, 24], sizes = [32, 4], strides = [1, 1]} : vector<32x32xbf16> to vector<32x4xbf16>
    %993 = tpu.concatenate %989, %990, %991, %992 in 1 : vector<32x4xbf16>, vector<32x4xbf16>, vector<32x4xbf16>, vector<32x4xbf16> -> vector<32x16xbf16>
    %994 = tpu.iota {dimensions = array<i32: 1>} : vector<1x16xi32>
    %c2_i32_196 = arith.constant 2 : i32
    %995 = vector.broadcast %c2_i32_196 : i32 to vector<1x16xi32>
    %996 = arith.shrsi %994, %995 : vector<1x16xi32>
    %c3_i32_197 = arith.constant 3 : i32
    %997 = vector.broadcast %c3_i32_197 : i32 to vector<1x16xi32>
    %998 = arith.andi %994, %997 : vector<1x16xi32>
    %c1_i32_198 = arith.constant 1 : i32
    %999 = vector.broadcast %c1_i32_198 : i32 to vector<1x16xi32>
    %1000 = arith.cmpi sge, %996, %999 : vector<1x16xi32>
    %c5_i32 = arith.constant 5 : i32
    %1001 = vector.broadcast %c5_i32 : i32 to vector<1x16xi32>
    %1002 = arith.cmpi slt, %996, %1001 : vector<1x16xi32>
    %1003 = arith.andi %1000, %1002 : vector<1x16xi1>
    %c0_i32_199 = arith.constant 0 : i32
    %1004 = vector.broadcast %c0_i32_199 : i32 to vector<1x16xi32>
    %1005 = arith.cmpi sge, %996, %1004 : vector<1x16xi32>
    %c4_i32_200 = arith.constant 4 : i32
    %1006 = vector.broadcast %c4_i32_200 : i32 to vector<1x16xi32>
    %1007 = arith.cmpi slt, %996, %1006 : vector<1x16xi32>
    %1008 = arith.andi %1005, %1007 : vector<1x16xi1>
    %c-1_i32_201 = arith.constant -1 : i32
    %1009 = vector.broadcast %c-1_i32_201 : i32 to vector<1x16xi32>
    %1010 = arith.cmpi sge, %996, %1009 : vector<1x16xi32>
    %c3_i32_202 = arith.constant 3 : i32
    %1011 = vector.broadcast %c3_i32_202 : i32 to vector<1x16xi32>
    %1012 = arith.cmpi slt, %996, %1011 : vector<1x16xi32>
    %1013 = arith.andi %1010, %1012 : vector<1x16xi1>
    %c1_i32_203 = arith.constant 1 : i32
    %1014 = vector.broadcast %c1_i32_203 : i32 to vector<1x16xi32>
    %1015 = arith.cmpi sge, %998, %1014 : vector<1x16xi32>
    %c5_i32_204 = arith.constant 5 : i32
    %1016 = vector.broadcast %c5_i32_204 : i32 to vector<1x16xi32>
    %1017 = arith.cmpi slt, %998, %1016 : vector<1x16xi32>
    %1018 = arith.andi %1015, %1017 : vector<1x16xi1>
    %c0_i32_205 = arith.constant 0 : i32
    %1019 = vector.broadcast %c0_i32_205 : i32 to vector<1x16xi32>
    %1020 = arith.cmpi sge, %998, %1019 : vector<1x16xi32>
    %c4_i32_206 = arith.constant 4 : i32
    %1021 = vector.broadcast %c4_i32_206 : i32 to vector<1x16xi32>
    %1022 = arith.cmpi slt, %998, %1021 : vector<1x16xi32>
    %1023 = arith.andi %1020, %1022 : vector<1x16xi1>
    %c-1_i32_207 = arith.constant -1 : i32
    %1024 = vector.broadcast %c-1_i32_207 : i32 to vector<1x16xi32>
    %1025 = arith.cmpi sge, %998, %1024 : vector<1x16xi32>
    %c3_i32_208 = arith.constant 3 : i32
    %1026 = vector.broadcast %c3_i32_208 : i32 to vector<1x16xi32>
    %1027 = arith.cmpi slt, %998, %1026 : vector<1x16xi32>
    %1028 = arith.andi %1025, %1027 : vector<1x16xi1>
    %1029 = vector.extract_strided_slice %993 {offsets = [0, 11], sizes = [32, 5], strides = [1, 1]} : vector<32x16xbf16> to vector<32x5xbf16>
    %1030 = vector.extract_strided_slice %993 {offsets = [0, 0], sizes = [32, 11], strides = [1, 1]} : vector<32x16xbf16> to vector<32x11xbf16>
    %1031 = tpu.concatenate %1029, %1030 in 1 : vector<32x5xbf16>, vector<32x11xbf16> -> vector<32x16xbf16>
    %1032 = arith.andi %1003, %1018 : vector<1x16xi1>
    %cst_209 = arith.constant 0.000000e+00 : bf16
    %1033 = vector.broadcast %cst_209 : bf16 to vector<32x16xbf16>
    %1034 = vector.shape_cast %1032 : vector<1x16xi1> to vector<1x16xi1>
    %1035 = vector.broadcast %1034 : vector<1x16xi1> to vector<32x16xi1>
    %1036 = arith.select %1035, %1031, %1033 : vector<32x16xi1>, vector<32x16xbf16>
    %1037 = vector.extract_strided_slice %993 {offsets = [0, 12], sizes = [32, 4], strides = [1, 1]} : vector<32x16xbf16> to vector<32x4xbf16>
    %1038 = vector.extract_strided_slice %993 {offsets = [0, 0], sizes = [32, 12], strides = [1, 1]} : vector<32x16xbf16> to vector<32x12xbf16>
    %1039 = tpu.concatenate %1037, %1038 in 1 : vector<32x4xbf16>, vector<32x12xbf16> -> vector<32x16xbf16>
    %1040 = arith.andi %1003, %1023 : vector<1x16xi1>
    %cst_210 = arith.constant 0.000000e+00 : bf16
    %1041 = vector.broadcast %cst_210 : bf16 to vector<32x16xbf16>
    %1042 = vector.shape_cast %1040 : vector<1x16xi1> to vector<1x16xi1>
    %1043 = vector.broadcast %1042 : vector<1x16xi1> to vector<32x16xi1>
    %1044 = arith.select %1043, %1039, %1041 : vector<32x16xi1>, vector<32x16xbf16>
    %1045 = vector.extract_strided_slice %993 {offsets = [0, 13], sizes = [32, 3], strides = [1, 1]} : vector<32x16xbf16> to vector<32x3xbf16>
    %1046 = vector.extract_strided_slice %993 {offsets = [0, 0], sizes = [32, 13], strides = [1, 1]} : vector<32x16xbf16> to vector<32x13xbf16>
    %1047 = tpu.concatenate %1045, %1046 in 1 : vector<32x3xbf16>, vector<32x13xbf16> -> vector<32x16xbf16>
    %1048 = arith.andi %1003, %1028 : vector<1x16xi1>
    %cst_211 = arith.constant 0.000000e+00 : bf16
    %1049 = vector.broadcast %cst_211 : bf16 to vector<32x16xbf16>
    %1050 = vector.shape_cast %1048 : vector<1x16xi1> to vector<1x16xi1>
    %1051 = vector.broadcast %1050 : vector<1x16xi1> to vector<32x16xi1>
    %1052 = arith.select %1051, %1047, %1049 : vector<32x16xi1>, vector<32x16xbf16>
    %1053 = vector.extract_strided_slice %993 {offsets = [0, 15], sizes = [32, 1], strides = [1, 1]} : vector<32x16xbf16> to vector<32x1xbf16>
    %1054 = vector.extract_strided_slice %993 {offsets = [0, 0], sizes = [32, 15], strides = [1, 1]} : vector<32x16xbf16> to vector<32x15xbf16>
    %1055 = tpu.concatenate %1053, %1054 in 1 : vector<32x1xbf16>, vector<32x15xbf16> -> vector<32x16xbf16>
    %1056 = arith.andi %1008, %1018 : vector<1x16xi1>
    %cst_212 = arith.constant 0.000000e+00 : bf16
    %1057 = vector.broadcast %cst_212 : bf16 to vector<32x16xbf16>
    %1058 = vector.shape_cast %1056 : vector<1x16xi1> to vector<1x16xi1>
    %1059 = vector.broadcast %1058 : vector<1x16xi1> to vector<32x16xi1>
    %1060 = arith.select %1059, %1055, %1057 : vector<32x16xi1>, vector<32x16xbf16>
    %1061 = vector.extract_strided_slice %993 {offsets = [0, 1], sizes = [32, 15], strides = [1, 1]} : vector<32x16xbf16> to vector<32x15xbf16>
    %1062 = vector.extract_strided_slice %993 {offsets = [0, 0], sizes = [32, 1], strides = [1, 1]} : vector<32x16xbf16> to vector<32x1xbf16>
    %1063 = tpu.concatenate %1061, %1062 in 1 : vector<32x15xbf16>, vector<32x1xbf16> -> vector<32x16xbf16>
    %1064 = arith.andi %1008, %1028 : vector<1x16xi1>
    %cst_213 = arith.constant 0.000000e+00 : bf16
    %1065 = vector.broadcast %cst_213 : bf16 to vector<32x16xbf16>
    %1066 = vector.shape_cast %1064 : vector<1x16xi1> to vector<1x16xi1>
    %1067 = vector.broadcast %1066 : vector<1x16xi1> to vector<32x16xi1>
    %1068 = arith.select %1067, %1063, %1065 : vector<32x16xi1>, vector<32x16xbf16>
    %1069 = vector.extract_strided_slice %993 {offsets = [0, 3], sizes = [32, 13], strides = [1, 1]} : vector<32x16xbf16> to vector<32x13xbf16>
    %1070 = vector.extract_strided_slice %993 {offsets = [0, 0], sizes = [32, 3], strides = [1, 1]} : vector<32x16xbf16> to vector<32x3xbf16>
    %1071 = tpu.concatenate %1069, %1070 in 1 : vector<32x13xbf16>, vector<32x3xbf16> -> vector<32x16xbf16>
    %1072 = arith.andi %1013, %1018 : vector<1x16xi1>
    %cst_214 = arith.constant 0.000000e+00 : bf16
    %1073 = vector.broadcast %cst_214 : bf16 to vector<32x16xbf16>
    %1074 = vector.shape_cast %1072 : vector<1x16xi1> to vector<1x16xi1>
    %1075 = vector.broadcast %1074 : vector<1x16xi1> to vector<32x16xi1>
    %1076 = arith.select %1075, %1071, %1073 : vector<32x16xi1>, vector<32x16xbf16>
    %1077 = vector.extract_strided_slice %993 {offsets = [0, 4], sizes = [32, 12], strides = [1, 1]} : vector<32x16xbf16> to vector<32x12xbf16>
    %1078 = vector.extract_strided_slice %993 {offsets = [0, 0], sizes = [32, 4], strides = [1, 1]} : vector<32x16xbf16> to vector<32x4xbf16>
    %1079 = tpu.concatenate %1077, %1078 in 1 : vector<32x12xbf16>, vector<32x4xbf16> -> vector<32x16xbf16>
    %1080 = arith.andi %1013, %1023 : vector<1x16xi1>
    %cst_215 = arith.constant 0.000000e+00 : bf16
    %1081 = vector.broadcast %cst_215 : bf16 to vector<32x16xbf16>
    %1082 = vector.shape_cast %1080 : vector<1x16xi1> to vector<1x16xi1>
    %1083 = vector.broadcast %1082 : vector<1x16xi1> to vector<32x16xi1>
    %1084 = arith.select %1083, %1079, %1081 : vector<32x16xi1>, vector<32x16xbf16>
    %1085 = vector.extract_strided_slice %993 {offsets = [0, 5], sizes = [32, 11], strides = [1, 1]} : vector<32x16xbf16> to vector<32x11xbf16>
    %1086 = vector.extract_strided_slice %993 {offsets = [0, 0], sizes = [32, 5], strides = [1, 1]} : vector<32x16xbf16> to vector<32x5xbf16>
    %1087 = tpu.concatenate %1085, %1086 in 1 : vector<32x11xbf16>, vector<32x5xbf16> -> vector<32x16xbf16>
    %1088 = arith.andi %1013, %1028 : vector<1x16xi1>
    %cst_216 = arith.constant 0.000000e+00 : bf16
    %1089 = vector.broadcast %cst_216 : bf16 to vector<32x16xbf16>
    %1090 = vector.shape_cast %1088 : vector<1x16xi1> to vector<1x16xi1>
    %1091 = vector.broadcast %1090 : vector<1x16xi1> to vector<32x16xi1>
    %1092 = arith.select %1091, %1087, %1089 : vector<32x16xi1>, vector<32x16xbf16>
    %1093 = tpu.concatenate %1036, %1044, %1052, %1060, %993, %1068, %1076, %1084, %1092 in 0 : vector<32x16xbf16>, vector<32x16xbf16>, vector<32x16xbf16>, vector<32x16xbf16>, vector<32x16xbf16>, vector<32x16xbf16>, vector<32x16xbf16>, vector<32x16xbf16>, vector<32x16xbf16> -> vector<288x16xbf16>
    %c96 = arith.constant 96 : index
    %c0_217 = arith.constant 0 : index
    %1094 = vector.load %arg2[%c96, %c0_217] : memref<160x400xf32, #tpu.memory_space<vmem>>, vector<32x288xf32>
    %1095 = arith.truncf %1094 : vector<32x288xf32> to vector<32x288xbf16>
    %cst_218 = arith.constant dense<0.000000e+00> : vector<32x16xf32>
    %1096 = tpu.matmul %1095, %1093, %cst_218 {dimension_numbers = #tpu.dot_dimension_numbers<[1], [0], [0], [1], [0, 0, 1, 1], [], []>} : vector<32x288xbf16>, vector<288x16xbf16>, vector<32x16xf32> -> vector<32x16xf32>
    %c0_219 = arith.constant 0 : index
    %c6 = arith.constant 6 : index
    %1097 = vector.load %arg3[%c0_219, %c6] : memref<32x8xf32, #tpu.memory_space<vmem>>, vector<32x1xf32>
    %1098 = vector.broadcast %1097 : vector<32x1xf32> to vector<32x16xf32>
    %1099 = arith.addf %1096, %1098 : vector<32x16xf32>
    %cst_220 = arith.constant 0.000000e+00 : f32
    %1100 = vector.broadcast %cst_220 : f32 to vector<32x16xf32>
    %1101 = arith.cmpf oge, %1099, %1100 : vector<32x16xf32>
    %cst_221 = arith.constant 0.00999999977 : f32
    %1102 = vector.broadcast %cst_221 : f32 to vector<32x16xf32>
    %1103 = arith.mulf %1102, %1099 : vector<32x16xf32>
    %1104 = arith.select %1101, %1099, %1103 : vector<32x16xi1>, vector<32x16xf32>
    %1105 = arith.truncf %1104 : vector<32x16xf32> to vector<32x16xbf16>
    %1106 = tpu.iota {dimensions = array<i32: 1>} : vector<1x16xi32>
    %c2_i32_222 = arith.constant 2 : i32
    %1107 = vector.broadcast %c2_i32_222 : i32 to vector<1x16xi32>
    %1108 = arith.shrsi %1106, %1107 : vector<1x16xi32>
    %c3_i32_223 = arith.constant 3 : i32
    %1109 = vector.broadcast %c3_i32_223 : i32 to vector<1x16xi32>
    %1110 = arith.andi %1106, %1109 : vector<1x16xi32>
    %c1_i32_224 = arith.constant 1 : i32
    %1111 = vector.broadcast %c1_i32_224 : i32 to vector<1x16xi32>
    %1112 = arith.cmpi sge, %1108, %1111 : vector<1x16xi32>
    %c5_i32_225 = arith.constant 5 : i32
    %1113 = vector.broadcast %c5_i32_225 : i32 to vector<1x16xi32>
    %1114 = arith.cmpi slt, %1108, %1113 : vector<1x16xi32>
    %1115 = arith.andi %1112, %1114 : vector<1x16xi1>
    %c0_i32_226 = arith.constant 0 : i32
    %1116 = vector.broadcast %c0_i32_226 : i32 to vector<1x16xi32>
    %1117 = arith.cmpi sge, %1108, %1116 : vector<1x16xi32>
    %c4_i32_227 = arith.constant 4 : i32
    %1118 = vector.broadcast %c4_i32_227 : i32 to vector<1x16xi32>
    %1119 = arith.cmpi slt, %1108, %1118 : vector<1x16xi32>
    %1120 = arith.andi %1117, %1119 : vector<1x16xi1>
    %c-1_i32_228 = arith.constant -1 : i32
    %1121 = vector.broadcast %c-1_i32_228 : i32 to vector<1x16xi32>
    %1122 = arith.cmpi sge, %1108, %1121 : vector<1x16xi32>
    %c3_i32_229 = arith.constant 3 : i32
    %1123 = vector.broadcast %c3_i32_229 : i32 to vector<1x16xi32>
    %1124 = arith.cmpi slt, %1108, %1123 : vector<1x16xi32>
    %1125 = arith.andi %1122, %1124 : vector<1x16xi1>
    %c1_i32_230 = arith.constant 1 : i32
    %1126 = vector.broadcast %c1_i32_230 : i32 to vector<1x16xi32>
    %1127 = arith.cmpi sge, %1110, %1126 : vector<1x16xi32>
    %c5_i32_231 = arith.constant 5 : i32
    %1128 = vector.broadcast %c5_i32_231 : i32 to vector<1x16xi32>
    %1129 = arith.cmpi slt, %1110, %1128 : vector<1x16xi32>
    %1130 = arith.andi %1127, %1129 : vector<1x16xi1>
    %c0_i32_232 = arith.constant 0 : i32
    %1131 = vector.broadcast %c0_i32_232 : i32 to vector<1x16xi32>
    %1132 = arith.cmpi sge, %1110, %1131 : vector<1x16xi32>
    %c4_i32_233 = arith.constant 4 : i32
    %1133 = vector.broadcast %c4_i32_233 : i32 to vector<1x16xi32>
    %1134 = arith.cmpi slt, %1110, %1133 : vector<1x16xi32>
    %1135 = arith.andi %1132, %1134 : vector<1x16xi1>
    %c-1_i32_234 = arith.constant -1 : i32
    %1136 = vector.broadcast %c-1_i32_234 : i32 to vector<1x16xi32>
    %1137 = arith.cmpi sge, %1110, %1136 : vector<1x16xi32>
    %c3_i32_235 = arith.constant 3 : i32
    %1138 = vector.broadcast %c3_i32_235 : i32 to vector<1x16xi32>
    %1139 = arith.cmpi slt, %1110, %1138 : vector<1x16xi32>
    %1140 = arith.andi %1137, %1139 : vector<1x16xi1>
    %1141 = vector.extract_strided_slice %1105 {offsets = [0, 11], sizes = [32, 5], strides = [1, 1]} : vector<32x16xbf16> to vector<32x5xbf16>
    %1142 = vector.extract_strided_slice %1105 {offsets = [0, 0], sizes = [32, 11], strides = [1, 1]} : vector<32x16xbf16> to vector<32x11xbf16>
    %1143 = tpu.concatenate %1141, %1142 in 1 : vector<32x5xbf16>, vector<32x11xbf16> -> vector<32x16xbf16>
    %1144 = arith.andi %1115, %1130 : vector<1x16xi1>
    %cst_236 = arith.constant 0.000000e+00 : bf16
    %1145 = vector.broadcast %cst_236 : bf16 to vector<32x16xbf16>
    %1146 = vector.shape_cast %1144 : vector<1x16xi1> to vector<1x16xi1>
    %1147 = vector.broadcast %1146 : vector<1x16xi1> to vector<32x16xi1>
    %1148 = arith.select %1147, %1143, %1145 : vector<32x16xi1>, vector<32x16xbf16>
    %1149 = vector.extract_strided_slice %1105 {offsets = [0, 12], sizes = [32, 4], strides = [1, 1]} : vector<32x16xbf16> to vector<32x4xbf16>
    %1150 = vector.extract_strided_slice %1105 {offsets = [0, 0], sizes = [32, 12], strides = [1, 1]} : vector<32x16xbf16> to vector<32x12xbf16>
    %1151 = tpu.concatenate %1149, %1150 in 1 : vector<32x4xbf16>, vector<32x12xbf16> -> vector<32x16xbf16>
    %1152 = arith.andi %1115, %1135 : vector<1x16xi1>
    %cst_237 = arith.constant 0.000000e+00 : bf16
    %1153 = vector.broadcast %cst_237 : bf16 to vector<32x16xbf16>
    %1154 = vector.shape_cast %1152 : vector<1x16xi1> to vector<1x16xi1>
    %1155 = vector.broadcast %1154 : vector<1x16xi1> to vector<32x16xi1>
    %1156 = arith.select %1155, %1151, %1153 : vector<32x16xi1>, vector<32x16xbf16>
    %1157 = vector.extract_strided_slice %1105 {offsets = [0, 13], sizes = [32, 3], strides = [1, 1]} : vector<32x16xbf16> to vector<32x3xbf16>
    %1158 = vector.extract_strided_slice %1105 {offsets = [0, 0], sizes = [32, 13], strides = [1, 1]} : vector<32x16xbf16> to vector<32x13xbf16>
    %1159 = tpu.concatenate %1157, %1158 in 1 : vector<32x3xbf16>, vector<32x13xbf16> -> vector<32x16xbf16>
    %1160 = arith.andi %1115, %1140 : vector<1x16xi1>
    %cst_238 = arith.constant 0.000000e+00 : bf16
    %1161 = vector.broadcast %cst_238 : bf16 to vector<32x16xbf16>
    %1162 = vector.shape_cast %1160 : vector<1x16xi1> to vector<1x16xi1>
    %1163 = vector.broadcast %1162 : vector<1x16xi1> to vector<32x16xi1>
    %1164 = arith.select %1163, %1159, %1161 : vector<32x16xi1>, vector<32x16xbf16>
    %1165 = vector.extract_strided_slice %1105 {offsets = [0, 15], sizes = [32, 1], strides = [1, 1]} : vector<32x16xbf16> to vector<32x1xbf16>
    %1166 = vector.extract_strided_slice %1105 {offsets = [0, 0], sizes = [32, 15], strides = [1, 1]} : vector<32x16xbf16> to vector<32x15xbf16>
    %1167 = tpu.concatenate %1165, %1166 in 1 : vector<32x1xbf16>, vector<32x15xbf16> -> vector<32x16xbf16>
    %1168 = arith.andi %1120, %1130 : vector<1x16xi1>
    %cst_239 = arith.constant 0.000000e+00 : bf16
    %1169 = vector.broadcast %cst_239 : bf16 to vector<32x16xbf16>
    %1170 = vector.shape_cast %1168 : vector<1x16xi1> to vector<1x16xi1>
    %1171 = vector.broadcast %1170 : vector<1x16xi1> to vector<32x16xi1>
    %1172 = arith.select %1171, %1167, %1169 : vector<32x16xi1>, vector<32x16xbf16>
    %1173 = vector.extract_strided_slice %1105 {offsets = [0, 1], sizes = [32, 15], strides = [1, 1]} : vector<32x16xbf16> to vector<32x15xbf16>
    %1174 = vector.extract_strided_slice %1105 {offsets = [0, 0], sizes = [32, 1], strides = [1, 1]} : vector<32x16xbf16> to vector<32x1xbf16>
    %1175 = tpu.concatenate %1173, %1174 in 1 : vector<32x15xbf16>, vector<32x1xbf16> -> vector<32x16xbf16>
    %1176 = arith.andi %1120, %1140 : vector<1x16xi1>
    %cst_240 = arith.constant 0.000000e+00 : bf16
    %1177 = vector.broadcast %cst_240 : bf16 to vector<32x16xbf16>
    %1178 = vector.shape_cast %1176 : vector<1x16xi1> to vector<1x16xi1>
    %1179 = vector.broadcast %1178 : vector<1x16xi1> to vector<32x16xi1>
    %1180 = arith.select %1179, %1175, %1177 : vector<32x16xi1>, vector<32x16xbf16>
    %1181 = vector.extract_strided_slice %1105 {offsets = [0, 3], sizes = [32, 13], strides = [1, 1]} : vector<32x16xbf16> to vector<32x13xbf16>
    %1182 = vector.extract_strided_slice %1105 {offsets = [0, 0], sizes = [32, 3], strides = [1, 1]} : vector<32x16xbf16> to vector<32x3xbf16>
    %1183 = tpu.concatenate %1181, %1182 in 1 : vector<32x13xbf16>, vector<32x3xbf16> -> vector<32x16xbf16>
    %1184 = arith.andi %1125, %1130 : vector<1x16xi1>
    %cst_241 = arith.constant 0.000000e+00 : bf16
    %1185 = vector.broadcast %cst_241 : bf16 to vector<32x16xbf16>
    %1186 = vector.shape_cast %1184 : vector<1x16xi1> to vector<1x16xi1>
    %1187 = vector.broadcast %1186 : vector<1x16xi1> to vector<32x16xi1>
    %1188 = arith.select %1187, %1183, %1185 : vector<32x16xi1>, vector<32x16xbf16>
    %1189 = vector.extract_strided_slice %1105 {offsets = [0, 4], sizes = [32, 12], strides = [1, 1]} : vector<32x16xbf16> to vector<32x12xbf16>
    %1190 = vector.extract_strided_slice %1105 {offsets = [0, 0], sizes = [32, 4], strides = [1, 1]} : vector<32x16xbf16> to vector<32x4xbf16>
    %1191 = tpu.concatenate %1189, %1190 in 1 : vector<32x12xbf16>, vector<32x4xbf16> -> vector<32x16xbf16>
    %1192 = arith.andi %1125, %1135 : vector<1x16xi1>
    %cst_242 = arith.constant 0.000000e+00 : bf16
    %1193 = vector.broadcast %cst_242 : bf16 to vector<32x16xbf16>
    %1194 = vector.shape_cast %1192 : vector<1x16xi1> to vector<1x16xi1>
    %1195 = vector.broadcast %1194 : vector<1x16xi1> to vector<32x16xi1>
    %1196 = arith.select %1195, %1191, %1193 : vector<32x16xi1>, vector<32x16xbf16>
    %1197 = vector.extract_strided_slice %1105 {offsets = [0, 5], sizes = [32, 11], strides = [1, 1]} : vector<32x16xbf16> to vector<32x11xbf16>
    %1198 = vector.extract_strided_slice %1105 {offsets = [0, 0], sizes = [32, 5], strides = [1, 1]} : vector<32x16xbf16> to vector<32x5xbf16>
    %1199 = tpu.concatenate %1197, %1198 in 1 : vector<32x11xbf16>, vector<32x5xbf16> -> vector<32x16xbf16>
    %1200 = arith.andi %1125, %1140 : vector<1x16xi1>
    %cst_243 = arith.constant 0.000000e+00 : bf16
    %1201 = vector.broadcast %cst_243 : bf16 to vector<32x16xbf16>
    %1202 = vector.shape_cast %1200 : vector<1x16xi1> to vector<1x16xi1>
    %1203 = vector.broadcast %1202 : vector<1x16xi1> to vector<32x16xi1>
    %1204 = arith.select %1203, %1199, %1201 : vector<32x16xi1>, vector<32x16xbf16>
    %1205 = tpu.concatenate %1148, %1156, %1164, %1172, %1105, %1180, %1188, %1196, %1204 in 0 : vector<32x16xbf16>, vector<32x16xbf16>, vector<32x16xbf16>, vector<32x16xbf16>, vector<32x16xbf16>, vector<32x16xbf16>, vector<32x16xbf16>, vector<32x16xbf16>, vector<32x16xbf16> -> vector<288x16xbf16>
    %c128 = arith.constant 128 : index
    %c0_244 = arith.constant 0 : index
    %1206 = vector.load %arg2[%c128, %c0_244] : memref<160x400xf32, #tpu.memory_space<vmem>>, vector<32x288xf32>
    %1207 = arith.truncf %1206 : vector<32x288xf32> to vector<32x288xbf16>
    %cst_245 = arith.constant dense<0.000000e+00> : vector<32x16xf32>
    %1208 = tpu.matmul %1207, %1205, %cst_245 {dimension_numbers = #tpu.dot_dimension_numbers<[1], [0], [0], [1], [0, 0, 1, 1], [], []>} : vector<32x288xbf16>, vector<288x16xbf16>, vector<32x16xf32> -> vector<32x16xf32>
    %c0_246 = arith.constant 0 : index
    %c7 = arith.constant 7 : index
    %1209 = vector.load %arg3[%c0_246, %c7] : memref<32x8xf32, #tpu.memory_space<vmem>>, vector<32x1xf32>
    %1210 = vector.broadcast %1209 : vector<32x1xf32> to vector<32x16xf32>
    %1211 = arith.addf %1208, %1210 : vector<32x16xf32>
    %c0_247 = arith.constant 0 : index
    %c0_248 = arith.constant 0 : index
    %c0_249 = arith.constant 0 : index
    %1212 = vector.load %arg4[%c0_247, %c0_248, %c0_249] : memref<1x32x16xf32, #tpu.memory_space<vmem>>, vector<1x32x16xf32>
    %1213 = vector.shape_cast %1212 : vector<1x32x16xf32> to vector<32x16xf32>
    %1214 = vector.shape_cast %1211 : vector<32x16xf32> to vector<1x32x16xf32>
    tpu.vector_store %arg4[%c0_247, %c0_248, %c0_249], %1214 {strides = array<i32>} : memref<1x32x16xf32, #tpu.memory_space<vmem>>, vector<1x32x16xf32>,
    return
  }
  func.func @transform_0(%arg0: i32) -> (i32, i32, i32) {
    %c0_i32 = arith.constant 0 : i32
    %c0_i32_0 = arith.constant 0 : i32
    %c0_i32_1 = arith.constant 0 : i32
    return %arg0, %c0_i32, %c0_i32_0 : i32, i32, i32
  }
  func.func @transform_1(%arg0: i32) -> (i32, i32) {
    %c0_i32 = arith.constant 0 : i32
    %c0_i32_0 = arith.constant 0 : i32
    %c0_i32_1 = arith.constant 0 : i32
    return %c0_i32, %c0_i32_0 : i32, i32
  }
  func.func @transform_2(%arg0: i32) -> (i32, i32) {
    %c0_i32 = arith.constant 0 : i32
    %c0_i32_0 = arith.constant 0 : i32
    %c0_i32_1 = arith.constant 0 : i32
    return %c0_i32, %c0_i32_0 : i32, i32
  }
  func.func @transform_3(%arg0: i32) -> (i32, i32, i32) {
    %c0_i32 = arith.constant 0 : i32
    %c0_i32_0 = arith.constant 0 : i32
    %c0_i32_1 = arith.constant 0 : i32
    return %arg0, %c0_i32, %c0_i32_0 : i32, i32, i32
  }
}

</mosaic_0001>

<llo_original>
// kernel: feature_net.1
$region0: #{feature_net.1}
  #allocation0 [shape = 'u32[]', space=smem, size = 0x4, offset = 0x4, fixed_abs, tag = 'smem constant byte address 0x4 - core index']
  #allocation1 [shape = 'u32[144,128]{1,0:T(1,128)}', space=vmem, size = 0x12000, scoped, tag = 'internal scratch']
  %s0 = inlined_call_operand.vmem [shape: bf16[2,8,256], index: 0, kind: input, shape index: {}]
  %s1 = inlined_call_operand.hbm [shape: f32[160,400], index: 1, kind: input, shape index: {}]
  %s2 = inlined_call_operand.vmem [shape: f32[32,8], index: 2, kind: input, shape index: {}]
  %s3 = inlined_call_operand.vmem [shape: f32[2,32,16], index: 3, kind: output, shape index: {}]
  %s4 = sld [smem:[#allocation0]]
  $region49: #{feature_net.1} parent=0
    _
  %s6 = ssub.s32 1, %s4
  %s7 = scalar_select 0, %s6, %s4
  $region1: #{feature_net.1} parent=0
    #allocation2 [shape = 'u8[327680]{0}', space=vmem, size = 0x50000, scoped, tag = 'input window, operand 1, single buffered']
    #allocation3 [shape = 's32[2]{0}', space=sflag, size = 0x8, scoped, tag = 'scoped memory for feature_net.1']
    %8 = vsyncpa [#allocation3], 0
    loop: start=0, step=1, limit=4
    $region2: #{feature_net.1} parent=1 // loop_pre_header
      _
    $region3: #{feature_net.1} parent=1 // loop_header
      %s10 = sphi 0, %s14
      %p11 = scmp.ge.s32.totalorder %s10, 4
      %s20 = sphi 0, %s22
      %s23 = sphi 0, %s20
      %s24 = sphi 0, %s23
      %s40 = sphi 0, %s24
      %s44 = sphi 0, %s44
      %s46 = sphi 0, %s44
      %s47 = sphi 0, %s46
      %s61 = sphi 0, %s47
      %s65 = sphi 0, %s65
      %s67 = sphi 0, %s65
      %s68 = sphi 0, %s67
      %s82 = sphi 0, %s68
      %s88 = sphi 0, %s90
      %s91 = sphi 0, %s88
      %s92 = sphi 0, %s91
      %s108 = sphi 0, %s92
    $region4: #{feature_net.1} parent=1 // loop_header_branch
      %13 = sbr.rel (%p11) target = $region8
    $region5: #{feature_net.1} parent=1 // loop_body
      %s15 = ssub.s32 %s10, 1
      %s16 = ssub.s32 %s10, 2
      %s17 = sadd.s32 %s10, 1
      %s18 = ssub.s32 %s10, %s17
      %p19 = scmp.eq.s32.totalorder %s18, 0
      %s21 = sadd.s32 %s20, 1
      %s22 = scalar_select %p19, %s20, %s21
      %p25 = pneg %p19
      %p26 = scmp.eq.s32.totalorder %s10, 1
      %p27 = por %p25, %p26
      %p28 = scmp.ne.s32.totalorder %s20, %s23
      %p29 = scmp.eq.s32.totalorder %s10, 0
      %p30 = por %p28, %p29
      %p31 = scmp.ne.s32.totalorder %s20, %s23
      %p32 = scmp.eq.s32.totalorder %s15, 1
      %p33 = por %p31, %p32
      %p34 = scmp.ne.s32.totalorder %s23, %s24
      %p35 = scmp.eq.s32.totalorder %s15, 0
      %p36 = por %p34, %p35
      %p37 = scmp.ne.s32.totalorder %s23, %s24
      %p38 = scmp.eq.s32.totalorder %s16, 1
      %p39 = por %p37, %p38
      %p41 = scmp.ne.s32.totalorder %s24, %s40
      %p42 = scmp.eq.s32.totalorder %s16, 0
      %p43 = por %p41, %p42
      %s45 = sadd.s32 %s44, 1
      %p48 = scmp.eq.s32.totalorder %s10, 1
      %p49 = scmp.ne.s32.totalorder %s44, %s46
      %p50 = scmp.eq.s32.totalorder %s10, 0
      %p51 = por %p49, %p50
      %p52 = scmp.ne.s32.totalorder %s44, %s46
      %p53 = scmp.eq.s32.totalorder %s15, 1
      %p54 = por %p52, %p53
      %p55 = scmp.ne.s32.totalorder %s46, %s47
      %p56 = scmp.eq.s32.totalorder %s15, 0
      %p57 = por %p55, %p56
      %p58 = scmp.ne.s32.totalorder %s46, %s47
      %p59 = scmp.eq.s32.totalorder %s16, 1
      %p60 = por %p58, %p59
      %p62 = scmp.ne.s32.totalorder %s47, %s61
      %p63 = scmp.eq.s32.totalorder %s16, 0
      %p64 = por %p62, %p63
      %s66 = sadd.s32 %s65, 1
      %p69 = scmp.eq.s32.totalorder %s10, 1
      %p70 = scmp.ne.s32.totalorder %s65, %s67
      %p71 = scmp.eq.s32.totalorder %s10, 0
      %p72 = por %p70, %p71
      %p73 = scmp.ne.s32.totalorder %s65, %s67
      %p74 = scmp.eq.s32.totalorder %s15, 1
      %p75 = por %p73, %p74
      %p76 = scmp.ne.s32.totalorder %s67, %s68
      %p77 = scmp.eq.s32.totalorder %s15, 0
      %p78 = por %p76, %p77
      %p79 = scmp.ne.s32.totalorder %s67, %s68
      %p80 = scmp.eq.s32.totalorder %s16, 1
      %p81 = por %p79, %p80
      %p83 = scmp.ne.s32.totalorder %s68, %s82
      %p84 = scmp.eq.s32.totalorder %s16, 0
      %p85 = por %p83, %p84
      %s86 = ssub.s32 %s10, %s17
      %p87 = scmp.eq.s32.totalorder %s86, 0
      %s89 = sadd.s32 %s88, 1
      %s90 = scalar_select %p87, %s88, %s89
      %p93 = pneg %p87
      %p94 = scmp.eq.s32.totalorder %s10, 1
      %p95 = por %p93, %p94
      %p96 = scmp.ne.s32.totalorder %s88, %s91
      %p97 = scmp.eq.s32.totalorder %s10, 0
      %p98 = por %p96, %p97
      %p99 = scmp.ne.s32.totalorder %s88, %s91
      %p100 = scmp.eq.s32.totalorder %s15, 1
      %p101 = por %p99, %p100
      %p102 = scmp.ne.s32.totalorder %s91, %s92
      %p103 = scmp.eq.s32.totalorder %s15, 0
      %p104 = por %p102, %p103
      %p105 = scmp.ne.s32.totalorder %s91, %s92
      %p106 = scmp.eq.s32.totalorder %s16, 1
      %p107 = por %p105, %p106
      %p109 = scmp.ne.s32.totalorder %s92, %s108
      %p110 = scmp.eq.s32.totalorder %s16, 0
      %p111 = por %p109, %p110
      %p112 = scmp.le.s32.totalorder 1, %s10
      %p113 = scmp.lt.s32.totalorder %s10, 3
      %p114 = pnand %p112, %p113
      %p115 = pneg %p114
      // Predicated region
      $region9: #{feature_net.1} parent=5 // pred_check
        _
      $region10: #{feature_net.1} parent=5 // pred_check_branch
        %117 = sbr.rel (%p114) target = $region12
      $region11: #{feature_net.1} parent=5 // pred_region
        %s118 = ssub.s32 %s10, 1
        // Predicated region
        $region13: #{feature_net.1} parent=11 // pred_check
          %p119 = pneg %p57
        $region14: #{feature_net.1} parent=11 // pred_check_branch
          %121 = sbr.rel (%p119) target = $region16
        $region15: #{feature_net.1} parent=11 // pred_region
          %s123 = ssub.s32 10240, 10240
          %124 = vsyncadd [#allocation3], %s123
          %s125 = sshll.u32 [#allocation2], 4
          %s126 = int_to_ptr.vmem [resolvable:$true] %s125
          %131 = dma.hbm_to_vmem [thread:$0]  %s1, 10240, %s126, [#allocation3], 512, 512, 32
        $region16: #{feature_net.1} parent=11 // pred_fallthru
          _
        // Predicated region
        $region17: #{feature_net.1} parent=11 // pred_check
          %p132 = pneg %p78
        $region18: #{feature_net.1} parent=11 // pred_check_branch
          %134 = sbr.rel (%p132) target = $region20
        $region19: #{feature_net.1} parent=11 // pred_region
          _
        $region20: #{feature_net.1} parent=11 // pred_fallthru
          _
      $region12: #{feature_net.1} parent=5 // pred_fallthru
        _
      %p135 = scmp.lt.s32.totalorder %s10, 2
      // Predicated region
      $region21: #{feature_net.1} parent=5 // pred_check
        %p136 = pneg %p135
      $region22: #{feature_net.1} parent=5 // pred_check_branch
        %138 = sbr.rel (%p136) target = $region24
      $region23: #{feature_net.1} parent=5 // pred_region
        // Predicated region
        $region25: #{feature_net.1} parent=23 // pred_check
          %p139 = pneg %p30
        $region26: #{feature_net.1} parent=23 // pred_check_branch
          %141 = sbr.rel (%p139) target = $region28
        $region27: #{feature_net.1} parent=23 // pred_region
          %p142 = scmp.lt.s32.totalorder %s10, 1
          %s143 = scalar_select %p142, %s10, 1
          %s144 = smul.addr %s143, 2
          %s145 = smul.addr %s144, 4
          %s146 = scalar_lea.vmem %s0, %s145
        $region28: #{feature_net.1} parent=23 // pred_fallthru
          _
      $region24: #{feature_net.1} parent=5 // pred_fallthru
        _
      %p147 = scmp.le.s32.totalorder 1, %s10
      %p148 = scmp.lt.s32.totalorder %s10, 3
      %p149 = pnand %p147, %p148
      %p150 = pneg %p149
      // Predicated region
      $region29: #{feature_net.1} parent=5 // pred_check
        _
      $region30: #{feature_net.1} parent=5 // pred_check_branch
        %152 = sbr.rel (%p149) target = $region32
      $region31: #{feature_net.1} parent=5 // pred_region
        %s153 = ssub.s32 %s10, 1
        // Predicated region
        $region33: #{feature_net.1} parent=31 // pred_check
          %p154 = pneg %p57
        $region34: #{feature_net.1} parent=31 // pred_check_branch
          %156 = sbr.rel (%p154) target = $region36
        $region35: #{feature_net.1} parent=31 // pred_region
          %157 = dma.done [#allocation3], 10240
        $region36: #{feature_net.1} parent=31 // pred_fallthru
          _
        %p158 = scmp.lt.s32.totalorder %s15, 1
        %s159 = scalar_select %p158, %s15, 1
        %s160 = smul.addr %s159, 2
        %s161 = smul.addr %s160, 4
        %s162 = scalar_lea.vmem %s0, %s161
        %p163 = pneg %p36
        %p164 = pneg %p33
        %p165 = pneg %p57
        %p166 = pneg %p54
        %p167 = pneg %p78
        %p168 = pneg %p75
        %p169 = pneg %p104
        %p170 = pneg %p101
        %p171 = scmp.lt.s32.totalorder %s15, 1
        %s172 = scalar_select %p171, %s15, 1
        %s173 = smul.addr %s172, 4
        %s174 = smul.addr %s173, 8
        %s175 = scalar_lea.vmem %s3, %s174
        %p176 = scmp.lt.s32.totalorder %s15, 1
        %s177 = scalar_select %p176, %s15, 1
        %s178 = smul.addr %s177, 2
        %s179 = smul.addr %s178, 4
        %s180 = scalar_lea.vmem %s0, %s179
        %p181 = scmp.lt.s32.totalorder %s15, 1
        %s182 = scalar_select %p181, %s15, 1
        %s183 = smul.addr %s182, 4
        %s184 = smul.addr %s183, 8
        %s185 = scalar_lea.vmem %s3, %s184
        %v189 = vld [vmem:[%s180] sm:$0xff]
        %v190 = vlaneseq
        %v191 = vand.u32 %v190, 127
        %v192 = vadd.s32 %v191, 128
        %v193 = vshra.s32 %v191, 4
        %v194 = vshra.s32 %v192, 4
        %v195 = vand.u32 %v191, 15
        %v196 = vand.u32 %v192, 15
        %vm197 = vcmp.ge.s32.totalorder %v193, 1
        %vm198 = vcmp.ge.s32.totalorder %v194, 1
        %vm199 = vcmp.lt.s32.totalorder %v193, 17
        %vm200 = vcmp.lt.s32.totalorder %v194, 17
        %vm201 = vmand %vm197, %vm199
        %vm202 = vmand %vm198, %vm200
        %vm203 = vcmp.ge.s32.totalorder %v193, 0
        %vm204 = vcmp.ge.s32.totalorder %v194, 0
        %vm205 = vcmp.lt.s32.totalorder %v193, 16
        %vm206 = vcmp.lt.s32.totalorder %v194, 16
        %vm207 = vmand %vm203, %vm205
        %vm208 = vmand %vm204, %vm206
        %vm209 = vcmp.ge.s32.totalorder %v193, 4294967295
        %vm210 = vcmp.ge.s32.totalorder %v194, 4294967295
        %vm211 = vcmp.lt.s32.totalorder %v193, 15
        %vm212 = vcmp.lt.s32.totalorder %v194, 15
        %vm213 = vmand %vm209, %vm211
        %vm214 = vmand %vm210, %vm212
        %vm215 = vcmp.ge.s32.totalorder %v195, 1
        %vm216 = vcmp.ge.s32.totalorder %v196, 1
        %vm217 = vcmp.lt.s32.totalorder %v195, 17
        %vm218 = vcmp.lt.s32.totalorder %v196, 17
        %vm219 = vmand %vm215, %vm217
        %vm220 = vmand %vm216, %vm218
        %vm221 = vcmp.ge.s32.totalorder %v195, 0
        %vm222 = vcmp.ge.s32.totalorder %v196, 0
        %vm223 = vcmp.lt.s32.totalorder %v195, 16
        %vm224 = vcmp.lt.s32.totalorder %v196, 16
        %vm225 = vmand %vm221, %vm223
        %vm226 = vmand %vm222, %vm224
        %vm227 = vcmp.ge.s32.totalorder %v195, 4294967295
        %vm228 = vcmp.ge.s32.totalorder %v196, 4294967295
        %vm229 = vcmp.lt.s32.totalorder %v195, 15
        %vm230 = vcmp.lt.s32.totalorder %v196, 15
        %vm231 = vmand %vm227, %vm229
        %vm232 = vmand %vm228, %vm230
        %v234 = vunpack.c.h.b16 %v189
        %v235 = vpack.c.b16 %v234, %v234
        %236 = vrot.lane.b32.xlu0 %v235, 17
        %v237 = vpop.permute.xlu0 %236
        %v238 = vunpack.c.l.b16 %v189
        %v239 = vpack.c.b16 %v238, %v238
        %240 = vrot.lane.b32.xlu0 %v239, 17
        %v241 = vpop.permute.xlu0 %240
        %vm242 = vcmask 138240
        %v243 = vsel %vm242, %v241, %v237
        %vm245 = vcmask 138240
        %v248 = vsel %vm245, %v237, %v241
        %vm250 = vmand %vm201, %vm219
        %vm251 = vmand %vm202, %vm220
        %v252 = vsel %vm250, 1, 0
        %v253 = vsel %vm251, 1, 0
        %vm254 = vcmp.eq.s32.totalorder %v252, 1
        %vm255 = vcmp.eq.s32.totalorder %v253, 1
        %vm256 = vmpackc.low %vm255, %vm254
        %v257 = vsel %vm256, 65537, 0
        %v258 = vlaneseq
        %v259 = vshrl.u32 %v258, 7
        %v260 = vsub.s32 0, %v259
        %v261 = vrot.slane %v257, %v260
        %v262 = vlaneseq
        %v263 = vshrl.u32 %v262, 7
        %v264 = vsub.s32 4, %v263
        %v265 = vrot.slane %v257, %v264
        %vm266 = vcmp.ne.s16.totalorder %v261, 0
        %vm267 = vcmp.ne.s16.totalorder %v265, 0
        %v268 = vsel %vm266, %v248, 0
        %v269 = vsel %vm267, %v243, 0
        %270 = vrot.lane.b32.xlu0 %v235, 16
        %v271 = vpop.permute.xlu0 %270
        %272 = vrot.lane.b32.xlu0 %v239, 16
        %v273 = vpop.permute.xlu0 %272
        %vm274 = vcmask 130048
        %v275 = vsel %vm274, %v273, %v271
        %vm277 = vcmask 130048
        %v280 = vsel %vm277, %v271, %v273
        %vm282 = vmand %vm201, %vm225
        %vm283 = vmand %vm202, %vm226
        %v284 = vsel %vm282, 1, 0
        %v285 = vsel %vm283, 1, 0
        %vm286 = vcmp.eq.s32.totalorder %v284, 1
        %vm287 = vcmp.eq.s32.totalorder %v285, 1
        %vm288 = vmpackc.low %vm287, %vm286
        %v289 = vsel %vm288, 65537, 0
        %v290 = vlaneseq
        %v291 = vshrl.u32 %v290, 7
        %v292 = vsub.s32 0, %v291
        %v293 = vrot.slane %v289, %v292
        %v294 = vlaneseq
        %v295 = vshrl.u32 %v294, 7
        %v296 = vsub.s32 4, %v295
        %v297 = vrot.slane %v289, %v296
        %vm298 = vcmp.ne.s16.totalorder %v293, 0
        %vm299 = vcmp.ne.s16.totalorder %v297, 0
        %v300 = vsel %vm298, %v280, 0
        %v301 = vsel %vm299, %v275, 0
        %302 = vrot.lane.b32.xlu0 %v235, 15
        %v303 = vpop.permute.xlu0 %302
        %304 = vrot.lane.b32.xlu0 %v239, 15
        %v305 = vpop.permute.xlu0 %304
        %vm306 = vcmask 121856
        %v307 = vsel %vm306, %v305, %v303
        %vm309 = vcmask 121856
        %v312 = vsel %vm309, %v303, %v305
        %vm314 = vmand %vm201, %vm231
        %vm315 = vmand %vm202, %vm232
        %v316 = vsel %vm314, 1, 0
        %v317 = vsel %vm315, 1, 0
        %vm318 = vcmp.eq.s32.totalorder %v316, 1
        %vm319 = vcmp.eq.s32.totalorder %v317, 1
        %vm320 = vmpackc.low %vm319, %vm318
        %v321 = vsel %vm320, 65537, 0
        %v322 = vlaneseq
        %v323 = vshrl.u32 %v322, 7
        %v324 = vsub.s32 0, %v323
        %v325 = vrot.slane %v321, %v324
        %v326 = vlaneseq
        %v327 = vshrl.u32 %v326, 7
        %v328 = vsub.s32 4, %v327
        %v329 = vrot.slane %v321, %v328
        %vm330 = vcmp.ne.s16.totalorder %v325, 0
        %vm331 = vcmp.ne.s16.totalorder %v329, 0
        %v332 = vsel %vm330, %v312, 0
        %v333 = vsel %vm331, %v307, 0
        %334 = vrot.lane.b32.xlu0 %v235, 1
        %v335 = vpop.permute.xlu0 %334
        %336 = vrot.lane.b32.xlu0 %v239, 1
        %v337 = vpop.permute.xlu0 %336
        %vm338 = vcmask 7168
        %v339 = vsel %vm338, %v337, %v335
        %vm341 = vcmask 7168
        %v344 = vsel %vm341, %v335, %v337
        %vm346 = vmand %vm207, %vm219
        %vm347 = vmand %vm208, %vm220
        %v348 = vsel %vm346, 1, 0
        %v349 = vsel %vm347, 1, 0
        %vm350 = vcmp.eq.s32.totalorder %v348, 1
        %vm351 = vcmp.eq.s32.totalorder %v349, 1
        %vm352 = vmpackc.low %vm351, %vm350
        %v353 = vsel %vm352, 65537, 0
        %v354 = vlaneseq
        %v355 = vshrl.u32 %v354, 7
        %v356 = vsub.s32 0, %v355
        %v357 = vrot.slane %v353, %v356
        %v358 = vlaneseq
        %v359 = vshrl.u32 %v358, 7
        %v360 = vsub.s32 4, %v359
        %v361 = vrot.slane %v353, %v360
        %vm362 = vcmp.ne.s16.totalorder %v357, 0
        %vm363 = vcmp.ne.s16.totalorder %v361, 0
        %v364 = vsel %vm362, %v344, 0
        %v365 = vsel %vm363, %v339, 0
        %366 = vrot.lane.b32.xlu0 %v239, 127
        %v367 = vpop.permute.xlu0 %366
        %368 = vrot.lane.b32.xlu0 %v235, 127
        %v369 = vpop.permute.xlu0 %368
        %vm370 = vcmask 1039360
        %v371 = vsel %vm370, %v367, %v369
        %vm373 = vcmask 1039360
        %v376 = vsel %vm373, %v369, %v367
        %vm378 = vmand %vm207, %vm231
        %vm379 = vmand %vm208, %vm232
        %v380 = vsel %vm378, 1, 0
        %v381 = vsel %vm379, 1, 0
        %vm382 = vcmp.eq.s32.totalorder %v380, 1
        %vm383 = vcmp.eq.s32.totalorder %v381, 1
        %vm384 = vmpackc.low %vm383, %vm382
        %v385 = vsel %vm384, 65537, 0
        %v386 = vlaneseq
        %v387 = vshrl.u32 %v386, 7
        %v388 = vsub.s32 0, %v387
        %v389 = vrot.slane %v385, %v388
        %v390 = vlaneseq
        %v391 = vshrl.u32 %v390, 7
        %v392 = vsub.s32 4, %v391
        %v393 = vrot.slane %v385, %v392
        %vm394 = vcmp.ne.s16.totalorder %v389, 0
        %vm395 = vcmp.ne.s16.totalorder %v393, 0
        %v396 = vsel %vm394, %v371, 0
        %v397 = vsel %vm395, %v376, 0
        %398 = vrot.lane.b32.xlu0 %v239, 113
        %v399 = vpop.permute.xlu0 %398
        %400 = vrot.lane.b32.xlu0 %v235, 113
        %v401 = vpop.permute.xlu0 %400
        %vm402 = vcmask 924672
        %v403 = vsel %vm402, %v399, %v401
        %vm405 = vcmask 924672
        %v408 = vsel %vm405, %v401, %v399
        %vm410 = vmand %vm213, %vm219
        %vm411 = vmand %vm214, %vm220
        %v412 = vsel %vm410, 1, 0
        %v413 = vsel %vm411, 1, 0
        %vm414 = vcmp.eq.s32.totalorder %v412, 1
        %vm415 = vcmp.eq.s32.totalorder %v413, 1
        %vm416 = vmpackc.low %vm415, %vm414
        %v417 = vsel %vm416, 65537, 0
        %v418 = vlaneseq
        %v419 = vshrl.u32 %v418, 7
        %v420 = vsub.s32 0, %v419
        %v421 = vrot.slane %v417, %v420
        %v422 = vlaneseq
        %v423 = vshrl.u32 %v422, 7
        %v424 = vsub.s32 4, %v423
        %v425 = vrot.slane %v417, %v424
        %vm426 = vcmp.ne.s16.totalorder %v421, 0
        %vm427 = vcmp.ne.s16.totalorder %v425, 0
        %v428 = vsel %vm426, %v403, 0
        %v429 = vsel %vm427, %v408, 0
        %430 = vrot.lane.b32.xlu0 %v239, 112
        %v431 = vpop.permute.xlu0 %430
        %432 = vrot.lane.b32.xlu0 %v235, 112
        %v433 = vpop.permute.xlu0 %432
        %vm434 = vcmask 916480
        %v435 = vsel %vm434, %v431, %v433
        %vm437 = vcmask 916480
        %v440 = vsel %vm437, %v433, %v431
        %vm442 = vmand %vm213, %vm225
        %vm443 = vmand %vm214, %vm226
        %v444 = vsel %vm442, 1, 0
        %v445 = vsel %vm443, 1, 0
        %vm446 = vcmp.eq.s32.totalorder %v444, 1
        %vm447 = vcmp.eq.s32.totalorder %v445, 1
        %vm448 = vmpackc.low %vm447, %vm446
        %v449 = vsel %vm448, 65537, 0
        %v450 = vlaneseq
        %v451 = vshrl.u32 %v450, 7
        %v452 = vsub.s32 0, %v451
        %v453 = vrot.slane %v449, %v452
        %v454 = vlaneseq
        %v455 = vshrl.u32 %v454, 7
        %v456 = vsub.s32 4, %v455
        %v457 = vrot.slane %v449, %v456
        %vm458 = vcmp.ne.s16.totalorder %v453, 0
        %vm459 = vcmp.ne.s16.totalorder %v457, 0
        %v460 = vsel %vm458, %v435, 0
        %v461 = vsel %vm459, %v440, 0
        %462 = vrot.lane.b32.xlu0 %v239, 111
        %v463 = vpop.permute.xlu0 %462
        %464 = vrot.lane.b32.xlu0 %v235, 111
        %v465 = vpop.permute.xlu0 %464
        %vm466 = vcmask 908288
        %v467 = vsel %vm466, %v463, %v465
        %vm469 = vcmask 908288
        %v472 = vsel %vm469, %v465, %v463
        %vm474 = vmand %vm213, %vm231
        %vm475 = vmand %vm214, %vm232
        %v476 = vsel %vm474, 1, 0
        %v477 = vsel %vm475, 1, 0
        %vm478 = vcmp.eq.s32.totalorder %v476, 1
        %vm479 = vcmp.eq.s32.totalorder %v477, 1
        %vm480 = vmpackc.low %vm479, %vm478
        %v481 = vsel %vm480, 65537, 0
        %v482 = vlaneseq
        %v483 = vshrl.u32 %v482, 7
        %v484 = vsub.s32 0, %v483
        %v485 = vrot.slane %v481, %v484
        %v486 = vlaneseq
        %v487 = vshrl.u32 %v486, 7
        %v488 = vsub.s32 4, %v487
        %v489 = vrot.slane %v481, %v488
        %vm490 = vcmp.ne.s16.totalorder %v485, 0
        %vm491 = vcmp.ne.s16.totalorder %v489, 0
        %v492 = vsel %vm490, %v467, 0
        %v493 = vsel %vm491, %v472, 0
        %v496 = vrot.slane %v300, 4
        %v497 = vrot.slane %v301, 4
        %v500 = vrot.slane %v364, 4
        %v501 = vrot.slane %v365, 4
        %v504 = vrot.slane %v396, 4
        %v505 = vrot.slane %v397, 4
        %v508 = vrot.slane %v460, 4
        %v509 = vrot.slane %v461, 4
        %vm510 = vcmask 1043456
        %v513 = vsel %vm510, %v268, %v496
        %v517 = vsel %vm510, %v269, %v497
        %v521 = vsel %vm510, %v332, %v500
        %v525 = vsel %vm510, %v333, %v501
        %v529 = vsel %vm510, %v239, %v504
        %v533 = vsel %vm510, %v235, %v505
        %v537 = vsel %vm510, %v428, %v508
        %v541 = vsel %vm510, %v429, %v509
        %v543 = vld [vmem:[#allocation2] sm:$0xff]
        %v544 = vpack.c.bf16 %v543, %v543
        %v545 = vld [vmem:[%s2] sm:$0xff]
        %547 = vset.pattern.permute.xlu0 0
        %548 = vperm.xlu0 %547, %v545
        %v549 = vpop.permute.xlu0 %548
        %vm551 = vcmask 588800
        %v553 = vsel %vm551, %v544, 0
        %v556 = vsel %vm510, %v492, 0
        %v559 = vsel %vm510, %v493, 0
        %561 = vmatprep.subr.bf16.mxu0 %v517
        %562 = vmatpush1.bf16.msra.mxu0 %v513
        %563 = vmatprep.subr.bf16.mxu0 %v525
        %564 = vmatpush1.bf16.msra.mxu0 %v521
        %565 = vmatprep.subr.bf16.mxu0 %v533
        %566 = vmatpush1.bf16.msra.mxu0 %v529
        %567 = vmatprep.subr.bf16.mxu0 %v541
        %568 = vmatpush1.bf16.msra.mxu0 %v537
        %569 = vmatprep.subr.bf16.mxu0 %v559
        %570 = vmatpush1.bf16.msra.mxu0 %v556
        %571 = vmatprep.subr.bf16.mxu0 0
        %572 = vmatpush1.bf16.msra.mxu0 0
        %573 = vmatprep.subr.bf16.mxu0 0
        %574 = vmatpush1.bf16.msra.mxu0 0
        %575 = vmatprep.subr.bf16.mxu0 0
        %576 = vmatpush1.bf16.msra.mxu0 0
        %577 = vmatprep.subr.bf16.mxu0 0
        %578 = vmatpush1.bf16.msra.mxu0 0
        %579 = vmatprep.subr.bf16.mxu0 0
        %580 = vmatpush1.bf16.msra.mxu0 0
        %581 = vmatprep.subr.bf16.mxu0 0
        %582 = vmatpush1.bf16.msra.mxu0 0
        %583 = vmatprep.subr.bf16.mxu0 0
        %584 = vmatpush1.bf16.msra.mxu0 0
        %585 = vmatprep.subr.bf16.mxu0 0
        %586 = vmatpush1.bf16.msra.mxu0 0
        %587 = vmatprep.subr.bf16.mxu0 0
        %588 = vmatpush1.bf16.msra.mxu0 0
        %589 = vmatprep.subr.bf16.mxu0 0
        %590 = vmatpush1.bf16.msra.mxu0 0
        %591 = vmatprep.subr.bf16.mxu0 0
        %592 = vmatpush1.bf16.msra.mxu0 0
        %593 = vmatprep.mubr.bf16.mxu0 0
        %594 = vmatmul.mubr.bf16.gmra.mrb[0].mxu0 %v553
        %v595 = vpop.f32.mrb[0].mxu0
        %v596 = vadd.f32 %v549, %v595
        %v597 = vpop.f32.mrb[0].mxu0
        %v598 = vadd.f32 %v549, %v597
        %v599 = vpop.f32.mrb[0].mxu0
        %v600 = vpop.f32.mrb[0].mxu0
        %601 = vdwg.mxu0
        %vm602 = vcmp.ge.f32.partialorder %v596, 0.0
        %vm603 = vcmp.ge.f32.partialorder %v598, 0.0
        %v604 = vmul.f32 %v596, 0.01
        %v605 = vmul.f32 %v598, 0.01
        %v606 = vsel %vm602, %v596, %v604
        %v607 = vsel %vm603, %v598, %v605
        %v608 = vpack.c.bf16 %v606, %v606
        %v609 = vpack.c.bf16 %v607, %v607
        %611 = vrot.lane.b32.xlu0 %v609, 17
        %v612 = vpop.permute.xlu0 %611
        %614 = vrot.lane.b32.xlu0 %v608, 17
        %v615 = vpop.permute.xlu0 %614
        %v616 = vsel %vm242, %v615, %v612
        %v620 = vsel %vm245, %v612, %v615
        %v622 = vsel %vm266, %v620, 0
        %v623 = vsel %vm267, %v616, 0
        %624 = vrot.lane.b32.xlu0 %v609, 16
        %v625 = vpop.permute.xlu0 %624
        %626 = vrot.lane.b32.xlu0 %v608, 16
        %v627 = vpop.permute.xlu0 %626
        %v628 = vsel %vm274, %v627, %v625
        %v632 = vsel %vm277, %v625, %v627
        %v634 = vsel %vm298, %v632, 0
        %v635 = vsel %vm299, %v628, 0
        %636 = vrot.lane.b32.xlu0 %v609, 15
        %v637 = vpop.permute.xlu0 %636
        %638 = vrot.lane.b32.xlu0 %v608, 15
        %v639 = vpop.permute.xlu0 %638
        %v640 = vsel %vm306, %v639, %v637
        %v644 = vsel %vm309, %v637, %v639
        %v646 = vsel %vm330, %v644, 0
        %v647 = vsel %vm331, %v640, 0
        %648 = vrot.lane.b32.xlu0 %v609, 1
        %v649 = vpop.permute.xlu0 %648
        %650 = vrot.lane.b32.xlu0 %v608, 1
        %v651 = vpop.permute.xlu0 %650
        %v652 = vsel %vm338, %v651, %v649
        %v656 = vsel %vm341, %v649, %v651
        %v658 = vsel %vm362, %v656, 0
        %v659 = vsel %vm363, %v652, 0
        %660 = vrot.lane.b32.xlu0 %v608, 127
        %v661 = vpop.permute.xlu0 %660
        %662 = vrot.lane.b32.xlu0 %v609, 127
        %v663 = vpop.permute.xlu0 %662
        %v664 = vsel %vm370, %v661, %v663
        %v668 = vsel %vm373, %v663, %v661
        %v670 = vsel %vm394, %v664, 0
        %v671 = vsel %vm395, %v668, 0
        %672 = vrot.lane.b32.xlu0 %v608, 113
        %v673 = vpop.permute.xlu0 %672
        %674 = vrot.lane.b32.xlu0 %v609, 113
        %v675 = vpop.permute.xlu0 %674
        %v676 = vsel %vm402, %v673, %v675
        %v680 = vsel %vm405, %v675, %v673
        %v682 = vsel %vm426, %v676, 0
        %v683 = vsel %vm427, %v680, 0
        %684 = vrot.lane.b32.xlu0 %v608, 112
        %v685 = vpop.permute.xlu0 %684
        %686 = vrot.lane.b32.xlu0 %v609, 112
        %v687 = vpop.permute.xlu0 %686
        %v688 = vsel %vm434, %v685, %v687
        %v692 = vsel %vm437, %v687, %v685
        %v694 = vsel %vm458, %v688, 0
        %v695 = vsel %vm459, %v692, 0
        %696 = vrot.lane.b32.xlu0 %v608, 111
        %v697 = vpop.permute.xlu0 %696
        %698 = vrot.lane.b32.xlu0 %v609, 111
        %v699 = vpop.permute.xlu0 %698
        %v700 = vsel %vm466, %v697, %v699
        %v704 = vsel %vm469, %v699, %v697
        %v706 = vsel %vm490, %v700, 0
        %v707 = vsel %vm491, %v704, 0
        %v710 = vrot.slane %v634, 4
        %v711 = vrot.slane %v635, 4
        %v714 = vrot.slane %v658, 4
        %v715 = vrot.slane %v659, 4
        %v718 = vrot.slane %v670, 4
        %v719 = vrot.slane %v671, 4
        %v722 = vrot.slane %v694, 4
        %v723 = vrot.slane %v695, 4
        %v726 = vsel %vm510, %v622, %v710
        %v730 = vsel %vm510, %v623, %v711
        %v734 = vsel %vm510, %v646, %v714
        %v738 = vsel %vm510, %v647, %v715
        %v742 = vsel %vm510, %v608, %v718
        %v746 = vsel %vm510, %v609, %v719
        %v750 = vsel %vm510, %v682, %v722
        %v754 = vsel %vm510, %v683, %v723
        %v756 = vld [vmem:[#allocation2 + $0x20] sm:$0xff]
        %v757 = vpack.c.bf16 %v756, %v756
        %758 = vset.pattern.permute.xlu0 1
        %759 = vperm.xlu0 %758, %v545
        %v760 = vpop.permute.xlu0 %759
        %v763 = vsel %vm551, %v757, 0
        %v766 = vsel %vm510, %v706, 0
        %v769 = vsel %vm510, %v707, 0
        %771 = vmatprep.subr.bf16.mxu0 %v730
        %772 = vmatpush1.bf16.msra.mxu0 %v726
        %773 = vmatprep.subr.bf16.mxu0 %v738
        %774 = vmatpush1.bf16.msra.mxu0 %v734
        %775 = vmatprep.subr.bf16.mxu0 %v746
        %776 = vmatpush1.bf16.msra.mxu0 %v742
        %777 = vmatprep.subr.bf16.mxu0 %v754
        %778 = vmatpush1.bf16.msra.mxu0 %v750
        %779 = vmatprep.subr.bf16.mxu0 %v769
        %780 = vmatpush1.bf16.msra.mxu0 %v766
        %781 = vmatprep.subr.bf16.mxu0 0
        %782 = vmatpush1.bf16.msra.mxu0 0
        %783 = vmatprep.subr.bf16.mxu0 0
        %784 = vmatpush1.bf16.msra.mxu0 0
        %785 = vmatprep.subr.bf16.mxu0 0
        %786 = vmatpush1.bf16.msra.mxu0 0
        %787 = vmatprep.subr.bf16.mxu0 0
        %788 = vmatpush1.bf16.msra.mxu0 0
        %789 = vmatprep.subr.bf16.mxu0 0
        %790 = vmatpush1.bf16.msra.mxu0 0
        %791 = vmatprep.subr.bf16.mxu0 0
        %792 = vmatpush1.bf16.msra.mxu0 0
        %793 = vmatprep.subr.bf16.mxu0 0
        %794 = vmatpush1.bf16.msra.mxu0 0
        %795 = vmatprep.subr.bf16.mxu0 0
        %796 = vmatpush1.bf16.msra.mxu0 0
        %797 = vmatprep.subr.bf16.mxu0 0
        %798 = vmatpush1.bf16.msra.mxu0 0
        %799 = vmatprep.subr.bf16.mxu0 0
        %800 = vmatpush1.bf16.msra.mxu0 0
        %801 = vmatprep.subr.bf16.mxu0 0
        %802 = vmatpush1.bf16.msra.mxu0 0
        %803 = vmatprep.mubr.bf16.mxu0 0
        %804 = vmatmul.mubr.bf16.gmra.mrb[0].mxu0 %v763
        %v805 = vpop.f32.mrb[0].mxu0
        %v806 = vadd.f32 %v760, %v805
        %v807 = vpop.f32.mrb[0].mxu0
        %v808 = vadd.f32 %v760, %v807
        %v809 = vpop.f32.mrb[0].mxu0
        %v810 = vpop.f32.mrb[0].mxu0
        %811 = vdwg.mxu0
        %vm812 = vcmp.ge.f32.partialorder %v806, 0.0
        %vm813 = vcmp.ge.f32.partialorder %v808, 0.0
        %v814 = vmul.f32 %v806, 0.01
        %v815 = vmul.f32 %v808, 0.01
        %v816 = vsel %vm812, %v806, %v814
        %v817 = vsel %vm813, %v808, %v815
        %v818 = vpack.c.bf16 %v816, %v816
        %v819 = vpack.c.bf16 %v817, %v817
        %vm820 = vcmp.ge.s32.totalorder %v193, 2
        %vm821 = vcmp.ge.s32.totalorder %v194, 2
        %vm822 = vcmp.lt.s32.totalorder %v193, 18
        %vm823 = vcmp.lt.s32.totalorder %v194, 18
        %vm824 = vmand %vm820, %vm822
        %vm825 = vmand %vm821, %vm823
        %vm826 = vcmp.ge.s32.totalorder %v193, 4294967294
        %vm827 = vcmp.ge.s32.totalorder %v194, 4294967294
        %vm828 = vcmp.lt.s32.totalorder %v193, 14
        %vm829 = vcmp.lt.s32.totalorder %v194, 14
        %vm830 = vmand %vm826, %vm828
        %vm831 = vmand %vm827, %vm829
        %vm832 = vcmp.ge.s32.totalorder %v195, 2
        %vm833 = vcmp.ge.s32.totalorder %v196, 2
        %vm834 = vcmp.lt.s32.totalorder %v195, 18
        %vm835 = vcmp.lt.s32.totalorder %v196, 18
        %vm836 = vmand %vm832, %vm834
        %vm837 = vmand %vm833, %vm835
        %vm838 = vcmp.ge.s32.totalorder %v195, 4294967294
        %vm839 = vcmp.ge.s32.totalorder %v196, 4294967294
        %vm840 = vcmp.lt.s32.totalorder %v195, 14
        %vm841 = vcmp.lt.s32.totalorder %v196, 14
        %vm842 = vmand %vm838, %vm840
        %vm843 = vmand %vm839, %vm841
        %845 = vrot.lane.b32.xlu0 %v819, 34
        %v846 = vpop.permute.xlu0 %845
        %848 = vrot.lane.b32.xlu0 %v818, 34
        %v849 = vpop.permute.xlu0 %848
        %vm850 = vcmask 277504
        %v851 = vsel %vm850, %v849, %v846
        %vm853 = vcmask 277504
        %v856 = vsel %vm853, %v846, %v849
        %vm858 = vmand %vm824, %vm836
        %vm859 = vmand %vm825, %vm837
        %v860 = vsel %vm858, 1, 0
        %v861 = vsel %vm859, 1, 0
        %vm862 = vcmp.eq.s32.totalorder %v860, 1
        %vm863 = vcmp.eq.s32.totalorder %v861, 1
        %vm864 = vmpackc.low %vm863, %vm862
        %v865 = vsel %vm864, 65537, 0
        %v866 = vlaneseq
        %v867 = vshrl.u32 %v866, 7
        %v868 = vsub.s32 0, %v867
        %v869 = vrot.slane %v865, %v868
        %v870 = vlaneseq
        %v871 = vshrl.u32 %v870, 7
        %v872 = vsub.s32 4, %v871
        %v873 = vrot.slane %v865, %v872
        %vm874 = vcmp.ne.s16.totalorder %v869, 0
        %vm875 = vcmp.ne.s16.totalorder %v873, 0
        %v876 = vsel %vm874, %v856, 0
        %v877 = vsel %vm875, %v851, 0
        %878 = vrot.lane.b32.xlu0 %v819, 33
        %v879 = vpop.permute.xlu0 %878
        %880 = vrot.lane.b32.xlu0 %v818, 33
        %v881 = vpop.permute.xlu0 %880
        %vm882 = vcmask 269312
        %v883 = vsel %vm882, %v881, %v879
        %vm885 = vcmask 269312
        %v888 = vsel %vm885, %v879, %v881
        %vm890 = vmand %vm824, %vm219
        %vm891 = vmand %vm825, %vm220
        %v892 = vsel %vm890, 1, 0
        %v893 = vsel %vm891, 1, 0
        %vm894 = vcmp.eq.s32.totalorder %v892, 1
        %vm895 = vcmp.eq.s32.totalorder %v893, 1
        %vm896 = vmpackc.low %vm895, %vm894
        %v897 = vsel %vm896, 65537, 0
        %v898 = vlaneseq
        %v899 = vshrl.u32 %v898, 7
        %v900 = vsub.s32 0, %v899
        %v901 = vrot.slane %v897, %v900
        %v902 = vlaneseq
        %v903 = vshrl.u32 %v902, 7
        %v904 = vsub.s32 4, %v903
        %v905 = vrot.slane %v897, %v904
        %vm906 = vcmp.ne.s16.totalorder %v901, 0
        %vm907 = vcmp.ne.s16.totalorder %v905, 0
        %v908 = vsel %vm906, %v888, 0
        %v909 = vsel %vm907, %v883, 0
        %910 = vrot.lane.b32.xlu0 %v819, 32
        %v911 = vpop.permute.xlu0 %910
        %912 = vrot.lane.b32.xlu0 %v818, 32
        %v913 = vpop.permute.xlu0 %912
        %vm914 = vcmask 261120
        %v915 = vsel %vm914, %v913, %v911
        %vm917 = vcmask 261120
        %v920 = vsel %vm917, %v911, %v913
        %vm922 = vmand %vm824, %vm225
        %vm923 = vmand %vm825, %vm226
        %v924 = vsel %vm922, 1, 0
        %v925 = vsel %vm923, 1, 0
        %vm926 = vcmp.eq.s32.totalorder %v924, 1
        %vm927 = vcmp.eq.s32.totalorder %v925, 1
        %vm928 = vmpackc.low %vm927, %vm926
        %v929 = vsel %vm928, 65537, 0
        %v930 = vlaneseq
        %v931 = vshrl.u32 %v930, 7
        %v932 = vsub.s32 0, %v931
        %v933 = vrot.slane %v929, %v932
        %v934 = vlaneseq
        %v935 = vshrl.u32 %v934, 7
        %v936 = vsub.s32 4, %v935
        %v937 = vrot.slane %v929, %v936
        %vm938 = vcmp.ne.s16.totalorder %v933, 0
        %vm939 = vcmp.ne.s16.totalorder %v937, 0
        %v940 = vsel %vm938, %v920, 0
        %v941 = vsel %vm939, %v915, 0
        %942 = vrot.lane.b32.xlu0 %v819, 31
        %v943 = vpop.permute.xlu0 %942
        %944 = vrot.lane.b32.xlu0 %v818, 31
        %v945 = vpop.permute.xlu0 %944
        %vm946 = vcmask 252928
        %v947 = vsel %vm946, %v945, %v943
        %vm949 = vcmask 252928
        %v952 = vsel %vm949, %v943, %v945
        %vm954 = vmand %vm824, %vm231
        %vm955 = vmand %vm825, %vm232
        %v956 = vsel %vm954, 1, 0
        %v957 = vsel %vm955, 1, 0
        %vm958 = vcmp.eq.s32.totalorder %v956, 1
        %vm959 = vcmp.eq.s32.totalorder %v957, 1
        %vm960 = vmpackc.low %vm959, %vm958
        %v961 = vsel %vm960, 65537, 0
        %v962 = vlaneseq
        %v963 = vshrl.u32 %v962, 7
        %v964 = vsub.s32 0, %v963
        %v965 = vrot.slane %v961, %v964
        %v966 = vlaneseq
        %v967 = vshrl.u32 %v966, 7
        %v968 = vsub.s32 4, %v967
        %v969 = vrot.slane %v961, %v968
        %vm970 = vcmp.ne.s16.totalorder %v965, 0
        %vm971 = vcmp.ne.s16.totalorder %v969, 0
        %v972 = vsel %vm970, %v952, 0
        %v973 = vsel %vm971, %v947, 0
        %974 = vrot.lane.b32.xlu0 %v819, 30
        %v975 = vpop.permute.xlu0 %974
        %976 = vrot.lane.b32.xlu0 %v818, 30
        %v977 = vpop.permute.xlu0 %976
        %vm978 = vcmask 244736
        %v979 = vsel %vm978, %v977, %v975
        %vm981 = vcmask 244736
        %v984 = vsel %vm981, %v975, %v977
        %vm986 = vmand %vm824, %vm842
        %vm987 = vmand %vm825, %vm843
        %v988 = vsel %vm986, 1, 0
        %v989 = vsel %vm987, 1, 0
        %vm990 = vcmp.eq.s32.totalorder %v988, 1
        %vm991 = vcmp.eq.s32.totalorder %v989, 1
        %vm992 = vmpackc.low %vm991, %vm990
        %v993 = vsel %vm992, 65537, 0
        %v994 = vlaneseq
        %v995 = vshrl.u32 %v994, 7
        %v996 = vsub.s32 0, %v995
        %v997 = vrot.slane %v993, %v996
        %v998 = vlaneseq
        %v999 = vshrl.u32 %v998, 7
        %v1000 = vsub.s32 4, %v999
        %v1001 = vrot.slane %v993, %v1000
        %vm1002 = vcmp.ne.s16.totalorder %v997, 0
        %vm1003 = vcmp.ne.s16.totalorder %v1001, 0
        %v1004 = vsel %vm1002, %v984, 0
        %v1005 = vsel %vm1003, %v979, 0
        %1006 = vrot.lane.b32.xlu0 %v819, 18
        %v1007 = vpop.permute.xlu0 %1006
        %1008 = vrot.lane.b32.xlu0 %v818, 18
        %v1009 = vpop.permute.xlu0 %1008
        %vm1010 = vcmask 146432
        %v1011 = vsel %vm1010, %v1009, %v1007
        %vm1013 = vcmask 146432
        %v1016 = vsel %vm1013, %v1007, %v1009
        %vm1018 = vmand %vm201, %vm836
        %vm1019 = vmand %vm202, %vm837
        %v1020 = vsel %vm1018, 1, 0
        %v1021 = vsel %vm1019, 1, 0
        %vm1022 = vcmp.eq.s32.totalorder %v1020, 1
        %vm1023 = vcmp.eq.s32.totalorder %v1021, 1
        %vm1024 = vmpackc.low %vm1023, %vm1022
        %v1025 = vsel %vm1024, 65537, 0
        %v1026 = vlaneseq
        %v1027 = vshrl.u32 %v1026, 7
        %v1028 = vsub.s32 0, %v1027
        %v1029 = vrot.slane %v1025, %v1028
        %v1030 = vlaneseq
        %v1031 = vshrl.u32 %v1030, 7
        %v1032 = vsub.s32 4, %v1031
        %v1033 = vrot.slane %v1025, %v1032
        %vm1034 = vcmp.ne.s16.totalorder %v1029, 0
        %vm1035 = vcmp.ne.s16.totalorder %v1033, 0
        %v1036 = vsel %vm1034, %v1016, 0
        %v1037 = vsel %vm1035, %v1011, 0
        %1038 = vrot.lane.b32.xlu0 %v819, 17
        %v1039 = vpop.permute.xlu0 %1038
        %1040 = vrot.lane.b32.xlu0 %v818, 17
        %v1041 = vpop.permute.xlu0 %1040
        %v1042 = vsel %vm242, %v1041, %v1039
        %v1046 = vsel %vm245, %v1039, %v1041
        %v1048 = vsel %vm266, %v1046, 0
        %v1049 = vsel %vm267, %v1042, 0
        %1050 = vrot.lane.b32.xlu0 %v819, 16
        %v1051 = vpop.permute.xlu0 %1050
        %1052 = vrot.lane.b32.xlu0 %v818, 16
        %v1053 = vpop.permute.xlu0 %1052
        %v1054 = vsel %vm274, %v1053, %v1051
        %v1058 = vsel %vm277, %v1051, %v1053
        %v1060 = vsel %vm298, %v1058, 0
        %v1061 = vsel %vm299, %v1054, 0
        %1062 = vrot.lane.b32.xlu0 %v819, 15
        %v1063 = vpop.permute.xlu0 %1062
        %1064 = vrot.lane.b32.xlu0 %v818, 15
        %v1065 = vpop.permute.xlu0 %1064
        %v1066 = vsel %vm306, %v1065, %v1063
        %v1070 = vsel %vm309, %v1063, %v1065
        %v1072 = vsel %vm330, %v1070, 0
        %v1073 = vsel %vm331, %v1066, 0
        %1074 = vrot.lane.b32.xlu0 %v819, 14
        %v1075 = vpop.permute.xlu0 %1074
        %1076 = vrot.lane.b32.xlu0 %v818, 14
        %v1077 = vpop.permute.xlu0 %1076
        %vm1078 = vcmask 113664
        %v1079 = vsel %vm1078, %v1077, %v1075
        %vm1081 = vcmask 113664
        %v1084 = vsel %vm1081, %v1075, %v1077
        %vm1086 = vmand %vm201, %vm842
        %vm1087 = vmand %vm202, %vm843
        %v1088 = vsel %vm1086, 1, 0
        %v1089 = vsel %vm1087, 1, 0
        %vm1090 = vcmp.eq.s32.totalorder %v1088, 1
        %vm1091 = vcmp.eq.s32.totalorder %v1089, 1
        %vm1092 = vmpackc.low %vm1091, %vm1090
        %v1093 = vsel %vm1092, 65537, 0
        %v1094 = vlaneseq
        %v1095 = vshrl.u32 %v1094, 7
        %v1096 = vsub.s32 0, %v1095
        %v1097 = vrot.slane %v1093, %v1096
        %v1098 = vlaneseq
        %v1099 = vshrl.u32 %v1098, 7
        %v1100 = vsub.s32 4, %v1099
        %v1101 = vrot.slane %v1093, %v1100
        %vm1102 = vcmp.ne.s16.totalorder %v1097, 0
        %vm1103 = vcmp.ne.s16.totalorder %v1101, 0
        %v1104 = vsel %vm1102, %v1084, 0
        %v1105 = vsel %vm1103, %v1079, 0
        %1106 = vrot.lane.b32.xlu0 %v819, 2
        %v1107 = vpop.permute.xlu0 %1106
        %1108 = vrot.lane.b32.xlu0 %v818, 2
        %v1109 = vpop.permute.xlu0 %1108
        %vm1110 = vcmask 15360
        %v1111 = vsel %vm1110, %v1109, %v1107
        %vm1113 = vcmask 15360
        %v1116 = vsel %vm1113, %v1107, %v1109
        %vm1118 = vmand %vm207, %vm836
        %vm1119 = vmand %vm208, %vm837
        %v1120 = vsel %vm1118, 1, 0
        %v1121 = vsel %vm1119, 1, 0
        %vm1122 = vcmp.eq.s32.totalorder %v1120, 1
        %vm1123 = vcmp.eq.s32.totalorder %v1121, 1
        %vm1124 = vmpackc.low %vm1123, %vm1122
        %v1125 = vsel %vm1124, 65537, 0
        %v1126 = vlaneseq
        %v1127 = vshrl.u32 %v1126, 7
        %v1128 = vsub.s32 0, %v1127
        %v1129 = vrot.slane %v1125, %v1128
        %v1130 = vlaneseq
        %v1131 = vshrl.u32 %v1130, 7
        %v1132 = vsub.s32 4, %v1131
        %v1133 = vrot.slane %v1125, %v1132
        %vm1134 = vcmp.ne.s16.totalorder %v1129, 0
        %vm1135 = vcmp.ne.s16.totalorder %v1133, 0
        %v1136 = vsel %vm1134, %v1116, 0
        %v1137 = vsel %vm1135, %v1111, 0
        %1138 = vrot.lane.b32.xlu0 %v819, 1
        %v1139 = vpop.permute.xlu0 %1138
        %1140 = vrot.lane.b32.xlu0 %v818, 1
        %v1141 = vpop.permute.xlu0 %1140
        %v1142 = vsel %vm338, %v1141, %v1139
        %v1146 = vsel %vm341, %v1139, %v1141
        %v1148 = vsel %vm362, %v1146, 0
        %v1149 = vsel %vm363, %v1142, 0
        %1150 = vrot.lane.b32.xlu0 %v818, 127
        %v1151 = vpop.permute.xlu0 %1150
        %1152 = vrot.lane.b32.xlu0 %v819, 127
        %v1153 = vpop.permute.xlu0 %1152
        %v1154 = vsel %vm370, %v1151, %v1153
        %v1158 = vsel %vm373, %v1153, %v1151
        %v1160 = vsel %vm394, %v1154, 0
        %v1161 = vsel %vm395, %v1158, 0
        %1162 = vrot.lane.b32.xlu0 %v818, 126
        %v1163 = vpop.permute.xlu0 %1162
        %1164 = vrot.lane.b32.xlu0 %v819, 126
        %v1165 = vpop.permute.xlu0 %1164
        %vm1166 = vcmask 1031168
        %v1167 = vsel %vm1166, %v1163, %v1165
        %vm1169 = vcmask 1031168
        %v1172 = vsel %vm1169, %v1165, %v1163
        %vm1174 = vmand %vm207, %vm842
        %vm1175 = vmand %vm208, %vm843
        %v1176 = vsel %vm1174, 1, 0
        %v1177 = vsel %vm1175, 1, 0
        %vm1178 = vcmp.eq.s32.totalorder %v1176, 1
        %vm1179 = vcmp.eq.s32.totalorder %v1177, 1
        %vm1180 = vmpackc.low %vm1179, %vm1178
        %v1181 = vsel %vm1180, 65537, 0
        %v1182 = vlaneseq
        %v1183 = vshrl.u32 %v1182, 7
        %v1184 = vsub.s32 0, %v1183
        %v1185 = vrot.slane %v1181, %v1184
        %v1186 = vlaneseq
        %v1187 = vshrl.u32 %v1186, 7
        %v1188 = vsub.s32 4, %v1187
        %v1189 = vrot.slane %v1181, %v1188
        %vm1190 = vcmp.ne.s16.totalorder %v1185, 0
        %vm1191 = vcmp.ne.s16.totalorder %v1189, 0
        %v1192 = vsel %vm1190, %v1167, 0
        %v1193 = vsel %vm1191, %v1172, 0
        %1194 = vrot.lane.b32.xlu0 %v818, 114
        %v1195 = vpop.permute.xlu0 %1194
        %1196 = vrot.lane.b32.xlu0 %v819, 114
        %v1197 = vpop.permute.xlu0 %1196
        %vm1198 = vcmask 932864
        %v1199 = vsel %vm1198, %v1195, %v1197
        %vm1201 = vcmask 932864
        %v1204 = vsel %vm1201, %v1197, %v1195
        %vm1206 = vmand %vm213, %vm836
        %vm1207 = vmand %vm214, %vm837
        %v1208 = vsel %vm1206, 1, 0
        %v1209 = vsel %vm1207, 1, 0
        %vm1210 = vcmp.eq.s32.totalorder %v1208, 1
        %vm1211 = vcmp.eq.s32.totalorder %v1209, 1
        %vm1212 = vmpackc.low %vm1211, %vm1210
        %v1213 = vsel %vm1212, 65537, 0
        %v1214 = vlaneseq
        %v1215 = vshrl.u32 %v1214, 7
        %v1216 = vsub.s32 0, %v1215
        %v1217 = vrot.slane %v1213, %v1216
        %v1218 = vlaneseq
        %v1219 = vshrl.u32 %v1218, 7
        %v1220 = vsub.s32 4, %v1219
        %v1221 = vrot.slane %v1213, %v1220
        %vm1222 = vcmp.ne.s16.totalorder %v1217, 0
        %vm1223 = vcmp.ne.s16.totalorder %v1221, 0
        %v1224 = vsel %vm1222, %v1199, 0
        %v1225 = vsel %vm1223, %v1204, 0
        %1226 = vrot.lane.b32.xlu0 %v818, 113
        %v1227 = vpop.permute.xlu0 %1226
        %1228 = vrot.lane.b32.xlu0 %v819, 113
        %v1229 = vpop.permute.xlu0 %1228
        %v1230 = vsel %vm402, %v1227, %v1229
        %v1234 = vsel %vm405, %v1229, %v1227
        %v1236 = vsel %vm426, %v1230, 0
        %v1237 = vsel %vm427, %v1234, 0
        %1238 = vrot.lane.b32.xlu0 %v818, 112
        %v1239 = vpop.permute.xlu0 %1238
        %1240 = vrot.lane.b32.xlu0 %v819, 112
        %v1241 = vpop.permute.xlu0 %1240
        %v1242 = vsel %vm434, %v1239, %v1241
        %v1246 = vsel %vm437, %v1241, %v1239
        %v1248 = vsel %vm458, %v1242, 0
        %v1249 = vsel %vm459, %v1246, 0
        %1250 = vrot.lane.b32.xlu0 %v818, 111
        %v1251 = vpop.permute.xlu0 %1250
        %1252 = vrot.lane.b32.xlu0 %v819, 111
        %v1253 = vpop.permute.xlu0 %1252
        %v1254 = vsel %vm466, %v1251, %v1253
        %v1258 = vsel %vm469, %v1253, %v1251
        %v1260 = vsel %vm490, %v1254, 0
        %v1261 = vsel %vm491, %v1258, 0
        %1262 = vrot.lane.b32.xlu0 %v818, 110
        %v1263 = vpop.permute.xlu0 %1262
        %1264 = vrot.lane.b32.xlu0 %v819, 110
        %v1265 = vpop.permute.xlu0 %1264
        %vm1266 = vcmask 900096
        %v1267 = vsel %vm1266, %v1263, %v1265
        %vm1269 = vcmask 900096
        %v1272 = vsel %vm1269, %v1265, %v1263
        %vm1274 = vmand %vm213, %vm842
        %vm1275 = vmand %vm214, %vm843
        %v1276 = vsel %vm1274, 1, 0
        %v1277 = vsel %vm1275, 1, 0
        %vm1278 = vcmp.eq.s32.totalorder %v1276, 1
        %vm1279 = vcmp.eq.s32.totalorder %v1277, 1
        %vm1280 = vmpackc.low %vm1279, %vm1278
        %v1281 = vsel %vm1280, 65537, 0
        %v1282 = vlaneseq
        %v1283 = vshrl.u32 %v1282, 7
        %v1284 = vsub.s32 0, %v1283
        %v1285 = vrot.slane %v1281, %v1284
        %v1286 = vlaneseq
        %v1287 = vshrl.u32 %v1286, 7
        %v1288 = vsub.s32 4, %v1287
        %v1289 = vrot.slane %v1281, %v1288
        %vm1290 = vcmp.ne.s16.totalorder %v1285, 0
        %vm1291 = vcmp.ne.s16.totalorder %v1289, 0
        %v1292 = vsel %vm1290, %v1267, 0
        %v1293 = vsel %vm1291, %v1272, 0
        %1294 = vrot.lane.b32.xlu0 %v818, 98
        %v1295 = vpop.permute.xlu0 %1294
        %1296 = vrot.lane.b32.xlu0 %v819, 98
        %v1297 = vpop.permute.xlu0 %1296
        %vm1298 = vcmask 801792
        %v1299 = vsel %vm1298, %v1295, %v1297
        %vm1301 = vcmask 801792
        %v1304 = vsel %vm1301, %v1297, %v1295
        %vm1306 = vmand %vm830, %vm836
        %vm1307 = vmand %vm831, %vm837
        %v1308 = vsel %vm1306, 1, 0
        %v1309 = vsel %vm1307, 1, 0
        %vm1310 = vcmp.eq.s32.totalorder %v1308, 1
        %vm1311 = vcmp.eq.s32.totalorder %v1309, 1
        %vm1312 = vmpackc.low %vm1311, %vm1310
        %v1313 = vsel %vm1312, 65537, 0
        %v1314 = vlaneseq
        %v1315 = vshrl.u32 %v1314, 7
        %v1316 = vsub.s32 0, %v1315
        %v1317 = vrot.slane %v1313, %v1316
        %v1318 = vlaneseq
        %v1319 = vshrl.u32 %v1318, 7
        %v1320 = vsub.s32 4, %v1319
        %v1321 = vrot.slane %v1313, %v1320
        %vm1322 = vcmp.ne.s16.totalorder %v1317, 0
        %vm1323 = vcmp.ne.s16.totalorder %v1321, 0
        %v1324 = vsel %vm1322, %v1299, 0
        %v1325 = vsel %vm1323, %v1304, 0
        %1326 = vrot.lane.b32.xlu0 %v818, 97
        %v1327 = vpop.permute.xlu0 %1326
        %1328 = vrot.lane.b32.xlu0 %v819, 97
        %v1329 = vpop.permute.xlu0 %1328
        %vm1330 = vcmask 793600
        %v1331 = vsel %vm1330, %v1327, %v1329
        %vm1333 = vcmask 793600
        %v1336 = vsel %vm1333, %v1329, %v1327
        %vm1338 = vmand %vm830, %vm219
        %vm1339 = vmand %vm831, %vm220
        %v1340 = vsel %vm1338, 1, 0
        %v1341 = vsel %vm1339, 1, 0
        %vm1342 = vcmp.eq.s32.totalorder %v1340, 1
        %vm1343 = vcmp.eq.s32.totalorder %v1341, 1
        %vm1344 = vmpackc.low %vm1343, %vm1342
        %v1345 = vsel %vm1344, 65537, 0
        %v1346 = vlaneseq
        %v1347 = vshrl.u32 %v1346, 7
        %v1348 = vsub.s32 0, %v1347
        %v1349 = vrot.slane %v1345, %v1348
        %v1350 = vlaneseq
        %v1351 = vshrl.u32 %v1350, 7
        %v1352 = vsub.s32 4, %v1351
        %v1353 = vrot.slane %v1345, %v1352
        %vm1354 = vcmp.ne.s16.totalorder %v1349, 0
        %vm1355 = vcmp.ne.s16.totalorder %v1353, 0
        %v1356 = vsel %vm1354, %v1331, 0
        %v1357 = vsel %vm1355, %v1336, 0
        %1358 = vrot.lane.b32.xlu0 %v818, 96
        %v1359 = vpop.permute.xlu0 %1358
        %1360 = vrot.lane.b32.xlu0 %v819, 96
        %v1361 = vpop.permute.xlu0 %1360
        %vm1362 = vcmask 785408
        %v1363 = vsel %vm1362, %v1359, %v1361
        %vm1365 = vcmask 785408
        %v1368 = vsel %vm1365, %v1361, %v1359
        %vm1370 = vmand %vm830, %vm225
        %vm1371 = vmand %vm831, %vm226
        %v1372 = vsel %vm1370, 1, 0
        %v1373 = vsel %vm1371, 1, 0
        %vm1374 = vcmp.eq.s32.totalorder %v1372, 1
        %vm1375 = vcmp.eq.s32.totalorder %v1373, 1
        %vm1376 = vmpackc.low %vm1375, %vm1374
        %v1377 = vsel %vm1376, 65537, 0
        %v1378 = vlaneseq
        %v1379 = vshrl.u32 %v1378, 7
        %v1380 = vsub.s32 0, %v1379
        %v1381 = vrot.slane %v1377, %v1380
        %v1382 = vlaneseq
        %v1383 = vshrl.u32 %v1382, 7
        %v1384 = vsub.s32 4, %v1383
        %v1385 = vrot.slane %v1377, %v1384
        %vm1386 = vcmp.ne.s16.totalorder %v1381, 0
        %vm1387 = vcmp.ne.s16.totalorder %v1385, 0
        %v1388 = vsel %vm1386, %v1363, 0
        %v1389 = vsel %vm1387, %v1368, 0
        %1390 = vrot.lane.b32.xlu0 %v818, 95
        %v1391 = vpop.permute.xlu0 %1390
        %1392 = vrot.lane.b32.xlu0 %v819, 95
        %v1393 = vpop.permute.xlu0 %1392
        %vm1394 = vcmask 777216
        %v1395 = vsel %vm1394, %v1391, %v1393
        %vm1397 = vcmask 777216
        %v1400 = vsel %vm1397, %v1393, %v1391
        %vm1402 = vmand %vm830, %vm231
        %vm1403 = vmand %vm831, %vm232
        %v1404 = vsel %vm1402, 1, 0
        %v1405 = vsel %vm1403, 1, 0
        %vm1406 = vcmp.eq.s32.totalorder %v1404, 1
        %vm1407 = vcmp.eq.s32.totalorder %v1405, 1
        %vm1408 = vmpackc.low %vm1407, %vm1406
        %v1409 = vsel %vm1408, 65537, 0
        %v1410 = vlaneseq
        %v1411 = vshrl.u32 %v1410, 7
        %v1412 = vsub.s32 0, %v1411
        %v1413 = vrot.slane %v1409, %v1412
        %v1414 = vlaneseq
        %v1415 = vshrl.u32 %v1414, 7
        %v1416 = vsub.s32 4, %v1415
        %v1417 = vrot.slane %v1409, %v1416
        %vm1418 = vcmp.ne.s16.totalorder %v1413, 0
        %vm1419 = vcmp.ne.s16.totalorder %v1417, 0
        %v1420 = vsel %vm1418, %v1395, 0
        %v1421 = vsel %vm1419, %v1400, 0
        %1422 = vrot.lane.b32.xlu0 %v818, 94
        %v1423 = vpop.permute.xlu0 %1422
        %1424 = vrot.lane.b32.xlu0 %v819, 94
        %v1425 = vpop.permute.xlu0 %1424
        %vm1426 = vcmask 769024
        %v1427 = vsel %vm1426, %v1423, %v1425
        %vm1429 = vcmask 769024
        %v1432 = vsel %vm1429, %v1425, %v1423
        %vm1434 = vmand %vm830, %vm842
        %vm1435 = vmand %vm831, %vm843
        %v1436 = vsel %vm1434, 1, 0
        %v1437 = vsel %vm1435, 1, 0
        %vm1438 = vcmp.eq.s32.totalorder %v1436, 1
        %vm1439 = vcmp.eq.s32.totalorder %v1437, 1
        %vm1440 = vmpackc.low %vm1439, %vm1438
        %v1441 = vsel %vm1440, 65537, 0
        %v1442 = vlaneseq
        %v1443 = vshrl.u32 %v1442, 7
        %v1444 = vsub.s32 0, %v1443
        %v1445 = vrot.slane %v1441, %v1444
        %v1446 = vlaneseq
        %v1447 = vshrl.u32 %v1446, 7
        %v1448 = vsub.s32 4, %v1447
        %v1449 = vrot.slane %v1441, %v1448
        %vm1450 = vcmp.ne.s16.totalorder %v1445, 0
        %vm1451 = vcmp.ne.s16.totalorder %v1449, 0
        %v1452 = vsel %vm1450, %v1427, 0
        %v1453 = vsel %vm1451, %v1432, 0
        %v1456 = vrot.slane %v908, 4
        %v1457 = vrot.slane %v909, 4
        %v1460 = vrot.slane %v972, 4
        %v1461 = vrot.slane %v973, 4
        %v1464 = vrot.slane %v1036, 4
        %v1465 = vrot.slane %v1037, 4
        %v1468 = vrot.slane %v1060, 4
        %v1469 = vrot.slane %v1061, 4
        %v1472 = vrot.slane %v1104, 4
        %v1473 = vrot.slane %v1105, 4
        %v1476 = vrot.slane %v1148, 4
        %v1477 = vrot.slane %v1149, 4
        %v1480 = vrot.slane %v1160, 4
        %v1481 = vrot.slane %v1161, 4
        %v1484 = vrot.slane %v1224, 4
        %v1485 = vrot.slane %v1225, 4
        %v1488 = vsel %vm510, %v876, %v1456
        %v1492 = vsel %vm510, %v877, %v1457
        %v1496 = vsel %vm510, %v940, %v1460
        %v1500 = vsel %vm510, %v941, %v1461
        %v1504 = vsel %vm510, %v1004, %v1464
        %v1508 = vsel %vm510, %v1005, %v1465
        %v1512 = vsel %vm510, %v1048, %v1468
        %v1516 = vsel %vm510, %v1049, %v1469
        %v1520 = vsel %vm510, %v1072, %v1472
        %v1524 = vsel %vm510, %v1073, %v1473
        %v1528 = vsel %vm510, %v1136, %v1476
        %v1532 = vsel %vm510, %v1137, %v1477
        %v1536 = vsel %vm510, %v818, %v1480
        %v1540 = vsel %vm510, %v819, %v1481
        %v1544 = vsel %vm510, %v1192, %v1484
        %v1548 = vsel %vm510, %v1193, %v1485
        %v1552 = vrot.slane %v1248, 4
        %v1553 = vrot.slane %v1249, 4
        %v1556 = vrot.slane %v1292, 4
        %v1557 = vrot.slane %v1293, 4
        %v1560 = vrot.slane %v1356, 4
        %v1561 = vrot.slane %v1357, 4
        %v1564 = vrot.slane %v1420, 4
        %v1565 = vrot.slane %v1421, 4
        %v1568 = vsel %vm510, %v1236, %v1552
        %v1572 = vsel %vm510, %v1237, %v1553
        %v1576 = vsel %vm510, %v1260, %v1556
        %v1580 = vsel %vm510, %v1261, %v1557
        %v1584 = vsel %vm510, %v1324, %v1560
        %v1588 = vsel %vm510, %v1325, %v1561
        %v1592 = vsel %vm510, %v1388, %v1564
        %v1596 = vsel %vm510, %v1389, %v1565
        %v1598 = vld [vmem:[#allocation2 + $0x40] sm:$0xff]
        %v1599 = vld [vmem:[#allocation2 + $0x48] sm:$0xff]
        %v1600 = vld [vmem:[#allocation2 + $0x60] sm:$0xff]
        %v1601 = vld [vmem:[#allocation2 + $0x68] sm:$0xff]
        %v1602 = vpack.c.bf16 %v1600, %v1598
        %v1603 = vpack.c.bf16 %v1601, %v1599
        %v1604 = vld [vmem:[%s2] sm:$0xff]
        %v1605 = vld [vmem:[%s2 + $0x8] sm:$0xff]
        %1607 = vset.pattern.permute.xlu0 2
        %1608 = vperm.xlu0 %1607, %v1604
        %v1609 = vpop.permute.xlu0 %1608
        %1612 = vset.pattern.permute.xlu0 2
        %1613 = vperm.xlu0 %1612, %v1605
        %v1614 = vpop.permute.xlu0 %1613
        %v1617 = vsel %vm551, %v1603, 0
        %v1620 = vsel %vm510, %v1452, 0
        %v1623 = vsel %vm510, %v1453, 0
        %1625 = vmatprep.subr.bf16.mxu0 %v1492
        %1626 = vmatpush1.bf16.msra.mxu0 %v1488
        %1627 = vmatprep.subr.bf16.mxu0 %v1500
        %1628 = vmatpush1.bf16.msra.mxu0 %v1496
        %1629 = vmatprep.subr.bf16.mxu0 %v1508
        %1630 = vmatpush1.bf16.msra.mxu0 %v1504
        %1631 = vmatprep.subr.bf16.mxu0 %v1516
        %1632 = vmatpush1.bf16.msra.mxu0 %v1512
        %1633 = vmatprep.subr.bf16.mxu0 %v1524
        %1634 = vmatpush1.bf16.msra.mxu0 %v1520
        %1635 = vmatprep.subr.bf16.mxu0 %v1532
        %1636 = vmatpush1.bf16.msra.mxu0 %v1528
        %1637 = vmatprep.subr.bf16.mxu0 %v1540
        %1638 = vmatpush1.bf16.msra.mxu0 %v1536
        %1639 = vmatprep.subr.bf16.mxu0 %v1548
        %1640 = vmatpush1.bf16.msra.mxu0 %v1544
        %1641 = vmatprep.subr.bf16.mxu0 %v1572
        %1642 = vmatpush1.bf16.msra.mxu0 %v1568
        %1643 = vmatprep.subr.bf16.mxu0 %v1580
        %1644 = vmatpush1.bf16.msra.mxu0 %v1576
        %1645 = vmatprep.subr.bf16.mxu0 %v1588
        %1646 = vmatpush1.bf16.msra.mxu0 %v1584
        %1647 = vmatprep.subr.bf16.mxu0 %v1596
        %1648 = vmatpush1.bf16.msra.mxu0 %v1592
        %1649 = vmatprep.subr.bf16.mxu0 %v1623
        %1650 = vmatpush1.bf16.msra.mxu0 %v1620
        %1651 = vmatprep.subr.bf16.mxu0 0
        %1652 = vmatpush1.bf16.msra.mxu0 0
        %1653 = vmatprep.subr.bf16.mxu0 0
        %1654 = vmatpush1.bf16.msra.mxu0 0
        %1655 = vmatprep.subr.bf16.mxu0 0
        %1656 = vmatpush1.bf16.msra.mxu0 0
        %1657 = vmatprep.mubr.bf16.mxu0 %v1617
        %1658 = vmatmul.mubr.bf16.gmra.mrb[0].mxu0 %v1602
        %v1659 = vpop.f32.mrb[0].mxu0
        %v1660 = vadd.f32 %v1609, %v1659
        %v1661 = vpop.f32.mrb[0].mxu0
        %v1662 = vadd.f32 %v1609, %v1661
        %v1663 = vpop.f32.mrb[0].mxu0
        %v1664 = vadd.f32 %v1614, %v1663
        %v1665 = vpop.f32.mrb[0].mxu0
        %v1666 = vadd.f32 %v1614, %v1665
        %1667 = vdwg.mxu0
        %vm1668 = vcmp.ge.f32.partialorder %v1660, 0.0
        %vm1669 = vcmp.ge.f32.partialorder %v1662, 0.0
        %vm1670 = vcmp.ge.f32.partialorder %v1664, 0.0
        %vm1671 = vcmp.ge.f32.partialorder %v1666, 0.0
        %v1672 = vmul.f32 %v1660, 0.01
        %v1673 = vmul.f32 %v1662, 0.01
        %v1674 = vmul.f32 %v1664, 0.01
        %v1675 = vmul.f32 %v1666, 0.01
        %v1676 = vsel %vm1668, %v1660, %v1672
        %v1677 = vsel %vm1669, %v1662, %v1673
        %v1678 = vsel %vm1670, %v1664, %v1674
        %v1679 = vsel %vm1671, %v1666, %v1675
        %v1680 = vpack.c.bf16 %v1678, %v1676
        %v1681 = vpack.c.bf16 %v1679, %v1677
        %1683 = vrot.lane.b32.xlu0 %v1680, 126
        %v1684 = vpop.permute.xlu0 %1683
        %1686 = vrot.lane.b32.xlu0 %v1680, 124
        %v1687 = vpop.permute.xlu0 %1686
        %1689 = vrot.lane.b32.xlu0 %v1680, 122
        %v1690 = vpop.permute.xlu0 %1689
        %1692 = vrot.lane.b32.xlu0 %v1680, 120
        %v1693 = vpop.permute.xlu0 %1692
        %1695 = vrot.lane.b32.xlu0 %v1680, 118
        %v1696 = vpop.permute.xlu0 %1695
        %1698 = vrot.lane.b32.xlu0 %v1680, 116
        %v1699 = vpop.permute.xlu0 %1698
        %1701 = vrot.lane.b32.xlu0 %v1680, 114
        %v1702 = vpop.permute.xlu0 %1701
        %1704 = vrot.lane.b32.xlu0 %v1680, 112
        %v1705 = vpop.permute.xlu0 %1704
        %1707 = vrot.lane.b32.xlu0 %v1680, 110
        %v1708 = vpop.permute.xlu0 %1707
        %1710 = vrot.lane.b32.xlu0 %v1680, 108
        %v1711 = vpop.permute.xlu0 %1710
        %1713 = vrot.lane.b32.xlu0 %v1680, 106
        %v1714 = vpop.permute.xlu0 %1713
        %1716 = vrot.lane.b32.xlu0 %v1680, 104
        %v1717 = vpop.permute.xlu0 %1716
        %1719 = vrot.lane.b32.xlu0 %v1680, 102
        %v1720 = vpop.permute.xlu0 %1719
        %1722 = vrot.lane.b32.xlu0 %v1680, 100
        %v1723 = vpop.permute.xlu0 %1722
        %1725 = vrot.lane.b32.xlu0 %v1680, 98
        %v1726 = vpop.permute.xlu0 %1725
        %1728 = vrot.lane.b32.xlu0 %v1680, 96
        %v1729 = vpop.permute.xlu0 %1728
        %1731 = vrot.lane.b32.xlu0 %v1680, 94
        %v1732 = vpop.permute.xlu0 %1731
        %1734 = vrot.lane.b32.xlu0 %v1680, 92
        %v1735 = vpop.permute.xlu0 %1734
        %1737 = vrot.lane.b32.xlu0 %v1680, 90
        %v1738 = vpop.permute.xlu0 %1737
        %1740 = vrot.lane.b32.xlu0 %v1680, 88
        %v1741 = vpop.permute.xlu0 %1740
        %1743 = vrot.lane.b32.xlu0 %v1680, 86
        %v1744 = vpop.permute.xlu0 %1743
        %1746 = vrot.lane.b32.xlu0 %v1680, 84
        %v1747 = vpop.permute.xlu0 %1746
        %1749 = vrot.lane.b32.xlu0 %v1680, 82
        %v1750 = vpop.permute.xlu0 %1749
        %1752 = vrot.lane.b32.xlu0 %v1680, 80
        %v1753 = vpop.permute.xlu0 %1752
        %1755 = vrot.lane.b32.xlu0 %v1680, 78
        %v1756 = vpop.permute.xlu0 %1755
        %1758 = vrot.lane.b32.xlu0 %v1680, 76
        %v1759 = vpop.permute.xlu0 %1758
        %1761 = vrot.lane.b32.xlu0 %v1680, 74
        %v1762 = vpop.permute.xlu0 %1761
        %1764 = vrot.lane.b32.xlu0 %v1680, 72
        %v1765 = vpop.permute.xlu0 %1764
        %1767 = vrot.lane.b32.xlu0 %v1680, 70
        %v1768 = vpop.permute.xlu0 %1767
        %1770 = vrot.lane.b32.xlu0 %v1680, 68
        %v1771 = vpop.permute.xlu0 %1770
        %1773 = vrot.lane.b32.xlu0 %v1680, 66
        %v1774 = vpop.permute.xlu0 %1773
        %1776 = vrot.lane.b32.xlu0 %v1680, 64
        %v1777 = vpop.permute.xlu0 %1776
        %1779 = vrot.lane.b32.xlu0 %v1680, 62
        %v1780 = vpop.permute.xlu0 %1779
        %1782 = vrot.lane.b32.xlu0 %v1680, 60
        %v1783 = vpop.permute.xlu0 %1782
        %1785 = vrot.lane.b32.xlu0 %v1680, 58
        %v1786 = vpop.permute.xlu0 %1785
        %1788 = vrot.lane.b32.xlu0 %v1680, 56
        %v1789 = vpop.permute.xlu0 %1788
        %1791 = vrot.lane.b32.xlu0 %v1680, 54
        %v1792 = vpop.permute.xlu0 %1791
        %1794 = vrot.lane.b32.xlu0 %v1680, 52
        %v1795 = vpop.permute.xlu0 %1794
        %1797 = vrot.lane.b32.xlu0 %v1680, 50
        %v1798 = vpop.permute.xlu0 %1797
        %1800 = vrot.lane.b32.xlu0 %v1680, 48
        %v1801 = vpop.permute.xlu0 %1800
        %1803 = vrot.lane.b32.xlu0 %v1680, 46
        %v1804 = vpop.permute.xlu0 %1803
        %1806 = vrot.lane.b32.xlu0 %v1680, 44
        %v1807 = vpop.permute.xlu0 %1806
        %1809 = vrot.lane.b32.xlu0 %v1680, 42
        %v1810 = vpop.permute.xlu0 %1809
        %1812 = vrot.lane.b32.xlu0 %v1680, 40
        %v1813 = vpop.permute.xlu0 %1812
        %1815 = vrot.lane.b32.xlu0 %v1680, 38
        %v1816 = vpop.permute.xlu0 %1815
        %1818 = vrot.lane.b32.xlu0 %v1680, 36
        %v1819 = vpop.permute.xlu0 %1818
        %1821 = vrot.lane.b32.xlu0 %v1680, 34
        %v1822 = vpop.permute.xlu0 %1821
        %1824 = vrot.lane.b32.xlu0 %v1680, 32
        %v1825 = vpop.permute.xlu0 %1824
        %1827 = vrot.lane.b32.xlu0 %v1680, 30
        %v1828 = vpop.permute.xlu0 %1827
        %1830 = vrot.lane.b32.xlu0 %v1680, 28
        %v1831 = vpop.permute.xlu0 %1830
        %1833 = vrot.lane.b32.xlu0 %v1680, 26
        %v1834 = vpop.permute.xlu0 %1833
        %1836 = vrot.lane.b32.xlu0 %v1680, 24
        %v1837 = vpop.permute.xlu0 %1836
        %1839 = vrot.lane.b32.xlu0 %v1680, 22
        %v1840 = vpop.permute.xlu0 %1839
        %1842 = vrot.lane.b32.xlu0 %v1680, 20
        %v1843 = vpop.permute.xlu0 %1842
        %1845 = vrot.lane.b32.xlu0 %v1680, 18
        %v1846 = vpop.permute.xlu0 %1845
        %1848 = vrot.lane.b32.xlu0 %v1680, 16
        %v1849 = vpop.permute.xlu0 %1848
        %1851 = vrot.lane.b32.xlu0 %v1680, 14
        %v1852 = vpop.permute.xlu0 %1851
        %1854 = vrot.lane.b32.xlu0 %v1680, 12
        %v1855 = vpop.permute.xlu0 %1854
        %1857 = vrot.lane.b32.xlu0 %v1680, 10
        %v1858 = vpop.permute.xlu0 %1857
        %1860 = vrot.lane.b32.xlu0 %v1680, 8
        %v1861 = vpop.permute.xlu0 %1860
        %1863 = vrot.lane.b32.xlu0 %v1680, 6
        %v1864 = vpop.permute.xlu0 %1863
        %1866 = vrot.lane.b32.xlu0 %v1680, 4
        %v1867 = vpop.permute.xlu0 %1866
        %1869 = vrot.lane.b32.xlu0 %v1680, 2
        %v1870 = vpop.permute.xlu0 %1869
        %1873 = vrot.lane.b32.xlu0 %v1681, 126
        %v1874 = vpop.permute.xlu0 %1873
        %1876 = vrot.lane.b32.xlu0 %v1681, 124
        %v1877 = vpop.permute.xlu0 %1876
        %1879 = vrot.lane.b32.xlu0 %v1681, 122
        %v1880 = vpop.permute.xlu0 %1879
        %1882 = vrot.lane.b32.xlu0 %v1681, 120
        %v1883 = vpop.permute.xlu0 %1882
        %1885 = vrot.lane.b32.xlu0 %v1681, 118
        %v1886 = vpop.permute.xlu0 %1885
        %1888 = vrot.lane.b32.xlu0 %v1681, 116
        %v1889 = vpop.permute.xlu0 %1888
        %1891 = vrot.lane.b32.xlu0 %v1681, 114
        %v1892 = vpop.permute.xlu0 %1891
        %1894 = vrot.lane.b32.xlu0 %v1681, 112
        %v1895 = vpop.permute.xlu0 %1894
        %1897 = vrot.lane.b32.xlu0 %v1681, 110
        %v1898 = vpop.permute.xlu0 %1897
        %1900 = vrot.lane.b32.xlu0 %v1681, 108
        %v1901 = vpop.permute.xlu0 %1900
        %1903 = vrot.lane.b32.xlu0 %v1681, 106
        %v1904 = vpop.permute.xlu0 %1903
        %1906 = vrot.lane.b32.xlu0 %v1681, 104
        %v1907 = vpop.permute.xlu0 %1906
        %1909 = vrot.lane.b32.xlu0 %v1681, 102
        %v1910 = vpop.permute.xlu0 %1909
        %1912 = vrot.lane.b32.xlu0 %v1681, 100
        %v1913 = vpop.permute.xlu0 %1912
        %1915 = vrot.lane.b32.xlu0 %v1681, 98
        %v1916 = vpop.permute.xlu0 %1915
        %1918 = vrot.lane.b32.xlu0 %v1681, 96
        %v1919 = vpop.permute.xlu0 %1918
        %1921 = vrot.lane.b32.xlu0 %v1681, 94
        %v1922 = vpop.permute.xlu0 %1921
        %1924 = vrot.lane.b32.xlu0 %v1681, 92
        %v1925 = vpop.permute.xlu0 %1924
        %1927 = vrot.lane.b32.xlu0 %v1681, 90
        %v1928 = vpop.permute.xlu0 %1927
        %1930 = vrot.lane.b32.xlu0 %v1681, 88
        %v1931 = vpop.permute.xlu0 %1930
        %1933 = vrot.lane.b32.xlu0 %v1681, 86
        %v1934 = vpop.permute.xlu0 %1933
        %1936 = vrot.lane.b32.xlu0 %v1681, 84
        %v1937 = vpop.permute.xlu0 %1936
        %1939 = vrot.lane.b32.xlu0 %v1681, 82
        %v1940 = vpop.permute.xlu0 %1939
        %1942 = vrot.lane.b32.xlu0 %v1681, 80
        %v1943 = vpop.permute.xlu0 %1942
        %1945 = vrot.lane.b32.xlu0 %v1681, 78
        %v1946 = vpop.permute.xlu0 %1945
        %1948 = vrot.lane.b32.xlu0 %v1681, 76
        %v1949 = vpop.permute.xlu0 %1948
        %1951 = vrot.lane.b32.xlu0 %v1681, 74
        %v1952 = vpop.permute.xlu0 %1951
        %1954 = vrot.lane.b32.xlu0 %v1681, 72
        %v1955 = vpop.permute.xlu0 %1954
        %1957 = vrot.lane.b32.xlu0 %v1681, 70
        %v1958 = vpop.permute.xlu0 %1957
        %1960 = vrot.lane.b32.xlu0 %v1681, 68
        %v1961 = vpop.permute.xlu0 %1960
        %1963 = vrot.lane.b32.xlu0 %v1681, 66
        %v1964 = vpop.permute.xlu0 %1963
        %1966 = vrot.lane.b32.xlu0 %v1681, 64
        %v1967 = vpop.permute.xlu0 %1966
        %1969 = vrot.lane.b32.xlu0 %v1681, 62
        %v1970 = vpop.permute.xlu0 %1969
        %1972 = vrot.lane.b32.xlu0 %v1681, 60
        %v1973 = vpop.permute.xlu0 %1972
        %1975 = vrot.lane.b32.xlu0 %v1681, 58
        %v1976 = vpop.permute.xlu0 %1975
        %1978 = vrot.lane.b32.xlu0 %v1681, 56
        %v1979 = vpop.permute.xlu0 %1978
        %1981 = vrot.lane.b32.xlu0 %v1681, 54
        %v1982 = vpop.permute.xlu0 %1981
        %1984 = vrot.lane.b32.xlu0 %v1681, 52
        %v1985 = vpop.permute.xlu0 %1984
        %1987 = vrot.lane.b32.xlu0 %v1681, 50
        %v1988 = vpop.permute.xlu0 %1987
        %1990 = vrot.lane.b32.xlu0 %v1681, 48
        %v1991 = vpop.permute.xlu0 %1990
        %1993 = vrot.lane.b32.xlu0 %v1681, 46
        %v1994 = vpop.permute.xlu0 %1993
        %1996 = vrot.lane.b32.xlu0 %v1681, 44
        %v1997 = vpop.permute.xlu0 %1996
        %1999 = vrot.lane.b32.xlu0 %v1681, 42
        %v2000 = vpop.permute.xlu0 %1999
        %2002 = vrot.lane.b32.xlu0 %v1681, 40
        %v2003 = vpop.permute.xlu0 %2002
        %2005 = vrot.lane.b32.xlu0 %v1681, 38
        %v2006 = vpop.permute.xlu0 %2005
        %2008 = vrot.lane.b32.xlu0 %v1681, 36
        %v2009 = vpop.permute.xlu0 %2008
        %2011 = vrot.lane.b32.xlu0 %v1681, 34
        %v2012 = vpop.permute.xlu0 %2011
        %2014 = vrot.lane.b32.xlu0 %v1681, 32
        %v2015 = vpop.permute.xlu0 %2014
        %2017 = vrot.lane.b32.xlu0 %v1681, 30
        %v2018 = vpop.permute.xlu0 %2017
        %2020 = vrot.lane.b32.xlu0 %v1681, 28
        %v2021 = vpop.permute.xlu0 %2020
        %2023 = vrot.lane.b32.xlu0 %v1681, 26
        %v2024 = vpop.permute.xlu0 %2023
        %2026 = vrot.lane.b32.xlu0 %v1681, 24
        %v2027 = vpop.permute.xlu0 %2026
        %2029 = vrot.lane.b32.xlu0 %v1681, 22
        %v2030 = vpop.permute.xlu0 %2029
        %2032 = vrot.lane.b32.xlu0 %v1681, 20
        %v2033 = vpop.permute.xlu0 %2032
        %2035 = vrot.lane.b32.xlu0 %v1681, 18
        %v2036 = vpop.permute.xlu0 %2035
        %2038 = vrot.lane.b32.xlu0 %v1681, 16
        %v2039 = vpop.permute.xlu0 %2038
        %2041 = vrot.lane.b32.xlu0 %v1681, 14
        %v2042 = vpop.permute.xlu0 %2041
        %2044 = vrot.lane.b32.xlu0 %v1681, 12
        %v2045 = vpop.permute.xlu0 %2044
        %2047 = vrot.lane.b32.xlu0 %v1681, 10
        %v2048 = vpop.permute.xlu0 %2047
        %2050 = vrot.lane.b32.xlu0 %v1681, 8
        %v2051 = vpop.permute.xlu0 %2050
        %2053 = vrot.lane.b32.xlu0 %v1681, 6
        %v2054 = vpop.permute.xlu0 %2053
        %2056 = vrot.lane.b32.xlu0 %v1681, 4
        %v2057 = vpop.permute.xlu0 %2056
        %2059 = vrot.lane.b32.xlu0 %v1681, 2
        %v2060 = vpop.permute.xlu0 %2059
        %v2062 = vcombine.low %v1680, %v1693
        %v2063 = vcombine.high %v1680, %v1693
        %v2065 = vunpack.c.l.s4 1983009808
        %v2066 = vunpack.c.0.s8 %v2065
        %v2067 = vlaneseq
        %v2068 = vshrl.u32 %v2067, 7
        %v2069 = vsub.s32 %v2066, %v2068
        %v2070 = vrot.slane %v2062, %v2069
        %v2072 = vunpack.c.l.s4 1983009808
        %v2073 = vunpack.c.0.s8 %v2072
        %v2074 = vlaneseq
        %v2075 = vshrl.u32 %v2074, 7
        %v2076 = vsub.s32 %v2073, %v2075
        %v2077 = vrot.slane %v2063, %v2076
        %v2078 = vcombine.low %v1687, %v1699
        %v2079 = vcombine.high %v1687, %v1699
        %v2081 = vunpack.c.l.s4 1983009808
        %v2082 = vunpack.c.0.s8 %v2081
        %v2083 = vlaneseq
        %v2084 = vshrl.u32 %v2083, 7
        %v2085 = vsub.s32 %v2082, %v2084
        %v2086 = vrot.slane %v2078, %v2085
        %v2088 = vunpack.c.l.s4 1983009808
        %v2089 = vunpack.c.0.s8 %v2088
        %v2090 = vlaneseq
        %v2091 = vshrl.u32 %v2090, 7
        %v2092 = vsub.s32 %v2089, %v2091
        %v2093 = vrot.slane %v2079, %v2092
        %v2094 = vcombine.low %v1705, %v1717
        %v2095 = vcombine.high %v1705, %v1717
        %v2097 = vunpack.c.l.s4 1983009808
        %v2098 = vunpack.c.0.s8 %v2097
        %v2099 = vlaneseq
        %v2100 = vshrl.u32 %v2099, 7
        %v2101 = vsub.s32 %v2098, %v2100
        %v2102 = vrot.slane %v2094, %v2101
        %v2104 = vunpack.c.l.s4 1983009808
        %v2105 = vunpack.c.0.s8 %v2104
        %v2106 = vlaneseq
        %v2107 = vshrl.u32 %v2106, 7
        %v2108 = vsub.s32 %v2105, %v2107
        %v2109 = vrot.slane %v2095, %v2108
        %v2110 = vcombine.low %v1711, %v1723
        %v2111 = vcombine.high %v1711, %v1723
        %v2113 = vunpack.c.l.s4 1983009808
        %v2114 = vunpack.c.0.s8 %v2113
        %v2115 = vlaneseq
        %v2116 = vshrl.u32 %v2115, 7
        %v2117 = vsub.s32 %v2114, %v2116
        %v2118 = vrot.slane %v2110, %v2117
        %v2120 = vunpack.c.l.s4 1983009808
        %v2121 = vunpack.c.0.s8 %v2120
        %v2122 = vlaneseq
        %v2123 = vshrl.u32 %v2122, 7
        %v2124 = vsub.s32 %v2121, %v2123
        %v2125 = vrot.slane %v2111, %v2124
        %v2126 = vcombine.low %v2070, %v2086
        %v2127 = vcombine.high %v2070, %v2086
        %v2129 = vunpack.c.l.s4 1934713408
        %v2130 = vunpack.c.0.s8 %v2129
        %v2131 = vlaneseq
        %v2132 = vshrl.u32 %v2131, 7
        %v2133 = vsub.s32 %v2130, %v2132
        %v2134 = vrot.slane %v2126, %v2133
        %v2136 = vunpack.c.l.s4 1934713408
        %v2137 = vunpack.c.0.s8 %v2136
        %v2138 = vlaneseq
        %v2139 = vshrl.u32 %v2138, 7
        %v2140 = vsub.s32 %v2137, %v2139
        %v2141 = vrot.slane %v2127, %v2140
        %v2142 = vcombine.low %v2077, %v2093
        %v2143 = vcombine.high %v2077, %v2093
        %v2145 = vunpack.c.l.s4 1934713408
        %v2146 = vunpack.c.0.s8 %v2145
        %v2147 = vlaneseq
        %v2148 = vshrl.u32 %v2147, 7
        %v2149 = vsub.s32 %v2146, %v2148
        %v2150 = vrot.slane %v2142, %v2149
        %v2152 = vunpack.c.l.s4 1934713408
        %v2153 = vunpack.c.0.s8 %v2152
        %v2154 = vlaneseq
        %v2155 = vshrl.u32 %v2154, 7
        %v2156 = vsub.s32 %v2153, %v2155
        %v2157 = vrot.slane %v2143, %v2156
        %v2158 = vcombine.low %v2102, %v2118
        %v2159 = vcombine.high %v2102, %v2118
        %v2161 = vunpack.c.l.s4 1934713408
        %v2162 = vunpack.c.0.s8 %v2161
        %v2163 = vlaneseq
        %v2164 = vshrl.u32 %v2163, 7
        %v2165 = vsub.s32 %v2162, %v2164
        %v2166 = vrot.slane %v2158, %v2165
        %v2168 = vunpack.c.l.s4 1934713408
        %v2169 = vunpack.c.0.s8 %v2168
        %v2170 = vlaneseq
        %v2171 = vshrl.u32 %v2170, 7
        %v2172 = vsub.s32 %v2169, %v2171
        %v2173 = vrot.slane %v2159, %v2172
        %v2174 = vcombine.low %v2109, %v2125
        %v2175 = vcombine.high %v2109, %v2125
        %v2177 = vunpack.c.l.s4 1934713408
        %v2178 = vunpack.c.0.s8 %v2177
        %v2179 = vlaneseq
        %v2180 = vshrl.u32 %v2179, 7
        %v2181 = vsub.s32 %v2178, %v2180
        %v2182 = vrot.slane %v2174, %v2181
        %v2184 = vunpack.c.l.s4 1934713408
        %v2185 = vunpack.c.0.s8 %v2184
        %v2186 = vlaneseq
        %v2187 = vshrl.u32 %v2186, 7
        %v2188 = vsub.s32 %v2185, %v2187
        %v2189 = vrot.slane %v2175, %v2188
        %v2190 = vcombine.low %v2134, %v2166
        %v2191 = vcombine.high %v2134, %v2166
        %v2192 = vcombine.low %v2141, %v2173
        %v2193 = vcombine.high %v2141, %v2173
        %v2194 = vcombine.low %v2150, %v2182
        %v2195 = vcombine.high %v2150, %v2182
        %v2196 = vcombine.low %v2157, %v2189
        %v2197 = vcombine.high %v2157, %v2189
        %v2198 = vcombine.low %v1684, %v1696
        %v2199 = vcombine.high %v1684, %v1696
        %v2201 = vunpack.c.l.s4 1983009808
        %v2202 = vunpack.c.0.s8 %v2201
        %v2203 = vlaneseq
        %v2204 = vshrl.u32 %v2203, 7
        %v2205 = vsub.s32 %v2202, %v2204
        %v2206 = vrot.slane %v2198, %v2205
        %v2208 = vunpack.c.l.s4 1983009808
        %v2209 = vunpack.c.0.s8 %v2208
        %v2210 = vlaneseq
        %v2211 = vshrl.u32 %v2210, 7
        %v2212 = vsub.s32 %v2209, %v2211
        %v2213 = vrot.slane %v2199, %v2212
        %v2214 = vcombine.low %v1690, %v1702
        %v2215 = vcombine.high %v1690, %v1702
        %v2217 = vunpack.c.l.s4 1983009808
        %v2218 = vunpack.c.0.s8 %v2217
        %v2219 = vlaneseq
        %v2220 = vshrl.u32 %v2219, 7
        %v2221 = vsub.s32 %v2218, %v2220
        %v2222 = vrot.slane %v2214, %v2221
        %v2224 = vunpack.c.l.s4 1983009808
        %v2225 = vunpack.c.0.s8 %v2224
        %v2226 = vlaneseq
        %v2227 = vshrl.u32 %v2226, 7
        %v2228 = vsub.s32 %v2225, %v2227
        %v2229 = vrot.slane %v2215, %v2228
        %v2230 = vcombine.low %v1708, %v1720
        %v2231 = vcombine.high %v1708, %v1720
        %v2233 = vunpack.c.l.s4 1983009808
        %v2234 = vunpack.c.0.s8 %v2233
        %v2235 = vlaneseq
        %v2236 = vshrl.u32 %v2235, 7
        %v2237 = vsub.s32 %v2234, %v2236
        %v2238 = vrot.slane %v2230, %v2237
        %v2240 = vunpack.c.l.s4 1983009808
        %v2241 = vunpack.c.0.s8 %v2240
        %v2242 = vlaneseq
        %v2243 = vshrl.u32 %v2242, 7
        %v2244 = vsub.s32 %v2241, %v2243
        %v2245 = vrot.slane %v2231, %v2244
        %v2246 = vcombine.low %v1714, %v1726
        %v2247 = vcombine.high %v1714, %v1726
        %v2249 = vunpack.c.l.s4 1983009808
        %v2250 = vunpack.c.0.s8 %v2249
        %v2251 = vlaneseq
        %v2252 = vshrl.u32 %v2251, 7
        %v2253 = vsub.s32 %v2250, %v2252
        %v2254 = vrot.slane %v2246, %v2253
        %v2256 = vunpack.c.l.s4 1983009808
        %v2257 = vunpack.c.0.s8 %v2256
        %v2258 = vlaneseq
        %v2259 = vshrl.u32 %v2258, 7
        %v2260 = vsub.s32 %v2257, %v2259
        %v2261 = vrot.slane %v2247, %v2260
        %v2262 = vcombine.low %v2206, %v2222
        %v2263 = vcombine.high %v2206, %v2222
        %v2265 = vunpack.c.l.s4 1934713408
        %v2266 = vunpack.c.0.s8 %v2265
        %v2267 = vlaneseq
        %v2268 = vshrl.u32 %v2267, 7
        %v2269 = vsub.s32 %v2266, %v2268
        %v2270 = vrot.slane %v2262, %v2269
        %v2272 = vunpack.c.l.s4 1934713408
        %v2273 = vunpack.c.0.s8 %v2272
        %v2274 = vlaneseq
        %v2275 = vshrl.u32 %v2274, 7
        %v2276 = vsub.s32 %v2273, %v2275
        %v2277 = vrot.slane %v2263, %v2276
        %v2278 = vcombine.low %v2213, %v2229
        %v2279 = vcombine.high %v2213, %v2229
        %v2281 = vunpack.c.l.s4 1934713408
        %v2282 = vunpack.c.0.s8 %v2281
        %v2283 = vlaneseq
        %v2284 = vshrl.u32 %v2283, 7
        %v2285 = vsub.s32 %v2282, %v2284
        %v2286 = vrot.slane %v2278, %v2285
        %v2288 = vunpack.c.l.s4 1934713408
        %v2289 = vunpack.c.0.s8 %v2288
        %v2290 = vlaneseq
        %v2291 = vshrl.u32 %v2290, 7
        %v2292 = vsub.s32 %v2289, %v2291
        %v2293 = vrot.slane %v2279, %v2292
        %v2294 = vcombine.low %v2238, %v2254
        %v2295 = vcombine.high %v2238, %v2254
        %v2297 = vunpack.c.l.s4 1934713408
        %v2298 = vunpack.c.0.s8 %v2297
        %v2299 = vlaneseq
        %v2300 = vshrl.u32 %v2299, 7
        %v2301 = vsub.s32 %v2298, %v2300
        %v2302 = vrot.slane %v2294, %v2301
        %v2304 = vunpack.c.l.s4 1934713408
        %v2305 = vunpack.c.0.s8 %v2304
        %v2306 = vlaneseq
        %v2307 = vshrl.u32 %v2306, 7
        %v2308 = vsub.s32 %v2305, %v2307
        %v2309 = vrot.slane %v2295, %v2308
        %v2310 = vcombine.low %v2245, %v2261
        %v2311 = vcombine.high %v2245, %v2261
        %v2313 = vunpack.c.l.s4 1934713408
        %v2314 = vunpack.c.0.s8 %v2313
        %v2315 = vlaneseq
        %v2316 = vshrl.u32 %v2315, 7
        %v2317 = vsub.s32 %v2314, %v2316
        %v2318 = vrot.slane %v2310, %v2317
        %v2320 = vunpack.c.l.s4 1934713408
        %v2321 = vunpack.c.0.s8 %v2320
        %v2322 = vlaneseq
        %v2323 = vshrl.u32 %v2322, 7
        %v2324 = vsub.s32 %v2321, %v2323
        %v2325 = vrot.slane %v2311, %v2324
        %v2326 = vcombine.low %v2270, %v2302
        %v2327 = vcombine.high %v2270, %v2302
        %v2328 = vcombine.low %v2277, %v2309
        %v2329 = vcombine.high %v2277, %v2309
        %v2330 = vcombine.low %v2286, %v2318
        %v2331 = vcombine.high %v2286, %v2318
        %v2332 = vcombine.low %v2293, %v2325
        %v2333 = vcombine.high %v2293, %v2325
        %v2334 = vcombine.low %v1729, %v1741
        %v2335 = vcombine.high %v1729, %v1741
        %v2337 = vunpack.c.l.s4 1983009808
        %v2338 = vunpack.c.0.s8 %v2337
        %v2339 = vlaneseq
        %v2340 = vshrl.u32 %v2339, 7
        %v2341 = vsub.s32 %v2338, %v2340
        %v2342 = vrot.slane %v2334, %v2341
        %v2344 = vunpack.c.l.s4 1983009808
        %v2345 = vunpack.c.0.s8 %v2344
        %v2346 = vlaneseq
        %v2347 = vshrl.u32 %v2346, 7
        %v2348 = vsub.s32 %v2345, %v2347
        %v2349 = vrot.slane %v2335, %v2348
        %v2350 = vcombine.low %v1735, %v1747
        %v2351 = vcombine.high %v1735, %v1747
        %v2353 = vunpack.c.l.s4 1983009808
        %v2354 = vunpack.c.0.s8 %v2353
        %v2355 = vlaneseq
        %v2356 = vshrl.u32 %v2355, 7
        %v2357 = vsub.s32 %v2354, %v2356
        %v2358 = vrot.slane %v2350, %v2357
        %v2360 = vunpack.c.l.s4 1983009808
        %v2361 = vunpack.c.0.s8 %v2360
        %v2362 = vlaneseq
        %v2363 = vshrl.u32 %v2362, 7
        %v2364 = vsub.s32 %v2361, %v2363
        %v2365 = vrot.slane %v2351, %v2364
        %v2366 = vcombine.low %v1753, %v1765
        %v2367 = vcombine.high %v1753, %v1765
        %v2369 = vunpack.c.l.s4 1983009808
        %v2370 = vunpack.c.0.s8 %v2369
        %v2371 = vlaneseq
        %v2372 = vshrl.u32 %v2371, 7
        %v2373 = vsub.s32 %v2370, %v2372
        %v2374 = vrot.slane %v2366, %v2373
        %v2376 = vunpack.c.l.s4 1983009808
        %v2377 = vunpack.c.0.s8 %v2376
        %v2378 = vlaneseq
        %v2379 = vshrl.u32 %v2378, 7
        %v2380 = vsub.s32 %v2377, %v2379
        %v2381 = vrot.slane %v2367, %v2380
        %v2382 = vcombine.low %v1759, %v1771
        %v2383 = vcombine.high %v1759, %v1771
        %v2385 = vunpack.c.l.s4 1983009808
        %v2386 = vunpack.c.0.s8 %v2385
        %v2387 = vlaneseq
        %v2388 = vshrl.u32 %v2387, 7
        %v2389 = vsub.s32 %v2386, %v2388
        %v2390 = vrot.slane %v2382, %v2389
        %v2392 = vunpack.c.l.s4 1983009808
        %v2393 = vunpack.c.0.s8 %v2392
        %v2394 = vlaneseq
        %v2395 = vshrl.u32 %v2394, 7
        %v2396 = vsub.s32 %v2393, %v2395
        %v2397 = vrot.slane %v2383, %v2396
        %v2398 = vcombine.low %v2342, %v2358
        %v2399 = vcombine.high %v2342, %v2358
        %v2401 = vunpack.c.l.s4 1934713408
        %v2402 = vunpack.c.0.s8 %v2401
        %v2403 = vlaneseq
        %v2404 = vshrl.u32 %v2403, 7
        %v2405 = vsub.s32 %v2402, %v2404
        %v2406 = vrot.slane %v2398, %v2405
        %v2408 = vunpack.c.l.s4 1934713408
        %v2409 = vunpack.c.0.s8 %v2408
        %v2410 = vlaneseq
        %v2411 = vshrl.u32 %v2410, 7
        %v2412 = vsub.s32 %v2409, %v2411
        %v2413 = vrot.slane %v2399, %v2412
        %v2414 = vcombine.low %v2349, %v2365
        %v2415 = vcombine.high %v2349, %v2365
        %v2417 = vunpack.c.l.s4 1934713408
        %v2418 = vunpack.c.0.s8 %v2417
        %v2419 = vlaneseq
        %v2420 = vshrl.u32 %v2419, 7
        %v2421 = vsub.s32 %v2418, %v2420
        %v2422 = vrot.slane %v2414, %v2421
        %v2424 = vunpack.c.l.s4 1934713408
        %v2425 = vunpack.c.0.s8 %v2424
        %v2426 = vlaneseq
        %v2427 = vshrl.u32 %v2426, 7
        %v2428 = vsub.s32 %v2425, %v2427
        %v2429 = vrot.slane %v2415, %v2428
        %v2430 = vcombine.low %v2374, %v2390
        %v2431 = vcombine.high %v2374, %v2390
        %v2433 = vunpack.c.l.s4 1934713408
        %v2434 = vunpack.c.0.s8 %v2433
        %v2435 = vlaneseq
        %v2436 = vshrl.u32 %v2435, 7
        %v2437 = vsub.s32 %v2434, %v2436
        %v2438 = vrot.slane %v2430, %v2437
        %v2440 = vunpack.c.l.s4 1934713408
        %v2441 = vunpack.c.0.s8 %v2440
        %v2442 = vlaneseq
        %v2443 = vshrl.u32 %v2442, 7
        %v2444 = vsub.s32 %v2441, %v2443
        %v2445 = vrot.slane %v2431, %v2444
        %v2446 = vcombine.low %v2381, %v2397
        %v2447 = vcombine.high %v2381, %v2397
        %v2449 = vunpack.c.l.s4 1934713408
        %v2450 = vunpack.c.0.s8 %v2449
        %v2451 = vlaneseq
        %v2452 = vshrl.u32 %v2451, 7
        %v2453 = vsub.s32 %v2450, %v2452
        %v2454 = vrot.slane %v2446, %v2453
        %v2456 = vunpack.c.l.s4 1934713408
        %v2457 = vunpack.c.0.s8 %v2456
        %v2458 = vlaneseq
        %v2459 = vshrl.u32 %v2458, 7
        %v2460 = vsub.s32 %v2457, %v2459
        %v2461 = vrot.slane %v2447, %v2460
        %v2462 = vcombine.low %v2406, %v2438
        %v2463 = vcombine.high %v2406, %v2438
        %v2464 = vcombine.low %v2413, %v2445
        %v2465 = vcombine.high %v2413, %v2445
        %v2466 = vcombine.low %v2422, %v2454
        %v2467 = vcombine.high %v2422, %v2454
        %v2468 = vcombine.low %v2429, %v2461
        %v2469 = vcombine.high %v2429, %v2461
        %v2470 = vcombine.low %v1732, %v1744
        %v2471 = vcombine.high %v1732, %v1744
        %v2473 = vunpack.c.l.s4 1983009808
        %v2474 = vunpack.c.0.s8 %v2473
        %v2475 = vlaneseq
        %v2476 = vshrl.u32 %v2475, 7
        %v2477 = vsub.s32 %v2474, %v2476
        %v2478 = vrot.slane %v2470, %v2477
        %v2480 = vunpack.c.l.s4 1983009808
        %v2481 = vunpack.c.0.s8 %v2480
        %v2482 = vlaneseq
        %v2483 = vshrl.u32 %v2482, 7
        %v2484 = vsub.s32 %v2481, %v2483
        %v2485 = vrot.slane %v2471, %v2484
        %v2486 = vcombine.low %v1738, %v1750
        %v2487 = vcombine.high %v1738, %v1750
        %v2489 = vunpack.c.l.s4 1983009808
        %v2490 = vunpack.c.0.s8 %v2489
        %v2491 = vlaneseq
        %v2492 = vshrl.u32 %v2491, 7
        %v2493 = vsub.s32 %v2490, %v2492
        %v2494 = vrot.slane %v2486, %v2493
        %v2496 = vunpack.c.l.s4 1983009808
        %v2497 = vunpack.c.0.s8 %v2496
        %v2498 = vlaneseq
        %v2499 = vshrl.u32 %v2498, 7
        %v2500 = vsub.s32 %v2497, %v2499
        %v2501 = vrot.slane %v2487, %v2500
        %v2502 = vcombine.low %v1756, %v1768
        %v2503 = vcombine.high %v1756, %v1768
        %v2505 = vunpack.c.l.s4 1983009808
        %v2506 = vunpack.c.0.s8 %v2505
        %v2507 = vlaneseq
        %v2508 = vshrl.u32 %v2507, 7
        %v2509 = vsub.s32 %v2506, %v2508
        %v2510 = vrot.slane %v2502, %v2509
        %v2512 = vunpack.c.l.s4 1983009808
        %v2513 = vunpack.c.0.s8 %v2512
        %v2514 = vlaneseq
        %v2515 = vshrl.u32 %v2514, 7
        %v2516 = vsub.s32 %v2513, %v2515
        %v2517 = vrot.slane %v2503, %v2516
        %v2518 = vcombine.low %v1762, %v1774
        %v2519 = vcombine.high %v1762, %v1774
        %v2521 = vunpack.c.l.s4 1983009808
        %v2522 = vunpack.c.0.s8 %v2521
        %v2523 = vlaneseq
        %v2524 = vshrl.u32 %v2523, 7
        %v2525 = vsub.s32 %v2522, %v2524
        %v2526 = vrot.slane %v2518, %v2525
        %v2528 = vunpack.c.l.s4 1983009808
        %v2529 = vunpack.c.0.s8 %v2528
        %v2530 = vlaneseq
        %v2531 = vshrl.u32 %v2530, 7
        %v2532 = vsub.s32 %v2529, %v2531
        %v2533 = vrot.slane %v2519, %v2532
        %v2534 = vcombine.low %v2478, %v2494
        %v2535 = vcombine.high %v2478, %v2494
        %v2537 = vunpack.c.l.s4 1934713408
        %v2538 = vunpack.c.0.s8 %v2537
        %v2539 = vlaneseq
        %v2540 = vshrl.u32 %v2539, 7
        %v2541 = vsub.s32 %v2538, %v2540
        %v2542 = vrot.slane %v2534, %v2541
        %v2544 = vunpack.c.l.s4 1934713408
        %v2545 = vunpack.c.0.s8 %v2544
        %v2546 = vlaneseq
        %v2547 = vshrl.u32 %v2546, 7
        %v2548 = vsub.s32 %v2545, %v2547
        %v2549 = vrot.slane %v2535, %v2548
        %v2550 = vcombine.low %v2485, %v2501
        %v2551 = vcombine.high %v2485, %v2501
        %v2553 = vunpack.c.l.s4 1934713408
        %v2554 = vunpack.c.0.s8 %v2553
        %v2555 = vlaneseq
        %v2556 = vshrl.u32 %v2555, 7
        %v2557 = vsub.s32 %v2554, %v2556
        %v2558 = vrot.slane %v2550, %v2557
        %v2560 = vunpack.c.l.s4 1934713408
        %v2561 = vunpack.c.0.s8 %v2560
        %v2562 = vlaneseq
        %v2563 = vshrl.u32 %v2562, 7
        %v2564 = vsub.s32 %v2561, %v2563
        %v2565 = vrot.slane %v2551, %v2564
        %v2566 = vcombine.low %v2510, %v2526
        %v2567 = vcombine.high %v2510, %v2526
        %v2569 = vunpack.c.l.s4 1934713408
        %v2570 = vunpack.c.0.s8 %v2569
        %v2571 = vlaneseq
        %v2572 = vshrl.u32 %v2571, 7
        %v2573 = vsub.s32 %v2570, %v2572
        %v2574 = vrot.slane %v2566, %v2573
        %v2576 = vunpack.c.l.s4 1934713408
        %v2577 = vunpack.c.0.s8 %v2576
        %v2578 = vlaneseq
        %v2579 = vshrl.u32 %v2578, 7
        %v2580 = vsub.s32 %v2577, %v2579
        %v2581 = vrot.slane %v2567, %v2580
        %v2582 = vcombine.low %v2517, %v2533
        %v2583 = vcombine.high %v2517, %v2533
        %v2585 = vunpack.c.l.s4 1934713408
        %v2586 = vunpack.c.0.s8 %v2585
        %v2587 = vlaneseq
        %v2588 = vshrl.u32 %v2587, 7
        %v2589 = vsub.s32 %v2586, %v2588
        %v2590 = vrot.slane %v2582, %v2589
        %v2592 = vunpack.c.l.s4 1934713408
        %v2593 = vunpack.c.0.s8 %v2592
        %v2594 = vlaneseq
        %v2595 = vshrl.u32 %v2594, 7
        %v2596 = vsub.s32 %v2593, %v2595
        %v2597 = vrot.slane %v2583, %v2596
        %v2598 = vcombine.low %v2542, %v2574
        %v2599 = vcombine.high %v2542, %v2574
        %v2600 = vcombine.low %v2549, %v2581
        %v2601 = vcombine.high %v2549, %v2581
        %v2602 = vcombine.low %v2558, %v2590
        %v2603 = vcombine.high %v2558, %v2590
        %v2604 = vcombine.low %v2565, %v2597
        %v2605 = vcombine.high %v2565, %v2597
        %v2606 = vcombine.low %v1777, %v1789
        %v2607 = vcombine.high %v1777, %v1789
        %v2609 = vunpack.c.l.s4 1983009808
        %v2610 = vunpack.c.0.s8 %v2609
        %v2611 = vlaneseq
        %v2612 = vshrl.u32 %v2611, 7
        %v2613 = vsub.s32 %v2610, %v2612
        %v2614 = vrot.slane %v2606, %v2613
        %v2616 = vunpack.c.l.s4 1983009808
        %v2617 = vunpack.c.0.s8 %v2616
        %v2618 = vlaneseq
        %v2619 = vshrl.u32 %v2618, 7
        %v2620 = vsub.s32 %v2617, %v2619
        %v2621 = vrot.slane %v2607, %v2620
        %v2622 = vcombine.low %v1783, %v1795
        %v2623 = vcombine.high %v1783, %v1795
        %v2625 = vunpack.c.l.s4 1983009808
        %v2626 = vunpack.c.0.s8 %v2625
        %v2627 = vlaneseq
        %v2628 = vshrl.u32 %v2627, 7
        %v2629 = vsub.s32 %v2626, %v2628
        %v2630 = vrot.slane %v2622, %v2629
        %v2632 = vunpack.c.l.s4 1983009808
        %v2633 = vunpack.c.0.s8 %v2632
        %v2634 = vlaneseq
        %v2635 = vshrl.u32 %v2634, 7
        %v2636 = vsub.s32 %v2633, %v2635
        %v2637 = vrot.slane %v2623, %v2636
        %v2638 = vcombine.low %v1801, %v1813
        %v2639 = vcombine.high %v1801, %v1813
        %v2641 = vunpack.c.l.s4 1983009808
        %v2642 = vunpack.c.0.s8 %v2641
        %v2643 = vlaneseq
        %v2644 = vshrl.u32 %v2643, 7
        %v2645 = vsub.s32 %v2642, %v2644
        %v2646 = vrot.slane %v2638, %v2645
        %v2648 = vunpack.c.l.s4 1983009808
        %v2649 = vunpack.c.0.s8 %v2648
        %v2650 = vlaneseq
        %v2651 = vshrl.u32 %v2650, 7
        %v2652 = vsub.s32 %v2649, %v2651
        %v2653 = vrot.slane %v2639, %v2652
        %v2654 = vcombine.low %v1807, %v1819
        %v2655 = vcombine.high %v1807, %v1819
        %v2657 = vunpack.c.l.s4 1983009808
        %v2658 = vunpack.c.0.s8 %v2657
        %v2659 = vlaneseq
        %v2660 = vshrl.u32 %v2659, 7
        %v2661 = vsub.s32 %v2658, %v2660
        %v2662 = vrot.slane %v2654, %v2661
        %v2664 = vunpack.c.l.s4 1983009808
        %v2665 = vunpack.c.0.s8 %v2664
        %v2666 = vlaneseq
        %v2667 = vshrl.u32 %v2666, 7
        %v2668 = vsub.s32 %v2665, %v2667
        %v2669 = vrot.slane %v2655, %v2668
        %v2670 = vcombine.low %v2614, %v2630
        %v2671 = vcombine.high %v2614, %v2630
        %v2673 = vunpack.c.l.s4 1934713408
        %v2674 = vunpack.c.0.s8 %v2673
        %v2675 = vlaneseq
        %v2676 = vshrl.u32 %v2675, 7
        %v2677 = vsub.s32 %v2674, %v2676
        %v2678 = vrot.slane %v2670, %v2677
        %v2680 = vunpack.c.l.s4 1934713408
        %v2681 = vunpack.c.0.s8 %v2680
        %v2682 = vlaneseq
        %v2683 = vshrl.u32 %v2682, 7
        %v2684 = vsub.s32 %v2681, %v2683
        %v2685 = vrot.slane %v2671, %v2684
        %v2686 = vcombine.low %v2621, %v2637
        %v2687 = vcombine.high %v2621, %v2637
        %v2689 = vunpack.c.l.s4 1934713408
        %v2690 = vunpack.c.0.s8 %v2689
        %v2691 = vlaneseq
        %v2692 = vshrl.u32 %v2691, 7
        %v2693 = vsub.s32 %v2690, %v2692
        %v2694 = vrot.slane %v2686, %v2693
        %v2696 = vunpack.c.l.s4 1934713408
        %v2697 = vunpack.c.0.s8 %v2696
        %v2698 = vlaneseq
        %v2699 = vshrl.u32 %v2698, 7
        %v2700 = vsub.s32 %v2697, %v2699
        %v2701 = vrot.slane %v2687, %v2700
        %v2702 = vcombine.low %v2646, %v2662
        %v2703 = vcombine.high %v2646, %v2662
        %v2705 = vunpack.c.l.s4 1934713408
        %v2706 = vunpack.c.0.s8 %v2705
        %v2707 = vlaneseq
        %v2708 = vshrl.u32 %v2707, 7
        %v2709 = vsub.s32 %v2706, %v2708
        %v2710 = vrot.slane %v2702, %v2709
        %v2712 = vunpack.c.l.s4 1934713408
        %v2713 = vunpack.c.0.s8 %v2712
        %v2714 = vlaneseq
        %v2715 = vshrl.u32 %v2714, 7
        %v2716 = vsub.s32 %v2713, %v2715
        %v2717 = vrot.slane %v2703, %v2716
        %v2718 = vcombine.low %v2653, %v2669
        %v2719 = vcombine.high %v2653, %v2669
        %v2721 = vunpack.c.l.s4 1934713408
        %v2722 = vunpack.c.0.s8 %v2721
        %v2723 = vlaneseq
        %v2724 = vshrl.u32 %v2723, 7
        %v2725 = vsub.s32 %v2722, %v2724
        %v2726 = vrot.slane %v2718, %v2725
        %v2728 = vunpack.c.l.s4 1934713408
        %v2729 = vunpack.c.0.s8 %v2728
        %v2730 = vlaneseq
        %v2731 = vshrl.u32 %v2730, 7
        %v2732 = vsub.s32 %v2729, %v2731
        %v2733 = vrot.slane %v2719, %v2732
        %v2734 = vcombine.low %v2678, %v2710
        %v2735 = vcombine.high %v2678, %v2710
        %v2736 = vcombine.low %v2685, %v2717
        %v2737 = vcombine.high %v2685, %v2717
        %v2738 = vcombine.low %v2694, %v2726
        %v2739 = vcombine.high %v2694, %v2726
        %v2740 = vcombine.low %v2701, %v2733
        %v2741 = vcombine.high %v2701, %v2733
        %v2742 = vcombine.low %v1780, %v1792
        %v2743 = vcombine.high %v1780, %v1792
        %v2745 = vunpack.c.l.s4 1983009808
        %v2746 = vunpack.c.0.s8 %v2745
        %v2747 = vlaneseq
        %v2748 = vshrl.u32 %v2747, 7
        %v2749 = vsub.s32 %v2746, %v2748
        %v2750 = vrot.slane %v2742, %v2749
        %v2752 = vunpack.c.l.s4 1983009808
        %v2753 = vunpack.c.0.s8 %v2752
        %v2754 = vlaneseq
        %v2755 = vshrl.u32 %v2754, 7
        %v2756 = vsub.s32 %v2753, %v2755
        %v2757 = vrot.slane %v2743, %v2756
        %v2758 = vcombine.low %v1786, %v1798
        %v2759 = vcombine.high %v1786, %v1798
        %v2761 = vunpack.c.l.s4 1983009808
        %v2762 = vunpack.c.0.s8 %v2761
        %v2763 = vlaneseq
        %v2764 = vshrl.u32 %v2763, 7
        %v2765 = vsub.s32 %v2762, %v2764
        %v2766 = vrot.slane %v2758, %v2765
        %v2768 = vunpack.c.l.s4 1983009808
        %v2769 = vunpack.c.0.s8 %v2768
        %v2770 = vlaneseq
        %v2771 = vshrl.u32 %v2770, 7
        %v2772 = vsub.s32 %v2769, %v2771
        %v2773 = vrot.slane %v2759, %v2772
        %v2774 = vcombine.low %v1804, %v1816
        %v2775 = vcombine.high %v1804, %v1816
        %v2777 = vunpack.c.l.s4 1983009808
        %v2778 = vunpack.c.0.s8 %v2777
        %v2779 = vlaneseq
        %v2780 = vshrl.u32 %v2779, 7
        %v2781 = vsub.s32 %v2778, %v2780
        %v2782 = vrot.slane %v2774, %v2781
        %v2784 = vunpack.c.l.s4 1983009808
        %v2785 = vunpack.c.0.s8 %v2784
        %v2786 = vlaneseq
        %v2787 = vshrl.u32 %v2786, 7
        %v2788 = vsub.s32 %v2785, %v2787
        %v2789 = vrot.slane %v2775, %v2788
        %v2790 = vcombine.low %v1810, %v1822
        %v2791 = vcombine.high %v1810, %v1822
        %v2793 = vunpack.c.l.s4 1983009808
        %v2794 = vunpack.c.0.s8 %v2793
        %v2795 = vlaneseq
        %v2796 = vshrl.u32 %v2795, 7
        %v2797 = vsub.s32 %v2794, %v2796
        %v2798 = vrot.slane %v2790, %v2797
        %v2800 = vunpack.c.l.s4 1983009808
        %v2801 = vunpack.c.0.s8 %v2800
        %v2802 = vlaneseq
        %v2803 = vshrl.u32 %v2802, 7
        %v2804 = vsub.s32 %v2801, %v2803
        %v2805 = vrot.slane %v2791, %v2804
        %v2806 = vcombine.low %v2750, %v2766
        %v2807 = vcombine.high %v2750, %v2766
        %v2809 = vunpack.c.l.s4 1934713408
        %v2810 = vunpack.c.0.s8 %v2809
        %v2811 = vlaneseq
        %v2812 = vshrl.u32 %v2811, 7
        %v2813 = vsub.s32 %v2810, %v2812
        %v2814 = vrot.slane %v2806, %v2813
        %v2816 = vunpack.c.l.s4 1934713408
        %v2817 = vunpack.c.0.s8 %v2816
        %v2818 = vlaneseq
        %v2819 = vshrl.u32 %v2818, 7
        %v2820 = vsub.s32 %v2817, %v2819
        %v2821 = vrot.slane %v2807, %v2820
        %v2822 = vcombine.low %v2757, %v2773
        %v2823 = vcombine.high %v2757, %v2773
        %v2825 = vunpack.c.l.s4 1934713408
        %v2826 = vunpack.c.0.s8 %v2825
        %v2827 = vlaneseq
        %v2828 = vshrl.u32 %v2827, 7
        %v2829 = vsub.s32 %v2826, %v2828
        %v2830 = vrot.slane %v2822, %v2829
        %v2832 = vunpack.c.l.s4 1934713408
        %v2833 = vunpack.c.0.s8 %v2832
        %v2834 = vlaneseq
        %v2835 = vshrl.u32 %v2834, 7
        %v2836 = vsub.s32 %v2833, %v2835
        %v2837 = vrot.slane %v2823, %v2836
        %v2838 = vcombine.low %v2782, %v2798
        %v2839 = vcombine.high %v2782, %v2798
        %v2841 = vunpack.c.l.s4 1934713408
        %v2842 = vunpack.c.0.s8 %v2841
        %v2843 = vlaneseq
        %v2844 = vshrl.u32 %v2843, 7
        %v2845 = vsub.s32 %v2842, %v2844
        %v2846 = vrot.slane %v2838, %v2845
        %v2848 = vunpack.c.l.s4 1934713408
        %v2849 = vunpack.c.0.s8 %v2848
        %v2850 = vlaneseq
        %v2851 = vshrl.u32 %v2850, 7
        %v2852 = vsub.s32 %v2849, %v2851
        %v2853 = vrot.slane %v2839, %v2852
        %v2854 = vcombine.low %v2789, %v2805
        %v2855 = vcombine.high %v2789, %v2805
        %v2857 = vunpack.c.l.s4 1934713408
        %v2858 = vunpack.c.0.s8 %v2857
        %v2859 = vlaneseq
        %v2860 = vshrl.u32 %v2859, 7
        %v2861 = vsub.s32 %v2858, %v2860
        %v2862 = vrot.slane %v2854, %v2861
        %v2864 = vunpack.c.l.s4 1934713408
        %v2865 = vunpack.c.0.s8 %v2864
        %v2866 = vlaneseq
        %v2867 = vshrl.u32 %v2866, 7
        %v2868 = vsub.s32 %v2865, %v2867
        %v2869 = vrot.slane %v2855, %v2868
        %v2870 = vcombine.low %v2814, %v2846
        %v2871 = vcombine.high %v2814, %v2846
        %v2872 = vcombine.low %v2821, %v2853
        %v2873 = vcombine.high %v2821, %v2853
        %v2874 = vcombine.low %v2830, %v2862
        %v2875 = vcombine.high %v2830, %v2862
        %v2876 = vcombine.low %v2837, %v2869
        %v2877 = vcombine.high %v2837, %v2869
        %v2878 = vcombine.low %v1825, %v1837
        %v2879 = vcombine.high %v1825, %v1837
        %v2881 = vunpack.c.l.s4 1983009808
        %v2882 = vunpack.c.0.s8 %v2881
        %v2883 = vlaneseq
        %v2884 = vshrl.u32 %v2883, 7
        %v2885 = vsub.s32 %v2882, %v2884
        %v2886 = vrot.slane %v2878, %v2885
        %v2888 = vunpack.c.l.s4 1983009808
        %v2889 = vunpack.c.0.s8 %v2888
        %v2890 = vlaneseq
        %v2891 = vshrl.u32 %v2890, 7
        %v2892 = vsub.s32 %v2889, %v2891
        %v2893 = vrot.slane %v2879, %v2892
        %v2894 = vcombine.low %v1831, %v1843
        %v2895 = vcombine.high %v1831, %v1843
        %v2897 = vunpack.c.l.s4 1983009808
        %v2898 = vunpack.c.0.s8 %v2897
        %v2899 = vlaneseq
        %v2900 = vshrl.u32 %v2899, 7
        %v2901 = vsub.s32 %v2898, %v2900
        %v2902 = vrot.slane %v2894, %v2901
        %v2904 = vunpack.c.l.s4 1983009808
        %v2905 = vunpack.c.0.s8 %v2904
        %v2906 = vlaneseq
        %v2907 = vshrl.u32 %v2906, 7
        %v2908 = vsub.s32 %v2905, %v2907
        %v2909 = vrot.slane %v2895, %v2908
        %v2910 = vcombine.low %v1849, %v1861
        %v2911 = vcombine.high %v1849, %v1861
        %v2913 = vunpack.c.l.s4 1983009808
        %v2914 = vunpack.c.0.s8 %v2913
        %v2915 = vlaneseq
        %v2916 = vshrl.u32 %v2915, 7
        %v2917 = vsub.s32 %v2914, %v2916
        %v2918 = vrot.slane %v2910, %v2917
        %v2920 = vunpack.c.l.s4 1983009808
        %v2921 = vunpack.c.0.s8 %v2920
        %v2922 = vlaneseq
        %v2923 = vshrl.u32 %v2922, 7
        %v2924 = vsub.s32 %v2921, %v2923
        %v2925 = vrot.slane %v2911, %v2924
        %v2926 = vcombine.low %v1855, %v1867
        %v2927 = vcombine.high %v1855, %v1867
        %v2929 = vunpack.c.l.s4 1983009808
        %v2930 = vunpack.c.0.s8 %v2929
        %v2931 = vlaneseq
        %v2932 = vshrl.u32 %v2931, 7
        %v2933 = vsub.s32 %v2930, %v2932
        %v2934 = vrot.slane %v2926, %v2933
        %v2936 = vunpack.c.l.s4 1983009808
        %v2937 = vunpack.c.0.s8 %v2936
        %v2938 = vlaneseq
        %v2939 = vshrl.u32 %v2938, 7
        %v2940 = vsub.s32 %v2937, %v2939
        %v2941 = vrot.slane %v2927, %v2940
        %v2942 = vcombine.low %v2886, %v2902
        %v2943 = vcombine.high %v2886, %v2902
        %v2945 = vunpack.c.l.s4 1934713408
        %v2946 = vunpack.c.0.s8 %v2945
        %v2947 = vlaneseq
        %v2948 = vshrl.u32 %v2947, 7
        %v2949 = vsub.s32 %v2946, %v2948
        %v2950 = vrot.slane %v2942, %v2949
        %v2952 = vunpack.c.l.s4 1934713408
        %v2953 = vunpack.c.0.s8 %v2952
        %v2954 = vlaneseq
        %v2955 = vshrl.u32 %v2954, 7
        %v2956 = vsub.s32 %v2953, %v2955
        %v2957 = vrot.slane %v2943, %v2956
        %v2958 = vcombine.low %v2893, %v2909
        %v2959 = vcombine.high %v2893, %v2909
        %v2961 = vunpack.c.l.s4 1934713408
        %v2962 = vunpack.c.0.s8 %v2961
        %v2963 = vlaneseq
        %v2964 = vshrl.u32 %v2963, 7
        %v2965 = vsub.s32 %v2962, %v2964
        %v2966 = vrot.slane %v2958, %v2965
        %v2968 = vunpack.c.l.s4 1934713408
        %v2969 = vunpack.c.0.s8 %v2968
        %v2970 = vlaneseq
        %v2971 = vshrl.u32 %v2970, 7
        %v2972 = vsub.s32 %v2969, %v2971
        %v2973 = vrot.slane %v2959, %v2972
        %v2974 = vcombine.low %v2918, %v2934
        %v2975 = vcombine.high %v2918, %v2934
        %v2977 = vunpack.c.l.s4 1934713408
        %v2978 = vunpack.c.0.s8 %v2977
        %v2979 = vlaneseq
        %v2980 = vshrl.u32 %v2979, 7
        %v2981 = vsub.s32 %v2978, %v2980
        %v2982 = vrot.slane %v2974, %v2981
        %v2984 = vunpack.c.l.s4 1934713408
        %v2985 = vunpack.c.0.s8 %v2984
        %v2986 = vlaneseq
        %v2987 = vshrl.u32 %v2986, 7
        %v2988 = vsub.s32 %v2985, %v2987
        %v2989 = vrot.slane %v2975, %v2988
        %v2990 = vcombine.low %v2925, %v2941
        %v2991 = vcombine.high %v2925, %v2941
        %v2993 = vunpack.c.l.s4 1934713408
        %v2994 = vunpack.c.0.s8 %v2993
        %v2995 = vlaneseq
        %v2996 = vshrl.u32 %v2995, 7
        %v2997 = vsub.s32 %v2994, %v2996
        %v2998 = vrot.slane %v2990, %v2997
        %v3000 = vunpack.c.l.s4 1934713408
        %v3001 = vunpack.c.0.s8 %v3000
        %v3002 = vlaneseq
        %v3003 = vshrl.u32 %v3002, 7
        %v3004 = vsub.s32 %v3001, %v3003
        %v3005 = vrot.slane %v2991, %v3004
        %v3006 = vcombine.low %v2950, %v2982
        %v3007 = vcombine.high %v2950, %v2982
        %v3008 = vcombine.low %v2957, %v2989
        %v3009 = vcombine.high %v2957, %v2989
        %v3010 = vcombine.low %v2966, %v2998
        %v3011 = vcombine.high %v2966, %v2998
        %v3012 = vcombine.low %v2973, %v3005
        %v3013 = vcombine.high %v2973, %v3005
        %v3014 = vcombine.low %v1828, %v1840
        %v3015 = vcombine.high %v1828, %v1840
        %v3017 = vunpack.c.l.s4 1983009808
        %v3018 = vunpack.c.0.s8 %v3017
        %v3019 = vlaneseq
        %v3020 = vshrl.u32 %v3019, 7
        %v3021 = vsub.s32 %v3018, %v3020
        %v3022 = vrot.slane %v3014, %v3021
        %v3024 = vunpack.c.l.s4 1983009808
        %v3025 = vunpack.c.0.s8 %v3024
        %v3026 = vlaneseq
        %v3027 = vshrl.u32 %v3026, 7
        %v3028 = vsub.s32 %v3025, %v3027
        %v3029 = vrot.slane %v3015, %v3028
        %v3030 = vcombine.low %v1834, %v1846
        %v3031 = vcombine.high %v1834, %v1846
        %v3033 = vunpack.c.l.s4 1983009808
        %v3034 = vunpack.c.0.s8 %v3033
        %v3035 = vlaneseq
        %v3036 = vshrl.u32 %v3035, 7
        %v3037 = vsub.s32 %v3034, %v3036
        %v3038 = vrot.slane %v3030, %v3037
        %v3040 = vunpack.c.l.s4 1983009808
        %v3041 = vunpack.c.0.s8 %v3040
        %v3042 = vlaneseq
        %v3043 = vshrl.u32 %v3042, 7
        %v3044 = vsub.s32 %v3041, %v3043
        %v3045 = vrot.slane %v3031, %v3044
        %v3046 = vcombine.low %v1852, %v1864
        %v3047 = vcombine.high %v1852, %v1864
        %v3049 = vunpack.c.l.s4 1983009808
        %v3050 = vunpack.c.0.s8 %v3049
        %v3051 = vlaneseq
        %v3052 = vshrl.u32 %v3051, 7
        %v3053 = vsub.s32 %v3050, %v3052
        %v3054 = vrot.slane %v3046, %v3053
        %v3056 = vunpack.c.l.s4 1983009808
        %v3057 = vunpack.c.0.s8 %v3056
        %v3058 = vlaneseq
        %v3059 = vshrl.u32 %v3058, 7
        %v3060 = vsub.s32 %v3057, %v3059
        %v3061 = vrot.slane %v3047, %v3060
        %v3062 = vcombine.low %v1858, %v1870
        %v3063 = vcombine.high %v1858, %v1870
        %v3065 = vunpack.c.l.s4 1983009808
        %v3066 = vunpack.c.0.s8 %v3065
        %v3067 = vlaneseq
        %v3068 = vshrl.u32 %v3067, 7
        %v3069 = vsub.s32 %v3066, %v3068
        %v3070 = vrot.slane %v3062, %v3069
        %v3072 = vunpack.c.l.s4 1983009808
        %v3073 = vunpack.c.0.s8 %v3072
        %v3074 = vlaneseq
        %v3075 = vshrl.u32 %v3074, 7
        %v3076 = vsub.s32 %v3073, %v3075
        %v3077 = vrot.slane %v3063, %v3076
        %v3078 = vcombine.low %v3022, %v3038
        %v3079 = vcombine.high %v3022, %v3038
        %v3081 = vunpack.c.l.s4 1934713408
        %v3082 = vunpack.c.0.s8 %v3081
        %v3083 = vlaneseq
        %v3084 = vshrl.u32 %v3083, 7
        %v3085 = vsub.s32 %v3082, %v3084
        %v3086 = vrot.slane %v3078, %v3085
        %v3088 = vunpack.c.l.s4 1934713408
        %v3089 = vunpack.c.0.s8 %v3088
        %v3090 = vlaneseq
        %v3091 = vshrl.u32 %v3090, 7
        %v3092 = vsub.s32 %v3089, %v3091
        %v3093 = vrot.slane %v3079, %v3092
        %v3094 = vcombine.low %v3029, %v3045
        %v3095 = vcombine.high %v3029, %v3045
        %v3097 = vunpack.c.l.s4 1934713408
        %v3098 = vunpack.c.0.s8 %v3097
        %v3099 = vlaneseq
        %v3100 = vshrl.u32 %v3099, 7
        %v3101 = vsub.s32 %v3098, %v3100
        %v3102 = vrot.slane %v3094, %v3101
        %v3104 = vunpack.c.l.s4 1934713408
        %v3105 = vunpack.c.0.s8 %v3104
        %v3106 = vlaneseq
        %v3107 = vshrl.u32 %v3106, 7
        %v3108 = vsub.s32 %v3105, %v3107
        %v3109 = vrot.slane %v3095, %v3108
        %v3110 = vcombine.low %v3054, %v3070
        %v3111 = vcombine.high %v3054, %v3070
        %v3113 = vunpack.c.l.s4 1934713408
        %v3114 = vunpack.c.0.s8 %v3113
        %v3115 = vlaneseq
        %v3116 = vshrl.u32 %v3115, 7
        %v3117 = vsub.s32 %v3114, %v3116
        %v3118 = vrot.slane %v3110, %v3117
        %v3120 = vunpack.c.l.s4 1934713408
        %v3121 = vunpack.c.0.s8 %v3120
        %v3122 = vlaneseq
        %v3123 = vshrl.u32 %v3122, 7
        %v3124 = vsub.s32 %v3121, %v3123
        %v3125 = vrot.slane %v3111, %v3124
        %v3126 = vcombine.low %v3061, %v3077
        %v3127 = vcombine.high %v3061, %v3077
        %v3129 = vunpack.c.l.s4 1934713408
        %v3130 = vunpack.c.0.s8 %v3129
        %v3131 = vlaneseq
        %v3132 = vshrl.u32 %v3131, 7
        %v3133 = vsub.s32 %v3130, %v3132
        %v3134 = vrot.slane %v3126, %v3133
        %v3136 = vunpack.c.l.s4 1934713408
        %v3137 = vunpack.c.0.s8 %v3136
        %v3138 = vlaneseq
        %v3139 = vshrl.u32 %v3138, 7
        %v3140 = vsub.s32 %v3137, %v3139
        %v3141 = vrot.slane %v3127, %v3140
        %v3142 = vcombine.low %v3086, %v3118
        %v3143 = vcombine.high %v3086, %v3118
        %v3144 = vcombine.low %v3093, %v3125
        %v3145 = vcombine.high %v3093, %v3125
        %v3146 = vcombine.low %v3102, %v3134
        %v3147 = vcombine.high %v3102, %v3134
        %v3148 = vcombine.low %v3109, %v3141
        %v3149 = vcombine.high %v3109, %v3141
        %v3150 = vcombine.low %v1681, %v1883
        %v3151 = vcombine.high %v1681, %v1883
        %v3153 = vunpack.c.l.s4 1983009808
        %v3154 = vunpack.c.0.s8 %v3153
        %v3155 = vlaneseq
        %v3156 = vshrl.u32 %v3155, 7
        %v3157 = vsub.s32 %v3154, %v3156
        %v3158 = vrot.slane %v3150, %v3157
        %v3160 = vunpack.c.l.s4 1983009808
        %v3161 = vunpack.c.0.s8 %v3160
        %v3162 = vlaneseq
        %v3163 = vshrl.u32 %v3162, 7
        %v3164 = vsub.s32 %v3161, %v3163
        %v3165 = vrot.slane %v3151, %v3164
        %v3166 = vcombine.low %v1877, %v1889
        %v3167 = vcombine.high %v1877, %v1889
        %v3169 = vunpack.c.l.s4 1983009808
        %v3170 = vunpack.c.0.s8 %v3169
        %v3171 = vlaneseq
        %v3172 = vshrl.u32 %v3171, 7
        %v3173 = vsub.s32 %v3170, %v3172
        %v3174 = vrot.slane %v3166, %v3173
        %v3176 = vunpack.c.l.s4 1983009808
        %v3177 = vunpack.c.0.s8 %v3176
        %v3178 = vlaneseq
        %v3179 = vshrl.u32 %v3178, 7
        %v3180 = vsub.s32 %v3177, %v3179
        %v3181 = vrot.slane %v3167, %v3180
        %v3182 = vcombine.low %v1895, %v1907
        %v3183 = vcombine.high %v1895, %v1907
        %v3185 = vunpack.c.l.s4 1983009808
        %v3186 = vunpack.c.0.s8 %v3185
        %v3187 = vlaneseq
        %v3188 = vshrl.u32 %v3187, 7
        %v3189 = vsub.s32 %v3186, %v3188
        %v3190 = vrot.slane %v3182, %v3189
        %v3192 = vunpack.c.l.s4 1983009808
        %v3193 = vunpack.c.0.s8 %v3192
        %v3194 = vlaneseq
        %v3195 = vshrl.u32 %v3194, 7
        %v3196 = vsub.s32 %v3193, %v3195
        %v3197 = vrot.slane %v3183, %v3196
        %v3198 = vcombine.low %v1901, %v1913
        %v3199 = vcombine.high %v1901, %v1913
        %v3201 = vunpack.c.l.s4 1983009808
        %v3202 = vunpack.c.0.s8 %v3201
        %v3203 = vlaneseq
        %v3204 = vshrl.u32 %v3203, 7
        %v3205 = vsub.s32 %v3202, %v3204
        %v3206 = vrot.slane %v3198, %v3205
        %v3208 = vunpack.c.l.s4 1983009808
        %v3209 = vunpack.c.0.s8 %v3208
        %v3210 = vlaneseq
        %v3211 = vshrl.u32 %v3210, 7
        %v3212 = vsub.s32 %v3209, %v3211
        %v3213 = vrot.slane %v3199, %v3212
        %v3214 = vcombine.low %v3158, %v3174
        %v3215 = vcombine.high %v3158, %v3174
        %v3217 = vunpack.c.l.s4 1934713408
        %v3218 = vunpack.c.0.s8 %v3217
        %v3219 = vlaneseq
        %v3220 = vshrl.u32 %v3219, 7
        %v3221 = vsub.s32 %v3218, %v3220
        %v3222 = vrot.slane %v3214, %v3221
        %v3224 = vunpack.c.l.s4 1934713408
        %v3225 = vunpack.c.0.s8 %v3224
        %v3226 = vlaneseq
        %v3227 = vshrl.u32 %v3226, 7
        %v3228 = vsub.s32 %v3225, %v3227
        %v3229 = vrot.slane %v3215, %v3228
        %v3230 = vcombine.low %v3165, %v3181
        %v3231 = vcombine.high %v3165, %v3181
        %v3233 = vunpack.c.l.s4 1934713408
        %v3234 = vunpack.c.0.s8 %v3233
        %v3235 = vlaneseq
        %v3236 = vshrl.u32 %v3235, 7
        %v3237 = vsub.s32 %v3234, %v3236
        %v3238 = vrot.slane %v3230, %v3237
        %v3240 = vunpack.c.l.s4 1934713408
        %v3241 = vunpack.c.0.s8 %v3240
        %v3242 = vlaneseq
        %v3243 = vshrl.u32 %v3242, 7
        %v3244 = vsub.s32 %v3241, %v3243
        %v3245 = vrot.slane %v3231, %v3244
        %v3246 = vcombine.low %v3190, %v3206
        %v3247 = vcombine.high %v3190, %v3206
        %v3249 = vunpack.c.l.s4 1934713408
        %v3250 = vunpack.c.0.s8 %v3249
        %v3251 = vlaneseq
        %v3252 = vshrl.u32 %v3251, 7
        %v3253 = vsub.s32 %v3250, %v3252
        %v3254 = vrot.slane %v3246, %v3253
        %v3256 = vunpack.c.l.s4 1934713408
        %v3257 = vunpack.c.0.s8 %v3256
        %v3258 = vlaneseq
        %v3259 = vshrl.u32 %v3258, 7
        %v3260 = vsub.s32 %v3257, %v3259
        %v3261 = vrot.slane %v3247, %v3260
        %v3262 = vcombine.low %v3197, %v3213
        %v3263 = vcombine.high %v3197, %v3213
        %v3265 = vunpack.c.l.s4 1934713408
        %v3266 = vunpack.c.0.s8 %v3265
        %v3267 = vlaneseq
        %v3268 = vshrl.u32 %v3267, 7
        %v3269 = vsub.s32 %v3266, %v3268
        %v3270 = vrot.slane %v3262, %v3269
        %v3272 = vunpack.c.l.s4 1934713408
        %v3273 = vunpack.c.0.s8 %v3272
        %v3274 = vlaneseq
        %v3275 = vshrl.u32 %v3274, 7
        %v3276 = vsub.s32 %v3273, %v3275
        %v3277 = vrot.slane %v3263, %v3276
        %v3278 = vcombine.low %v3222, %v3254
        %v3279 = vcombine.high %v3222, %v3254
        %v3280 = vcombine.low %v3229, %v3261
        %v3281 = vcombine.high %v3229, %v3261
        %v3282 = vcombine.low %v3238, %v3270
        %v3283 = vcombine.high %v3238, %v3270
        %v3284 = vcombine.low %v3245, %v3277
        %v3285 = vcombine.high %v3245, %v3277
        %v3286 = vcombine.low %v1874, %v1886
        %v3287 = vcombine.high %v1874, %v1886
        %v3289 = vunpack.c.l.s4 1983009808
        %v3290 = vunpack.c.0.s8 %v3289
        %v3291 = vlaneseq
        %v3292 = vshrl.u32 %v3291, 7
        %v3293 = vsub.s32 %v3290, %v3292
        %v3294 = vrot.slane %v3286, %v3293
        %v3296 = vunpack.c.l.s4 1983009808
        %v3297 = vunpack.c.0.s8 %v3296
        %v3298 = vlaneseq
        %v3299 = vshrl.u32 %v3298, 7
        %v3300 = vsub.s32 %v3297, %v3299
        %v3301 = vrot.slane %v3287, %v3300
        %v3302 = vcombine.low %v1880, %v1892
        %v3303 = vcombine.high %v1880, %v1892
        %v3305 = vunpack.c.l.s4 1983009808
        %v3306 = vunpack.c.0.s8 %v3305
        %v3307 = vlaneseq
        %v3308 = vshrl.u32 %v3307, 7
        %v3309 = vsub.s32 %v3306, %v3308
        %v3310 = vrot.slane %v3302, %v3309
        %v3312 = vunpack.c.l.s4 1983009808
        %v3313 = vunpack.c.0.s8 %v3312
        %v3314 = vlaneseq
        %v3315 = vshrl.u32 %v3314, 7
        %v3316 = vsub.s32 %v3313, %v3315
        %v3317 = vrot.slane %v3303, %v3316
        %v3318 = vcombine.low %v1898, %v1910
        %v3319 = vcombine.high %v1898, %v1910
        %v3321 = vunpack.c.l.s4 1983009808
        %v3322 = vunpack.c.0.s8 %v3321
        %v3323 = vlaneseq
        %v3324 = vshrl.u32 %v3323, 7
        %v3325 = vsub.s32 %v3322, %v3324
        %v3326 = vrot.slane %v3318, %v3325
        %v3328 = vunpack.c.l.s4 1983009808
        %v3329 = vunpack.c.0.s8 %v3328
        %v3330 = vlaneseq
        %v3331 = vshrl.u32 %v3330, 7
        %v3332 = vsub.s32 %v3329, %v3331
        %v3333 = vrot.slane %v3319, %v3332
        %v3334 = vcombine.low %v1904, %v1916
        %v3335 = vcombine.high %v1904, %v1916
        %v3337 = vunpack.c.l.s4 1983009808
        %v3338 = vunpack.c.0.s8 %v3337
        %v3339 = vlaneseq
        %v3340 = vshrl.u32 %v3339, 7
        %v3341 = vsub.s32 %v3338, %v3340
        %v3342 = vrot.slane %v3334, %v3341
        %v3344 = vunpack.c.l.s4 1983009808
        %v3345 = vunpack.c.0.s8 %v3344
        %v3346 = vlaneseq
        %v3347 = vshrl.u32 %v3346, 7
        %v3348 = vsub.s32 %v3345, %v3347
        %v3349 = vrot.slane %v3335, %v3348
        %v3350 = vcombine.low %v3294, %v3310
        %v3351 = vcombine.high %v3294, %v3310
        %v3353 = vunpack.c.l.s4 1934713408
        %v3354 = vunpack.c.0.s8 %v3353
        %v3355 = vlaneseq
        %v3356 = vshrl.u32 %v3355, 7
        %v3357 = vsub.s32 %v3354, %v3356
        %v3358 = vrot.slane %v3350, %v3357
        %v3360 = vunpack.c.l.s4 1934713408
        %v3361 = vunpack.c.0.s8 %v3360
        %v3362 = vlaneseq
        %v3363 = vshrl.u32 %v3362, 7
        %v3364 = vsub.s32 %v3361, %v3363
        %v3365 = vrot.slane %v3351, %v3364
        %v3366 = vcombine.low %v3301, %v3317
        %v3367 = vcombine.high %v3301, %v3317
        %v3369 = vunpack.c.l.s4 1934713408
        %v3370 = vunpack.c.0.s8 %v3369
        %v3371 = vlaneseq
        %v3372 = vshrl.u32 %v3371, 7
        %v3373 = vsub.s32 %v3370, %v3372
        %v3374 = vrot.slane %v3366, %v3373
        %v3376 = vunpack.c.l.s4 1934713408
        %v3377 = vunpack.c.0.s8 %v3376
        %v3378 = vlaneseq
        %v3379 = vshrl.u32 %v3378, 7
        %v3380 = vsub.s32 %v3377, %v3379
        %v3381 = vrot.slane %v3367, %v3380
        %v3382 = vcombine.low %v3326, %v3342
        %v3383 = vcombine.high %v3326, %v3342
        %v3385 = vunpack.c.l.s4 1934713408
        %v3386 = vunpack.c.0.s8 %v3385
        %v3387 = vlaneseq
        %v3388 = vshrl.u32 %v3387, 7
        %v3389 = vsub.s32 %v3386, %v3388
        %v3390 = vrot.slane %v3382, %v3389
        %v3392 = vunpack.c.l.s4 1934713408
        %v3393 = vunpack.c.0.s8 %v3392
        %v3394 = vlaneseq
        %v3395 = vshrl.u32 %v3394, 7
        %v3396 = vsub.s32 %v3393, %v3395
        %v3397 = vrot.slane %v3383, %v3396
        %v3398 = vcombine.low %v3333, %v3349
        %v3399 = vcombine.high %v3333, %v3349
        %v3401 = vunpack.c.l.s4 1934713408
        %v3402 = vunpack.c.0.s8 %v3401
        %v3403 = vlaneseq
        %v3404 = vshrl.u32 %v3403, 7
        %v3405 = vsub.s32 %v3402, %v3404
        %v3406 = vrot.slane %v3398, %v3405
        %v3408 = vunpack.c.l.s4 1934713408
        %v3409 = vunpack.c.0.s8 %v3408
        %v3410 = vlaneseq
        %v3411 = vshrl.u32 %v3410, 7
        %v3412 = vsub.s32 %v3409, %v3411
        %v3413 = vrot.slane %v3399, %v3412
        %v3414 = vcombine.low %v3358, %v3390
        %v3415 = vcombine.high %v3358, %v3390
        %v3416 = vcombine.low %v3365, %v3397
        %v3417 = vcombine.high %v3365, %v3397
        %v3418 = vcombine.low %v3374, %v3406
        %v3419 = vcombine.high %v3374, %v3406
        %v3420 = vcombine.low %v3381, %v3413
        %v3421 = vcombine.high %v3381, %v3413
        %v3422 = vcombine.low %v1919, %v1931
        %v3423 = vcombine.high %v1919, %v1931
        %v3425 = vunpack.c.l.s4 1983009808
        %v3426 = vunpack.c.0.s8 %v3425
        %v3427 = vlaneseq
        %v3428 = vshrl.u32 %v3427, 7
        %v3429 = vsub.s32 %v3426, %v3428
        %v3430 = vrot.slane %v3422, %v3429
        %v3432 = vunpack.c.l.s4 1983009808
        %v3433 = vunpack.c.0.s8 %v3432
        %v3434 = vlaneseq
        %v3435 = vshrl.u32 %v3434, 7
        %v3436 = vsub.s32 %v3433, %v3435
        %v3437 = vrot.slane %v3423, %v3436
        %v3438 = vcombine.low %v1925, %v1937
        %v3439 = vcombine.high %v1925, %v1937
        %v3441 = vunpack.c.l.s4 1983009808
        %v3442 = vunpack.c.0.s8 %v3441
        %v3443 = vlaneseq
        %v3444 = vshrl.u32 %v3443, 7
        %v3445 = vsub.s32 %v3442, %v3444
        %v3446 = vrot.slane %v3438, %v3445
        %v3448 = vunpack.c.l.s4 1983009808
        %v3449 = vunpack.c.0.s8 %v3448
        %v3450 = vlaneseq
        %v3451 = vshrl.u32 %v3450, 7
        %v3452 = vsub.s32 %v3449, %v3451
        %v3453 = vrot.slane %v3439, %v3452
        %v3454 = vcombine.low %v1943, %v1955
        %v3455 = vcombine.high %v1943, %v1955
        %v3457 = vunpack.c.l.s4 1983009808
        %v3458 = vunpack.c.0.s8 %v3457
        %v3459 = vlaneseq
        %v3460 = vshrl.u32 %v3459, 7
        %v3461 = vsub.s32 %v3458, %v3460
        %v3462 = vrot.slane %v3454, %v3461
        %v3464 = vunpack.c.l.s4 1983009808
        %v3465 = vunpack.c.0.s8 %v3464
        %v3466 = vlaneseq
        %v3467 = vshrl.u32 %v3466, 7
        %v3468 = vsub.s32 %v3465, %v3467
        %v3469 = vrot.slane %v3455, %v3468
        %v3470 = vcombine.low %v1949, %v1961
        %v3471 = vcombine.high %v1949, %v1961
        %v3473 = vunpack.c.l.s4 1983009808
        %v3474 = vunpack.c.0.s8 %v3473
        %v3475 = vlaneseq
        %v3476 = vshrl.u32 %v3475, 7
        %v3477 = vsub.s32 %v3474, %v3476
        %v3478 = vrot.slane %v3470, %v3477
        %v3480 = vunpack.c.l.s4 1983009808
        %v3481 = vunpack.c.0.s8 %v3480
        %v3482 = vlaneseq
        %v3483 = vshrl.u32 %v3482, 7
        %v3484 = vsub.s32 %v3481, %v3483
        %v3485 = vrot.slane %v3471, %v3484
        %v3486 = vcombine.low %v3430, %v3446
        %v3487 = vcombine.high %v3430, %v3446
        %v3489 = vunpack.c.l.s4 1934713408
        %v3490 = vunpack.c.0.s8 %v3489
        %v3491 = vlaneseq
        %v3492 = vshrl.u32 %v3491, 7
        %v3493 = vsub.s32 %v3490, %v3492
        %v3494 = vrot.slane %v3486, %v3493
        %v3496 = vunpack.c.l.s4 1934713408
        %v3497 = vunpack.c.0.s8 %v3496
        %v3498 = vlaneseq
        %v3499 = vshrl.u32 %v3498, 7
        %v3500 = vsub.s32 %v3497, %v3499
        %v3501 = vrot.slane %v3487, %v3500
        %v3502 = vcombine.low %v3437, %v3453
        %v3503 = vcombine.high %v3437, %v3453
        %v3505 = vunpack.c.l.s4 1934713408
        %v3506 = vunpack.c.0.s8 %v3505
        %v3507 = vlaneseq
        %v3508 = vshrl.u32 %v3507, 7
        %v3509 = vsub.s32 %v3506, %v3508
        %v3510 = vrot.slane %v3502, %v3509
        %v3512 = vunpack.c.l.s4 1934713408
        %v3513 = vunpack.c.0.s8 %v3512
        %v3514 = vlaneseq
        %v3515 = vshrl.u32 %v3514, 7
        %v3516 = vsub.s32 %v3513, %v3515
        %v3517 = vrot.slane %v3503, %v3516
        %v3518 = vcombine.low %v3462, %v3478
        %v3519 = vcombine.high %v3462, %v3478
        %v3521 = vunpack.c.l.s4 1934713408
        %v3522 = vunpack.c.0.s8 %v3521
        %v3523 = vlaneseq
        %v3524 = vshrl.u32 %v3523, 7
        %v3525 = vsub.s32 %v3522, %v3524
        %v3526 = vrot.slane %v3518, %v3525
        %v3528 = vunpack.c.l.s4 1934713408
        %v3529 = vunpack.c.0.s8 %v3528
        %v3530 = vlaneseq
        %v3531 = vshrl.u32 %v3530, 7
        %v3532 = vsub.s32 %v3529, %v3531
        %v3533 = vrot.slane %v3519, %v3532
        %v3534 = vcombine.low %v3469, %v3485
        %v3535 = vcombine.high %v3469, %v3485
        %v3537 = vunpack.c.l.s4 1934713408
        %v3538 = vunpack.c.0.s8 %v3537
        %v3539 = vlaneseq
        %v3540 = vshrl.u32 %v3539, 7
        %v3541 = vsub.s32 %v3538, %v3540
        %v3542 = vrot.slane %v3534, %v3541
        %v3544 = vunpack.c.l.s4 1934713408
        %v3545 = vunpack.c.0.s8 %v3544
        %v3546 = vlaneseq
        %v3547 = vshrl.u32 %v3546, 7
        %v3548 = vsub.s32 %v3545, %v3547
        %v3549 = vrot.slane %v3535, %v3548
        %v3550 = vcombine.low %v3494, %v3526
        %v3551 = vcombine.high %v3494, %v3526
        %v3552 = vcombine.low %v3501, %v3533
        %v3553 = vcombine.high %v3501, %v3533
        %v3554 = vcombine.low %v3510, %v3542
        %v3555 = vcombine.high %v3510, %v3542
        %v3556 = vcombine.low %v3517, %v3549
        %v3557 = vcombine.high %v3517, %v3549
        %v3558 = vcombine.low %v1922, %v1934
        %v3559 = vcombine.high %v1922, %v1934
        %v3561 = vunpack.c.l.s4 1983009808
        %v3562 = vunpack.c.0.s8 %v3561
        %v3563 = vlaneseq
        %v3564 = vshrl.u32 %v3563, 7
        %v3565 = vsub.s32 %v3562, %v3564
        %v3566 = vrot.slane %v3558, %v3565
        %v3568 = vunpack.c.l.s4 1983009808
        %v3569 = vunpack.c.0.s8 %v3568
        %v3570 = vlaneseq
        %v3571 = vshrl.u32 %v3570, 7
        %v3572 = vsub.s32 %v3569, %v3571
        %v3573 = vrot.slane %v3559, %v3572
        %v3574 = vcombine.low %v1928, %v1940
        %v3575 = vcombine.high %v1928, %v1940
        %v3577 = vunpack.c.l.s4 1983009808
        %v3578 = vunpack.c.0.s8 %v3577
        %v3579 = vlaneseq
        %v3580 = vshrl.u32 %v3579, 7
        %v3581 = vsub.s32 %v3578, %v3580
        %v3582 = vrot.slane %v3574, %v3581
        %v3584 = vunpack.c.l.s4 1983009808
        %v3585 = vunpack.c.0.s8 %v3584
        %v3586 = vlaneseq
        %v3587 = vshrl.u32 %v3586, 7
        %v3588 = vsub.s32 %v3585, %v3587
        %v3589 = vrot.slane %v3575, %v3588
        %v3590 = vcombine.low %v1946, %v1958
        %v3591 = vcombine.high %v1946, %v1958
        %v3593 = vunpack.c.l.s4 1983009808
        %v3594 = vunpack.c.0.s8 %v3593
        %v3595 = vlaneseq
        %v3596 = vshrl.u32 %v3595, 7
        %v3597 = vsub.s32 %v3594, %v3596
        %v3598 = vrot.slane %v3590, %v3597
        %v3600 = vunpack.c.l.s4 1983009808
        %v3601 = vunpack.c.0.s8 %v3600
        %v3602 = vlaneseq
        %v3603 = vshrl.u32 %v3602, 7
        %v3604 = vsub.s32 %v3601, %v3603
        %v3605 = vrot.slane %v3591, %v3604
        %v3606 = vcombine.low %v1952, %v1964
        %v3607 = vcombine.high %v1952, %v1964
        %v3609 = vunpack.c.l.s4 1983009808
        %v3610 = vunpack.c.0.s8 %v3609
        %v3611 = vlaneseq
        %v3612 = vshrl.u32 %v3611, 7
        %v3613 = vsub.s32 %v3610, %v3612
        %v3614 = vrot.slane %v3606, %v3613
        %v3616 = vunpack.c.l.s4 1983009808
        %v3617 = vunpack.c.0.s8 %v3616
        %v3618 = vlaneseq
        %v3619 = vshrl.u32 %v3618, 7
        %v3620 = vsub.s32 %v3617, %v3619
        %v3621 = vrot.slane %v3607, %v3620
        %v3622 = vcombine.low %v3566, %v3582
        %v3623 = vcombine.high %v3566, %v3582
        %v3625 = vunpack.c.l.s4 1934713408
        %v3626 = vunpack.c.0.s8 %v3625
        %v3627 = vlaneseq
        %v3628 = vshrl.u32 %v3627, 7
        %v3629 = vsub.s32 %v3626, %v3628
        %v3630 = vrot.slane %v3622, %v3629
        %v3632 = vunpack.c.l.s4 1934713408
        %v3633 = vunpack.c.0.s8 %v3632
        %v3634 = vlaneseq
        %v3635 = vshrl.u32 %v3634, 7
        %v3636 = vsub.s32 %v3633, %v3635
        %v3637 = vrot.slane %v3623, %v3636
        %v3638 = vcombine.low %v3573, %v3589
        %v3639 = vcombine.high %v3573, %v3589
        %v3641 = vunpack.c.l.s4 1934713408
        %v3642 = vunpack.c.0.s8 %v3641
        %v3643 = vlaneseq
        %v3644 = vshrl.u32 %v3643, 7
        %v3645 = vsub.s32 %v3642, %v3644
        %v3646 = vrot.slane %v3638, %v3645
        %v3648 = vunpack.c.l.s4 1934713408
        %v3649 = vunpack.c.0.s8 %v3648
        %v3650 = vlaneseq
        %v3651 = vshrl.u32 %v3650, 7
        %v3652 = vsub.s32 %v3649, %v3651
        %v3653 = vrot.slane %v3639, %v3652
        %v3654 = vcombine.low %v3598, %v3614
        %v3655 = vcombine.high %v3598, %v3614
        %v3657 = vunpack.c.l.s4 1934713408
        %v3658 = vunpack.c.0.s8 %v3657
        %v3659 = vlaneseq
        %v3660 = vshrl.u32 %v3659, 7
        %v3661 = vsub.s32 %v3658, %v3660
        %v3662 = vrot.slane %v3654, %v3661
        %v3664 = vunpack.c.l.s4 1934713408
        %v3665 = vunpack.c.0.s8 %v3664
        %v3666 = vlaneseq
        %v3667 = vshrl.u32 %v3666, 7
        %v3668 = vsub.s32 %v3665, %v3667
        %v3669 = vrot.slane %v3655, %v3668
        %v3670 = vcombine.low %v3605, %v3621
        %v3671 = vcombine.high %v3605, %v3621
        %v3673 = vunpack.c.l.s4 1934713408
        %v3674 = vunpack.c.0.s8 %v3673
        %v3675 = vlaneseq
        %v3676 = vshrl.u32 %v3675, 7
        %v3677 = vsub.s32 %v3674, %v3676
        %v3678 = vrot.slane %v3670, %v3677
        %v3680 = vunpack.c.l.s4 1934713408
        %v3681 = vunpack.c.0.s8 %v3680
        %v3682 = vlaneseq
        %v3683 = vshrl.u32 %v3682, 7
        %v3684 = vsub.s32 %v3681, %v3683
        %v3685 = vrot.slane %v3671, %v3684
        %v3686 = vcombine.low %v3630, %v3662
        %v3687 = vcombine.high %v3630, %v3662
        %v3688 = vcombine.low %v3637, %v3669
        %v3689 = vcombine.high %v3637, %v3669
        %v3690 = vcombine.low %v3646, %v3678
        %v3691 = vcombine.high %v3646, %v3678
        %v3692 = vcombine.low %v3653, %v3685
        %v3693 = vcombine.high %v3653, %v3685
        %v3694 = vcombine.low %v1967, %v1979
        %v3695 = vcombine.high %v1967, %v1979
        %v3697 = vunpack.c.l.s4 1983009808
        %v3698 = vunpack.c.0.s8 %v3697
        %v3699 = vlaneseq
        %v3700 = vshrl.u32 %v3699, 7
        %v3701 = vsub.s32 %v3698, %v3700
        %v3702 = vrot.slane %v3694, %v3701
        %v3704 = vunpack.c.l.s4 1983009808
        %v3705 = vunpack.c.0.s8 %v3704
        %v3706 = vlaneseq
        %v3707 = vshrl.u32 %v3706, 7
        %v3708 = vsub.s32 %v3705, %v3707
        %v3709 = vrot.slane %v3695, %v3708
        %v3710 = vcombine.low %v1973, %v1985
        %v3711 = vcombine.high %v1973, %v1985
        %v3713 = vunpack.c.l.s4 1983009808
        %v3714 = vunpack.c.0.s8 %v3713
        %v3715 = vlaneseq
        %v3716 = vshrl.u32 %v3715, 7
        %v3717 = vsub.s32 %v3714, %v3716
        %v3718 = vrot.slane %v3710, %v3717
        %v3720 = vunpack.c.l.s4 1983009808
        %v3721 = vunpack.c.0.s8 %v3720
        %v3722 = vlaneseq
        %v3723 = vshrl.u32 %v3722, 7
        %v3724 = vsub.s32 %v3721, %v3723
        %v3725 = vrot.slane %v3711, %v3724
        %v3726 = vcombine.low %v1991, %v2003
        %v3727 = vcombine.high %v1991, %v2003
        %v3729 = vunpack.c.l.s4 1983009808
        %v3730 = vunpack.c.0.s8 %v3729
        %v3731 = vlaneseq
        %v3732 = vshrl.u32 %v3731, 7
        %v3733 = vsub.s32 %v3730, %v3732
        %v3734 = vrot.slane %v3726, %v3733
        %v3736 = vunpack.c.l.s4 1983009808
        %v3737 = vunpack.c.0.s8 %v3736
        %v3738 = vlaneseq
        %v3739 = vshrl.u32 %v3738, 7
        %v3740 = vsub.s32 %v3737, %v3739
        %v3741 = vrot.slane %v3727, %v3740
        %v3742 = vcombine.low %v1997, %v2009
        %v3743 = vcombine.high %v1997, %v2009
        %v3745 = vunpack.c.l.s4 1983009808
        %v3746 = vunpack.c.0.s8 %v3745
        %v3747 = vlaneseq
        %v3748 = vshrl.u32 %v3747, 7
        %v3749 = vsub.s32 %v3746, %v3748
        %v3750 = vrot.slane %v3742, %v3749
        %v3752 = vunpack.c.l.s4 1983009808
        %v3753 = vunpack.c.0.s8 %v3752
        %v3754 = vlaneseq
        %v3755 = vshrl.u32 %v3754, 7
        %v3756 = vsub.s32 %v3753, %v3755
        %v3757 = vrot.slane %v3743, %v3756
        %v3758 = vcombine.low %v3702, %v3718
        %v3759 = vcombine.high %v3702, %v3718
        %v3761 = vunpack.c.l.s4 1934713408
        %v3762 = vunpack.c.0.s8 %v3761
        %v3763 = vlaneseq
        %v3764 = vshrl.u32 %v3763, 7
        %v3765 = vsub.s32 %v3762, %v3764
        %v3766 = vrot.slane %v3758, %v3765
        %v3768 = vunpack.c.l.s4 1934713408
        %v3769 = vunpack.c.0.s8 %v3768
        %v3770 = vlaneseq
        %v3771 = vshrl.u32 %v3770, 7
        %v3772 = vsub.s32 %v3769, %v3771
        %v3773 = vrot.slane %v3759, %v3772
        %v3774 = vcombine.low %v3709, %v3725
        %v3775 = vcombine.high %v3709, %v3725
        %v3777 = vunpack.c.l.s4 1934713408
        %v3778 = vunpack.c.0.s8 %v3777
        %v3779 = vlaneseq
        %v3780 = vshrl.u32 %v3779, 7
        %v3781 = vsub.s32 %v3778, %v3780
        %v3782 = vrot.slane %v3774, %v3781
        %v3784 = vunpack.c.l.s4 1934713408
        %v3785 = vunpack.c.0.s8 %v3784
        %v3786 = vlaneseq
        %v3787 = vshrl.u32 %v3786, 7
        %v3788 = vsub.s32 %v3785, %v3787
        %v3789 = vrot.slane %v3775, %v3788
        %v3790 = vcombine.low %v3734, %v3750
        %v3791 = vcombine.high %v3734, %v3750
        %v3793 = vunpack.c.l.s4 1934713408
        %v3794 = vunpack.c.0.s8 %v3793
        %v3795 = vlaneseq
        %v3796 = vshrl.u32 %v3795, 7
        %v3797 = vsub.s32 %v3794, %v3796
        %v3798 = vrot.slane %v3790, %v3797
        %v3800 = vunpack.c.l.s4 1934713408
        %v3801 = vunpack.c.0.s8 %v3800
        %v3802 = vlaneseq
        %v3803 = vshrl.u32 %v3802, 7
        %v3804 = vsub.s32 %v3801, %v3803
        %v3805 = vrot.slane %v3791, %v3804
        %v3806 = vcombine.low %v3741, %v3757
        %v3807 = vcombine.high %v3741, %v3757
        %v3809 = vunpack.c.l.s4 1934713408
        %v3810 = vunpack.c.0.s8 %v3809
        %v3811 = vlaneseq
        %v3812 = vshrl.u32 %v3811, 7
        %v3813 = vsub.s32 %v3810, %v3812
        %v3814 = vrot.slane %v3806, %v3813
        %v3816 = vunpack.c.l.s4 1934713408
        %v3817 = vunpack.c.0.s8 %v3816
        %v3818 = vlaneseq
        %v3819 = vshrl.u32 %v3818, 7
        %v3820 = vsub.s32 %v3817, %v3819
        %v3821 = vrot.slane %v3807, %v3820
        %v3822 = vcombine.low %v3766, %v3798
        %v3823 = vcombine.high %v3766, %v3798
        %v3824 = vcombine.low %v3773, %v3805
        %v3825 = vcombine.high %v3773, %v3805
        %v3826 = vcombine.low %v3782, %v3814
        %v3827 = vcombine.high %v3782, %v3814
        %v3828 = vcombine.low %v3789, %v3821
        %v3829 = vcombine.high %v3789, %v3821
        %v3830 = vcombine.low %v1970, %v1982
        %v3831 = vcombine.high %v1970, %v1982
        %v3833 = vunpack.c.l.s4 1983009808
        %v3834 = vunpack.c.0.s8 %v3833
        %v3835 = vlaneseq
        %v3836 = vshrl.u32 %v3835, 7
        %v3837 = vsub.s32 %v3834, %v3836
        %v3838 = vrot.slane %v3830, %v3837
        %v3840 = vunpack.c.l.s4 1983009808
        %v3841 = vunpack.c.0.s8 %v3840
        %v3842 = vlaneseq
        %v3843 = vshrl.u32 %v3842, 7
        %v3844 = vsub.s32 %v3841, %v3843
        %v3845 = vrot.slane %v3831, %v3844
        %v3846 = vcombine.low %v1976, %v1988
        %v3847 = vcombine.high %v1976, %v1988
        %v3849 = vunpack.c.l.s4 1983009808
        %v3850 = vunpack.c.0.s8 %v3849
        %v3851 = vlaneseq
        %v3852 = vshrl.u32 %v3851, 7
        %v3853 = vsub.s32 %v3850, %v3852
        %v3854 = vrot.slane %v3846, %v3853
        %v3856 = vunpack.c.l.s4 1983009808
        %v3857 = vunpack.c.0.s8 %v3856
        %v3858 = vlaneseq
        %v3859 = vshrl.u32 %v3858, 7
        %v3860 = vsub.s32 %v3857, %v3859
        %v3861 = vrot.slane %v3847, %v3860
        %v3862 = vcombine.low %v1994, %v2006
        %v3863 = vcombine.high %v1994, %v2006
        %v3865 = vunpack.c.l.s4 1983009808
        %v3866 = vunpack.c.0.s8 %v3865
        %v3867 = vlaneseq
        %v3868 = vshrl.u32 %v3867, 7
        %v3869 = vsub.s32 %v3866, %v3868
        %v3870 = vrot.slane %v3862, %v3869
        %v3872 = vunpack.c.l.s4 1983009808
        %v3873 = vunpack.c.0.s8 %v3872
        %v3874 = vlaneseq
        %v3875 = vshrl.u32 %v3874, 7
        %v3876 = vsub.s32 %v3873, %v3875
        %v3877 = vrot.slane %v3863, %v3876
        %v3878 = vcombine.low %v2000, %v2012
        %v3879 = vcombine.high %v2000, %v2012
        %v3881 = vunpack.c.l.s4 1983009808
        %v3882 = vunpack.c.0.s8 %v3881
        %v3883 = vlaneseq
        %v3884 = vshrl.u32 %v3883, 7
        %v3885 = vsub.s32 %v3882, %v3884
        %v3886 = vrot.slane %v3878, %v3885
        %v3888 = vunpack.c.l.s4 1983009808
        %v3889 = vunpack.c.0.s8 %v3888
        %v3890 = vlaneseq
        %v3891 = vshrl.u32 %v3890, 7
        %v3892 = vsub.s32 %v3889, %v3891
        %v3893 = vrot.slane %v3879, %v3892
        %v3894 = vcombine.low %v3838, %v3854
        %v3895 = vcombine.high %v3838, %v3854
        %v3897 = vunpack.c.l.s4 1934713408
        %v3898 = vunpack.c.0.s8 %v3897
        %v3899 = vlaneseq
        %v3900 = vshrl.u32 %v3899, 7
        %v3901 = vsub.s32 %v3898, %v3900
        %v3902 = vrot.slane %v3894, %v3901
        %v3904 = vunpack.c.l.s4 1934713408
        %v3905 = vunpack.c.0.s8 %v3904
        %v3906 = vlaneseq
        %v3907 = vshrl.u32 %v3906, 7
        %v3908 = vsub.s32 %v3905, %v3907
        %v3909 = vrot.slane %v3895, %v3908
        %v3910 = vcombine.low %v3845, %v3861
        %v3911 = vcombine.high %v3845, %v3861
        %v3913 = vunpack.c.l.s4 1934713408
        %v3914 = vunpack.c.0.s8 %v3913
        %v3915 = vlaneseq
        %v3916 = vshrl.u32 %v3915, 7
        %v3917 = vsub.s32 %v3914, %v3916
        %v3918 = vrot.slane %v3910, %v3917
        %v3920 = vunpack.c.l.s4 1934713408
        %v3921 = vunpack.c.0.s8 %v3920
        %v3922 = vlaneseq
        %v3923 = vshrl.u32 %v3922, 7
        %v3924 = vsub.s32 %v3921, %v3923
        %v3925 = vrot.slane %v3911, %v3924
        %v3926 = vcombine.low %v3870, %v3886
        %v3927 = vcombine.high %v3870, %v3886
        %v3929 = vunpack.c.l.s4 1934713408
        %v3930 = vunpack.c.0.s8 %v3929
        %v3931 = vlaneseq
        %v3932 = vshrl.u32 %v3931, 7
        %v3933 = vsub.s32 %v3930, %v3932
        %v3934 = vrot.slane %v3926, %v3933
        %v3936 = vunpack.c.l.s4 1934713408
        %v3937 = vunpack.c.0.s8 %v3936
        %v3938 = vlaneseq
        %v3939 = vshrl.u32 %v3938, 7
        %v3940 = vsub.s32 %v3937, %v3939
        %v3941 = vrot.slane %v3927, %v3940
        %v3942 = vcombine.low %v3877, %v3893
        %v3943 = vcombine.high %v3877, %v3893
        %v3945 = vunpack.c.l.s4 1934713408
        %v3946 = vunpack.c.0.s8 %v3945
        %v3947 = vlaneseq
        %v3948 = vshrl.u32 %v3947, 7
        %v3949 = vsub.s32 %v3946, %v3948
        %v3950 = vrot.slane %v3942, %v3949
        %v3952 = vunpack.c.l.s4 1934713408
        %v3953 = vunpack.c.0.s8 %v3952
        %v3954 = vlaneseq
        %v3955 = vshrl.u32 %v3954, 7
        %v3956 = vsub.s32 %v3953, %v3955
        %v3957 = vrot.slane %v3943, %v3956
        %v3958 = vcombine.low %v3902, %v3934
        %v3959 = vcombine.high %v3902, %v3934
        %v3960 = vcombine.low %v3909, %v3941
        %v3961 = vcombine.high %v3909, %v3941
        %v3962 = vcombine.low %v3918, %v3950
        %v3963 = vcombine.high %v3918, %v3950
        %v3964 = vcombine.low %v3925, %v3957
        %v3965 = vcombine.high %v3925, %v3957
        %v3966 = vcombine.low %v2015, %v2027
        %v3967 = vcombine.high %v2015, %v2027
        %v3969 = vunpack.c.l.s4 1983009808
        %v3970 = vunpack.c.0.s8 %v3969
        %v3971 = vlaneseq
        %v3972 = vshrl.u32 %v3971, 7
        %v3973 = vsub.s32 %v3970, %v3972
        %v3974 = vrot.slane %v3966, %v3973
        %v3976 = vunpack.c.l.s4 1983009808
        %v3977 = vunpack.c.0.s8 %v3976
        %v3978 = vlaneseq
        %v3979 = vshrl.u32 %v3978, 7
        %v3980 = vsub.s32 %v3977, %v3979
        %v3981 = vrot.slane %v3967, %v3980
        %v3982 = vcombine.low %v2021, %v2033
        %v3983 = vcombine.high %v2021, %v2033
        %v3985 = vunpack.c.l.s4 1983009808
        %v3986 = vunpack.c.0.s8 %v3985
        %v3987 = vlaneseq
        %v3988 = vshrl.u32 %v3987, 7
        %v3989 = vsub.s32 %v3986, %v3988
        %v3990 = vrot.slane %v3982, %v3989
        %v3992 = vunpack.c.l.s4 1983009808
        %v3993 = vunpack.c.0.s8 %v3992
        %v3994 = vlaneseq
        %v3995 = vshrl.u32 %v3994, 7
        %v3996 = vsub.s32 %v3993, %v3995
        %v3997 = vrot.slane %v3983, %v3996
        %v3998 = vcombine.low %v2039, %v2051
        %v3999 = vcombine.high %v2039, %v2051
        %v4001 = vunpack.c.l.s4 1983009808
        %v4002 = vunpack.c.0.s8 %v4001
        %v4003 = vlaneseq
        %v4004 = vshrl.u32 %v4003, 7
        %v4005 = vsub.s32 %v4002, %v4004
        %v4006 = vrot.slane %v3998, %v4005
        %v4008 = vunpack.c.l.s4 1983009808
        %v4009 = vunpack.c.0.s8 %v4008
        %v4010 = vlaneseq
        %v4011 = vshrl.u32 %v4010, 7
        %v4012 = vsub.s32 %v4009, %v4011
        %v4013 = vrot.slane %v3999, %v4012
        %v4014 = vcombine.low %v2045, %v2057
        %v4015 = vcombine.high %v2045, %v2057
        %v4017 = vunpack.c.l.s4 1983009808
        %v4018 = vunpack.c.0.s8 %v4017
        %v4019 = vlaneseq
        %v4020 = vshrl.u32 %v4019, 7
        %v4021 = vsub.s32 %v4018, %v4020
        %v4022 = vrot.slane %v4014, %v4021
        %v4024 = vunpack.c.l.s4 1983009808
        %v4025 = vunpack.c.0.s8 %v4024
        %v4026 = vlaneseq
        %v4027 = vshrl.u32 %v4026, 7
        %v4028 = vsub.s32 %v4025, %v4027
        %v4029 = vrot.slane %v4015, %v4028
        %v4030 = vcombine.low %v3974, %v3990
        %v4031 = vcombine.high %v3974, %v3990
        %v4033 = vunpack.c.l.s4 1934713408
        %v4034 = vunpack.c.0.s8 %v4033
        %v4035 = vlaneseq
        %v4036 = vshrl.u32 %v4035, 7
        %v4037 = vsub.s32 %v4034, %v4036
        %v4038 = vrot.slane %v4030, %v4037
        %v4040 = vunpack.c.l.s4 1934713408
        %v4041 = vunpack.c.0.s8 %v4040
        %v4042 = vlaneseq
        %v4043 = vshrl.u32 %v4042, 7
        %v4044 = vsub.s32 %v4041, %v4043
        %v4045 = vrot.slane %v4031, %v4044
        %v4046 = vcombine.low %v3981, %v3997
        %v4047 = vcombine.high %v3981, %v3997
        %v4049 = vunpack.c.l.s4 1934713408
        %v4050 = vunpack.c.0.s8 %v4049
        %v4051 = vlaneseq
        %v4052 = vshrl.u32 %v4051, 7
        %v4053 = vsub.s32 %v4050, %v4052
        %v4054 = vrot.slane %v4046, %v4053
        %v4056 = vunpack.c.l.s4 1934713408
        %v4057 = vunpack.c.0.s8 %v4056
        %v4058 = vlaneseq
        %v4059 = vshrl.u32 %v4058, 7
        %v4060 = vsub.s32 %v4057, %v4059
        %v4061 = vrot.slane %v4047, %v4060
        %v4062 = vcombine.low %v4006, %v4022
        %v4063 = vcombine.high %v4006, %v4022
        %v4065 = vunpack.c.l.s4 1934713408
        %v4066 = vunpack.c.0.s8 %v4065
        %v4067 = vlaneseq
        %v4068 = vshrl.u32 %v4067, 7
        %v4069 = vsub.s32 %v4066, %v4068
        %v4070 = vrot.slane %v4062, %v4069
        %v4072 = vunpack.c.l.s4 1934713408
        %v4073 = vunpack.c.0.s8 %v4072
        %v4074 = vlaneseq
        %v4075 = vshrl.u32 %v4074, 7
        %v4076 = vsub.s32 %v4073, %v4075
        %v4077 = vrot.slane %v4063, %v4076
        %v4078 = vcombine.low %v4013, %v4029
        %v4079 = vcombine.high %v4013, %v4029
        %v4081 = vunpack.c.l.s4 1934713408
        %v4082 = vunpack.c.0.s8 %v4081
        %v4083 = vlaneseq
        %v4084 = vshrl.u32 %v4083, 7
        %v4085 = vsub.s32 %v4082, %v4084
        %v4086 = vrot.slane %v4078, %v4085
        %v4088 = vunpack.c.l.s4 1934713408
        %v4089 = vunpack.c.0.s8 %v4088
        %v4090 = vlaneseq
        %v4091 = vshrl.u32 %v4090, 7
        %v4092 = vsub.s32 %v4089, %v4091
        %v4093 = vrot.slane %v4079, %v4092
        %v4094 = vcombine.low %v4038, %v4070
        %v4095 = vcombine.high %v4038, %v4070
        %v4096 = vcombine.low %v4045, %v4077
        %v4097 = vcombine.high %v4045, %v4077
        %v4098 = vcombine.low %v4054, %v4086
        %v4099 = vcombine.high %v4054, %v4086
        %v4100 = vcombine.low %v4061, %v4093
        %v4101 = vcombine.high %v4061, %v4093
        %v4102 = vcombine.low %v2018, %v2030
        %v4103 = vcombine.high %v2018, %v2030
        %v4105 = vunpack.c.l.s4 1983009808
        %v4106 = vunpack.c.0.s8 %v4105
        %v4107 = vlaneseq
        %v4108 = vshrl.u32 %v4107, 7
        %v4109 = vsub.s32 %v4106, %v4108
        %v4110 = vrot.slane %v4102, %v4109
        %v4112 = vunpack.c.l.s4 1983009808
        %v4113 = vunpack.c.0.s8 %v4112
        %v4114 = vlaneseq
        %v4115 = vshrl.u32 %v4114, 7
        %v4116 = vsub.s32 %v4113, %v4115
        %v4117 = vrot.slane %v4103, %v4116
        %v4118 = vcombine.low %v2024, %v2036
        %v4119 = vcombine.high %v2024, %v2036
        %v4121 = vunpack.c.l.s4 1983009808
        %v4122 = vunpack.c.0.s8 %v4121
        %v4123 = vlaneseq
        %v4124 = vshrl.u32 %v4123, 7
        %v4125 = vsub.s32 %v4122, %v4124
        %v4126 = vrot.slane %v4118, %v4125
        %v4128 = vunpack.c.l.s4 1983009808
        %v4129 = vunpack.c.0.s8 %v4128
        %v4130 = vlaneseq
        %v4131 = vshrl.u32 %v4130, 7
        %v4132 = vsub.s32 %v4129, %v4131
        %v4133 = vrot.slane %v4119, %v4132
        %v4134 = vcombine.low %v2042, %v2054
        %v4135 = vcombine.high %v2042, %v2054
        %v4137 = vunpack.c.l.s4 1983009808
        %v4138 = vunpack.c.0.s8 %v4137
        %v4139 = vlaneseq
        %v4140 = vshrl.u32 %v4139, 7
        %v4141 = vsub.s32 %v4138, %v4140
        %v4142 = vrot.slane %v4134, %v4141
        %v4144 = vunpack.c.l.s4 1983009808
        %v4145 = vunpack.c.0.s8 %v4144
        %v4146 = vlaneseq
        %v4147 = vshrl.u32 %v4146, 7
        %v4148 = vsub.s32 %v4145, %v4147
        %v4149 = vrot.slane %v4135, %v4148
        %v4150 = vcombine.low %v2048, %v2060
        %v4151 = vcombine.high %v2048, %v2060
        %v4153 = vunpack.c.l.s4 1983009808
        %v4154 = vunpack.c.0.s8 %v4153
        %v4155 = vlaneseq
        %v4156 = vshrl.u32 %v4155, 7
        %v4157 = vsub.s32 %v4154, %v4156
        %v4158 = vrot.slane %v4150, %v4157
        %v4160 = vunpack.c.l.s4 1983009808
        %v4161 = vunpack.c.0.s8 %v4160
        %v4162 = vlaneseq
        %v4163 = vshrl.u32 %v4162, 7
        %v4164 = vsub.s32 %v4161, %v4163
        %v4165 = vrot.slane %v4151, %v4164
        %v4166 = vcombine.low %v4110, %v4126
        %v4167 = vcombine.high %v4110, %v4126
        %v4169 = vunpack.c.l.s4 1934713408
        %v4170 = vunpack.c.0.s8 %v4169
        %v4171 = vlaneseq
        %v4172 = vshrl.u32 %v4171, 7
        %v4173 = vsub.s32 %v4170, %v4172
        %v4174 = vrot.slane %v4166, %v4173
        %v4176 = vunpack.c.l.s4 1934713408
        %v4177 = vunpack.c.0.s8 %v4176
        %v4178 = vlaneseq
        %v4179 = vshrl.u32 %v4178, 7
        %v4180 = vsub.s32 %v4177, %v4179
        %v4181 = vrot.slane %v4167, %v4180
        %v4182 = vcombine.low %v4117, %v4133
        %v4183 = vcombine.high %v4117, %v4133
        %v4185 = vunpack.c.l.s4 1934713408
        %v4186 = vunpack.c.0.s8 %v4185
        %v4187 = vlaneseq
        %v4188 = vshrl.u32 %v4187, 7
        %v4189 = vsub.s32 %v4186, %v4188
        %v4190 = vrot.slane %v4182, %v4189
        %v4192 = vunpack.c.l.s4 1934713408
        %v4193 = vunpack.c.0.s8 %v4192
        %v4194 = vlaneseq
        %v4195 = vshrl.u32 %v4194, 7
        %v4196 = vsub.s32 %v4193, %v4195
        %v4197 = vrot.slane %v4183, %v4196
        %v4198 = vcombine.low %v4142, %v4158
        %v4199 = vcombine.high %v4142, %v4158
        %v4201 = vunpack.c.l.s4 1934713408
        %v4202 = vunpack.c.0.s8 %v4201
        %v4203 = vlaneseq
        %v4204 = vshrl.u32 %v4203, 7
        %v4205 = vsub.s32 %v4202, %v4204
        %v4206 = vrot.slane %v4198, %v4205
        %v4208 = vunpack.c.l.s4 1934713408
        %v4209 = vunpack.c.0.s8 %v4208
        %v4210 = vlaneseq
        %v4211 = vshrl.u32 %v4210, 7
        %v4212 = vsub.s32 %v4209, %v4211
        %v4213 = vrot.slane %v4199, %v4212
        %v4214 = vcombine.low %v4149, %v4165
        %v4215 = vcombine.high %v4149, %v4165
        %v4217 = vunpack.c.l.s4 1934713408
        %v4218 = vunpack.c.0.s8 %v4217
        %v4219 = vlaneseq
        %v4220 = vshrl.u32 %v4219, 7
        %v4221 = vsub.s32 %v4218, %v4220
        %v4222 = vrot.slane %v4214, %v4221
        %v4224 = vunpack.c.l.s4 1934713408
        %v4225 = vunpack.c.0.s8 %v4224
        %v4226 = vlaneseq
        %v4227 = vshrl.u32 %v4226, 7
        %v4228 = vsub.s32 %v4225, %v4227
        %v4229 = vrot.slane %v4215, %v4228
        %v4230 = vcombine.low %v4174, %v4206
        %v4231 = vcombine.high %v4174, %v4206
        %v4232 = vcombine.low %v4181, %v4213
        %v4233 = vcombine.high %v4181, %v4213
        %v4234 = vcombine.low %v4190, %v4222
        %v4235 = vcombine.high %v4190, %v4222
        %v4236 = vcombine.low %v4197, %v4229
        %v4237 = vcombine.high %v4197, %v4229
        %v4240 = vpack.i.b16 %v2326, %v2190
        %v4241 = vshrl.u32 %v2190, 16
        %v4242 = vshrl.u32 %v2326, 16
        %v4243 = vpack.i.b16 %v4242, %v4241
        %v4246 = vpack.i.b16 %v2327, %v2191
        %v4247 = vshrl.u32 %v2191, 16
        %v4248 = vshrl.u32 %v2327, 16
        %v4249 = vpack.i.b16 %v4248, %v4247
        %v4252 = vpack.i.b16 %v2328, %v2192
        %v4253 = vshrl.u32 %v2192, 16
        %v4254 = vshrl.u32 %v2328, 16
        %v4255 = vpack.i.b16 %v4254, %v4253
        %v4258 = vpack.i.b16 %v2329, %v2193
        %v4259 = vshrl.u32 %v2193, 16
        %v4260 = vshrl.u32 %v2329, 16
        %v4261 = vpack.i.b16 %v4260, %v4259
        %v4264 = vpack.i.b16 %v2330, %v2194
        %v4265 = vshrl.u32 %v2194, 16
        %v4266 = vshrl.u32 %v2330, 16
        %v4267 = vpack.i.b16 %v4266, %v4265
        %v4270 = vpack.i.b16 %v2331, %v2195
        %v4271 = vshrl.u32 %v2195, 16
        %v4272 = vshrl.u32 %v2331, 16
        %v4273 = vpack.i.b16 %v4272, %v4271
        %v4276 = vpack.i.b16 %v2332, %v2196
        %v4277 = vshrl.u32 %v2196, 16
        %v4278 = vshrl.u32 %v2332, 16
        %v4279 = vpack.i.b16 %v4278, %v4277
        %v4282 = vpack.i.b16 %v2333, %v2197
        %v4283 = vshrl.u32 %v2197, 16
        %v4284 = vshrl.u32 %v2333, 16
        %v4285 = vpack.i.b16 %v4284, %v4283
        %v4288 = vpack.i.b16 %v2598, %v2462
        %v4289 = vshrl.u32 %v2462, 16
        %v4290 = vshrl.u32 %v2598, 16
        %v4291 = vpack.i.b16 %v4290, %v4289
        %v4294 = vpack.i.b16 %v2599, %v2463
        %v4295 = vshrl.u32 %v2463, 16
        %v4296 = vshrl.u32 %v2599, 16
        %v4297 = vpack.i.b16 %v4296, %v4295
        %v4300 = vpack.i.b16 %v2600, %v2464
        %v4301 = vshrl.u32 %v2464, 16
        %v4302 = vshrl.u32 %v2600, 16
        %v4303 = vpack.i.b16 %v4302, %v4301
        %v4306 = vpack.i.b16 %v2601, %v2465
        %v4307 = vshrl.u32 %v2465, 16
        %v4308 = vshrl.u32 %v2601, 16
        %v4309 = vpack.i.b16 %v4308, %v4307
        %v4312 = vpack.i.b16 %v2602, %v2466
        %v4313 = vshrl.u32 %v2466, 16
        %v4314 = vshrl.u32 %v2602, 16
        %v4315 = vpack.i.b16 %v4314, %v4313
        %v4318 = vpack.i.b16 %v2603, %v2467
        %v4319 = vshrl.u32 %v2467, 16
        %v4320 = vshrl.u32 %v2603, 16
        %v4321 = vpack.i.b16 %v4320, %v4319
        %v4324 = vpack.i.b16 %v2604, %v2468
        %v4325 = vshrl.u32 %v2468, 16
        %v4326 = vshrl.u32 %v2604, 16
        %v4327 = vpack.i.b16 %v4326, %v4325
        %v4330 = vpack.i.b16 %v2605, %v2469
        %v4331 = vshrl.u32 %v2469, 16
        %v4332 = vshrl.u32 %v2605, 16
        %v4333 = vpack.i.b16 %v4332, %v4331
        %v4336 = vpack.i.b16 %v2870, %v2734
        %v4337 = vshrl.u32 %v2734, 16
        %v4338 = vshrl.u32 %v2870, 16
        %v4339 = vpack.i.b16 %v4338, %v4337
        %v4342 = vpack.i.b16 %v2871, %v2735
        %v4343 = vshrl.u32 %v2735, 16
        %v4344 = vshrl.u32 %v2871, 16
        %v4345 = vpack.i.b16 %v4344, %v4343
        %v4348 = vpack.i.b16 %v2872, %v2736
        %v4349 = vshrl.u32 %v2736, 16
        %v4350 = vshrl.u32 %v2872, 16
        %v4351 = vpack.i.b16 %v4350, %v4349
        %v4354 = vpack.i.b16 %v2873, %v2737
        %v4355 = vshrl.u32 %v2737, 16
        %v4356 = vshrl.u32 %v2873, 16
        %v4357 = vpack.i.b16 %v4356, %v4355
        %v4360 = vpack.i.b16 %v2874, %v2738
        %v4361 = vshrl.u32 %v2738, 16
        %v4362 = vshrl.u32 %v2874, 16
        %v4363 = vpack.i.b16 %v4362, %v4361
        %v4366 = vpack.i.b16 %v2875, %v2739
        %v4367 = vshrl.u32 %v2739, 16
        %v4368 = vshrl.u32 %v2875, 16
        %v4369 = vpack.i.b16 %v4368, %v4367
        %v4372 = vpack.i.b16 %v2876, %v2740
        %v4373 = vshrl.u32 %v2740, 16
        %v4374 = vshrl.u32 %v2876, 16
        %v4375 = vpack.i.b16 %v4374, %v4373
        %v4378 = vpack.i.b16 %v2877, %v2741
        %v4379 = vshrl.u32 %v2741, 16
        %v4380 = vshrl.u32 %v2877, 16
        %v4381 = vpack.i.b16 %v4380, %v4379
        %v4384 = vpack.i.b16 %v3142, %v3006
        %v4385 = vshrl.u32 %v3006, 16
        %v4386 = vshrl.u32 %v3142, 16
        %v4387 = vpack.i.b16 %v4386, %v4385
        %v4390 = vpack.i.b16 %v3143, %v3007
        %v4391 = vshrl.u32 %v3007, 16
        %v4392 = vshrl.u32 %v3143, 16
        %v4393 = vpack.i.b16 %v4392, %v4391
        %v4396 = vpack.i.b16 %v3144, %v3008
        %v4397 = vshrl.u32 %v3008, 16
        %v4398 = vshrl.u32 %v3144, 16
        %v4399 = vpack.i.b16 %v4398, %v4397
        %v4402 = vpack.i.b16 %v3145, %v3009
        %v4403 = vshrl.u32 %v3009, 16
        %v4404 = vshrl.u32 %v3145, 16
        %v4405 = vpack.i.b16 %v4404, %v4403
        %v4408 = vpack.i.b16 %v3146, %v3010
        %v4409 = vshrl.u32 %v3010, 16
        %v4410 = vshrl.u32 %v3146, 16
        %v4411 = vpack.i.b16 %v4410, %v4409
        %v4414 = vpack.i.b16 %v3147, %v3011
        %v4415 = vshrl.u32 %v3011, 16
        %v4416 = vshrl.u32 %v3147, 16
        %v4417 = vpack.i.b16 %v4416, %v4415
        %v4420 = vpack.i.b16 %v3148, %v3012
        %v4421 = vshrl.u32 %v3012, 16
        %v4422 = vshrl.u32 %v3148, 16
        %v4423 = vpack.i.b16 %v4422, %v4421
        %v4426 = vpack.i.b16 %v3149, %v3013
        %v4427 = vshrl.u32 %v3013, 16
        %v4428 = vshrl.u32 %v3149, 16
        %v4429 = vpack.i.b16 %v4428, %v4427
        %v4432 = vpack.i.b16 %v3414, %v3278
        %v4433 = vshrl.u32 %v3278, 16
        %v4434 = vshrl.u32 %v3414, 16
        %v4435 = vpack.i.b16 %v4434, %v4433
        %v4438 = vpack.i.b16 %v3415, %v3279
        %v4439 = vshrl.u32 %v3279, 16
        %v4440 = vshrl.u32 %v3415, 16
        %v4441 = vpack.i.b16 %v4440, %v4439
        %v4444 = vpack.i.b16 %v3416, %v3280
        %v4445 = vshrl.u32 %v3280, 16
        %v4446 = vshrl.u32 %v3416, 16
        %v4447 = vpack.i.b16 %v4446, %v4445
        %v4450 = vpack.i.b16 %v3417, %v3281
        %v4451 = vshrl.u32 %v3281, 16
        %v4452 = vshrl.u32 %v3417, 16
        %v4453 = vpack.i.b16 %v4452, %v4451
        %v4456 = vpack.i.b16 %v3418, %v3282
        %v4457 = vshrl.u32 %v3282, 16
        %v4458 = vshrl.u32 %v3418, 16
        %v4459 = vpack.i.b16 %v4458, %v4457
        %v4462 = vpack.i.b16 %v3419, %v3283
        %v4463 = vshrl.u32 %v3283, 16
        %v4464 = vshrl.u32 %v3419, 16
        %v4465 = vpack.i.b16 %v4464, %v4463
        %v4468 = vpack.i.b16 %v3420, %v3284
        %v4469 = vshrl.u32 %v3284, 16
        %v4470 = vshrl.u32 %v3420, 16
        %v4471 = vpack.i.b16 %v4470, %v4469
        %v4474 = vpack.i.b16 %v3421, %v3285
        %v4475 = vshrl.u32 %v3285, 16
        %v4476 = vshrl.u32 %v3421, 16
        %v4477 = vpack.i.b16 %v4476, %v4475
        %v4480 = vpack.i.b16 %v3686, %v3550
        %v4481 = vshrl.u32 %v3550, 16
        %v4482 = vshrl.u32 %v3686, 16
        %v4483 = vpack.i.b16 %v4482, %v4481
        %v4486 = vpack.i.b16 %v3687, %v3551
        %v4487 = vshrl.u32 %v3551, 16
        %v4488 = vshrl.u32 %v3687, 16
        %v4489 = vpack.i.b16 %v4488, %v4487
        %v4492 = vpack.i.b16 %v3688, %v3552
        %v4493 = vshrl.u32 %v3552, 16
        %v4494 = vshrl.u32 %v3688, 16
        %v4495 = vpack.i.b16 %v4494, %v4493
        %v4498 = vpack.i.b16 %v3689, %v3553
        %v4499 = vshrl.u32 %v3553, 16
        %v4500 = vshrl.u32 %v3689, 16
        %v4501 = vpack.i.b16 %v4500, %v4499
        %v4504 = vpack.i.b16 %v3690, %v3554
        %v4505 = vshrl.u32 %v3554, 16
        %v4506 = vshrl.u32 %v3690, 16
        %v4507 = vpack.i.b16 %v4506, %v4505
        %v4510 = vpack.i.b16 %v3691, %v3555
        %v4511 = vshrl.u32 %v3555, 16
        %v4512 = vshrl.u32 %v3691, 16
        %v4513 = vpack.i.b16 %v4512, %v4511
        %v4516 = vpack.i.b16 %v3692, %v3556
        %v4517 = vshrl.u32 %v3556, 16
        %v4518 = vshrl.u32 %v3692, 16
        %v4519 = vpack.i.b16 %v4518, %v4517
        %v4522 = vpack.i.b16 %v3693, %v3557
        %v4523 = vshrl.u32 %v3557, 16
        %v4524 = vshrl.u32 %v3693, 16
        %v4525 = vpack.i.b16 %v4524, %v4523
        %v4528 = vpack.i.b16 %v3958, %v3822
        %v4529 = vshrl.u32 %v3822, 16
        %v4530 = vshrl.u32 %v3958, 16
        %v4531 = vpack.i.b16 %v4530, %v4529
        %v4534 = vpack.i.b16 %v3959, %v3823
        %v4535 = vshrl.u32 %v3823, 16
        %v4536 = vshrl.u32 %v3959, 16
        %v4537 = vpack.i.b16 %v4536, %v4535
        %v4540 = vpack.i.b16 %v3960, %v3824
        %v4541 = vshrl.u32 %v3824, 16
        %v4542 = vshrl.u32 %v3960, 16
        %v4543 = vpack.i.b16 %v4542, %v4541
        %v4546 = vpack.i.b16 %v3961, %v3825
        %v4547 = vshrl.u32 %v3825, 16
        %v4548 = vshrl.u32 %v3961, 16
        %v4549 = vpack.i.b16 %v4548, %v4547
        %v4552 = vpack.i.b16 %v3962, %v3826
        %v4553 = vshrl.u32 %v3826, 16
        %v4554 = vshrl.u32 %v3962, 16
        %v4555 = vpack.i.b16 %v4554, %v4553
        %v4558 = vpack.i.b16 %v3963, %v3827
        %v4559 = vshrl.u32 %v3827, 16
        %v4560 = vshrl.u32 %v3963, 16
        %v4561 = vpack.i.b16 %v4560, %v4559
        %v4564 = vpack.i.b16 %v3964, %v3828
        %v4565 = vshrl.u32 %v3828, 16
        %v4566 = vshrl.u32 %v3964, 16
        %v4567 = vpack.i.b16 %v4566, %v4565
        %v4570 = vpack.i.b16 %v3965, %v3829
        %v4571 = vshrl.u32 %v3829, 16
        %v4572 = vshrl.u32 %v3965, 16
        %v4573 = vpack.i.b16 %v4572, %v4571
        %v4576 = vpack.i.b16 %v4230, %v4094
        %v4577 = vshrl.u32 %v4094, 16
        %v4578 = vshrl.u32 %v4230, 16
        %v4579 = vpack.i.b16 %v4578, %v4577
        %v4582 = vpack.i.b16 %v4231, %v4095
        %v4583 = vshrl.u32 %v4095, 16
        %v4584 = vshrl.u32 %v4231, 16
        %v4585 = vpack.i.b16 %v4584, %v4583
        %v4588 = vpack.i.b16 %v4232, %v4096
        %v4589 = vshrl.u32 %v4096, 16
        %v4590 = vshrl.u32 %v4232, 16
        %v4591 = vpack.i.b16 %v4590, %v4589
        %v4594 = vpack.i.b16 %v4233, %v4097
        %v4595 = vshrl.u32 %v4097, 16
        %v4596 = vshrl.u32 %v4233, 16
        %v4597 = vpack.i.b16 %v4596, %v4595
        %v4600 = vpack.i.b16 %v4234, %v4098
        %v4601 = vshrl.u32 %v4098, 16
        %v4602 = vshrl.u32 %v4234, 16
        %v4603 = vpack.i.b16 %v4602, %v4601
        %v4606 = vpack.i.b16 %v4235, %v4099
        %v4607 = vshrl.u32 %v4099, 16
        %v4608 = vshrl.u32 %v4235, 16
        %v4609 = vpack.i.b16 %v4608, %v4607
        %v4612 = vpack.i.b16 %v4236, %v4100
        %v4613 = vshrl.u32 %v4100, 16
        %v4614 = vshrl.u32 %v4236, 16
        %v4615 = vpack.i.b16 %v4614, %v4613
        %v4618 = vpack.i.b16 %v4237, %v4101
        %v4619 = vshrl.u32 %v4101, 16
        %v4620 = vshrl.u32 %v4237, 16
        %v4621 = vpack.i.b16 %v4620, %v4619
        %v4622 = vunpack.c.l.b16 %v4240
        %v4623 = vunpack.c.l.b16 %v4243
        %v4624 = vunpack.c.l.b16 %v4246
        %v4625 = vunpack.c.l.b16 %v4249
        %v4626 = vunpack.c.l.b16 %v4252
        %v4627 = vunpack.c.l.b16 %v4255
        %v4628 = vunpack.c.l.b16 %v4258
        %v4629 = vunpack.c.l.b16 %v4261
        %v4630 = vunpack.c.l.b16 %v4264
        %v4631 = vunpack.c.l.b16 %v4267
        %v4632 = vunpack.c.l.b16 %v4270
        %v4633 = vunpack.c.l.b16 %v4273
        %v4634 = vunpack.c.l.b16 %v4276
        %v4635 = vunpack.c.l.b16 %v4279
        %v4636 = vunpack.c.l.b16 %v4282
        %v4637 = vunpack.c.l.b16 %v4285
        %4638 = vset.pattern.permute.xlu0 0
        %4639 = vperm.xlu0 %4638, %v4622
        %v4640 = vpop.permute.xlu0 %4639
        %4641 = vset.pattern.permute.xlu0 0
        %4642 = vperm.xlu0 %4641, %v4623
        %v4643 = vpop.permute.xlu0 %4642
        %4644 = vset.pattern.permute.xlu0 0
        %4645 = vperm.xlu0 %4644, %v4624
        %v4646 = vpop.permute.xlu0 %4645
        %4647 = vset.pattern.permute.xlu0 0
        %4648 = vperm.xlu0 %4647, %v4625
        %v4649 = vpop.permute.xlu0 %4648
        %4650 = vset.pattern.permute.xlu0 0
        %4651 = vperm.xlu0 %4650, %v4626
        %v4652 = vpop.permute.xlu0 %4651
        %4653 = vset.pattern.permute.xlu0 0
        %4654 = vperm.xlu0 %4653, %v4627
        %v4655 = vpop.permute.xlu0 %4654
        %4656 = vset.pattern.permute.xlu0 0
        %4657 = vperm.xlu0 %4656, %v4628
        %v4658 = vpop.permute.xlu0 %4657
        %4659 = vset.pattern.permute.xlu0 0
        %4660 = vperm.xlu0 %4659, %v4629
        %v4661 = vpop.permute.xlu0 %4660
        %4662 = vset.pattern.permute.xlu0 0
        %4663 = vperm.xlu0 %4662, %v4630
        %v4664 = vpop.permute.xlu0 %4663
        %4665 = vset.pattern.permute.xlu0 0
        %4666 = vperm.xlu0 %4665, %v4631
        %v4667 = vpop.permute.xlu0 %4666
        %4668 = vset.pattern.permute.xlu0 0
        %4669 = vperm.xlu0 %4668, %v4632
        %v4670 = vpop.permute.xlu0 %4669
        %4671 = vset.pattern.permute.xlu0 0
        %4672 = vperm.xlu0 %4671, %v4633
        %v4673 = vpop.permute.xlu0 %4672
        %4674 = vset.pattern.permute.xlu0 0
        %4675 = vperm.xlu0 %4674, %v4634
        %v4676 = vpop.permute.xlu0 %4675
        %4677 = vset.pattern.permute.xlu0 0
        %4678 = vperm.xlu0 %4677, %v4635
        %v4679 = vpop.permute.xlu0 %4678
        %4680 = vset.pattern.permute.xlu0 0
        %4681 = vperm.xlu0 %4680, %v4636
        %v4682 = vpop.permute.xlu0 %4681
        %4683 = vset.pattern.permute.xlu0 0
        %4684 = vperm.xlu0 %4683, %v4637
        %v4685 = vpop.permute.xlu0 %4684
        %v4686 = vlaneseq
        %v4687 = vshrl.u32 %v4686, 7
        %v4688 = vsub.s32 %v191, %v4687
        %v4689 = vrot.slane %v4640, %v4688
        %v4690 = vlaneseq
        %v4691 = vshrl.u32 %v4690, 7
        %v4692 = vsub.s32 %v191, %v4691
        %v4693 = vrot.slane %v4643, %v4692
        %v4694 = vlaneseq
        %v4695 = vshrl.u32 %v4694, 7
        %v4696 = vsub.s32 %v191, %v4695
        %v4697 = vrot.slane %v4646, %v4696
        %v4698 = vlaneseq
        %v4699 = vshrl.u32 %v4698, 7
        %v4700 = vsub.s32 %v191, %v4699
        %v4701 = vrot.slane %v4649, %v4700
        %v4702 = vlaneseq
        %v4703 = vshrl.u32 %v4702, 7
        %v4704 = vsub.s32 %v191, %v4703
        %v4705 = vrot.slane %v4652, %v4704
        %v4706 = vlaneseq
        %v4707 = vshrl.u32 %v4706, 7
        %v4708 = vsub.s32 %v191, %v4707
        %v4709 = vrot.slane %v4655, %v4708
        %v4710 = vlaneseq
        %v4711 = vshrl.u32 %v4710, 7
        %v4712 = vsub.s32 %v191, %v4711
        %v4713 = vrot.slane %v4658, %v4712
        %v4714 = vlaneseq
        %v4715 = vshrl.u32 %v4714, 7
        %v4716 = vsub.s32 %v191, %v4715
        %v4717 = vrot.slane %v4661, %v4716
        %v4718 = vlaneseq
        %v4719 = vshrl.u32 %v4718, 7
        %v4720 = vsub.s32 %v191, %v4719
        %v4721 = vrot.slane %v4664, %v4720
        %v4722 = vlaneseq
        %v4723 = vshrl.u32 %v4722, 7
        %v4724 = vsub.s32 %v191, %v4723
        %v4725 = vrot.slane %v4667, %v4724
        %v4726 = vlaneseq
        %v4727 = vshrl.u32 %v4726, 7
        %v4728 = vsub.s32 %v191, %v4727
        %v4729 = vrot.slane %v4670, %v4728
        %v4730 = vlaneseq
        %v4731 = vshrl.u32 %v4730, 7
        %v4732 = vsub.s32 %v191, %v4731
        %v4733 = vrot.slane %v4673, %v4732
        %v4734 = vlaneseq
        %v4735 = vshrl.u32 %v4734, 7
        %v4736 = vsub.s32 %v191, %v4735
        %v4737 = vrot.slane %v4676, %v4736
        %v4738 = vlaneseq
        %v4739 = vshrl.u32 %v4738, 7
        %v4740 = vsub.s32 %v191, %v4739
        %v4741 = vrot.slane %v4679, %v4740
        %v4742 = vlaneseq
        %v4743 = vshrl.u32 %v4742, 7
        %v4744 = vsub.s32 %v191, %v4743
        %v4745 = vrot.slane %v4682, %v4744
        %v4746 = vlaneseq
        %v4747 = vshrl.u32 %v4746, 7
        %v4748 = vsub.s32 %v191, %v4747
        %v4749 = vrot.slane %v4685, %v4748
        %vm4750 = vcmask 1041409
        %v4751 = vsel %vm4750, %v4693, %v4689
        %vm4752 = vcmask 1042434
        %v4753 = vsel %vm4752, %v4697, %v4751
        %vm4754 = vcmask 1043459
        %v4755 = vsel %vm4754, %v4701, %v4753
        %vm4756 = vcmask 1044484
        %v4757 = vsel %vm4756, %v4705, %v4755
        %vm4758 = vcmask 1045509
        %v4759 = vsel %vm4758, %v4709, %v4757
        %vm4760 = vcmask 1046534
        %v4761 = vsel %vm4760, %v4713, %v4759
        %vm4762 = vcmask 1047559
        %v4763 = vsel %vm4762, %v4717, %v4761
        %v4764 = vsel %vm4750, %v4725, %v4721
        %v4765 = vsel %vm4752, %v4729, %v4764
        %v4766 = vsel %vm4754, %v4733, %v4765
        %v4767 = vsel %vm4756, %v4737, %v4766
        %v4768 = vsel %vm4758, %v4741, %v4767
        %v4769 = vsel %vm4760, %v4745, %v4768
        %v4770 = vsel %vm4762, %v4749, %v4769
        %v4771 = vpack.c.b16 %v4770, %v4763
        %v4772 = vunpack.c.l.b16 %v4288
        %v4773 = vunpack.c.l.b16 %v4291
        %v4774 = vunpack.c.l.b16 %v4294
        %v4775 = vunpack.c.l.b16 %v4297
        %v4776 = vunpack.c.l.b16 %v4300
        %v4777 = vunpack.c.l.b16 %v4303
        %v4778 = vunpack.c.l.b16 %v4306
        %v4779 = vunpack.c.l.b16 %v4309
        %v4780 = vunpack.c.l.b16 %v4312
        %v4781 = vunpack.c.l.b16 %v4315
        %v4782 = vunpack.c.l.b16 %v4318
        %v4783 = vunpack.c.l.b16 %v4321
        %v4784 = vunpack.c.l.b16 %v4324
        %v4785 = vunpack.c.l.b16 %v4327
        %v4786 = vunpack.c.l.b16 %v4330
        %v4787 = vunpack.c.l.b16 %v4333
        %4788 = vset.pattern.permute.xlu0 0
        %4789 = vperm.xlu0 %4788, %v4772
        %v4790 = vpop.permute.xlu0 %4789
        %4791 = vset.pattern.permute.xlu0 0
        %4792 = vperm.xlu0 %4791, %v4773
        %v4793 = vpop.permute.xlu0 %4792
        %4794 = vset.pattern.permute.xlu0 0
        %4795 = vperm.xlu0 %4794, %v4774
        %v4796 = vpop.permute.xlu0 %4795
        %4797 = vset.pattern.permute.xlu0 0
        %4798 = vperm.xlu0 %4797, %v4775
        %v4799 = vpop.permute.xlu0 %4798
        %4800 = vset.pattern.permute.xlu0 0
        %4801 = vperm.xlu0 %4800, %v4776
        %v4802 = vpop.permute.xlu0 %4801
        %4803 = vset.pattern.permute.xlu0 0
        %4804 = vperm.xlu0 %4803, %v4777
        %v4805 = vpop.permute.xlu0 %4804
        %4806 = vset.pattern.permute.xlu0 0
        %4807 = vperm.xlu0 %4806, %v4778
        %v4808 = vpop.permute.xlu0 %4807
        %4809 = vset.pattern.permute.xlu0 0
        %4810 = vperm.xlu0 %4809, %v4779
        %v4811 = vpop.permute.xlu0 %4810
        %4812 = vset.pattern.permute.xlu0 0
        %4813 = vperm.xlu0 %4812, %v4780
        %v4814 = vpop.permute.xlu0 %4813
        %4815 = vset.pattern.permute.xlu0 0
        %4816 = vperm.xlu0 %4815, %v4781
        %v4817 = vpop.permute.xlu0 %4816
        %4818 = vset.pattern.permute.xlu0 0
        %4819 = vperm.xlu0 %4818, %v4782
        %v4820 = vpop.permute.xlu0 %4819
        %4821 = vset.pattern.permute.xlu0 0
        %4822 = vperm.xlu0 %4821, %v4783
        %v4823 = vpop.permute.xlu0 %4822
        %4824 = vset.pattern.permute.xlu0 0
        %4825 = vperm.xlu0 %4824, %v4784
        %v4826 = vpop.permute.xlu0 %4825
        %4827 = vset.pattern.permute.xlu0 0
        %4828 = vperm.xlu0 %4827, %v4785
        %v4829 = vpop.permute.xlu0 %4828
        %4830 = vset.pattern.permute.xlu0 0
        %4831 = vperm.xlu0 %4830, %v4786
        %v4832 = vpop.permute.xlu0 %4831
        %4833 = vset.pattern.permute.xlu0 0
        %4834 = vperm.xlu0 %4833, %v4787
        %v4835 = vpop.permute.xlu0 %4834
        %v4836 = vadd.s32 %v191, 4294967288
        %v4837 = vlaneseq
        %v4838 = vshrl.u32 %v4837, 7
        %v4839 = vsub.s32 %v4836, %v4838
        %v4840 = vrot.slane %v4790, %v4839
        %v4841 = vlaneseq
        %v4842 = vshrl.u32 %v4841, 7
        %v4843 = vsub.s32 %v4836, %v4842
        %v4844 = vrot.slane %v4793, %v4843
        %v4845 = vlaneseq
        %v4846 = vshrl.u32 %v4845, 7
        %v4847 = vsub.s32 %v4836, %v4846
        %v4848 = vrot.slane %v4796, %v4847
        %v4849 = vlaneseq
        %v4850 = vshrl.u32 %v4849, 7
        %v4851 = vsub.s32 %v4836, %v4850
        %v4852 = vrot.slane %v4799, %v4851
        %v4853 = vlaneseq
        %v4854 = vshrl.u32 %v4853, 7
        %v4855 = vsub.s32 %v4836, %v4854
        %v4856 = vrot.slane %v4802, %v4855
        %v4857 = vlaneseq
        %v4858 = vshrl.u32 %v4857, 7
        %v4859 = vsub.s32 %v4836, %v4858
        %v4860 = vrot.slane %v4805, %v4859
        %v4861 = vlaneseq
        %v4862 = vshrl.u32 %v4861, 7
        %v4863 = vsub.s32 %v4836, %v4862
        %v4864 = vrot.slane %v4808, %v4863
        %v4865 = vlaneseq
        %v4866 = vshrl.u32 %v4865, 7
        %v4867 = vsub.s32 %v4836, %v4866
        %v4868 = vrot.slane %v4811, %v4867
        %v4869 = vlaneseq
        %v4870 = vshrl.u32 %v4869, 7
        %v4871 = vsub.s32 %v4836, %v4870
        %v4872 = vrot.slane %v4814, %v4871
        %v4873 = vlaneseq
        %v4874 = vshrl.u32 %v4873, 7
        %v4875 = vsub.s32 %v4836, %v4874
        %v4876 = vrot.slane %v4817, %v4875
        %v4877 = vlaneseq
        %v4878 = vshrl.u32 %v4877, 7
        %v4879 = vsub.s32 %v4836, %v4878
        %v4880 = vrot.slane %v4820, %v4879
        %v4881 = vlaneseq
        %v4882 = vshrl.u32 %v4881, 7
        %v4883 = vsub.s32 %v4836, %v4882
        %v4884 = vrot.slane %v4823, %v4883
        %v4885 = vlaneseq
        %v4886 = vshrl.u32 %v4885, 7
        %v4887 = vsub.s32 %v4836, %v4886
        %v4888 = vrot.slane %v4826, %v4887
        %v4889 = vlaneseq
        %v4890 = vshrl.u32 %v4889, 7
        %v4891 = vsub.s32 %v4836, %v4890
        %v4892 = vrot.slane %v4829, %v4891
        %v4893 = vlaneseq
        %v4894 = vshrl.u32 %v4893, 7
        %v4895 = vsub.s32 %v4836, %v4894
        %v4896 = vrot.slane %v4832, %v4895
        %v4897 = vlaneseq
        %v4898 = vshrl.u32 %v4897, 7
        %v4899 = vsub.s32 %v4836, %v4898
        %v4900 = vrot.slane %v4835, %v4899
        %v4901 = vsel %vm4750, %v4844, %v4840
        %v4902 = vsel %vm4752, %v4848, %v4901
        %v4903 = vsel %vm4754, %v4852, %v4902
        %v4904 = vsel %vm4756, %v4856, %v4903
        %v4905 = vsel %vm4758, %v4860, %v4904
        %v4906 = vsel %vm4760, %v4864, %v4905
        %v4907 = vsel %vm4762, %v4868, %v4906
        %v4908 = vsel %vm4750, %v4876, %v4872
        %v4909 = vsel %vm4752, %v4880, %v4908
        %v4910 = vsel %vm4754, %v4884, %v4909
        %v4911 = vsel %vm4756, %v4888, %v4910
        %v4912 = vsel %vm4758, %v4892, %v4911
        %v4913 = vsel %vm4760, %v4896, %v4912
        %v4914 = vsel %vm4762, %v4900, %v4913
        %v4915 = vpack.c.b16 %v4914, %v4907
        %v4916 = vunpack.c.l.b16 %v4336
        %v4917 = vunpack.c.l.b16 %v4339
        %v4918 = vunpack.c.l.b16 %v4342
        %v4919 = vunpack.c.l.b16 %v4345
        %v4920 = vunpack.c.l.b16 %v4348
        %v4921 = vunpack.c.l.b16 %v4351
        %v4922 = vunpack.c.l.b16 %v4354
        %v4923 = vunpack.c.l.b16 %v4357
        %v4924 = vunpack.c.l.b16 %v4360
        %v4925 = vunpack.c.l.b16 %v4363
        %v4926 = vunpack.c.l.b16 %v4366
        %v4927 = vunpack.c.l.b16 %v4369
        %v4928 = vunpack.c.l.b16 %v4372
        %v4929 = vunpack.c.l.b16 %v4375
        %v4930 = vunpack.c.l.b16 %v4378
        %v4931 = vunpack.c.l.b16 %v4381
        %4932 = vset.pattern.permute.xlu0 0
        %4933 = vperm.xlu0 %4932, %v4916
        %v4934 = vpop.permute.xlu0 %4933
        %4935 = vset.pattern.permute.xlu0 0
        %4936 = vperm.xlu0 %4935, %v4917
        %v4937 = vpop.permute.xlu0 %4936
        %4938 = vset.pattern.permute.xlu0 0
        %4939 = vperm.xlu0 %4938, %v4918
        %v4940 = vpop.permute.xlu0 %4939
        %4941 = vset.pattern.permute.xlu0 0
        %4942 = vperm.xlu0 %4941, %v4919
        %v4943 = vpop.permute.xlu0 %4942
        %4944 = vset.pattern.permute.xlu0 0
        %4945 = vperm.xlu0 %4944, %v4920
        %v4946 = vpop.permute.xlu0 %4945
        %4947 = vset.pattern.permute.xlu0 0
        %4948 = vperm.xlu0 %4947, %v4921
        %v4949 = vpop.permute.xlu0 %4948
        %4950 = vset.pattern.permute.xlu0 0
        %4951 = vperm.xlu0 %4950, %v4922
        %v4952 = vpop.permute.xlu0 %4951
        %4953 = vset.pattern.permute.xlu0 0
        %4954 = vperm.xlu0 %4953, %v4923
        %v4955 = vpop.permute.xlu0 %4954
        %4956 = vset.pattern.permute.xlu0 0
        %4957 = vperm.xlu0 %4956, %v4924
        %v4958 = vpop.permute.xlu0 %4957
        %4959 = vset.pattern.permute.xlu0 0
        %4960 = vperm.xlu0 %4959, %v4925
        %v4961 = vpop.permute.xlu0 %4960
        %4962 = vset.pattern.permute.xlu0 0
        %4963 = vperm.xlu0 %4962, %v4926
        %v4964 = vpop.permute.xlu0 %4963
        %4965 = vset.pattern.permute.xlu0 0
        %4966 = vperm.xlu0 %4965, %v4927
        %v4967 = vpop.permute.xlu0 %4966
        %4968 = vset.pattern.permute.xlu0 0
        %4969 = vperm.xlu0 %4968, %v4928
        %v4970 = vpop.permute.xlu0 %4969
        %4971 = vset.pattern.permute.xlu0 0
        %4972 = vperm.xlu0 %4971, %v4929
        %v4973 = vpop.permute.xlu0 %4972
        %4974 = vset.pattern.permute.xlu0 0
        %4975 = vperm.xlu0 %4974, %v4930
        %v4976 = vpop.permute.xlu0 %4975
        %4977 = vset.pattern.permute.xlu0 0
        %4978 = vperm.xlu0 %4977, %v4931
        %v4979 = vpop.permute.xlu0 %4978
        %v4980 = vadd.s32 %v191, 4294967280
        %v4981 = vlaneseq
        %v4982 = vshrl.u32 %v4981, 7
        %v4983 = vsub.s32 %v4980, %v4982
        %v4984 = vrot.slane %v4934, %v4983
        %v4985 = vlaneseq
        %v4986 = vshrl.u32 %v4985, 7
        %v4987 = vsub.s32 %v4980, %v4986
        %v4988 = vrot.slane %v4937, %v4987
        %v4989 = vlaneseq
        %v4990 = vshrl.u32 %v4989, 7
        %v4991 = vsub.s32 %v4980, %v4990
        %v4992 = vrot.slane %v4940, %v4991
        %v4993 = vlaneseq
        %v4994 = vshrl.u32 %v4993, 7
        %v4995 = vsub.s32 %v4980, %v4994
        %v4996 = vrot.slane %v4943, %v4995
        %v4997 = vlaneseq
        %v4998 = vshrl.u32 %v4997, 7
        %v4999 = vsub.s32 %v4980, %v4998
        %v5000 = vrot.slane %v4946, %v4999
        %v5001 = vlaneseq
        %v5002 = vshrl.u32 %v5001, 7
        %v5003 = vsub.s32 %v4980, %v5002
        %v5004 = vrot.slane %v4949, %v5003
        %v5005 = vlaneseq
        %v5006 = vshrl.u32 %v5005, 7
        %v5007 = vsub.s32 %v4980, %v5006
        %v5008 = vrot.slane %v4952, %v5007
        %v5009 = vlaneseq
        %v5010 = vshrl.u32 %v5009, 7
        %v5011 = vsub.s32 %v4980, %v5010
        %v5012 = vrot.slane %v4955, %v5011
        %v5013 = vlaneseq
        %v5014 = vshrl.u32 %v5013, 7
        %v5015 = vsub.s32 %v4980, %v5014
        %v5016 = vrot.slane %v4958, %v5015
        %v5017 = vlaneseq
        %v5018 = vshrl.u32 %v5017, 7
        %v5019 = vsub.s32 %v4980, %v5018
        %v5020 = vrot.slane %v4961, %v5019
        %v5021 = vlaneseq
        %v5022 = vshrl.u32 %v5021, 7
        %v5023 = vsub.s32 %v4980, %v5022
        %v5024 = vrot.slane %v4964, %v5023
        %v5025 = vlaneseq
        %v5026 = vshrl.u32 %v5025, 7
        %v5027 = vsub.s32 %v4980, %v5026
        %v5028 = vrot.slane %v4967, %v5027
        %v5029 = vlaneseq
        %v5030 = vshrl.u32 %v5029, 7
        %v5031 = vsub.s32 %v4980, %v5030
        %v5032 = vrot.slane %v4970, %v5031
        %v5033 = vlaneseq
        %v5034 = vshrl.u32 %v5033, 7
        %v5035 = vsub.s32 %v4980, %v5034
        %v5036 = vrot.slane %v4973, %v5035
        %v5037 = vlaneseq
        %v5038 = vshrl.u32 %v5037, 7
        %v5039 = vsub.s32 %v4980, %v5038
        %v5040 = vrot.slane %v4976, %v5039
        %v5041 = vlaneseq
        %v5042 = vshrl.u32 %v5041, 7
        %v5043 = vsub.s32 %v4980, %v5042
        %v5044 = vrot.slane %v4979, %v5043
        %v5045 = vsel %vm4750, %v4988, %v4984
        %v5046 = vsel %vm4752, %v4992, %v5045
        %v5047 = vsel %vm4754, %v4996, %v5046
        %v5048 = vsel %vm4756, %v5000, %v5047
        %v5049 = vsel %vm4758, %v5004, %v5048
        %v5050 = vsel %vm4760, %v5008, %v5049
        %v5051 = vsel %vm4762, %v5012, %v5050
        %v5052 = vsel %vm4750, %v5020, %v5016
        %v5053 = vsel %vm4752, %v5024, %v5052
        %v5054 = vsel %vm4754, %v5028, %v5053
        %v5055 = vsel %vm4756, %v5032, %v5054
        %v5056 = vsel %vm4758, %v5036, %v5055
        %v5057 = vsel %vm4760, %v5040, %v5056
        %v5058 = vsel %vm4762, %v5044, %v5057
        %v5059 = vpack.c.b16 %v5058, %v5051
        %v5060 = vunpack.c.l.b16 %v4384
        %v5061 = vunpack.c.l.b16 %v4387
        %v5062 = vunpack.c.l.b16 %v4390
        %v5063 = vunpack.c.l.b16 %v4393
        %v5064 = vunpack.c.l.b16 %v4396
        %v5065 = vunpack.c.l.b16 %v4399
        %v5066 = vunpack.c.l.b16 %v4402
        %v5067 = vunpack.c.l.b16 %v4405
        %v5068 = vunpack.c.l.b16 %v4408
        %v5069 = vunpack.c.l.b16 %v4411
        %v5070 = vunpack.c.l.b16 %v4414
        %v5071 = vunpack.c.l.b16 %v4417
        %v5072 = vunpack.c.l.b16 %v4420
        %v5073 = vunpack.c.l.b16 %v4423
        %v5074 = vunpack.c.l.b16 %v4426
        %v5075 = vunpack.c.l.b16 %v4429
        %5076 = vset.pattern.permute.xlu0 0
        %5077 = vperm.xlu0 %5076, %v5060
        %v5078 = vpop.permute.xlu0 %5077
        %5079 = vset.pattern.permute.xlu0 0
        %5080 = vperm.xlu0 %5079, %v5061
        %v5081 = vpop.permute.xlu0 %5080
        %5082 = vset.pattern.permute.xlu0 0
        %5083 = vperm.xlu0 %5082, %v5062
        %v5084 = vpop.permute.xlu0 %5083
        %5085 = vset.pattern.permute.xlu0 0
        %5086 = vperm.xlu0 %5085, %v5063
        %v5087 = vpop.permute.xlu0 %5086
        %5088 = vset.pattern.permute.xlu0 0
        %5089 = vperm.xlu0 %5088, %v5064
        %v5090 = vpop.permute.xlu0 %5089
        %5091 = vset.pattern.permute.xlu0 0
        %5092 = vperm.xlu0 %5091, %v5065
        %v5093 = vpop.permute.xlu0 %5092
        %5094 = vset.pattern.permute.xlu0 0
        %5095 = vperm.xlu0 %5094, %v5066
        %v5096 = vpop.permute.xlu0 %5095
        %5097 = vset.pattern.permute.xlu0 0
        %5098 = vperm.xlu0 %5097, %v5067
        %v5099 = vpop.permute.xlu0 %5098
        %5100 = vset.pattern.permute.xlu0 0
        %5101 = vperm.xlu0 %5100, %v5068
        %v5102 = vpop.permute.xlu0 %5101
        %5103 = vset.pattern.permute.xlu0 0
        %5104 = vperm.xlu0 %5103, %v5069
        %v5105 = vpop.permute.xlu0 %5104
        %5106 = vset.pattern.permute.xlu0 0
        %5107 = vperm.xlu0 %5106, %v5070
        %v5108 = vpop.permute.xlu0 %5107
        %5109 = vset.pattern.permute.xlu0 0
        %5110 = vperm.xlu0 %5109, %v5071
        %v5111 = vpop.permute.xlu0 %5110
        %5112 = vset.pattern.permute.xlu0 0
        %5113 = vperm.xlu0 %5112, %v5072
        %v5114 = vpop.permute.xlu0 %5113
        %5115 = vset.pattern.permute.xlu0 0
        %5116 = vperm.xlu0 %5115, %v5073
        %v5117 = vpop.permute.xlu0 %5116
        %5118 = vset.pattern.permute.xlu0 0
        %5119 = vperm.xlu0 %5118, %v5074
        %v5120 = vpop.permute.xlu0 %5119
        %5121 = vset.pattern.permute.xlu0 0
        %5122 = vperm.xlu0 %5121, %v5075
        %v5123 = vpop.permute.xlu0 %5122
        %v5124 = vadd.s32 %v191, 4294967272
        %v5125 = vlaneseq
        %v5126 = vshrl.u32 %v5125, 7
        %v5127 = vsub.s32 %v5124, %v5126
        %v5128 = vrot.slane %v5078, %v5127
        %v5129 = vlaneseq
        %v5130 = vshrl.u32 %v5129, 7
        %v5131 = vsub.s32 %v5124, %v5130
        %v5132 = vrot.slane %v5081, %v5131
        %v5133 = vlaneseq
        %v5134 = vshrl.u32 %v5133, 7
        %v5135 = vsub.s32 %v5124, %v5134
        %v5136 = vrot.slane %v5084, %v5135
        %v5137 = vlaneseq
        %v5138 = vshrl.u32 %v5137, 7
        %v5139 = vsub.s32 %v5124, %v5138
        %v5140 = vrot.slane %v5087, %v5139
        %v5141 = vlaneseq
        %v5142 = vshrl.u32 %v5141, 7
        %v5143 = vsub.s32 %v5124, %v5142
        %v5144 = vrot.slane %v5090, %v5143
        %v5145 = vlaneseq
        %v5146 = vshrl.u32 %v5145, 7
        %v5147 = vsub.s32 %v5124, %v5146
        %v5148 = vrot.slane %v5093, %v5147
        %v5149 = vlaneseq
        %v5150 = vshrl.u32 %v5149, 7
        %v5151 = vsub.s32 %v5124, %v5150
        %v5152 = vrot.slane %v5096, %v5151
        %v5153 = vlaneseq
        %v5154 = vshrl.u32 %v5153, 7
        %v5155 = vsub.s32 %v5124, %v5154
        %v5156 = vrot.slane %v5099, %v5155
        %v5157 = vlaneseq
        %v5158 = vshrl.u32 %v5157, 7
        %v5159 = vsub.s32 %v5124, %v5158
        %v5160 = vrot.slane %v5102, %v5159
        %v5161 = vlaneseq
        %v5162 = vshrl.u32 %v5161, 7
        %v5163 = vsub.s32 %v5124, %v5162
        %v5164 = vrot.slane %v5105, %v5163
        %v5165 = vlaneseq
        %v5166 = vshrl.u32 %v5165, 7
        %v5167 = vsub.s32 %v5124, %v5166
        %v5168 = vrot.slane %v5108, %v5167
        %v5169 = vlaneseq
        %v5170 = vshrl.u32 %v5169, 7
        %v5171 = vsub.s32 %v5124, %v5170
        %v5172 = vrot.slane %v5111, %v5171
        %v5173 = vlaneseq
        %v5174 = vshrl.u32 %v5173, 7
        %v5175 = vsub.s32 %v5124, %v5174
        %v5176 = vrot.slane %v5114, %v5175
        %v5177 = vlaneseq
        %v5178 = vshrl.u32 %v5177, 7
        %v5179 = vsub.s32 %v5124, %v5178
        %v5180 = vrot.slane %v5117, %v5179
        %v5181 = vlaneseq
        %v5182 = vshrl.u32 %v5181, 7
        %v5183 = vsub.s32 %v5124, %v5182
        %v5184 = vrot.slane %v5120, %v5183
        %v5185 = vlaneseq
        %v5186 = vshrl.u32 %v5185, 7
        %v5187 = vsub.s32 %v5124, %v5186
        %v5188 = vrot.slane %v5123, %v5187
        %v5189 = vsel %vm4750, %v5132, %v5128
        %v5190 = vsel %vm4752, %v5136, %v5189
        %v5191 = vsel %vm4754, %v5140, %v5190
        %v5192 = vsel %vm4756, %v5144, %v5191
        %v5193 = vsel %vm4758, %v5148, %v5192
        %v5194 = vsel %vm4760, %v5152, %v5193
        %v5195 = vsel %vm4762, %v5156, %v5194
        %v5196 = vsel %vm4750, %v5164, %v5160
        %v5197 = vsel %vm4752, %v5168, %v5196
        %v5198 = vsel %vm4754, %v5172, %v5197
        %v5199 = vsel %vm4756, %v5176, %v5198
        %v5200 = vsel %vm4758, %v5180, %v5199
        %v5201 = vsel %vm4760, %v5184, %v5200
        %v5202 = vsel %vm4762, %v5188, %v5201
        %v5203 = vpack.c.b16 %v5202, %v5195
        %v5204 = vunpack.c.l.b16 %v4432
        %v5205 = vunpack.c.l.b16 %v4435
        %v5206 = vunpack.c.l.b16 %v4438
        %v5207 = vunpack.c.l.b16 %v4441
        %v5208 = vunpack.c.l.b16 %v4444
        %v5209 = vunpack.c.l.b16 %v4447
        %v5210 = vunpack.c.l.b16 %v4450
        %v5211 = vunpack.c.l.b16 %v4453
        %v5212 = vunpack.c.l.b16 %v4456
        %v5213 = vunpack.c.l.b16 %v4459
        %v5214 = vunpack.c.l.b16 %v4462
        %v5215 = vunpack.c.l.b16 %v4465
        %v5216 = vunpack.c.l.b16 %v4468
        %v5217 = vunpack.c.l.b16 %v4471
        %v5218 = vunpack.c.l.b16 %v4474
        %v5219 = vunpack.c.l.b16 %v4477
        %5220 = vset.pattern.permute.xlu0 0
        %5221 = vperm.xlu0 %5220, %v5204
        %v5222 = vpop.permute.xlu0 %5221
        %5223 = vset.pattern.permute.xlu0 0
        %5224 = vperm.xlu0 %5223, %v5205
        %v5225 = vpop.permute.xlu0 %5224
        %5226 = vset.pattern.permute.xlu0 0
        %5227 = vperm.xlu0 %5226, %v5206
        %v5228 = vpop.permute.xlu0 %5227
        %5229 = vset.pattern.permute.xlu0 0
        %5230 = vperm.xlu0 %5229, %v5207
        %v5231 = vpop.permute.xlu0 %5230
        %5232 = vset.pattern.permute.xlu0 0
        %5233 = vperm.xlu0 %5232, %v5208
        %v5234 = vpop.permute.xlu0 %5233
        %5235 = vset.pattern.permute.xlu0 0
        %5236 = vperm.xlu0 %5235, %v5209
        %v5237 = vpop.permute.xlu0 %5236
        %5238 = vset.pattern.permute.xlu0 0
        %5239 = vperm.xlu0 %5238, %v5210
        %v5240 = vpop.permute.xlu0 %5239
        %5241 = vset.pattern.permute.xlu0 0
        %5242 = vperm.xlu0 %5241, %v5211
        %v5243 = vpop.permute.xlu0 %5242
        %5244 = vset.pattern.permute.xlu0 0
        %5245 = vperm.xlu0 %5244, %v5212
        %v5246 = vpop.permute.xlu0 %5245
        %5247 = vset.pattern.permute.xlu0 0
        %5248 = vperm.xlu0 %5247, %v5213
        %v5249 = vpop.permute.xlu0 %5248
        %5250 = vset.pattern.permute.xlu0 0
        %5251 = vperm.xlu0 %5250, %v5214
        %v5252 = vpop.permute.xlu0 %5251
        %5253 = vset.pattern.permute.xlu0 0
        %5254 = vperm.xlu0 %5253, %v5215
        %v5255 = vpop.permute.xlu0 %5254
        %5256 = vset.pattern.permute.xlu0 0
        %5257 = vperm.xlu0 %5256, %v5216
        %v5258 = vpop.permute.xlu0 %5257
        %5259 = vset.pattern.permute.xlu0 0
        %5260 = vperm.xlu0 %5259, %v5217
        %v5261 = vpop.permute.xlu0 %5260
        %5262 = vset.pattern.permute.xlu0 0
        %5263 = vperm.xlu0 %5262, %v5218
        %v5264 = vpop.permute.xlu0 %5263
        %5265 = vset.pattern.permute.xlu0 0
        %5266 = vperm.xlu0 %5265, %v5219
        %v5267 = vpop.permute.xlu0 %5266
        %v5268 = vadd.s32 %v191, 4294967264
        %v5269 = vlaneseq
        %v5270 = vshrl.u32 %v5269, 7
        %v5271 = vsub.s32 %v5268, %v5270
        %v5272 = vrot.slane %v5222, %v5271
        %v5273 = vlaneseq
        %v5274 = vshrl.u32 %v5273, 7
        %v5275 = vsub.s32 %v5268, %v5274
        %v5276 = vrot.slane %v5225, %v5275
        %v5277 = vlaneseq
        %v5278 = vshrl.u32 %v5277, 7
        %v5279 = vsub.s32 %v5268, %v5278
        %v5280 = vrot.slane %v5228, %v5279
        %v5281 = vlaneseq
        %v5282 = vshrl.u32 %v5281, 7
        %v5283 = vsub.s32 %v5268, %v5282
        %v5284 = vrot.slane %v5231, %v5283
        %v5285 = vlaneseq
        %v5286 = vshrl.u32 %v5285, 7
        %v5287 = vsub.s32 %v5268, %v5286
        %v5288 = vrot.slane %v5234, %v5287
        %v5289 = vlaneseq
        %v5290 = vshrl.u32 %v5289, 7
        %v5291 = vsub.s32 %v5268, %v5290
        %v5292 = vrot.slane %v5237, %v5291
        %v5293 = vlaneseq
        %v5294 = vshrl.u32 %v5293, 7
        %v5295 = vsub.s32 %v5268, %v5294
        %v5296 = vrot.slane %v5240, %v5295
        %v5297 = vlaneseq
        %v5298 = vshrl.u32 %v5297, 7
        %v5299 = vsub.s32 %v5268, %v5298
        %v5300 = vrot.slane %v5243, %v5299
        %v5301 = vlaneseq
        %v5302 = vshrl.u32 %v5301, 7
        %v5303 = vsub.s32 %v5268, %v5302
        %v5304 = vrot.slane %v5246, %v5303
        %v5305 = vlaneseq
        %v5306 = vshrl.u32 %v5305, 7
        %v5307 = vsub.s32 %v5268, %v5306
        %v5308 = vrot.slane %v5249, %v5307
        %v5309 = vlaneseq
        %v5310 = vshrl.u32 %v5309, 7
        %v5311 = vsub.s32 %v5268, %v5310
        %v5312 = vrot.slane %v5252, %v5311
        %v5313 = vlaneseq
        %v5314 = vshrl.u32 %v5313, 7
        %v5315 = vsub.s32 %v5268, %v5314
        %v5316 = vrot.slane %v5255, %v5315
        %v5317 = vlaneseq
        %v5318 = vshrl.u32 %v5317, 7
        %v5319 = vsub.s32 %v5268, %v5318
        %v5320 = vrot.slane %v5258, %v5319
        %v5321 = vlaneseq
        %v5322 = vshrl.u32 %v5321, 7
        %v5323 = vsub.s32 %v5268, %v5322
        %v5324 = vrot.slane %v5261, %v5323
        %v5325 = vlaneseq
        %v5326 = vshrl.u32 %v5325, 7
        %v5327 = vsub.s32 %v5268, %v5326
        %v5328 = vrot.slane %v5264, %v5327
        %v5329 = vlaneseq
        %v5330 = vshrl.u32 %v5329, 7
        %v5331 = vsub.s32 %v5268, %v5330
        %v5332 = vrot.slane %v5267, %v5331
        %v5333 = vsel %vm4750, %v5276, %v5272
        %v5334 = vsel %vm4752, %v5280, %v5333
        %v5335 = vsel %vm4754, %v5284, %v5334
        %v5336 = vsel %vm4756, %v5288, %v5335
        %v5337 = vsel %vm4758, %v5292, %v5336
        %v5338 = vsel %vm4760, %v5296, %v5337
        %v5339 = vsel %vm4762, %v5300, %v5338
        %v5340 = vsel %vm4750, %v5308, %v5304
        %v5341 = vsel %vm4752, %v5312, %v5340
        %v5342 = vsel %vm4754, %v5316, %v5341
        %v5343 = vsel %vm4756, %v5320, %v5342
        %v5344 = vsel %vm4758, %v5324, %v5343
        %v5345 = vsel %vm4760, %v5328, %v5344
        %v5346 = vsel %vm4762, %v5332, %v5345
        %v5347 = vpack.c.b16 %v5346, %v5339
        %v5348 = vunpack.c.l.b16 %v4480
        %v5349 = vunpack.c.l.b16 %v4483
        %v5350 = vunpack.c.l.b16 %v4486
        %v5351 = vunpack.c.l.b16 %v4489
        %v5352 = vunpack.c.l.b16 %v4492
        %v5353 = vunpack.c.l.b16 %v4495
        %v5354 = vunpack.c.l.b16 %v4498
        %v5355 = vunpack.c.l.b16 %v4501
        %v5356 = vunpack.c.l.b16 %v4504
        %v5357 = vunpack.c.l.b16 %v4507
        %v5358 = vunpack.c.l.b16 %v4510
        %v5359 = vunpack.c.l.b16 %v4513
        %v5360 = vunpack.c.l.b16 %v4516
        %v5361 = vunpack.c.l.b16 %v4519
        %v5362 = vunpack.c.l.b16 %v4522
        %v5363 = vunpack.c.l.b16 %v4525
        %5364 = vset.pattern.permute.xlu0 0
        %5365 = vperm.xlu0 %5364, %v5348
        %v5366 = vpop.permute.xlu0 %5365
        %5367 = vset.pattern.permute.xlu0 0
        %5368 = vperm.xlu0 %5367, %v5349
        %v5369 = vpop.permute.xlu0 %5368
        %5370 = vset.pattern.permute.xlu0 0
        %5371 = vperm.xlu0 %5370, %v5350
        %v5372 = vpop.permute.xlu0 %5371
        %5373 = vset.pattern.permute.xlu0 0
        %5374 = vperm.xlu0 %5373, %v5351
        %v5375 = vpop.permute.xlu0 %5374
        %5376 = vset.pattern.permute.xlu0 0
        %5377 = vperm.xlu0 %5376, %v5352
        %v5378 = vpop.permute.xlu0 %5377
        %5379 = vset.pattern.permute.xlu0 0
        %5380 = vperm.xlu0 %5379, %v5353
        %v5381 = vpop.permute.xlu0 %5380
        %5382 = vset.pattern.permute.xlu0 0
        %5383 = vperm.xlu0 %5382, %v5354
        %v5384 = vpop.permute.xlu0 %5383
        %5385 = vset.pattern.permute.xlu0 0
        %5386 = vperm.xlu0 %5385, %v5355
        %v5387 = vpop.permute.xlu0 %5386
        %5388 = vset.pattern.permute.xlu0 0
        %5389 = vperm.xlu0 %5388, %v5356
        %v5390 = vpop.permute.xlu0 %5389
        %5391 = vset.pattern.permute.xlu0 0
        %5392 = vperm.xlu0 %5391, %v5357
        %v5393 = vpop.permute.xlu0 %5392
        %5394 = vset.pattern.permute.xlu0 0
        %5395 = vperm.xlu0 %5394, %v5358
        %v5396 = vpop.permute.xlu0 %5395
        %5397 = vset.pattern.permute.xlu0 0
        %5398 = vperm.xlu0 %5397, %v5359
        %v5399 = vpop.permute.xlu0 %5398
        %5400 = vset.pattern.permute.xlu0 0
        %5401 = vperm.xlu0 %5400, %v5360
        %v5402 = vpop.permute.xlu0 %5401
        %5403 = vset.pattern.permute.xlu0 0
        %5404 = vperm.xlu0 %5403, %v5361
        %v5405 = vpop.permute.xlu0 %5404
        %5406 = vset.pattern.permute.xlu0 0
        %5407 = vperm.xlu0 %5406, %v5362
        %v5408 = vpop.permute.xlu0 %5407
        %5409 = vset.pattern.permute.xlu0 0
        %5410 = vperm.xlu0 %5409, %v5363
        %v5411 = vpop.permute.xlu0 %5410
        %v5412 = vadd.s32 %v191, 4294967256
        %v5413 = vlaneseq
        %v5414 = vshrl.u32 %v5413, 7
        %v5415 = vsub.s32 %v5412, %v5414
        %v5416 = vrot.slane %v5366, %v5415
        %v5417 = vlaneseq
        %v5418 = vshrl.u32 %v5417, 7
        %v5419 = vsub.s32 %v5412, %v5418
        %v5420 = vrot.slane %v5369, %v5419
        %v5421 = vlaneseq
        %v5422 = vshrl.u32 %v5421, 7
        %v5423 = vsub.s32 %v5412, %v5422
        %v5424 = vrot.slane %v5372, %v5423
        %v5425 = vlaneseq
        %v5426 = vshrl.u32 %v5425, 7
        %v5427 = vsub.s32 %v5412, %v5426
        %v5428 = vrot.slane %v5375, %v5427
        %v5429 = vlaneseq
        %v5430 = vshrl.u32 %v5429, 7
        %v5431 = vsub.s32 %v5412, %v5430
        %v5432 = vrot.slane %v5378, %v5431
        %v5433 = vlaneseq
        %v5434 = vshrl.u32 %v5433, 7
        %v5435 = vsub.s32 %v5412, %v5434
        %v5436 = vrot.slane %v5381, %v5435
        %v5437 = vlaneseq
        %v5438 = vshrl.u32 %v5437, 7
        %v5439 = vsub.s32 %v5412, %v5438
        %v5440 = vrot.slane %v5384, %v5439
        %v5441 = vlaneseq
        %v5442 = vshrl.u32 %v5441, 7
        %v5443 = vsub.s32 %v5412, %v5442
        %v5444 = vrot.slane %v5387, %v5443
        %v5445 = vlaneseq
        %v5446 = vshrl.u32 %v5445, 7
        %v5447 = vsub.s32 %v5412, %v5446
        %v5448 = vrot.slane %v5390, %v5447
        %v5449 = vlaneseq
        %v5450 = vshrl.u32 %v5449, 7
        %v5451 = vsub.s32 %v5412, %v5450
        %v5452 = vrot.slane %v5393, %v5451
        %v5453 = vlaneseq
        %v5454 = vshrl.u32 %v5453, 7
        %v5455 = vsub.s32 %v5412, %v5454
        %v5456 = vrot.slane %v5396, %v5455
        %v5457 = vlaneseq
        %v5458 = vshrl.u32 %v5457, 7
        %v5459 = vsub.s32 %v5412, %v5458
        %v5460 = vrot.slane %v5399, %v5459
        %v5461 = vlaneseq
        %v5462 = vshrl.u32 %v5461, 7
        %v5463 = vsub.s32 %v5412, %v5462
        %v5464 = vrot.slane %v5402, %v5463
        %v5465 = vlaneseq
        %v5466 = vshrl.u32 %v5465, 7
        %v5467 = vsub.s32 %v5412, %v5466
        %v5468 = vrot.slane %v5405, %v5467
        %v5469 = vlaneseq
        %v5470 = vshrl.u32 %v5469, 7
        %v5471 = vsub.s32 %v5412, %v5470
        %v5472 = vrot.slane %v5408, %v5471
        %v5473 = vlaneseq
        %v5474 = vshrl.u32 %v5473, 7
        %v5475 = vsub.s32 %v5412, %v5474
        %v5476 = vrot.slane %v5411, %v5475
        %v5477 = vsel %vm4750, %v5420, %v5416
        %v5478 = vsel %vm4752, %v5424, %v5477
        %v5479 = vsel %vm4754, %v5428, %v5478
        %v5480 = vsel %vm4756, %v5432, %v5479
        %v5481 = vsel %vm4758, %v5436, %v5480
        %v5482 = vsel %vm4760, %v5440, %v5481
        %v5483 = vsel %vm4762, %v5444, %v5482
        %v5484 = vsel %vm4750, %v5452, %v5448
        %v5485 = vsel %vm4752, %v5456, %v5484
        %v5486 = vsel %vm4754, %v5460, %v5485
        %v5487 = vsel %vm4756, %v5464, %v5486
        %v5488 = vsel %vm4758, %v5468, %v5487
        %v5489 = vsel %vm4760, %v5472, %v5488
        %v5490 = vsel %vm4762, %v5476, %v5489
        %v5491 = vpack.c.b16 %v5490, %v5483
        %v5492 = vunpack.c.l.b16 %v4528
        %v5493 = vunpack.c.l.b16 %v4531
        %v5494 = vunpack.c.l.b16 %v4534
        %v5495 = vunpack.c.l.b16 %v4537
        %v5496 = vunpack.c.l.b16 %v4540
        %v5497 = vunpack.c.l.b16 %v4543
        %v5498 = vunpack.c.l.b16 %v4546
        %v5499 = vunpack.c.l.b16 %v4549
        %v5500 = vunpack.c.l.b16 %v4552
        %v5501 = vunpack.c.l.b16 %v4555
        %v5502 = vunpack.c.l.b16 %v4558
        %v5503 = vunpack.c.l.b16 %v4561
        %v5504 = vunpack.c.l.b16 %v4564
        %v5505 = vunpack.c.l.b16 %v4567
        %v5506 = vunpack.c.l.b16 %v4570
        %v5507 = vunpack.c.l.b16 %v4573
        %5508 = vset.pattern.permute.xlu0 0
        %5509 = vperm.xlu0 %5508, %v5492
        %v5510 = vpop.permute.xlu0 %5509
        %5511 = vset.pattern.permute.xlu0 0
        %5512 = vperm.xlu0 %5511, %v5493
        %v5513 = vpop.permute.xlu0 %5512
        %5514 = vset.pattern.permute.xlu0 0
        %5515 = vperm.xlu0 %5514, %v5494
        %v5516 = vpop.permute.xlu0 %5515
        %5517 = vset.pattern.permute.xlu0 0
        %5518 = vperm.xlu0 %5517, %v5495
        %v5519 = vpop.permute.xlu0 %5518
        %5520 = vset.pattern.permute.xlu0 0
        %5521 = vperm.xlu0 %5520, %v5496
        %v5522 = vpop.permute.xlu0 %5521
        %5523 = vset.pattern.permute.xlu0 0
        %5524 = vperm.xlu0 %5523, %v5497
        %v5525 = vpop.permute.xlu0 %5524
        %5526 = vset.pattern.permute.xlu0 0
        %5527 = vperm.xlu0 %5526, %v5498
        %v5528 = vpop.permute.xlu0 %5527
        %5529 = vset.pattern.permute.xlu0 0
        %5530 = vperm.xlu0 %5529, %v5499
        %v5531 = vpop.permute.xlu0 %5530
        %5532 = vset.pattern.permute.xlu0 0
        %5533 = vperm.xlu0 %5532, %v5500
        %v5534 = vpop.permute.xlu0 %5533
        %5535 = vset.pattern.permute.xlu0 0
        %5536 = vperm.xlu0 %5535, %v5501
        %v5537 = vpop.permute.xlu0 %5536
        %5538 = vset.pattern.permute.xlu0 0
        %5539 = vperm.xlu0 %5538, %v5502
        %v5540 = vpop.permute.xlu0 %5539
        %5541 = vset.pattern.permute.xlu0 0
        %5542 = vperm.xlu0 %5541, %v5503
        %v5543 = vpop.permute.xlu0 %5542
        %5544 = vset.pattern.permute.xlu0 0
        %5545 = vperm.xlu0 %5544, %v5504
        %v5546 = vpop.permute.xlu0 %5545
        %5547 = vset.pattern.permute.xlu0 0
        %5548 = vperm.xlu0 %5547, %v5505
        %v5549 = vpop.permute.xlu0 %5548
        %5550 = vset.pattern.permute.xlu0 0
        %5551 = vperm.xlu0 %5550, %v5506
        %v5552 = vpop.permute.xlu0 %5551
        %5553 = vset.pattern.permute.xlu0 0
        %5554 = vperm.xlu0 %5553, %v5507
        %v5555 = vpop.permute.xlu0 %5554
        %v5556 = vadd.s32 %v191, 4294967248
        %v5557 = vlaneseq
        %v5558 = vshrl.u32 %v5557, 7
        %v5559 = vsub.s32 %v5556, %v5558
        %v5560 = vrot.slane %v5510, %v5559
        %v5561 = vlaneseq
        %v5562 = vshrl.u32 %v5561, 7
        %v5563 = vsub.s32 %v5556, %v5562
        %v5564 = vrot.slane %v5513, %v5563
        %v5565 = vlaneseq
        %v5566 = vshrl.u32 %v5565, 7
        %v5567 = vsub.s32 %v5556, %v5566
        %v5568 = vrot.slane %v5516, %v5567
        %v5569 = vlaneseq
        %v5570 = vshrl.u32 %v5569, 7
        %v5571 = vsub.s32 %v5556, %v5570
        %v5572 = vrot.slane %v5519, %v5571
        %v5573 = vlaneseq
        %v5574 = vshrl.u32 %v5573, 7
        %v5575 = vsub.s32 %v5556, %v5574
        %v5576 = vrot.slane %v5522, %v5575
        %v5577 = vlaneseq
        %v5578 = vshrl.u32 %v5577, 7
        %v5579 = vsub.s32 %v5556, %v5578
        %v5580 = vrot.slane %v5525, %v5579
        %v5581 = vlaneseq
        %v5582 = vshrl.u32 %v5581, 7
        %v5583 = vsub.s32 %v5556, %v5582
        %v5584 = vrot.slane %v5528, %v5583
        %v5585 = vlaneseq
        %v5586 = vshrl.u32 %v5585, 7
        %v5587 = vsub.s32 %v5556, %v5586
        %v5588 = vrot.slane %v5531, %v5587
        %v5589 = vlaneseq
        %v5590 = vshrl.u32 %v5589, 7
        %v5591 = vsub.s32 %v5556, %v5590
        %v5592 = vrot.slane %v5534, %v5591
        %v5593 = vlaneseq
        %v5594 = vshrl.u32 %v5593, 7
        %v5595 = vsub.s32 %v5556, %v5594
        %v5596 = vrot.slane %v5537, %v5595
        %v5597 = vlaneseq
        %v5598 = vshrl.u32 %v5597, 7
        %v5599 = vsub.s32 %v5556, %v5598
        %v5600 = vrot.slane %v5540, %v5599
        %v5601 = vlaneseq
        %v5602 = vshrl.u32 %v5601, 7
        %v5603 = vsub.s32 %v5556, %v5602
        %v5604 = vrot.slane %v5543, %v5603
        %v5605 = vlaneseq
        %v5606 = vshrl.u32 %v5605, 7
        %v5607 = vsub.s32 %v5556, %v5606
        %v5608 = vrot.slane %v5546, %v5607
        %v5609 = vlaneseq
        %v5610 = vshrl.u32 %v5609, 7
        %v5611 = vsub.s32 %v5556, %v5610
        %v5612 = vrot.slane %v5549, %v5611
        %v5613 = vlaneseq
        %v5614 = vshrl.u32 %v5613, 7
        %v5615 = vsub.s32 %v5556, %v5614
        %v5616 = vrot.slane %v5552, %v5615
        %v5617 = vlaneseq
        %v5618 = vshrl.u32 %v5617, 7
        %v5619 = vsub.s32 %v5556, %v5618
        %v5620 = vrot.slane %v5555, %v5619
        %v5621 = vsel %vm4750, %v5564, %v5560
        %v5622 = vsel %vm4752, %v5568, %v5621
        %v5623 = vsel %vm4754, %v5572, %v5622
        %v5624 = vsel %vm4756, %v5576, %v5623
        %v5625 = vsel %vm4758, %v5580, %v5624
        %v5626 = vsel %vm4760, %v5584, %v5625
        %v5627 = vsel %vm4762, %v5588, %v5626
        %v5628 = vsel %vm4750, %v5596, %v5592
        %v5629 = vsel %vm4752, %v5600, %v5628
        %v5630 = vsel %vm4754, %v5604, %v5629
        %v5631 = vsel %vm4756, %v5608, %v5630
        %v5632 = vsel %vm4758, %v5612, %v5631
        %v5633 = vsel %vm4760, %v5616, %v5632
        %v5634 = vsel %vm4762, %v5620, %v5633
        %v5635 = vpack.c.b16 %v5634, %v5627
        %v5636 = vunpack.c.l.b16 %v4576
        %v5637 = vunpack.c.l.b16 %v4579
        %v5638 = vunpack.c.l.b16 %v4582
        %v5639 = vunpack.c.l.b16 %v4585
        %v5640 = vunpack.c.l.b16 %v4588
        %v5641 = vunpack.c.l.b16 %v4591
        %v5642 = vunpack.c.l.b16 %v4594
        %v5643 = vunpack.c.l.b16 %v4597
        %v5644 = vunpack.c.l.b16 %v4600
        %v5645 = vunpack.c.l.b16 %v4603
        %v5646 = vunpack.c.l.b16 %v4606
        %v5647 = vunpack.c.l.b16 %v4609
        %v5648 = vunpack.c.l.b16 %v4612
        %v5649 = vunpack.c.l.b16 %v4615
        %v5650 = vunpack.c.l.b16 %v4618
        %v5651 = vunpack.c.l.b16 %v4621
        %5652 = vset.pattern.permute.xlu0 0
        %5653 = vperm.xlu0 %5652, %v5636
        %v5654 = vpop.permute.xlu0 %5653
        %5655 = vset.pattern.permute.xlu0 0
        %5656 = vperm.xlu0 %5655, %v5637
        %v5657 = vpop.permute.xlu0 %5656
        %5658 = vset.pattern.permute.xlu0 0
        %5659 = vperm.xlu0 %5658, %v5638
        %v5660 = vpop.permute.xlu0 %5659
        %5661 = vset.pattern.permute.xlu0 0
        %5662 = vperm.xlu0 %5661, %v5639
        %v5663 = vpop.permute.xlu0 %5662
        %5664 = vset.pattern.permute.xlu0 0
        %5665 = vperm.xlu0 %5664, %v5640
        %v5666 = vpop.permute.xlu0 %5665
        %5667 = vset.pattern.permute.xlu0 0
        %5668 = vperm.xlu0 %5667, %v5641
        %v5669 = vpop.permute.xlu0 %5668
        %5670 = vset.pattern.permute.xlu0 0
        %5671 = vperm.xlu0 %5670, %v5642
        %v5672 = vpop.permute.xlu0 %5671
        %5673 = vset.pattern.permute.xlu0 0
        %5674 = vperm.xlu0 %5673, %v5643
        %v5675 = vpop.permute.xlu0 %5674
        %5676 = vset.pattern.permute.xlu0 0
        %5677 = vperm.xlu0 %5676, %v5644
        %v5678 = vpop.permute.xlu0 %5677
        %5679 = vset.pattern.permute.xlu0 0
        %5680 = vperm.xlu0 %5679, %v5645
        %v5681 = vpop.permute.xlu0 %5680
        %5682 = vset.pattern.permute.xlu0 0
        %5683 = vperm.xlu0 %5682, %v5646
        %v5684 = vpop.permute.xlu0 %5683
        %5685 = vset.pattern.permute.xlu0 0
        %5686 = vperm.xlu0 %5685, %v5647
        %v5687 = vpop.permute.xlu0 %5686
        %5688 = vset.pattern.permute.xlu0 0
        %5689 = vperm.xlu0 %5688, %v5648
        %v5690 = vpop.permute.xlu0 %5689
        %5691 = vset.pattern.permute.xlu0 0
        %5692 = vperm.xlu0 %5691, %v5649
        %v5693 = vpop.permute.xlu0 %5692
        %5694 = vset.pattern.permute.xlu0 0
        %5695 = vperm.xlu0 %5694, %v5650
        %v5696 = vpop.permute.xlu0 %5695
        %5697 = vset.pattern.permute.xlu0 0
        %5698 = vperm.xlu0 %5697, %v5651
        %v5699 = vpop.permute.xlu0 %5698
        %v5700 = vadd.s32 %v191, 4294967240
        %v5701 = vlaneseq
        %v5702 = vshrl.u32 %v5701, 7
        %v5703 = vsub.s32 %v5700, %v5702
        %v5704 = vrot.slane %v5654, %v5703
        %v5705 = vlaneseq
        %v5706 = vshrl.u32 %v5705, 7
        %v5707 = vsub.s32 %v5700, %v5706
        %v5708 = vrot.slane %v5657, %v5707
        %v5709 = vlaneseq
        %v5710 = vshrl.u32 %v5709, 7
        %v5711 = vsub.s32 %v5700, %v5710
        %v5712 = vrot.slane %v5660, %v5711
        %v5713 = vlaneseq
        %v5714 = vshrl.u32 %v5713, 7
        %v5715 = vsub.s32 %v5700, %v5714
        %v5716 = vrot.slane %v5663, %v5715
        %v5717 = vlaneseq
        %v5718 = vshrl.u32 %v5717, 7
        %v5719 = vsub.s32 %v5700, %v5718
        %v5720 = vrot.slane %v5666, %v5719
        %v5721 = vlaneseq
        %v5722 = vshrl.u32 %v5721, 7
        %v5723 = vsub.s32 %v5700, %v5722
        %v5724 = vrot.slane %v5669, %v5723
        %v5725 = vlaneseq
        %v5726 = vshrl.u32 %v5725, 7
        %v5727 = vsub.s32 %v5700, %v5726
        %v5728 = vrot.slane %v5672, %v5727
        %v5729 = vlaneseq
        %v5730 = vshrl.u32 %v5729, 7
        %v5731 = vsub.s32 %v5700, %v5730
        %v5732 = vrot.slane %v5675, %v5731
        %v5733 = vlaneseq
        %v5734 = vshrl.u32 %v5733, 7
        %v5735 = vsub.s32 %v5700, %v5734
        %v5736 = vrot.slane %v5678, %v5735
        %v5737 = vlaneseq
        %v5738 = vshrl.u32 %v5737, 7
        %v5739 = vsub.s32 %v5700, %v5738
        %v5740 = vrot.slane %v5681, %v5739
        %v5741 = vlaneseq
        %v5742 = vshrl.u32 %v5741, 7
        %v5743 = vsub.s32 %v5700, %v5742
        %v5744 = vrot.slane %v5684, %v5743
        %v5745 = vlaneseq
        %v5746 = vshrl.u32 %v5745, 7
        %v5747 = vsub.s32 %v5700, %v5746
        %v5748 = vrot.slane %v5687, %v5747
        %v5749 = vlaneseq
        %v5750 = vshrl.u32 %v5749, 7
        %v5751 = vsub.s32 %v5700, %v5750
        %v5752 = vrot.slane %v5690, %v5751
        %v5753 = vlaneseq
        %v5754 = vshrl.u32 %v5753, 7
        %v5755 = vsub.s32 %v5700, %v5754
        %v5756 = vrot.slane %v5693, %v5755
        %v5757 = vlaneseq
        %v5758 = vshrl.u32 %v5757, 7
        %v5759 = vsub.s32 %v5700, %v5758
        %v5760 = vrot.slane %v5696, %v5759
        %v5761 = vlaneseq
        %v5762 = vshrl.u32 %v5761, 7
        %v5763 = vsub.s32 %v5700, %v5762
        %v5764 = vrot.slane %v5699, %v5763
        %v5765 = vsel %vm4750, %v5708, %v5704
        %v5766 = vsel %vm4752, %v5712, %v5765
        %v5767 = vsel %vm4754, %v5716, %v5766
        %v5768 = vsel %vm4756, %v5720, %v5767
        %v5769 = vsel %vm4758, %v5724, %v5768
        %v5770 = vsel %vm4760, %v5728, %v5769
        %v5771 = vsel %vm4762, %v5732, %v5770
        %v5772 = vsel %vm4750, %v5740, %v5736
        %v5773 = vsel %vm4752, %v5744, %v5772
        %v5774 = vsel %vm4754, %v5748, %v5773
        %v5775 = vsel %vm4756, %v5752, %v5774
        %v5776 = vsel %vm4758, %v5756, %v5775
        %v5777 = vsel %vm4760, %v5760, %v5776
        %v5778 = vsel %vm4762, %v5764, %v5777
        %v5779 = vpack.c.b16 %v5778, %v5771
        %vm5780 = vcmask 64512
        %v5783 = vsel %vm5780, %v4771, %v4915
        %v5785 = vsel %vm277, %v5783, %v5059
        %vm5786 = vcmask 195584
        %v5788 = vsel %vm5786, %v5785, %v5203
        %v5790 = vsel %vm917, %v5788, %v5347
        %vm5791 = vcmask 326656
        %v5793 = vsel %vm5791, %v5790, %v5491
        %vm5794 = vcmask 392192
        %v5796 = vsel %vm5794, %v5793, %v5635
        %vm5797 = vcmask 457728
        %v5799 = vsel %vm5797, %v5796, %v5779
        %v5801 = vshra.s32 %v191, 3
        %v5802 = vand.u32 %v191, 7
        %vm5803 = vcmp.ge.s32.totalorder %v5801, 1
        %vm5804 = vcmp.lt.s32.totalorder %v5801, 9
        %vm5805 = vmand %vm5803, %vm5804
        %vm5806 = vcmp.ge.s32.totalorder %v5801, 0
        %vm5807 = vcmp.lt.s32.totalorder %v5801, 8
        %vm5808 = vmand %vm5806, %vm5807
        %vm5809 = vcmp.ge.s32.totalorder %v5801, 4294967295
        %vm5810 = vcmp.lt.s32.totalorder %v5801, 7
        %vm5811 = vmand %vm5809, %vm5810
        %vm5812 = vcmp.ge.s32.totalorder %v5802, 1
        %vm5813 = vcmp.lt.s32.totalorder %v5802, 9
        %vm5814 = vmand %vm5812, %vm5813
        %vm5815 = vcmp.ge.s32.totalorder %v5802, 0
        %vm5816 = vcmp.lt.s32.totalorder %v5802, 8
        %vm5817 = vmand %vm5815, %vm5816
        %vm5818 = vcmp.ge.s32.totalorder %v5802, 4294967295
        %vm5819 = vcmp.lt.s32.totalorder %v5802, 7
        %vm5820 = vmand %vm5818, %vm5819
        %5822 = vrot.lane.b32.xlu0 %v5799, 73
        %v5823 = vpop.permute.xlu0 %5822
        %5824 = vrot.lane.b32.xlu0 %v5799, 9
        %v5825 = vpop.permute.xlu0 %5824
        %vm5826 = vcmask 72704
        %v5829 = vsel %vm5826, %v5823, %v5825
        %vm5831 = vmand %vm5805, %vm5814
        %v5832 = vsel %vm5831, 1, 0
        %vm5833 = vcmp.eq.s32.totalorder %v5832, 1
        %vm5834 = vmpackc.low %vm5833, %vm5833
        %v5835 = vsel %vm5834, 65537, 0
        %v5836 = vlaneseq
        %v5837 = vshrl.u32 %v5836, 7
        %v5838 = vsub.s32 0, %v5837
        %v5839 = vrot.slane %v5835, %v5838
        %vm5840 = vcmp.ne.s16.totalorder %v5839, 0
        %v5841 = vsel %vm5840, %v5829, 0
        %5842 = vrot.lane.b32.xlu0 %v5799, 72
        %v5843 = vpop.permute.xlu0 %5842
        %5844 = vrot.lane.b32.xlu0 %v5799, 8
        %v5845 = vpop.permute.xlu0 %5844
        %v5848 = vsel %vm5780, %v5843, %v5845
        %vm5850 = vmand %vm5805, %vm5817
        %v5851 = vsel %vm5850, 1, 0
        %vm5852 = vcmp.eq.s32.totalorder %v5851, 1
        %vm5853 = vmpackc.low %vm5852, %vm5852
        %v5854 = vsel %vm5853, 65537, 0
        %v5855 = vlaneseq
        %v5856 = vshrl.u32 %v5855, 7
        %v5857 = vsub.s32 0, %v5856
        %v5858 = vrot.slane %v5854, %v5857
        %vm5859 = vcmp.ne.s16.totalorder %v5858, 0
        %v5860 = vsel %vm5859, %v5848, 0
        %5861 = vrot.lane.b32.xlu0 %v5799, 71
        %v5862 = vpop.permute.xlu0 %5861
        %5863 = vrot.lane.b32.xlu0 %v5799, 7
        %v5864 = vpop.permute.xlu0 %5863
        %vm5865 = vcmask 56320
        %v5868 = vsel %vm5865, %v5862, %v5864
        %vm5870 = vmand %vm5805, %vm5820
        %v5871 = vsel %vm5870, 1, 0
        %vm5872 = vcmp.eq.s32.totalorder %v5871, 1
        %vm5873 = vmpackc.low %vm5872, %vm5872
        %v5874 = vsel %vm5873, 65537, 0
        %v5875 = vlaneseq
        %v5876 = vshrl.u32 %v5875, 7
        %v5877 = vsub.s32 0, %v5876
        %v5878 = vrot.slane %v5874, %v5877
        %vm5879 = vcmp.ne.s16.totalorder %v5878, 0
        %v5880 = vsel %vm5879, %v5868, 0
        %5881 = vrot.lane.b32.xlu0 %v5799, 65
        %v5882 = vpop.permute.xlu0 %5881
        %5883 = vrot.lane.b32.xlu0 %v5799, 1
        %v5884 = vpop.permute.xlu0 %5883
        %v5887 = vsel %vm341, %v5882, %v5884
        %vm5889 = vmand %vm5808, %vm5814
        %v5890 = vsel %vm5889, 1, 0
        %vm5891 = vcmp.eq.s32.totalorder %v5890, 1
        %vm5892 = vmpackc.low %vm5891, %vm5891
        %v5893 = vsel %vm5892, 65537, 0
        %v5894 = vlaneseq
        %v5895 = vshrl.u32 %v5894, 7
        %v5896 = vsub.s32 0, %v5895
        %v5897 = vrot.slane %v5893, %v5896
        %vm5898 = vcmp.ne.s16.totalorder %v5897, 0
        %v5899 = vsel %vm5898, %v5887, 0
        %5900 = vrot.lane.b32.xlu0 %v5799, 127
        %v5901 = vpop.permute.xlu0 %5900
        %5902 = vrot.lane.b32.xlu0 %v5799, 63
        %v5903 = vpop.permute.xlu0 %5902
        %vm5904 = vcmask 515072
        %v5907 = vsel %vm5904, %v5901, %v5903
        %vm5909 = vmand %vm5808, %vm5820
        %v5910 = vsel %vm5909, 1, 0
        %vm5911 = vcmp.eq.s32.totalorder %v5910, 1
        %vm5912 = vmpackc.low %vm5911, %vm5911
        %v5913 = vsel %vm5912, 65537, 0
        %v5914 = vlaneseq
        %v5915 = vshrl.u32 %v5914, 7
        %v5916 = vsub.s32 0, %v5915
        %v5917 = vrot.slane %v5913, %v5916
        %vm5918 = vcmp.ne.s16.totalorder %v5917, 0
        %v5919 = vsel %vm5918, %v5907, 0
        %5920 = vrot.lane.b32.xlu0 %v5799, 121
        %v5921 = vpop.permute.xlu0 %5920
        %5922 = vrot.lane.b32.xlu0 %v5799, 57
        %v5923 = vpop.permute.xlu0 %5922
        %vm5924 = vcmask 465920
        %v5927 = vsel %vm5924, %v5921, %v5923
        %vm5929 = vmand %vm5811, %vm5814
        %v5930 = vsel %vm5929, 1, 0
        %vm5931 = vcmp.eq.s32.totalorder %v5930, 1
        %vm5932 = vmpackc.low %vm5931, %vm5931
        %v5933 = vsel %vm5932, 65537, 0
        %v5934 = vlaneseq
        %v5935 = vshrl.u32 %v5934, 7
        %v5936 = vsub.s32 0, %v5935
        %v5937 = vrot.slane %v5933, %v5936
        %vm5938 = vcmp.ne.s16.totalorder %v5937, 0
        %v5939 = vsel %vm5938, %v5927, 0
        %5940 = vrot.lane.b32.xlu0 %v5799, 120
        %v5941 = vpop.permute.xlu0 %5940
        %5942 = vrot.lane.b32.xlu0 %v5799, 56
        %v5943 = vpop.permute.xlu0 %5942
        %v5946 = vsel %vm5797, %v5941, %v5943
        %vm5948 = vmand %vm5811, %vm5817
        %v5949 = vsel %vm5948, 1, 0
        %vm5950 = vcmp.eq.s32.totalorder %v5949, 1
        %vm5951 = vmpackc.low %vm5950, %vm5950
        %v5952 = vsel %vm5951, 65537, 0
        %v5953 = vlaneseq
        %v5954 = vshrl.u32 %v5953, 7
        %v5955 = vsub.s32 0, %v5954
        %v5956 = vrot.slane %v5952, %v5955
        %vm5957 = vcmp.ne.s16.totalorder %v5956, 0
        %v5958 = vsel %vm5957, %v5946, 0
        %5959 = vrot.lane.b32.xlu0 %v5799, 119
        %v5960 = vpop.permute.xlu0 %5959
        %5961 = vrot.lane.b32.xlu0 %v5799, 55
        %v5962 = vpop.permute.xlu0 %5961
        %vm5963 = vcmask 449536
        %v5966 = vsel %vm5963, %v5960, %v5962
        %vm5968 = vmand %vm5811, %vm5820
        %v5969 = vsel %vm5968, 1, 0
        %vm5970 = vcmp.eq.s32.totalorder %v5969, 1
        %vm5971 = vmpackc.low %vm5970, %vm5970
        %v5972 = vsel %vm5971, 65537, 0
        %v5973 = vlaneseq
        %v5974 = vshrl.u32 %v5973, 7
        %v5975 = vsub.s32 0, %v5974
        %v5976 = vrot.slane %v5972, %v5975
        %vm5977 = vcmp.ne.s16.totalorder %v5976, 0
        %v5978 = vsel %vm5977, %v5966, 0
        %v5979 = vld [vmem:[#allocation2 + $0x80] sm:$0xff]
        %v5980 = vld [vmem:[#allocation2 + $0x88] sm:$0xff]
        %v5981 = vld [vmem:[#allocation2 + $0xa0] sm:$0xff]
        %v5982 = vld [vmem:[#allocation2 + $0xa8] sm:$0xff]
        %v5983 = vpack.c.bf16 %v5981, %v5979
        %v5984 = vpack.c.bf16 %v5982, %v5980
        %v5985 = vld [vmem:[%s2] sm:$0xff]
        %v5986 = vld [vmem:[%s2 + $0x8] sm:$0xff]
        %5988 = vset.pattern.permute.xlu0 3
        %5989 = vperm.xlu0 %5988, %v5985
        %v5990 = vpop.permute.xlu0 %5989
        %5993 = vset.pattern.permute.xlu0 3
        %5994 = vperm.xlu0 %5993, %v5986
        %v5995 = vpop.permute.xlu0 %5994
        %v5998 = vsel %vm277, %v5984, 0
        %6000 = vmatprep.subr.bf16.mxu0 0
        %6001 = vmatpush1.bf16.msra.mxu0 %v5841
        %6002 = vmatprep.subr.bf16.mxu0 0
        %6003 = vmatpush1.bf16.msra.mxu0 %v5860
        %6004 = vmatprep.subr.bf16.mxu0 0
        %6005 = vmatpush1.bf16.msra.mxu0 %v5880
        %6006 = vmatprep.subr.bf16.mxu0 0
        %6007 = vmatpush1.bf16.msra.mxu0 %v5899
        %6008 = vmatprep.subr.bf16.mxu0 0
        %6009 = vmatpush1.bf16.msra.mxu0 %v5799
        %6010 = vmatprep.subr.bf16.mxu0 0
        %6011 = vmatpush1.bf16.msra.mxu0 %v5919
        %6012 = vmatprep.subr.bf16.mxu0 0
        %6013 = vmatpush1.bf16.msra.mxu0 %v5939
        %6014 = vmatprep.subr.bf16.mxu0 0
        %6015 = vmatpush1.bf16.msra.mxu0 %v5958
        %6016 = vmatprep.subr.bf16.mxu0 0
        %6017 = vmatpush1.bf16.msra.mxu0 %v5978
        %6018 = vmatprep.subr.bf16.mxu0 0
        %6019 = vmatpush1.bf16.msra.mxu0 0
        %6020 = vmatprep.subr.bf16.mxu0 0
        %6021 = vmatpush1.bf16.msra.mxu0 0
        %6022 = vmatprep.subr.bf16.mxu0 0
        %6023 = vmatpush1.bf16.msra.mxu0 0
        %6024 = vmatprep.subr.bf16.mxu0 0
        %6025 = vmatpush1.bf16.msra.mxu0 0
        %6026 = vmatprep.subr.bf16.mxu0 0
        %6027 = vmatpush1.bf16.msra.mxu0 0
        %6028 = vmatprep.subr.bf16.mxu0 0
        %6029 = vmatpush1.bf16.msra.mxu0 0
        %6030 = vmatprep.subr.bf16.mxu0 0
        %6031 = vmatpush1.bf16.msra.mxu0 0
        %6032 = vmatprep.mubr.bf16.mxu0 %v5998
        %6033 = vmatmul.mubr.bf16.gmra.mrb[0].mxu0 %v5983
        %v6034 = vpop.f32.mrb[0].mxu0
        %v6035 = vadd.f32 %v5990, %v6034
        %v6036 = vpop.f32.mrb[0].mxu0
        %v6037 = vpop.f32.mrb[0].mxu0
        %v6038 = vadd.f32 %v5995, %v6037
        %v6039 = vpop.f32.mrb[0].mxu0
        %6040 = vdwg.mxu0
        %vm6041 = vcmp.ge.f32.partialorder %v6035, 0.0
        %vm6042 = vcmp.ge.f32.partialorder %v6038, 0.0
        %v6043 = vmul.f32 %v6035, 0.01
        %v6044 = vmul.f32 %v6038, 0.01
        %v6045 = vsel %vm6041, %v6035, %v6043
        %v6046 = vsel %vm6042, %v6038, %v6044
        %v6047 = vpack.c.bf16 %v6046, %v6045
        %6049 = vrot.lane.b32.xlu0 %v6047, 73
        %v6050 = vpop.permute.xlu0 %6049
        %6051 = vrot.lane.b32.xlu0 %v6047, 9
        %v6052 = vpop.permute.xlu0 %6051
        %v6055 = vsel %vm5826, %v6050, %v6052
        %v6057 = vsel %vm5840, %v6055, 0
        %6058 = vrot.lane.b32.xlu0 %v6047, 72
        %v6059 = vpop.permute.xlu0 %6058
        %6060 = vrot.lane.b32.xlu0 %v6047, 8
        %v6061 = vpop.permute.xlu0 %6060
        %v6064 = vsel %vm5780, %v6059, %v6061
        %v6066 = vsel %vm5859, %v6064, 0
        %6067 = vrot.lane.b32.xlu0 %v6047, 71
        %v6068 = vpop.permute.xlu0 %6067
        %6069 = vrot.lane.b32.xlu0 %v6047, 7
        %v6070 = vpop.permute.xlu0 %6069
        %v6073 = vsel %vm5865, %v6068, %v6070
        %v6075 = vsel %vm5879, %v6073, 0
        %6076 = vrot.lane.b32.xlu0 %v6047, 65
        %v6077 = vpop.permute.xlu0 %6076
        %6078 = vrot.lane.b32.xlu0 %v6047, 1
        %v6079 = vpop.permute.xlu0 %6078
        %v6082 = vsel %vm341, %v6077, %v6079
        %v6084 = vsel %vm5898, %v6082, 0
        %6085 = vrot.lane.b32.xlu0 %v6047, 127
        %v6086 = vpop.permute.xlu0 %6085
        %6087 = vrot.lane.b32.xlu0 %v6047, 63
        %v6088 = vpop.permute.xlu0 %6087
        %v6091 = vsel %vm5904, %v6086, %v6088
        %v6093 = vsel %vm5918, %v6091, 0
        %6094 = vrot.lane.b32.xlu0 %v6047, 121
        %v6095 = vpop.permute.xlu0 %6094
        %6096 = vrot.lane.b32.xlu0 %v6047, 57
        %v6097 = vpop.permute.xlu0 %6096
        %v6100 = vsel %vm5924, %v6095, %v6097
        %v6102 = vsel %vm5938, %v6100, 0
        %6103 = vrot.lane.b32.xlu0 %v6047, 120
        %v6104 = vpop.permute.xlu0 %6103
        %6105 = vrot.lane.b32.xlu0 %v6047, 56
        %v6106 = vpop.permute.xlu0 %6105
        %v6109 = vsel %vm5797, %v6104, %v6106
        %v6111 = vsel %vm5957, %v6109, 0
        %6112 = vrot.lane.b32.xlu0 %v6047, 119
        %v6113 = vpop.permute.xlu0 %6112
        %6114 = vrot.lane.b32.xlu0 %v6047, 55
        %v6115 = vpop.permute.xlu0 %6114
        %v6118 = vsel %vm5963, %v6113, %v6115
        %v6120 = vsel %vm5977, %v6118, 0
        %v6121 = vld [vmem:[#allocation2 + $0xc0] sm:$0xff]
        %v6122 = vld [vmem:[#allocation2 + $0xc8] sm:$0xff]
        %v6123 = vld [vmem:[#allocation2 + $0xe0] sm:$0xff]
        %v6124 = vld [vmem:[#allocation2 + $0xe8] sm:$0xff]
        %v6125 = vpack.c.bf16 %v6123, %v6121
        %v6126 = vpack.c.bf16 %v6124, %v6122
        %6127 = vset.pattern.permute.xlu0 4
        %6128 = vperm.xlu0 %6127, %v5985
        %v6129 = vpop.permute.xlu0 %6128
        %6131 = vset.pattern.permute.xlu0 4
        %6132 = vperm.xlu0 %6131, %v5986
        %v6133 = vpop.permute.xlu0 %6132
        %v6136 = vsel %vm277, %v6126, 0
        %6138 = vmatprep.subr.bf16.mxu0 0
        %6139 = vmatpush1.bf16.msra.mxu0 %v6057
        %6140 = vmatprep.subr.bf16.mxu0 0
        %6141 = vmatpush1.bf16.msra.mxu0 %v6066
        %6142 = vmatprep.subr.bf16.mxu0 0
        %6143 = vmatpush1.bf16.msra.mxu0 %v6075
        %6144 = vmatprep.subr.bf16.mxu0 0
        %6145 = vmatpush1.bf16.msra.mxu0 %v6084
        %6146 = vmatprep.subr.bf16.mxu0 0
        %6147 = vmatpush1.bf16.msra.mxu0 %v6047
        %6148 = vmatprep.subr.bf16.mxu0 0
        %6149 = vmatpush1.bf16.msra.mxu0 %v6093
        %6150 = vmatprep.subr.bf16.mxu0 0
        %6151 = vmatpush1.bf16.msra.mxu0 %v6102
        %6152 = vmatprep.subr.bf16.mxu0 0
        %6153 = vmatpush1.bf16.msra.mxu0 %v6111
        %6154 = vmatprep.subr.bf16.mxu0 0
        %6155 = vmatpush1.bf16.msra.mxu0 %v6120
        %6156 = vmatprep.subr.bf16.mxu0 0
        %6157 = vmatpush1.bf16.msra.mxu0 0
        %6158 = vmatprep.subr.bf16.mxu0 0
        %6159 = vmatpush1.bf16.msra.mxu0 0
        %6160 = vmatprep.subr.bf16.mxu0 0
        %6161 = vmatpush1.bf16.msra.mxu0 0
        %6162 = vmatprep.subr.bf16.mxu0 0
        %6163 = vmatpush1.bf16.msra.mxu0 0
        %6164 = vmatprep.subr.bf16.mxu0 0
        %6165 = vmatpush1.bf16.msra.mxu0 0
        %6166 = vmatprep.subr.bf16.mxu0 0
        %6167 = vmatpush1.bf16.msra.mxu0 0
        %6168 = vmatprep.subr.bf16.mxu0 0
        %6169 = vmatpush1.bf16.msra.mxu0 0
        %6170 = vmatprep.mubr.bf16.mxu0 %v6136
        %6171 = vmatmul.mubr.bf16.gmra.mrb[0].mxu0 %v6125
        %v6172 = vpop.f32.mrb[0].mxu0
        %v6173 = vadd.f32 %v6129, %v6172
        %v6174 = vpop.f32.mrb[0].mxu0
        %v6175 = vpop.f32.mrb[0].mxu0
        %v6176 = vadd.f32 %v6133, %v6175
        %v6177 = vpop.f32.mrb[0].mxu0
        %6178 = vdwg.mxu0
        %vm6179 = vcmp.ge.f32.partialorder %v6173, 0.0
        %vm6180 = vcmp.ge.f32.partialorder %v6176, 0.0
        %v6181 = vmul.f32 %v6173, 0.01
        %v6182 = vmul.f32 %v6176, 0.01
        %v6183 = vsel %vm6179, %v6173, %v6181
        %v6184 = vsel %vm6180, %v6176, %v6182
        %v6185 = vpack.c.bf16 %v6184, %v6183
        %vm6186 = vcmp.ge.s32.totalorder %v5801, 2
        %vm6187 = vcmp.lt.s32.totalorder %v5801, 10
        %vm6188 = vmand %vm6186, %vm6187
        %vm6189 = vcmp.ge.s32.totalorder %v5801, 4294967294
        %vm6190 = vcmp.lt.s32.totalorder %v5801, 6
        %vm6191 = vmand %vm6189, %vm6190
        %vm6192 = vcmp.ge.s32.totalorder %v5802, 2
        %vm6193 = vcmp.lt.s32.totalorder %v5802, 10
        %vm6194 = vmand %vm6192, %vm6193
        %vm6195 = vcmp.ge.s32.totalorder %v5802, 4294967294
        %vm6196 = vcmp.lt.s32.totalorder %v5802, 6
        %vm6197 = vmand %vm6195, %vm6196
        %6199 = vrot.lane.b32.xlu0 %v6185, 82
        %v6200 = vpop.permute.xlu0 %6199
        %6201 = vrot.lane.b32.xlu0 %v6185, 18
        %v6202 = vpop.permute.xlu0 %6201
        %v6205 = vsel %vm1013, %v6200, %v6202
        %vm6207 = vmand %vm6188, %vm6194
        %v6208 = vsel %vm6207, 1, 0
        %vm6209 = vcmp.eq.s32.totalorder %v6208, 1
        %vm6210 = vmpackc.low %vm6209, %vm6209
        %v6211 = vsel %vm6210, 65537, 0
        %v6212 = vlaneseq
        %v6213 = vshrl.u32 %v6212, 7
        %v6214 = vsub.s32 0, %v6213
        %v6215 = vrot.slane %v6211, %v6214
        %vm6216 = vcmp.ne.s16.totalorder %v6215, 0
        %v6217 = vsel %vm6216, %v6205, 0
        %6218 = vrot.lane.b32.xlu0 %v6185, 81
        %v6219 = vpop.permute.xlu0 %6218
        %6220 = vrot.lane.b32.xlu0 %v6185, 17
        %v6221 = vpop.permute.xlu0 %6220
        %v6224 = vsel %vm245, %v6219, %v6221
        %vm6226 = vmand %vm6188, %vm5814
        %v6227 = vsel %vm6226, 1, 0
        %vm6228 = vcmp.eq.s32.totalorder %v6227, 1
        %vm6229 = vmpackc.low %vm6228, %vm6228
        %v6230 = vsel %vm6229, 65537, 0
        %v6231 = vlaneseq
        %v6232 = vshrl.u32 %v6231, 7
        %v6233 = vsub.s32 0, %v6232
        %v6234 = vrot.slane %v6230, %v6233
        %vm6235 = vcmp.ne.s16.totalorder %v6234, 0
        %v6236 = vsel %vm6235, %v6224, 0
        %6237 = vrot.lane.b32.xlu0 %v6185, 80
        %v6238 = vpop.permute.xlu0 %6237
        %6239 = vrot.lane.b32.xlu0 %v6185, 16
        %v6240 = vpop.permute.xlu0 %6239
        %v6243 = vsel %vm277, %v6238, %v6240
        %vm6245 = vmand %vm6188, %vm5817
        %v6246 = vsel %vm6245, 1, 0
        %vm6247 = vcmp.eq.s32.totalorder %v6246, 1
        %vm6248 = vmpackc.low %vm6247, %vm6247
        %v6249 = vsel %vm6248, 65537, 0
        %v6250 = vlaneseq
        %v6251 = vshrl.u32 %v6250, 7
        %v6252 = vsub.s32 0, %v6251
        %v6253 = vrot.slane %v6249, %v6252
        %vm6254 = vcmp.ne.s16.totalorder %v6253, 0
        %v6255 = vsel %vm6254, %v6243, 0
        %6256 = vrot.lane.b32.xlu0 %v6185, 79
        %v6257 = vpop.permute.xlu0 %6256
        %6258 = vrot.lane.b32.xlu0 %v6185, 15
        %v6259 = vpop.permute.xlu0 %6258
        %v6262 = vsel %vm309, %v6257, %v6259
        %vm6264 = vmand %vm6188, %vm5820
        %v6265 = vsel %vm6264, 1, 0
        %vm6266 = vcmp.eq.s32.totalorder %v6265, 1
        %vm6267 = vmpackc.low %vm6266, %vm6266
        %v6268 = vsel %vm6267, 65537, 0
        %v6269 = vlaneseq
        %v6270 = vshrl.u32 %v6269, 7
        %v6271 = vsub.s32 0, %v6270
        %v6272 = vrot.slane %v6268, %v6271
        %vm6273 = vcmp.ne.s16.totalorder %v6272, 0
        %v6274 = vsel %vm6273, %v6262, 0
        %6275 = vrot.lane.b32.xlu0 %v6185, 78
        %v6276 = vpop.permute.xlu0 %6275
        %6277 = vrot.lane.b32.xlu0 %v6185, 14
        %v6278 = vpop.permute.xlu0 %6277
        %v6281 = vsel %vm1081, %v6276, %v6278
        %vm6283 = vmand %vm6188, %vm6197
        %v6284 = vsel %vm6283, 1, 0
        %vm6285 = vcmp.eq.s32.totalorder %v6284, 1
        %vm6286 = vmpackc.low %vm6285, %vm6285
        %v6287 = vsel %vm6286, 65537, 0
        %v6288 = vlaneseq
        %v6289 = vshrl.u32 %v6288, 7
        %v6290 = vsub.s32 0, %v6289
        %v6291 = vrot.slane %v6287, %v6290
        %vm6292 = vcmp.ne.s16.totalorder %v6291, 0
        %v6293 = vsel %vm6292, %v6281, 0
        %6294 = vrot.lane.b32.xlu0 %v6185, 74
        %v6295 = vpop.permute.xlu0 %6294
        %6296 = vrot.lane.b32.xlu0 %v6185, 10
        %v6297 = vpop.permute.xlu0 %6296
        %vm6298 = vcmask 80896
        %v6301 = vsel %vm6298, %v6295, %v6297
        %vm6303 = vmand %vm5805, %vm6194
        %v6304 = vsel %vm6303, 1, 0
        %vm6305 = vcmp.eq.s32.totalorder %v6304, 1
        %vm6306 = vmpackc.low %vm6305, %vm6305
        %v6307 = vsel %vm6306, 65537, 0
        %v6308 = vlaneseq
        %v6309 = vshrl.u32 %v6308, 7
        %v6310 = vsub.s32 0, %v6309
        %v6311 = vrot.slane %v6307, %v6310
        %vm6312 = vcmp.ne.s16.totalorder %v6311, 0
        %v6313 = vsel %vm6312, %v6301, 0
        %6314 = vrot.lane.b32.xlu0 %v6185, 73
        %v6315 = vpop.permute.xlu0 %6314
        %6316 = vrot.lane.b32.xlu0 %v6185, 9
        %v6317 = vpop.permute.xlu0 %6316
        %v6320 = vsel %vm5826, %v6315, %v6317
        %v6322 = vsel %vm5840, %v6320, 0
        %6323 = vrot.lane.b32.xlu0 %v6185, 72
        %v6324 = vpop.permute.xlu0 %6323
        %6325 = vrot.lane.b32.xlu0 %v6185, 8
        %v6326 = vpop.permute.xlu0 %6325
        %v6329 = vsel %vm5780, %v6324, %v6326
        %v6331 = vsel %vm5859, %v6329, 0
        %6332 = vrot.lane.b32.xlu0 %v6185, 71
        %v6333 = vpop.permute.xlu0 %6332
        %6334 = vrot.lane.b32.xlu0 %v6185, 7
        %v6335 = vpop.permute.xlu0 %6334
        %v6338 = vsel %vm5865, %v6333, %v6335
        %v6340 = vsel %vm5879, %v6338, 0
        %6341 = vrot.lane.b32.xlu0 %v6185, 70
        %v6342 = vpop.permute.xlu0 %6341
        %6343 = vrot.lane.b32.xlu0 %v6185, 6
        %v6344 = vpop.permute.xlu0 %6343
        %vm6345 = vcmask 48128
        %v6348 = vsel %vm6345, %v6342, %v6344
        %vm6350 = vmand %vm5805, %vm6197
        %v6351 = vsel %vm6350, 1, 0
        %vm6352 = vcmp.eq.s32.totalorder %v6351, 1
        %vm6353 = vmpackc.low %vm6352, %vm6352
        %v6354 = vsel %vm6353, 65537, 0
        %v6355 = vlaneseq
        %v6356 = vshrl.u32 %v6355, 7
        %v6357 = vsub.s32 0, %v6356
        %v6358 = vrot.slane %v6354, %v6357
        %vm6359 = vcmp.ne.s16.totalorder %v6358, 0
        %v6360 = vsel %vm6359, %v6348, 0
        %6361 = vrot.lane.b32.xlu0 %v6185, 66
        %v6362 = vpop.permute.xlu0 %6361
        %6363 = vrot.lane.b32.xlu0 %v6185, 2
        %v6364 = vpop.permute.xlu0 %6363
        %v6367 = vsel %vm1113, %v6362, %v6364
        %vm6369 = vmand %vm5808, %vm6194
        %v6370 = vsel %vm6369, 1, 0
        %vm6371 = vcmp.eq.s32.totalorder %v6370, 1
        %vm6372 = vmpackc.low %vm6371, %vm6371
        %v6373 = vsel %vm6372, 65537, 0
        %v6374 = vlaneseq
        %v6375 = vshrl.u32 %v6374, 7
        %v6376 = vsub.s32 0, %v6375
        %v6377 = vrot.slane %v6373, %v6376
        %vm6378 = vcmp.ne.s16.totalorder %v6377, 0
        %v6379 = vsel %vm6378, %v6367, 0
        %6380 = vrot.lane.b32.xlu0 %v6185, 65
        %v6381 = vpop.permute.xlu0 %6380
        %6382 = vrot.lane.b32.xlu0 %v6185, 1
        %v6383 = vpop.permute.xlu0 %6382
        %v6386 = vsel %vm341, %v6381, %v6383
        %v6388 = vsel %vm5898, %v6386, 0
        %6389 = vrot.lane.b32.xlu0 %v6185, 127
        %v6390 = vpop.permute.xlu0 %6389
        %6391 = vrot.lane.b32.xlu0 %v6185, 63
        %v6392 = vpop.permute.xlu0 %6391
        %v6395 = vsel %vm5904, %v6390, %v6392
        %v6397 = vsel %vm5918, %v6395, 0
        %6398 = vrot.lane.b32.xlu0 %v6185, 126
        %v6399 = vpop.permute.xlu0 %6398
        %6400 = vrot.lane.b32.xlu0 %v6185, 62
        %v6401 = vpop.permute.xlu0 %6400
        %vm6402 = vcmask 506880
        %v6405 = vsel %vm6402, %v6399, %v6401
        %vm6407 = vmand %vm5808, %vm6197
        %v6408 = vsel %vm6407, 1, 0
        %vm6409 = vcmp.eq.s32.totalorder %v6408, 1
        %vm6410 = vmpackc.low %vm6409, %vm6409
        %v6411 = vsel %vm6410, 65537, 0
        %v6412 = vlaneseq
        %v6413 = vshrl.u32 %v6412, 7
        %v6414 = vsub.s32 0, %v6413
        %v6415 = vrot.slane %v6411, %v6414
        %vm6416 = vcmp.ne.s16.totalorder %v6415, 0
        %v6417 = vsel %vm6416, %v6405, 0
        %6418 = vrot.lane.b32.xlu0 %v6185, 122
        %v6419 = vpop.permute.xlu0 %6418
        %6420 = vrot.lane.b32.xlu0 %v6185, 58
        %v6421 = vpop.permute.xlu0 %6420
        %vm6422 = vcmask 474112
        %v6425 = vsel %vm6422, %v6419, %v6421
        %vm6427 = vmand %vm5811, %vm6194
        %v6428 = vsel %vm6427, 1, 0
        %vm6429 = vcmp.eq.s32.totalorder %v6428, 1
        %vm6430 = vmpackc.low %vm6429, %vm6429
        %v6431 = vsel %vm6430, 65537, 0
        %v6432 = vlaneseq
        %v6433 = vshrl.u32 %v6432, 7
        %v6434 = vsub.s32 0, %v6433
        %v6435 = vrot.slane %v6431, %v6434
        %vm6436 = vcmp.ne.s16.totalorder %v6435, 0
        %v6437 = vsel %vm6436, %v6425, 0
        %6438 = vrot.lane.b32.xlu0 %v6185, 121
        %v6439 = vpop.permute.xlu0 %6438
        %6440 = vrot.lane.b32.xlu0 %v6185, 57
        %v6441 = vpop.permute.xlu0 %6440
        %v6444 = vsel %vm5924, %v6439, %v6441
        %v6446 = vsel %vm5938, %v6444, 0
        %6447 = vrot.lane.b32.xlu0 %v6185, 120
        %v6448 = vpop.permute.xlu0 %6447
        %6449 = vrot.lane.b32.xlu0 %v6185, 56
        %v6450 = vpop.permute.xlu0 %6449
        %v6453 = vsel %vm5797, %v6448, %v6450
        %v6455 = vsel %vm5957, %v6453, 0
        %6456 = vrot.lane.b32.xlu0 %v6185, 119
        %v6457 = vpop.permute.xlu0 %6456
        %6458 = vrot.lane.b32.xlu0 %v6185, 55
        %v6459 = vpop.permute.xlu0 %6458
        %v6462 = vsel %vm5963, %v6457, %v6459
        %v6464 = vsel %vm5977, %v6462, 0
        %6465 = vrot.lane.b32.xlu0 %v6185, 118
        %v6466 = vpop.permute.xlu0 %6465
        %6467 = vrot.lane.b32.xlu0 %v6185, 54
        %v6468 = vpop.permute.xlu0 %6467
        %vm6469 = vcmask 441344
        %v6472 = vsel %vm6469, %v6466, %v6468
        %vm6474 = vmand %vm5811, %vm6197
        %v6475 = vsel %vm6474, 1, 0
        %vm6476 = vcmp.eq.s32.totalorder %v6475, 1
        %vm6477 = vmpackc.low %vm6476, %vm6476
        %v6478 = vsel %vm6477, 65537, 0
        %v6479 = vlaneseq
        %v6480 = vshrl.u32 %v6479, 7
        %v6481 = vsub.s32 0, %v6480
        %v6482 = vrot.slane %v6478, %v6481
        %vm6483 = vcmp.ne.s16.totalorder %v6482, 0
        %v6484 = vsel %vm6483, %v6472, 0
        %6485 = vrot.lane.b32.xlu0 %v6185, 114
        %v6486 = vpop.permute.xlu0 %6485
        %6487 = vrot.lane.b32.xlu0 %v6185, 50
        %v6488 = vpop.permute.xlu0 %6487
        %vm6489 = vcmask 408576
        %v6492 = vsel %vm6489, %v6486, %v6488
        %vm6494 = vmand %vm6191, %vm6194
        %v6495 = vsel %vm6494, 1, 0
        %vm6496 = vcmp.eq.s32.totalorder %v6495, 1
        %vm6497 = vmpackc.low %vm6496, %vm6496
        %v6498 = vsel %vm6497, 65537, 0
        %v6499 = vlaneseq
        %v6500 = vshrl.u32 %v6499, 7
        %v6501 = vsub.s32 0, %v6500
        %v6502 = vrot.slane %v6498, %v6501
        %vm6503 = vcmp.ne.s16.totalorder %v6502, 0
        %v6504 = vsel %vm6503, %v6492, 0
        %6505 = vrot.lane.b32.xlu0 %v6185, 113
        %v6506 = vpop.permute.xlu0 %6505
        %6507 = vrot.lane.b32.xlu0 %v6185, 49
        %v6508 = vpop.permute.xlu0 %6507
        %vm6509 = vcmask 400384
        %v6512 = vsel %vm6509, %v6506, %v6508
        %vm6514 = vmand %vm6191, %vm5814
        %v6515 = vsel %vm6514, 1, 0
        %vm6516 = vcmp.eq.s32.totalorder %v6515, 1
        %vm6517 = vmpackc.low %vm6516, %vm6516
        %v6518 = vsel %vm6517, 65537, 0
        %v6519 = vlaneseq
        %v6520 = vshrl.u32 %v6519, 7
        %v6521 = vsub.s32 0, %v6520
        %v6522 = vrot.slane %v6518, %v6521
        %vm6523 = vcmp.ne.s16.totalorder %v6522, 0
        %v6524 = vsel %vm6523, %v6512, 0
        %6525 = vrot.lane.b32.xlu0 %v6185, 112
        %v6526 = vpop.permute.xlu0 %6525
        %6527 = vrot.lane.b32.xlu0 %v6185, 48
        %v6528 = vpop.permute.xlu0 %6527
        %v6531 = vsel %vm5794, %v6526, %v6528
        %vm6533 = vmand %vm6191, %vm5817
        %v6534 = vsel %vm6533, 1, 0
        %vm6535 = vcmp.eq.s32.totalorder %v6534, 1
        %vm6536 = vmpackc.low %vm6535, %vm6535
        %v6537 = vsel %vm6536, 65537, 0
        %v6538 = vlaneseq
        %v6539 = vshrl.u32 %v6538, 7
        %v6540 = vsub.s32 0, %v6539
        %v6541 = vrot.slane %v6537, %v6540
        %vm6542 = vcmp.ne.s16.totalorder %v6541, 0
        %v6543 = vsel %vm6542, %v6531, 0
        %6544 = vrot.lane.b32.xlu0 %v6185, 111
        %v6545 = vpop.permute.xlu0 %6544
        %6546 = vrot.lane.b32.xlu0 %v6185, 47
        %v6547 = vpop.permute.xlu0 %6546
        %vm6548 = vcmask 384000
        %v6551 = vsel %vm6548, %v6545, %v6547
        %vm6553 = vmand %vm6191, %vm5820
        %v6554 = vsel %vm6553, 1, 0
        %vm6555 = vcmp.eq.s32.totalorder %v6554, 1
        %vm6556 = vmpackc.low %vm6555, %vm6555
        %v6557 = vsel %vm6556, 65537, 0
        %v6558 = vlaneseq
        %v6559 = vshrl.u32 %v6558, 7
        %v6560 = vsub.s32 0, %v6559
        %v6561 = vrot.slane %v6557, %v6560
        %vm6562 = vcmp.ne.s16.totalorder %v6561, 0
        %v6563 = vsel %vm6562, %v6551, 0
        %6564 = vrot.lane.b32.xlu0 %v6185, 110
        %v6565 = vpop.permute.xlu0 %6564
        %6566 = vrot.lane.b32.xlu0 %v6185, 46
        %v6567 = vpop.permute.xlu0 %6566
        %vm6568 = vcmask 375808
        %v6571 = vsel %vm6568, %v6565, %v6567
        %vm6573 = vmand %vm6191, %vm6197
        %v6574 = vsel %vm6573, 1, 0
        %vm6575 = vcmp.eq.s32.totalorder %v6574, 1
        %vm6576 = vmpackc.low %vm6575, %vm6575
        %v6577 = vsel %vm6576, 65537, 0
        %v6578 = vlaneseq
        %v6579 = vshrl.u32 %v6578, 7
        %v6580 = vsub.s32 0, %v6579
        %v6581 = vrot.slane %v6577, %v6580
        %vm6582 = vcmp.ne.s16.totalorder %v6581, 0
        %v6583 = vsel %vm6582, %v6571, 0
        %v6584 = vld [vmem:[#allocation2 + $0x100] sm:$0xff]
        %v6585 = vld [vmem:[#allocation2 + $0x108] sm:$0xff]
        %v6586 = vld [vmem:[#allocation2 + $0x110] sm:$0xff]
        %v6587 = vld [vmem:[#allocation2 + $0x118] sm:$0xff]
        %v6588 = vld [vmem:[#allocation2 + $0x120] sm:$0xff]
        %v6589 = vld [vmem:[#allocation2 + $0x128] sm:$0xff]
        %v6590 = vld [vmem:[#allocation2 + $0x130] sm:$0xff]
        %v6591 = vld [vmem:[#allocation2 + $0x138] sm:$0xff]
        %v6592 = vld [vmem:[#allocation2 + $0x140] sm:$0xff]
        %v6593 = vld [vmem:[#allocation2 + $0x148] sm:$0xff]
        %v6594 = vld [vmem:[#allocation2 + $0x150] sm:$0xff]
        %v6595 = vld [vmem:[#allocation2 + $0x158] sm:$0xff]
        %v6596 = vld [vmem:[#allocation2 + $0x160] sm:$0xff]
        %v6597 = vld [vmem:[#allocation2 + $0x168] sm:$0xff]
        %v6598 = vld [vmem:[#allocation2 + $0x170] sm:$0xff]
        %v6599 = vld [vmem:[#allocation2 + $0x178] sm:$0xff]
        %v6600 = vpack.c.bf16 %v6588, %v6584
        %v6601 = vpack.c.bf16 %v6589, %v6585
        %v6602 = vpack.c.bf16 %v6590, %v6586
        %v6603 = vpack.c.bf16 %v6591, %v6587
        %v6604 = vpack.c.bf16 %v6596, %v6592
        %v6605 = vpack.c.bf16 %v6597, %v6593
        %v6606 = vpack.c.bf16 %v6598, %v6594
        %v6607 = vpack.c.bf16 %v6599, %v6595
        %v6608 = vld [vmem:[%s2] sm:$0xff]
        %v6609 = vld [vmem:[%s2 + $0x8] sm:$0xff]
        %v6610 = vld [vmem:[%s2 + $0x10] sm:$0xff]
        %v6611 = vld [vmem:[%s2 + $0x18] sm:$0xff]
        %6613 = vset.pattern.permute.xlu0 5
        %6614 = vperm.xlu0 %6613, %v6608
        %v6615 = vpop.permute.xlu0 %6614
        %6618 = vset.pattern.permute.xlu0 5
        %6619 = vperm.xlu0 %6618, %v6609
        %v6620 = vpop.permute.xlu0 %6619
        %6623 = vset.pattern.permute.xlu0 5
        %6624 = vperm.xlu0 %6623, %v6610
        %v6625 = vpop.permute.xlu0 %6624
        %6628 = vset.pattern.permute.xlu0 5
        %6629 = vperm.xlu0 %6628, %v6611
        %v6630 = vpop.permute.xlu0 %6629
        %v6633 = vsel %vm277, %v6603, 0
        %v6636 = vsel %vm277, %v6607, 0
        %6638 = vmatprep.subr.bf16.mxu0 0
        %6639 = vmatpush1.bf16.msra.mxu0 %v6217
        %6640 = vmatprep.subr.bf16.mxu0 0
        %6641 = vmatpush1.bf16.msra.mxu0 %v6236
        %6642 = vmatprep.subr.bf16.mxu0 0
        %6643 = vmatpush1.bf16.msra.mxu0 %v6255
        %6644 = vmatprep.subr.bf16.mxu0 0
        %6645 = vmatpush1.bf16.msra.mxu0 %v6274
        %6646 = vmatprep.subr.bf16.mxu0 0
        %6647 = vmatpush1.bf16.msra.mxu0 %v6293
        %6648 = vmatprep.subr.bf16.mxu0 0
        %6649 = vmatpush1.bf16.msra.mxu0 %v6313
        %6650 = vmatprep.subr.bf16.mxu0 0
        %6651 = vmatpush1.bf16.msra.mxu0 %v6322
        %6652 = vmatprep.subr.bf16.mxu0 0
        %6653 = vmatpush1.bf16.msra.mxu0 %v6331
        %6654 = vmatprep.subr.bf16.mxu0 0
        %6655 = vmatpush1.bf16.msra.mxu0 %v6340
        %6656 = vmatprep.subr.bf16.mxu0 0
        %6657 = vmatpush1.bf16.msra.mxu0 %v6360
        %6658 = vmatprep.subr.bf16.mxu0 0
        %6659 = vmatpush1.bf16.msra.mxu0 %v6379
        %6660 = vmatprep.subr.bf16.mxu0 0
        %6661 = vmatpush1.bf16.msra.mxu0 %v6388
        %6662 = vmatprep.subr.bf16.mxu0 0
        %6663 = vmatpush1.bf16.msra.mxu0 %v6185
        %6664 = vmatprep.subr.bf16.mxu0 0
        %6665 = vmatpush1.bf16.msra.mxu0 %v6397
        %6666 = vmatprep.subr.bf16.mxu0 0
        %6667 = vmatpush1.bf16.msra.mxu0 %v6417
        %6668 = vmatprep.subr.bf16.mxu0 0
        %6669 = vmatpush1.bf16.msra.mxu0 %v6437
        %6670 = vmatprep.mubr.bf16.mxu0 %v6601
        %6671 = vmatmul.mubr.bf16.gmra.mrb[0].mxu0 %v6600
        %v6672 = vpop.f32.mrb[0].mxu0
        %v6673 = vadd.f32 %v6615, %v6672
        %v6674 = vpop.f32.mrb[0].mxu0
        %v6675 = vpop.f32.mrb[0].mxu0
        %v6676 = vadd.f32 %v6620, %v6675
        %v6677 = vpop.f32.mrb[0].mxu0
        %6678 = vmatprep.mubr.bf16.mxu0 %v6605
        %6679 = vmatmul.mubr.bf16.gmra.mrb[0].mxu0 %v6604
        %v6680 = vpop.f32.mrb[0].mxu0
        %v6681 = vadd.f32 %v6625, %v6680
        %v6682 = vpop.f32.mrb[0].mxu0
        %v6683 = vpop.f32.mrb[0].mxu0
        %v6684 = vadd.f32 %v6630, %v6683
        %v6685 = vpop.f32.mrb[0].mxu0
        %6686 = vdwg.mxu0
        %6687 = vmatprep.subr.bf16.mxu0 0
        %6688 = vmatpush1.bf16.msra.mxu0 %v6446
        %6689 = vmatprep.subr.bf16.mxu0 0
        %6690 = vmatpush1.bf16.msra.mxu0 %v6455
        %6691 = vmatprep.subr.bf16.mxu0 0
        %6692 = vmatpush1.bf16.msra.mxu0 %v6464
        %6693 = vmatprep.subr.bf16.mxu0 0
        %6694 = vmatpush1.bf16.msra.mxu0 %v6484
        %6695 = vmatprep.subr.bf16.mxu0 0
        %6696 = vmatpush1.bf16.msra.mxu0 %v6504
        %6697 = vmatprep.subr.bf16.mxu0 0
        %6698 = vmatpush1.bf16.msra.mxu0 %v6524
        %6699 = vmatprep.subr.bf16.mxu0 0
        %6700 = vmatpush1.bf16.msra.mxu0 %v6543
        %6701 = vmatprep.subr.bf16.mxu0 0
        %6702 = vmatpush1.bf16.msra.mxu0 %v6563
        %6703 = vmatprep.subr.bf16.mxu0 0
        %6704 = vmatpush1.bf16.msra.mxu0 %v6583
        %6705 = vmatprep.subr.bf16.mxu0 0
        %6706 = vmatpush1.bf16.msra.mxu0 0
        %6707 = vmatprep.subr.bf16.mxu0 0
        %6708 = vmatpush1.bf16.msra.mxu0 0
        %6709 = vmatprep.subr.bf16.mxu0 0
        %6710 = vmatpush1.bf16.msra.mxu0 0
        %6711 = vmatprep.subr.bf16.mxu0 0
        %6712 = vmatpush1.bf16.msra.mxu0 0
        %6713 = vmatprep.subr.bf16.mxu0 0
        %6714 = vmatpush1.bf16.msra.mxu0 0
        %6715 = vmatprep.subr.bf16.mxu0 0
        %6716 = vmatpush1.bf16.msra.mxu0 0
        %6717 = vmatprep.subr.bf16.mxu0 0
        %6718 = vmatpush1.bf16.msra.mxu0 0
        %6719 = vmatprep.mubr.bf16.mxu0 %v6633
        %6720 = vmatmul.mubr.bf16.gmra.mrb[0].mxu0 %v6602
        %v6721 = vpop.f32.mrb[0].mxu0
        %v6722 = vadd.f32 %v6673, %v6721
        %v6723 = vpop.f32.mrb[0].mxu0
        %v6724 = vpop.f32.mrb[0].mxu0
        %v6725 = vadd.f32 %v6676, %v6724
        %v6726 = vpop.f32.mrb[0].mxu0
        %6727 = vmatprep.mubr.bf16.mxu0 %v6636
        %6728 = vmatmul.mubr.bf16.gmra.mrb[0].mxu0 %v6606
        %v6729 = vpop.f32.mrb[0].mxu0
        %v6730 = vadd.f32 %v6681, %v6729
        %v6731 = vpop.f32.mrb[0].mxu0
        %v6732 = vpop.f32.mrb[0].mxu0
        %v6733 = vadd.f32 %v6684, %v6732
        %v6734 = vpop.f32.mrb[0].mxu0
        %6735 = vdwg.mxu0
        %vm6736 = vcmp.ge.f32.partialorder %v6722, 0.0
        %vm6737 = vcmp.ge.f32.partialorder %v6725, 0.0
        %vm6738 = vcmp.ge.f32.partialorder %v6730, 0.0
        %vm6739 = vcmp.ge.f32.partialorder %v6733, 0.0
        %v6740 = vmul.f32 %v6722, 0.01
        %v6741 = vmul.f32 %v6725, 0.01
        %v6742 = vmul.f32 %v6730, 0.01
        %v6743 = vmul.f32 %v6733, 0.01
        %v6744 = vsel %vm6736, %v6722, %v6740
        %v6745 = vsel %vm6737, %v6725, %v6741
        %v6746 = vsel %vm6738, %v6730, %v6742
        %v6747 = vsel %vm6739, %v6733, %v6743
        %v6748 = vpack.c.bf16 %v6745, %v6744
        %v6749 = vpack.c.bf16 %v6747, %v6746
        %6752 = vrot.lane.b32.xlu0 %v6748, 126
        %v6753 = vpop.permute.xlu0 %6752
        %6754 = vrot.lane.b32.xlu0 %v6749, 126
        %v6755 = vpop.permute.xlu0 %6754
        %6758 = vrot.lane.b32.xlu0 %v6748, 124
        %v6759 = vpop.permute.xlu0 %6758
        %6760 = vrot.lane.b32.xlu0 %v6749, 124
        %v6761 = vpop.permute.xlu0 %6760
        %6764 = vrot.lane.b32.xlu0 %v6748, 122
        %v6765 = vpop.permute.xlu0 %6764
        %6766 = vrot.lane.b32.xlu0 %v6749, 122
        %v6767 = vpop.permute.xlu0 %6766
        %6770 = vrot.lane.b32.xlu0 %v6748, 120
        %v6771 = vpop.permute.xlu0 %6770
        %6772 = vrot.lane.b32.xlu0 %v6749, 120
        %v6773 = vpop.permute.xlu0 %6772
        %6776 = vrot.lane.b32.xlu0 %v6748, 118
        %v6777 = vpop.permute.xlu0 %6776
        %6778 = vrot.lane.b32.xlu0 %v6749, 118
        %v6779 = vpop.permute.xlu0 %6778
        %6782 = vrot.lane.b32.xlu0 %v6748, 116
        %v6783 = vpop.permute.xlu0 %6782
        %6784 = vrot.lane.b32.xlu0 %v6749, 116
        %v6785 = vpop.permute.xlu0 %6784
        %6788 = vrot.lane.b32.xlu0 %v6748, 114
        %v6789 = vpop.permute.xlu0 %6788
        %6790 = vrot.lane.b32.xlu0 %v6749, 114
        %v6791 = vpop.permute.xlu0 %6790
        %6794 = vrot.lane.b32.xlu0 %v6748, 112
        %v6795 = vpop.permute.xlu0 %6794
        %6796 = vrot.lane.b32.xlu0 %v6749, 112
        %v6797 = vpop.permute.xlu0 %6796
        %6800 = vrot.lane.b32.xlu0 %v6748, 110
        %v6801 = vpop.permute.xlu0 %6800
        %6802 = vrot.lane.b32.xlu0 %v6749, 110
        %v6803 = vpop.permute.xlu0 %6802
        %6806 = vrot.lane.b32.xlu0 %v6748, 108
        %v6807 = vpop.permute.xlu0 %6806
        %6808 = vrot.lane.b32.xlu0 %v6749, 108
        %v6809 = vpop.permute.xlu0 %6808
        %6812 = vrot.lane.b32.xlu0 %v6748, 106
        %v6813 = vpop.permute.xlu0 %6812
        %6814 = vrot.lane.b32.xlu0 %v6749, 106
        %v6815 = vpop.permute.xlu0 %6814
        %6818 = vrot.lane.b32.xlu0 %v6748, 104
        %v6819 = vpop.permute.xlu0 %6818
        %6820 = vrot.lane.b32.xlu0 %v6749, 104
        %v6821 = vpop.permute.xlu0 %6820
        %6824 = vrot.lane.b32.xlu0 %v6748, 102
        %v6825 = vpop.permute.xlu0 %6824
        %6826 = vrot.lane.b32.xlu0 %v6749, 102
        %v6827 = vpop.permute.xlu0 %6826
        %6830 = vrot.lane.b32.xlu0 %v6748, 100
        %v6831 = vpop.permute.xlu0 %6830
        %6832 = vrot.lane.b32.xlu0 %v6749, 100
        %v6833 = vpop.permute.xlu0 %6832
        %6836 = vrot.lane.b32.xlu0 %v6748, 98
        %v6837 = vpop.permute.xlu0 %6836
        %6838 = vrot.lane.b32.xlu0 %v6749, 98
        %v6839 = vpop.permute.xlu0 %6838
        %6842 = vrot.lane.b32.xlu0 %v6748, 96
        %v6843 = vpop.permute.xlu0 %6842
        %6844 = vrot.lane.b32.xlu0 %v6749, 96
        %v6845 = vpop.permute.xlu0 %6844
        %6848 = vrot.lane.b32.xlu0 %v6748, 94
        %v6849 = vpop.permute.xlu0 %6848
        %6850 = vrot.lane.b32.xlu0 %v6749, 94
        %v6851 = vpop.permute.xlu0 %6850
        %6854 = vrot.lane.b32.xlu0 %v6748, 92
        %v6855 = vpop.permute.xlu0 %6854
        %6856 = vrot.lane.b32.xlu0 %v6749, 92
        %v6857 = vpop.permute.xlu0 %6856
        %6860 = vrot.lane.b32.xlu0 %v6748, 90
        %v6861 = vpop.permute.xlu0 %6860
        %6862 = vrot.lane.b32.xlu0 %v6749, 90
        %v6863 = vpop.permute.xlu0 %6862
        %6866 = vrot.lane.b32.xlu0 %v6748, 88
        %v6867 = vpop.permute.xlu0 %6866
        %6868 = vrot.lane.b32.xlu0 %v6749, 88
        %v6869 = vpop.permute.xlu0 %6868
        %6872 = vrot.lane.b32.xlu0 %v6748, 86
        %v6873 = vpop.permute.xlu0 %6872
        %6874 = vrot.lane.b32.xlu0 %v6749, 86
        %v6875 = vpop.permute.xlu0 %6874
        %6878 = vrot.lane.b32.xlu0 %v6748, 84
        %v6879 = vpop.permute.xlu0 %6878
        %6880 = vrot.lane.b32.xlu0 %v6749, 84
        %v6881 = vpop.permute.xlu0 %6880
        %6884 = vrot.lane.b32.xlu0 %v6748, 82
        %v6885 = vpop.permute.xlu0 %6884
        %6886 = vrot.lane.b32.xlu0 %v6749, 82
        %v6887 = vpop.permute.xlu0 %6886
        %6890 = vrot.lane.b32.xlu0 %v6748, 80
        %v6891 = vpop.permute.xlu0 %6890
        %6892 = vrot.lane.b32.xlu0 %v6749, 80
        %v6893 = vpop.permute.xlu0 %6892
        %6896 = vrot.lane.b32.xlu0 %v6748, 78
        %v6897 = vpop.permute.xlu0 %6896
        %6898 = vrot.lane.b32.xlu0 %v6749, 78
        %v6899 = vpop.permute.xlu0 %6898
        %6902 = vrot.lane.b32.xlu0 %v6748, 76
        %v6903 = vpop.permute.xlu0 %6902
        %6904 = vrot.lane.b32.xlu0 %v6749, 76
        %v6905 = vpop.permute.xlu0 %6904
        %6908 = vrot.lane.b32.xlu0 %v6748, 74
        %v6909 = vpop.permute.xlu0 %6908
        %6910 = vrot.lane.b32.xlu0 %v6749, 74
        %v6911 = vpop.permute.xlu0 %6910
        %6914 = vrot.lane.b32.xlu0 %v6748, 72
        %v6915 = vpop.permute.xlu0 %6914
        %6916 = vrot.lane.b32.xlu0 %v6749, 72
        %v6917 = vpop.permute.xlu0 %6916
        %6920 = vrot.lane.b32.xlu0 %v6748, 70
        %v6921 = vpop.permute.xlu0 %6920
        %6922 = vrot.lane.b32.xlu0 %v6749, 70
        %v6923 = vpop.permute.xlu0 %6922
        %6926 = vrot.lane.b32.xlu0 %v6748, 68
        %v6927 = vpop.permute.xlu0 %6926
        %6928 = vrot.lane.b32.xlu0 %v6749, 68
        %v6929 = vpop.permute.xlu0 %6928
        %6932 = vrot.lane.b32.xlu0 %v6748, 66
        %v6933 = vpop.permute.xlu0 %6932
        %6934 = vrot.lane.b32.xlu0 %v6749, 66
        %v6935 = vpop.permute.xlu0 %6934
        %v6938 = vcombine.low %v6748, %v6771
        %v6939 = vcombine.high %v6748, %v6771
        %v6941 = vunpack.c.l.s4 1983009808
        %v6942 = vunpack.c.0.s8 %v6941
        %v6943 = vlaneseq
        %v6944 = vshrl.u32 %v6943, 7
        %v6945 = vsub.s32 %v6942, %v6944
        %v6946 = vrot.slane %v6938, %v6945
        %v6948 = vunpack.c.l.s4 1983009808
        %v6949 = vunpack.c.0.s8 %v6948
        %v6950 = vlaneseq
        %v6951 = vshrl.u32 %v6950, 7
        %v6952 = vsub.s32 %v6949, %v6951
        %v6953 = vrot.slane %v6939, %v6952
        %v6954 = vcombine.low %v6759, %v6783
        %v6955 = vcombine.high %v6759, %v6783
        %v6957 = vunpack.c.l.s4 1983009808
        %v6958 = vunpack.c.0.s8 %v6957
        %v6959 = vlaneseq
        %v6960 = vshrl.u32 %v6959, 7
        %v6961 = vsub.s32 %v6958, %v6960
        %v6962 = vrot.slane %v6954, %v6961
        %v6964 = vunpack.c.l.s4 1983009808
        %v6965 = vunpack.c.0.s8 %v6964
        %v6966 = vlaneseq
        %v6967 = vshrl.u32 %v6966, 7
        %v6968 = vsub.s32 %v6965, %v6967
        %v6969 = vrot.slane %v6955, %v6968
        %v6970 = vcombine.low %v6795, %v6819
        %v6971 = vcombine.high %v6795, %v6819
        %v6973 = vunpack.c.l.s4 1983009808
        %v6974 = vunpack.c.0.s8 %v6973
        %v6975 = vlaneseq
        %v6976 = vshrl.u32 %v6975, 7
        %v6977 = vsub.s32 %v6974, %v6976
        %v6978 = vrot.slane %v6970, %v6977
        %v6980 = vunpack.c.l.s4 1983009808
        %v6981 = vunpack.c.0.s8 %v6980
        %v6982 = vlaneseq
        %v6983 = vshrl.u32 %v6982, 7
        %v6984 = vsub.s32 %v6981, %v6983
        %v6985 = vrot.slane %v6971, %v6984
        %v6986 = vcombine.low %v6807, %v6831
        %v6987 = vcombine.high %v6807, %v6831
        %v6989 = vunpack.c.l.s4 1983009808
        %v6990 = vunpack.c.0.s8 %v6989
        %v6991 = vlaneseq
        %v6992 = vshrl.u32 %v6991, 7
        %v6993 = vsub.s32 %v6990, %v6992
        %v6994 = vrot.slane %v6986, %v6993
        %v6996 = vunpack.c.l.s4 1983009808
        %v6997 = vunpack.c.0.s8 %v6996
        %v6998 = vlaneseq
        %v6999 = vshrl.u32 %v6998, 7
        %v7000 = vsub.s32 %v6997, %v6999
        %v7001 = vrot.slane %v6987, %v7000
        %v7002 = vcombine.low %v6946, %v6962
        %v7003 = vcombine.high %v6946, %v6962
        %v7005 = vunpack.c.l.s4 1934713408
        %v7006 = vunpack.c.0.s8 %v7005
        %v7007 = vlaneseq
        %v7008 = vshrl.u32 %v7007, 7
        %v7009 = vsub.s32 %v7006, %v7008
        %v7010 = vrot.slane %v7002, %v7009
        %v7012 = vunpack.c.l.s4 1934713408
        %v7013 = vunpack.c.0.s8 %v7012
        %v7014 = vlaneseq
        %v7015 = vshrl.u32 %v7014, 7
        %v7016 = vsub.s32 %v7013, %v7015
        %v7017 = vrot.slane %v7003, %v7016
        %v7018 = vcombine.low %v6953, %v6969
        %v7019 = vcombine.high %v6953, %v6969
        %v7021 = vunpack.c.l.s4 1934713408
        %v7022 = vunpack.c.0.s8 %v7021
        %v7023 = vlaneseq
        %v7024 = vshrl.u32 %v7023, 7
        %v7025 = vsub.s32 %v7022, %v7024
        %v7026 = vrot.slane %v7018, %v7025
        %v7028 = vunpack.c.l.s4 1934713408
        %v7029 = vunpack.c.0.s8 %v7028
        %v7030 = vlaneseq
        %v7031 = vshrl.u32 %v7030, 7
        %v7032 = vsub.s32 %v7029, %v7031
        %v7033 = vrot.slane %v7019, %v7032
        %v7034 = vcombine.low %v6978, %v6994
        %v7035 = vcombine.high %v6978, %v6994
        %v7037 = vunpack.c.l.s4 1934713408
        %v7038 = vunpack.c.0.s8 %v7037
        %v7039 = vlaneseq
        %v7040 = vshrl.u32 %v7039, 7
        %v7041 = vsub.s32 %v7038, %v7040
        %v7042 = vrot.slane %v7034, %v7041
        %v7044 = vunpack.c.l.s4 1934713408
        %v7045 = vunpack.c.0.s8 %v7044
        %v7046 = vlaneseq
        %v7047 = vshrl.u32 %v7046, 7
        %v7048 = vsub.s32 %v7045, %v7047
        %v7049 = vrot.slane %v7035, %v7048
        %v7050 = vcombine.low %v6985, %v7001
        %v7051 = vcombine.high %v6985, %v7001
        %v7053 = vunpack.c.l.s4 1934713408
        %v7054 = vunpack.c.0.s8 %v7053
        %v7055 = vlaneseq
        %v7056 = vshrl.u32 %v7055, 7
        %v7057 = vsub.s32 %v7054, %v7056
        %v7058 = vrot.slane %v7050, %v7057
        %v7060 = vunpack.c.l.s4 1934713408
        %v7061 = vunpack.c.0.s8 %v7060
        %v7062 = vlaneseq
        %v7063 = vshrl.u32 %v7062, 7
        %v7064 = vsub.s32 %v7061, %v7063
        %v7065 = vrot.slane %v7051, %v7064
        %v7066 = vcombine.low %v7010, %v7042
        %v7067 = vcombine.high %v7010, %v7042
        %v7068 = vcombine.low %v7017, %v7049
        %v7069 = vcombine.high %v7017, %v7049
        %v7070 = vcombine.low %v7026, %v7058
        %v7071 = vcombine.high %v7026, %v7058
        %v7072 = vcombine.low %v7033, %v7065
        %v7073 = vcombine.high %v7033, %v7065
        %v7074 = vcombine.low %v6753, %v6777
        %v7075 = vcombine.high %v6753, %v6777
        %v7077 = vunpack.c.l.s4 1983009808
        %v7078 = vunpack.c.0.s8 %v7077
        %v7079 = vlaneseq
        %v7080 = vshrl.u32 %v7079, 7
        %v7081 = vsub.s32 %v7078, %v7080
        %v7082 = vrot.slane %v7074, %v7081
        %v7084 = vunpack.c.l.s4 1983009808
        %v7085 = vunpack.c.0.s8 %v7084
        %v7086 = vlaneseq
        %v7087 = vshrl.u32 %v7086, 7
        %v7088 = vsub.s32 %v7085, %v7087
        %v7089 = vrot.slane %v7075, %v7088
        %v7090 = vcombine.low %v6765, %v6789
        %v7091 = vcombine.high %v6765, %v6789
        %v7093 = vunpack.c.l.s4 1983009808
        %v7094 = vunpack.c.0.s8 %v7093
        %v7095 = vlaneseq
        %v7096 = vshrl.u32 %v7095, 7
        %v7097 = vsub.s32 %v7094, %v7096
        %v7098 = vrot.slane %v7090, %v7097
        %v7100 = vunpack.c.l.s4 1983009808
        %v7101 = vunpack.c.0.s8 %v7100
        %v7102 = vlaneseq
        %v7103 = vshrl.u32 %v7102, 7
        %v7104 = vsub.s32 %v7101, %v7103
        %v7105 = vrot.slane %v7091, %v7104
        %v7106 = vcombine.low %v6801, %v6825
        %v7107 = vcombine.high %v6801, %v6825
        %v7109 = vunpack.c.l.s4 1983009808
        %v7110 = vunpack.c.0.s8 %v7109
        %v7111 = vlaneseq
        %v7112 = vshrl.u32 %v7111, 7
        %v7113 = vsub.s32 %v7110, %v7112
        %v7114 = vrot.slane %v7106, %v7113
        %v7116 = vunpack.c.l.s4 1983009808
        %v7117 = vunpack.c.0.s8 %v7116
        %v7118 = vlaneseq
        %v7119 = vshrl.u32 %v7118, 7
        %v7120 = vsub.s32 %v7117, %v7119
        %v7121 = vrot.slane %v7107, %v7120
        %v7122 = vcombine.low %v6813, %v6837
        %v7123 = vcombine.high %v6813, %v6837
        %v7125 = vunpack.c.l.s4 1983009808
        %v7126 = vunpack.c.0.s8 %v7125
        %v7127 = vlaneseq
        %v7128 = vshrl.u32 %v7127, 7
        %v7129 = vsub.s32 %v7126, %v7128
        %v7130 = vrot.slane %v7122, %v7129
        %v7132 = vunpack.c.l.s4 1983009808
        %v7133 = vunpack.c.0.s8 %v7132
        %v7134 = vlaneseq
        %v7135 = vshrl.u32 %v7134, 7
        %v7136 = vsub.s32 %v7133, %v7135
        %v7137 = vrot.slane %v7123, %v7136
        %v7138 = vcombine.low %v7082, %v7098
        %v7139 = vcombine.high %v7082, %v7098
        %v7141 = vunpack.c.l.s4 1934713408
        %v7142 = vunpack.c.0.s8 %v7141
        %v7143 = vlaneseq
        %v7144 = vshrl.u32 %v7143, 7
        %v7145 = vsub.s32 %v7142, %v7144
        %v7146 = vrot.slane %v7138, %v7145
        %v7148 = vunpack.c.l.s4 1934713408
        %v7149 = vunpack.c.0.s8 %v7148
        %v7150 = vlaneseq
        %v7151 = vshrl.u32 %v7150, 7
        %v7152 = vsub.s32 %v7149, %v7151
        %v7153 = vrot.slane %v7139, %v7152
        %v7154 = vcombine.low %v7089, %v7105
        %v7155 = vcombine.high %v7089, %v7105
        %v7157 = vunpack.c.l.s4 1934713408
        %v7158 = vunpack.c.0.s8 %v7157
        %v7159 = vlaneseq
        %v7160 = vshrl.u32 %v7159, 7
        %v7161 = vsub.s32 %v7158, %v7160
        %v7162 = vrot.slane %v7154, %v7161
        %v7164 = vunpack.c.l.s4 1934713408
        %v7165 = vunpack.c.0.s8 %v7164
        %v7166 = vlaneseq
        %v7167 = vshrl.u32 %v7166, 7
        %v7168 = vsub.s32 %v7165, %v7167
        %v7169 = vrot.slane %v7155, %v7168
        %v7170 = vcombine.low %v7114, %v7130
        %v7171 = vcombine.high %v7114, %v7130
        %v7173 = vunpack.c.l.s4 1934713408
        %v7174 = vunpack.c.0.s8 %v7173
        %v7175 = vlaneseq
        %v7176 = vshrl.u32 %v7175, 7
        %v7177 = vsub.s32 %v7174, %v7176
        %v7178 = vrot.slane %v7170, %v7177
        %v7180 = vunpack.c.l.s4 1934713408
        %v7181 = vunpack.c.0.s8 %v7180
        %v7182 = vlaneseq
        %v7183 = vshrl.u32 %v7182, 7
        %v7184 = vsub.s32 %v7181, %v7183
        %v7185 = vrot.slane %v7171, %v7184
        %v7186 = vcombine.low %v7121, %v7137
        %v7187 = vcombine.high %v7121, %v7137
        %v7189 = vunpack.c.l.s4 1934713408
        %v7190 = vunpack.c.0.s8 %v7189
        %v7191 = vlaneseq
        %v7192 = vshrl.u32 %v7191, 7
        %v7193 = vsub.s32 %v7190, %v7192
        %v7194 = vrot.slane %v7186, %v7193
        %v7196 = vunpack.c.l.s4 1934713408
        %v7197 = vunpack.c.0.s8 %v7196
        %v7198 = vlaneseq
        %v7199 = vshrl.u32 %v7198, 7
        %v7200 = vsub.s32 %v7197, %v7199
        %v7201 = vrot.slane %v7187, %v7200
        %v7202 = vcombine.low %v7146, %v7178
        %v7203 = vcombine.high %v7146, %v7178
        %v7204 = vcombine.low %v7153, %v7185
        %v7205 = vcombine.high %v7153, %v7185
        %v7206 = vcombine.low %v7162, %v7194
        %v7207 = vcombine.high %v7162, %v7194
        %v7208 = vcombine.low %v7169, %v7201
        %v7209 = vcombine.high %v7169, %v7201
        %v7210 = vcombine.low %v6843, %v6867
        %v7211 = vcombine.high %v6843, %v6867
        %v7213 = vunpack.c.l.s4 1983009808
        %v7214 = vunpack.c.0.s8 %v7213
        %v7215 = vlaneseq
        %v7216 = vshrl.u32 %v7215, 7
        %v7217 = vsub.s32 %v7214, %v7216
        %v7218 = vrot.slane %v7210, %v7217
        %v7220 = vunpack.c.l.s4 1983009808
        %v7221 = vunpack.c.0.s8 %v7220
        %v7222 = vlaneseq
        %v7223 = vshrl.u32 %v7222, 7
        %v7224 = vsub.s32 %v7221, %v7223
        %v7225 = vrot.slane %v7211, %v7224
        %v7226 = vcombine.low %v6855, %v6879
        %v7227 = vcombine.high %v6855, %v6879
        %v7229 = vunpack.c.l.s4 1983009808
        %v7230 = vunpack.c.0.s8 %v7229
        %v7231 = vlaneseq
        %v7232 = vshrl.u32 %v7231, 7
        %v7233 = vsub.s32 %v7230, %v7232
        %v7234 = vrot.slane %v7226, %v7233
        %v7236 = vunpack.c.l.s4 1983009808
        %v7237 = vunpack.c.0.s8 %v7236
        %v7238 = vlaneseq
        %v7239 = vshrl.u32 %v7238, 7
        %v7240 = vsub.s32 %v7237, %v7239
        %v7241 = vrot.slane %v7227, %v7240
        %v7242 = vcombine.low %v6891, %v6915
        %v7243 = vcombine.high %v6891, %v6915
        %v7245 = vunpack.c.l.s4 1983009808
        %v7246 = vunpack.c.0.s8 %v7245
        %v7247 = vlaneseq
        %v7248 = vshrl.u32 %v7247, 7
        %v7249 = vsub.s32 %v7246, %v7248
        %v7250 = vrot.slane %v7242, %v7249
        %v7252 = vunpack.c.l.s4 1983009808
        %v7253 = vunpack.c.0.s8 %v7252
        %v7254 = vlaneseq
        %v7255 = vshrl.u32 %v7254, 7
        %v7256 = vsub.s32 %v7253, %v7255
        %v7257 = vrot.slane %v7243, %v7256
        %v7258 = vcombine.low %v6903, %v6927
        %v7259 = vcombine.high %v6903, %v6927
        %v7261 = vunpack.c.l.s4 1983009808
        %v7262 = vunpack.c.0.s8 %v7261
        %v7263 = vlaneseq
        %v7264 = vshrl.u32 %v7263, 7
        %v7265 = vsub.s32 %v7262, %v7264
        %v7266 = vrot.slane %v7258, %v7265
        %v7268 = vunpack.c.l.s4 1983009808
        %v7269 = vunpack.c.0.s8 %v7268
        %v7270 = vlaneseq
        %v7271 = vshrl.u32 %v7270, 7
        %v7272 = vsub.s32 %v7269, %v7271
        %v7273 = vrot.slane %v7259, %v7272
        %v7274 = vcombine.low %v7218, %v7234
        %v7275 = vcombine.high %v7218, %v7234
        %v7277 = vunpack.c.l.s4 1934713408
        %v7278 = vunpack.c.0.s8 %v7277
        %v7279 = vlaneseq
        %v7280 = vshrl.u32 %v7279, 7
        %v7281 = vsub.s32 %v7278, %v7280
        %v7282 = vrot.slane %v7274, %v7281
        %v7284 = vunpack.c.l.s4 1934713408
        %v7285 = vunpack.c.0.s8 %v7284
        %v7286 = vlaneseq
        %v7287 = vshrl.u32 %v7286, 7
        %v7288 = vsub.s32 %v7285, %v7287
        %v7289 = vrot.slane %v7275, %v7288
        %v7290 = vcombine.low %v7225, %v7241
        %v7291 = vcombine.high %v7225, %v7241
        %v7293 = vunpack.c.l.s4 1934713408
        %v7294 = vunpack.c.0.s8 %v7293
        %v7295 = vlaneseq
        %v7296 = vshrl.u32 %v7295, 7
        %v7297 = vsub.s32 %v7294, %v7296
        %v7298 = vrot.slane %v7290, %v7297
        %v7300 = vunpack.c.l.s4 1934713408
        %v7301 = vunpack.c.0.s8 %v7300
        %v7302 = vlaneseq
        %v7303 = vshrl.u32 %v7302, 7
        %v7304 = vsub.s32 %v7301, %v7303
        %v7305 = vrot.slane %v7291, %v7304
        %v7306 = vcombine.low %v7250, %v7266
        %v7307 = vcombine.high %v7250, %v7266
        %v7309 = vunpack.c.l.s4 1934713408
        %v7310 = vunpack.c.0.s8 %v7309
        %v7311 = vlaneseq
        %v7312 = vshrl.u32 %v7311, 7
        %v7313 = vsub.s32 %v7310, %v7312
        %v7314 = vrot.slane %v7306, %v7313
        %v7316 = vunpack.c.l.s4 1934713408
        %v7317 = vunpack.c.0.s8 %v7316
        %v7318 = vlaneseq
        %v7319 = vshrl.u32 %v7318, 7
        %v7320 = vsub.s32 %v7317, %v7319
        %v7321 = vrot.slane %v7307, %v7320
        %v7322 = vcombine.low %v7257, %v7273
        %v7323 = vcombine.high %v7257, %v7273
        %v7325 = vunpack.c.l.s4 1934713408
        %v7326 = vunpack.c.0.s8 %v7325
        %v7327 = vlaneseq
        %v7328 = vshrl.u32 %v7327, 7
        %v7329 = vsub.s32 %v7326, %v7328
        %v7330 = vrot.slane %v7322, %v7329
        %v7332 = vunpack.c.l.s4 1934713408
        %v7333 = vunpack.c.0.s8 %v7332
        %v7334 = vlaneseq
        %v7335 = vshrl.u32 %v7334, 7
        %v7336 = vsub.s32 %v7333, %v7335
        %v7337 = vrot.slane %v7323, %v7336
        %v7338 = vcombine.low %v7282, %v7314
        %v7339 = vcombine.high %v7282, %v7314
        %v7340 = vcombine.low %v7289, %v7321
        %v7341 = vcombine.high %v7289, %v7321
        %v7342 = vcombine.low %v7298, %v7330
        %v7343 = vcombine.high %v7298, %v7330
        %v7344 = vcombine.low %v7305, %v7337
        %v7345 = vcombine.high %v7305, %v7337
        %v7346 = vcombine.low %v6849, %v6873
        %v7347 = vcombine.high %v6849, %v6873
        %v7349 = vunpack.c.l.s4 1983009808
        %v7350 = vunpack.c.0.s8 %v7349
        %v7351 = vlaneseq
        %v7352 = vshrl.u32 %v7351, 7
        %v7353 = vsub.s32 %v7350, %v7352
        %v7354 = vrot.slane %v7346, %v7353
        %v7356 = vunpack.c.l.s4 1983009808
        %v7357 = vunpack.c.0.s8 %v7356
        %v7358 = vlaneseq
        %v7359 = vshrl.u32 %v7358, 7
        %v7360 = vsub.s32 %v7357, %v7359
        %v7361 = vrot.slane %v7347, %v7360
        %v7362 = vcombine.low %v6861, %v6885
        %v7363 = vcombine.high %v6861, %v6885
        %v7365 = vunpack.c.l.s4 1983009808
        %v7366 = vunpack.c.0.s8 %v7365
        %v7367 = vlaneseq
        %v7368 = vshrl.u32 %v7367, 7
        %v7369 = vsub.s32 %v7366, %v7368
        %v7370 = vrot.slane %v7362, %v7369
        %v7372 = vunpack.c.l.s4 1983009808
        %v7373 = vunpack.c.0.s8 %v7372
        %v7374 = vlaneseq
        %v7375 = vshrl.u32 %v7374, 7
        %v7376 = vsub.s32 %v7373, %v7375
        %v7377 = vrot.slane %v7363, %v7376
        %v7378 = vcombine.low %v6897, %v6921
        %v7379 = vcombine.high %v6897, %v6921
        %v7381 = vunpack.c.l.s4 1983009808
        %v7382 = vunpack.c.0.s8 %v7381
        %v7383 = vlaneseq
        %v7384 = vshrl.u32 %v7383, 7
        %v7385 = vsub.s32 %v7382, %v7384
        %v7386 = vrot.slane %v7378, %v7385
        %v7388 = vunpack.c.l.s4 1983009808
        %v7389 = vunpack.c.0.s8 %v7388
        %v7390 = vlaneseq
        %v7391 = vshrl.u32 %v7390, 7
        %v7392 = vsub.s32 %v7389, %v7391
        %v7393 = vrot.slane %v7379, %v7392
        %v7394 = vcombine.low %v6909, %v6933
        %v7395 = vcombine.high %v6909, %v6933
        %v7397 = vunpack.c.l.s4 1983009808
        %v7398 = vunpack.c.0.s8 %v7397
        %v7399 = vlaneseq
        %v7400 = vshrl.u32 %v7399, 7
        %v7401 = vsub.s32 %v7398, %v7400
        %v7402 = vrot.slane %v7394, %v7401
        %v7404 = vunpack.c.l.s4 1983009808
        %v7405 = vunpack.c.0.s8 %v7404
        %v7406 = vlaneseq
        %v7407 = vshrl.u32 %v7406, 7
        %v7408 = vsub.s32 %v7405, %v7407
        %v7409 = vrot.slane %v7395, %v7408
        %v7410 = vcombine.low %v7354, %v7370
        %v7411 = vcombine.high %v7354, %v7370
        %v7413 = vunpack.c.l.s4 1934713408
        %v7414 = vunpack.c.0.s8 %v7413
        %v7415 = vlaneseq
        %v7416 = vshrl.u32 %v7415, 7
        %v7417 = vsub.s32 %v7414, %v7416
        %v7418 = vrot.slane %v7410, %v7417
        %v7420 = vunpack.c.l.s4 1934713408
        %v7421 = vunpack.c.0.s8 %v7420
        %v7422 = vlaneseq
        %v7423 = vshrl.u32 %v7422, 7
        %v7424 = vsub.s32 %v7421, %v7423
        %v7425 = vrot.slane %v7411, %v7424
        %v7426 = vcombine.low %v7361, %v7377
        %v7427 = vcombine.high %v7361, %v7377
        %v7429 = vunpack.c.l.s4 1934713408
        %v7430 = vunpack.c.0.s8 %v7429
        %v7431 = vlaneseq
        %v7432 = vshrl.u32 %v7431, 7
        %v7433 = vsub.s32 %v7430, %v7432
        %v7434 = vrot.slane %v7426, %v7433
        %v7436 = vunpack.c.l.s4 1934713408
        %v7437 = vunpack.c.0.s8 %v7436
        %v7438 = vlaneseq
        %v7439 = vshrl.u32 %v7438, 7
        %v7440 = vsub.s32 %v7437, %v7439
        %v7441 = vrot.slane %v7427, %v7440
        %v7442 = vcombine.low %v7386, %v7402
        %v7443 = vcombine.high %v7386, %v7402
        %v7445 = vunpack.c.l.s4 1934713408
        %v7446 = vunpack.c.0.s8 %v7445
        %v7447 = vlaneseq
        %v7448 = vshrl.u32 %v7447, 7
        %v7449 = vsub.s32 %v7446, %v7448
        %v7450 = vrot.slane %v7442, %v7449
        %v7452 = vunpack.c.l.s4 1934713408
        %v7453 = vunpack.c.0.s8 %v7452
        %v7454 = vlaneseq
        %v7455 = vshrl.u32 %v7454, 7
        %v7456 = vsub.s32 %v7453, %v7455
        %v7457 = vrot.slane %v7443, %v7456
        %v7458 = vcombine.low %v7393, %v7409
        %v7459 = vcombine.high %v7393, %v7409
        %v7461 = vunpack.c.l.s4 1934713408
        %v7462 = vunpack.c.0.s8 %v7461
        %v7463 = vlaneseq
        %v7464 = vshrl.u32 %v7463, 7
        %v7465 = vsub.s32 %v7462, %v7464
        %v7466 = vrot.slane %v7458, %v7465
        %v7468 = vunpack.c.l.s4 1934713408
        %v7469 = vunpack.c.0.s8 %v7468
        %v7470 = vlaneseq
        %v7471 = vshrl.u32 %v7470, 7
        %v7472 = vsub.s32 %v7469, %v7471
        %v7473 = vrot.slane %v7459, %v7472
        %v7474 = vcombine.low %v7418, %v7450
        %v7475 = vcombine.high %v7418, %v7450
        %v7476 = vcombine.low %v7425, %v7457
        %v7477 = vcombine.high %v7425, %v7457
        %v7478 = vcombine.low %v7434, %v7466
        %v7479 = vcombine.high %v7434, %v7466
        %v7480 = vcombine.low %v7441, %v7473
        %v7481 = vcombine.high %v7441, %v7473
        %v7482 = vcombine.low %v6749, %v6773
        %v7483 = vcombine.high %v6749, %v6773
        %v7485 = vunpack.c.l.s4 1983009808
        %v7486 = vunpack.c.0.s8 %v7485
        %v7487 = vlaneseq
        %v7488 = vshrl.u32 %v7487, 7
        %v7489 = vsub.s32 %v7486, %v7488
        %v7490 = vrot.slane %v7482, %v7489
        %v7492 = vunpack.c.l.s4 1983009808
        %v7493 = vunpack.c.0.s8 %v7492
        %v7494 = vlaneseq
        %v7495 = vshrl.u32 %v7494, 7
        %v7496 = vsub.s32 %v7493, %v7495
        %v7497 = vrot.slane %v7483, %v7496
        %v7498 = vcombine.low %v6761, %v6785
        %v7499 = vcombine.high %v6761, %v6785
        %v7501 = vunpack.c.l.s4 1983009808
        %v7502 = vunpack.c.0.s8 %v7501
        %v7503 = vlaneseq
        %v7504 = vshrl.u32 %v7503, 7
        %v7505 = vsub.s32 %v7502, %v7504
        %v7506 = vrot.slane %v7498, %v7505
        %v7508 = vunpack.c.l.s4 1983009808
        %v7509 = vunpack.c.0.s8 %v7508
        %v7510 = vlaneseq
        %v7511 = vshrl.u32 %v7510, 7
        %v7512 = vsub.s32 %v7509, %v7511
        %v7513 = vrot.slane %v7499, %v7512
        %v7514 = vcombine.low %v6797, %v6821
        %v7515 = vcombine.high %v6797, %v6821
        %v7517 = vunpack.c.l.s4 1983009808
        %v7518 = vunpack.c.0.s8 %v7517
        %v7519 = vlaneseq
        %v7520 = vshrl.u32 %v7519, 7
        %v7521 = vsub.s32 %v7518, %v7520
        %v7522 = vrot.slane %v7514, %v7521
        %v7524 = vunpack.c.l.s4 1983009808
        %v7525 = vunpack.c.0.s8 %v7524
        %v7526 = vlaneseq
        %v7527 = vshrl.u32 %v7526, 7
        %v7528 = vsub.s32 %v7525, %v7527
        %v7529 = vrot.slane %v7515, %v7528
        %v7530 = vcombine.low %v6809, %v6833
        %v7531 = vcombine.high %v6809, %v6833
        %v7533 = vunpack.c.l.s4 1983009808
        %v7534 = vunpack.c.0.s8 %v7533
        %v7535 = vlaneseq
        %v7536 = vshrl.u32 %v7535, 7
        %v7537 = vsub.s32 %v7534, %v7536
        %v7538 = vrot.slane %v7530, %v7537
        %v7540 = vunpack.c.l.s4 1983009808
        %v7541 = vunpack.c.0.s8 %v7540
        %v7542 = vlaneseq
        %v7543 = vshrl.u32 %v7542, 7
        %v7544 = vsub.s32 %v7541, %v7543
        %v7545 = vrot.slane %v7531, %v7544
        %v7546 = vcombine.low %v7490, %v7506
        %v7547 = vcombine.high %v7490, %v7506
        %v7549 = vunpack.c.l.s4 1934713408
        %v7550 = vunpack.c.0.s8 %v7549
        %v7551 = vlaneseq
        %v7552 = vshrl.u32 %v7551, 7
        %v7553 = vsub.s32 %v7550, %v7552
        %v7554 = vrot.slane %v7546, %v7553
        %v7556 = vunpack.c.l.s4 1934713408
        %v7557 = vunpack.c.0.s8 %v7556
        %v7558 = vlaneseq
        %v7559 = vshrl.u32 %v7558, 7
        %v7560 = vsub.s32 %v7557, %v7559
        %v7561 = vrot.slane %v7547, %v7560
        %v7562 = vcombine.low %v7497, %v7513
        %v7563 = vcombine.high %v7497, %v7513
        %v7565 = vunpack.c.l.s4 1934713408
        %v7566 = vunpack.c.0.s8 %v7565
        %v7567 = vlaneseq
        %v7568 = vshrl.u32 %v7567, 7
        %v7569 = vsub.s32 %v7566, %v7568
        %v7570 = vrot.slane %v7562, %v7569
        %v7572 = vunpack.c.l.s4 1934713408
        %v7573 = vunpack.c.0.s8 %v7572
        %v7574 = vlaneseq
        %v7575 = vshrl.u32 %v7574, 7
        %v7576 = vsub.s32 %v7573, %v7575
        %v7577 = vrot.slane %v7563, %v7576
        %v7578 = vcombine.low %v7522, %v7538
        %v7579 = vcombine.high %v7522, %v7538
        %v7581 = vunpack.c.l.s4 1934713408
        %v7582 = vunpack.c.0.s8 %v7581
        %v7583 = vlaneseq
        %v7584 = vshrl.u32 %v7583, 7
        %v7585 = vsub.s32 %v7582, %v7584
        %v7586 = vrot.slane %v7578, %v7585
        %v7588 = vunpack.c.l.s4 1934713408
        %v7589 = vunpack.c.0.s8 %v7588
        %v7590 = vlaneseq
        %v7591 = vshrl.u32 %v7590, 7
        %v7592 = vsub.s32 %v7589, %v7591
        %v7593 = vrot.slane %v7579, %v7592
        %v7594 = vcombine.low %v7529, %v7545
        %v7595 = vcombine.high %v7529, %v7545
        %v7597 = vunpack.c.l.s4 1934713408
        %v7598 = vunpack.c.0.s8 %v7597
        %v7599 = vlaneseq
        %v7600 = vshrl.u32 %v7599, 7
        %v7601 = vsub.s32 %v7598, %v7600
        %v7602 = vrot.slane %v7594, %v7601
        %v7604 = vunpack.c.l.s4 1934713408
        %v7605 = vunpack.c.0.s8 %v7604
        %v7606 = vlaneseq
        %v7607 = vshrl.u32 %v7606, 7
        %v7608 = vsub.s32 %v7605, %v7607
        %v7609 = vrot.slane %v7595, %v7608
        %v7610 = vcombine.low %v7554, %v7586
        %v7611 = vcombine.high %v7554, %v7586
        %v7612 = vcombine.low %v7561, %v7593
        %v7613 = vcombine.high %v7561, %v7593
        %v7614 = vcombine.low %v7570, %v7602
        %v7615 = vcombine.high %v7570, %v7602
        %v7616 = vcombine.low %v7577, %v7609
        %v7617 = vcombine.high %v7577, %v7609
        %v7618 = vcombine.low %v6755, %v6779
        %v7619 = vcombine.high %v6755, %v6779
        %v7621 = vunpack.c.l.s4 1983009808
        %v7622 = vunpack.c.0.s8 %v7621
        %v7623 = vlaneseq
        %v7624 = vshrl.u32 %v7623, 7
        %v7625 = vsub.s32 %v7622, %v7624
        %v7626 = vrot.slane %v7618, %v7625
        %v7628 = vunpack.c.l.s4 1983009808
        %v7629 = vunpack.c.0.s8 %v7628
        %v7630 = vlaneseq
        %v7631 = vshrl.u32 %v7630, 7
        %v7632 = vsub.s32 %v7629, %v7631
        %v7633 = vrot.slane %v7619, %v7632
        %v7634 = vcombine.low %v6767, %v6791
        %v7635 = vcombine.high %v6767, %v6791
        %v7637 = vunpack.c.l.s4 1983009808
        %v7638 = vunpack.c.0.s8 %v7637
        %v7639 = vlaneseq
        %v7640 = vshrl.u32 %v7639, 7
        %v7641 = vsub.s32 %v7638, %v7640
        %v7642 = vrot.slane %v7634, %v7641
        %v7644 = vunpack.c.l.s4 1983009808
        %v7645 = vunpack.c.0.s8 %v7644
        %v7646 = vlaneseq
        %v7647 = vshrl.u32 %v7646, 7
        %v7648 = vsub.s32 %v7645, %v7647
        %v7649 = vrot.slane %v7635, %v7648
        %v7650 = vcombine.low %v6803, %v6827
        %v7651 = vcombine.high %v6803, %v6827
        %v7653 = vunpack.c.l.s4 1983009808
        %v7654 = vunpack.c.0.s8 %v7653
        %v7655 = vlaneseq
        %v7656 = vshrl.u32 %v7655, 7
        %v7657 = vsub.s32 %v7654, %v7656
        %v7658 = vrot.slane %v7650, %v7657
        %v7660 = vunpack.c.l.s4 1983009808
        %v7661 = vunpack.c.0.s8 %v7660
        %v7662 = vlaneseq
        %v7663 = vshrl.u32 %v7662, 7
        %v7664 = vsub.s32 %v7661, %v7663
        %v7665 = vrot.slane %v7651, %v7664
        %v7666 = vcombine.low %v6815, %v6839
        %v7667 = vcombine.high %v6815, %v6839
        %v7669 = vunpack.c.l.s4 1983009808
        %v7670 = vunpack.c.0.s8 %v7669
        %v7671 = vlaneseq
        %v7672 = vshrl.u32 %v7671, 7
        %v7673 = vsub.s32 %v7670, %v7672
        %v7674 = vrot.slane %v7666, %v7673
        %v7676 = vunpack.c.l.s4 1983009808
        %v7677 = vunpack.c.0.s8 %v7676
        %v7678 = vlaneseq
        %v7679 = vshrl.u32 %v7678, 7
        %v7680 = vsub.s32 %v7677, %v7679
        %v7681 = vrot.slane %v7667, %v7680
        %v7682 = vcombine.low %v7626, %v7642
        %v7683 = vcombine.high %v7626, %v7642
        %v7685 = vunpack.c.l.s4 1934713408
        %v7686 = vunpack.c.0.s8 %v7685
        %v7687 = vlaneseq
        %v7688 = vshrl.u32 %v7687, 7
        %v7689 = vsub.s32 %v7686, %v7688
        %v7690 = vrot.slane %v7682, %v7689
        %v7692 = vunpack.c.l.s4 1934713408
        %v7693 = vunpack.c.0.s8 %v7692
        %v7694 = vlaneseq
        %v7695 = vshrl.u32 %v7694, 7
        %v7696 = vsub.s32 %v7693, %v7695
        %v7697 = vrot.slane %v7683, %v7696
        %v7698 = vcombine.low %v7633, %v7649
        %v7699 = vcombine.high %v7633, %v7649
        %v7701 = vunpack.c.l.s4 1934713408
        %v7702 = vunpack.c.0.s8 %v7701
        %v7703 = vlaneseq
        %v7704 = vshrl.u32 %v7703, 7
        %v7705 = vsub.s32 %v7702, %v7704
        %v7706 = vrot.slane %v7698, %v7705
        %v7708 = vunpack.c.l.s4 1934713408
        %v7709 = vunpack.c.0.s8 %v7708
        %v7710 = vlaneseq
        %v7711 = vshrl.u32 %v7710, 7
        %v7712 = vsub.s32 %v7709, %v7711
        %v7713 = vrot.slane %v7699, %v7712
        %v7714 = vcombine.low %v7658, %v7674
        %v7715 = vcombine.high %v7658, %v7674
        %v7717 = vunpack.c.l.s4 1934713408
        %v7718 = vunpack.c.0.s8 %v7717
        %v7719 = vlaneseq
        %v7720 = vshrl.u32 %v7719, 7
        %v7721 = vsub.s32 %v7718, %v7720
        %v7722 = vrot.slane %v7714, %v7721
        %v7724 = vunpack.c.l.s4 1934713408
        %v7725 = vunpack.c.0.s8 %v7724
        %v7726 = vlaneseq
        %v7727 = vshrl.u32 %v7726, 7
        %v7728 = vsub.s32 %v7725, %v7727
        %v7729 = vrot.slane %v7715, %v7728
        %v7730 = vcombine.low %v7665, %v7681
        %v7731 = vcombine.high %v7665, %v7681
        %v7733 = vunpack.c.l.s4 1934713408
        %v7734 = vunpack.c.0.s8 %v7733
        %v7735 = vlaneseq
        %v7736 = vshrl.u32 %v7735, 7
        %v7737 = vsub.s32 %v7734, %v7736
        %v7738 = vrot.slane %v7730, %v7737
        %v7740 = vunpack.c.l.s4 1934713408
        %v7741 = vunpack.c.0.s8 %v7740
        %v7742 = vlaneseq
        %v7743 = vshrl.u32 %v7742, 7
        %v7744 = vsub.s32 %v7741, %v7743
        %v7745 = vrot.slane %v7731, %v7744
        %v7746 = vcombine.low %v7690, %v7722
        %v7747 = vcombine.high %v7690, %v7722
        %v7748 = vcombine.low %v7697, %v7729
        %v7749 = vcombine.high %v7697, %v7729
        %v7750 = vcombine.low %v7706, %v7738
        %v7751 = vcombine.high %v7706, %v7738
        %v7752 = vcombine.low %v7713, %v7745
        %v7753 = vcombine.high %v7713, %v7745
        %v7754 = vcombine.low %v6845, %v6869
        %v7755 = vcombine.high %v6845, %v6869
        %v7757 = vunpack.c.l.s4 1983009808
        %v7758 = vunpack.c.0.s8 %v7757
        %v7759 = vlaneseq
        %v7760 = vshrl.u32 %v7759, 7
        %v7761 = vsub.s32 %v7758, %v7760
        %v7762 = vrot.slane %v7754, %v7761
        %v7764 = vunpack.c.l.s4 1983009808
        %v7765 = vunpack.c.0.s8 %v7764
        %v7766 = vlaneseq
        %v7767 = vshrl.u32 %v7766, 7
        %v7768 = vsub.s32 %v7765, %v7767
        %v7769 = vrot.slane %v7755, %v7768
        %v7770 = vcombine.low %v6857, %v6881
        %v7771 = vcombine.high %v6857, %v6881
        %v7773 = vunpack.c.l.s4 1983009808
        %v7774 = vunpack.c.0.s8 %v7773
        %v7775 = vlaneseq
        %v7776 = vshrl.u32 %v7775, 7
        %v7777 = vsub.s32 %v7774, %v7776
        %v7778 = vrot.slane %v7770, %v7777
        %v7780 = vunpack.c.l.s4 1983009808
        %v7781 = vunpack.c.0.s8 %v7780
        %v7782 = vlaneseq
        %v7783 = vshrl.u32 %v7782, 7
        %v7784 = vsub.s32 %v7781, %v7783
        %v7785 = vrot.slane %v7771, %v7784
        %v7786 = vcombine.low %v6893, %v6917
        %v7787 = vcombine.high %v6893, %v6917
        %v7789 = vunpack.c.l.s4 1983009808
        %v7790 = vunpack.c.0.s8 %v7789
        %v7791 = vlaneseq
        %v7792 = vshrl.u32 %v7791, 7
        %v7793 = vsub.s32 %v7790, %v7792
        %v7794 = vrot.slane %v7786, %v7793
        %v7796 = vunpack.c.l.s4 1983009808
        %v7797 = vunpack.c.0.s8 %v7796
        %v7798 = vlaneseq
        %v7799 = vshrl.u32 %v7798, 7
        %v7800 = vsub.s32 %v7797, %v7799
        %v7801 = vrot.slane %v7787, %v7800
        %v7802 = vcombine.low %v6905, %v6929
        %v7803 = vcombine.high %v6905, %v6929
        %v7805 = vunpack.c.l.s4 1983009808
        %v7806 = vunpack.c.0.s8 %v7805
        %v7807 = vlaneseq
        %v7808 = vshrl.u32 %v7807, 7
        %v7809 = vsub.s32 %v7806, %v7808
        %v7810 = vrot.slane %v7802, %v7809
        %v7812 = vunpack.c.l.s4 1983009808
        %v7813 = vunpack.c.0.s8 %v7812
        %v7814 = vlaneseq
        %v7815 = vshrl.u32 %v7814, 7
        %v7816 = vsub.s32 %v7813, %v7815
        %v7817 = vrot.slane %v7803, %v7816
        %v7818 = vcombine.low %v7762, %v7778
        %v7819 = vcombine.high %v7762, %v7778
        %v7821 = vunpack.c.l.s4 1934713408
        %v7822 = vunpack.c.0.s8 %v7821
        %v7823 = vlaneseq
        %v7824 = vshrl.u32 %v7823, 7
        %v7825 = vsub.s32 %v7822, %v7824
        %v7826 = vrot.slane %v7818, %v7825
        %v7828 = vunpack.c.l.s4 1934713408
        %v7829 = vunpack.c.0.s8 %v7828
        %v7830 = vlaneseq
        %v7831 = vshrl.u32 %v7830, 7
        %v7832 = vsub.s32 %v7829, %v7831
        %v7833 = vrot.slane %v7819, %v7832
        %v7834 = vcombine.low %v7769, %v7785
        %v7835 = vcombine.high %v7769, %v7785
        %v7837 = vunpack.c.l.s4 1934713408
        %v7838 = vunpack.c.0.s8 %v7837
        %v7839 = vlaneseq
        %v7840 = vshrl.u32 %v7839, 7
        %v7841 = vsub.s32 %v7838, %v7840
        %v7842 = vrot.slane %v7834, %v7841
        %v7844 = vunpack.c.l.s4 1934713408
        %v7845 = vunpack.c.0.s8 %v7844
        %v7846 = vlaneseq
        %v7847 = vshrl.u32 %v7846, 7
        %v7848 = vsub.s32 %v7845, %v7847
        %v7849 = vrot.slane %v7835, %v7848
        %v7850 = vcombine.low %v7794, %v7810
        %v7851 = vcombine.high %v7794, %v7810
        %v7853 = vunpack.c.l.s4 1934713408
        %v7854 = vunpack.c.0.s8 %v7853
        %v7855 = vlaneseq
        %v7856 = vshrl.u32 %v7855, 7
        %v7857 = vsub.s32 %v7854, %v7856
        %v7858 = vrot.slane %v7850, %v7857
        %v7860 = vunpack.c.l.s4 1934713408
        %v7861 = vunpack.c.0.s8 %v7860
        %v7862 = vlaneseq
        %v7863 = vshrl.u32 %v7862, 7
        %v7864 = vsub.s32 %v7861, %v7863
        %v7865 = vrot.slane %v7851, %v7864
        %v7866 = vcombine.low %v7801, %v7817
        %v7867 = vcombine.high %v7801, %v7817
        %v7869 = vunpack.c.l.s4 1934713408
        %v7870 = vunpack.c.0.s8 %v7869
        %v7871 = vlaneseq
        %v7872 = vshrl.u32 %v7871, 7
        %v7873 = vsub.s32 %v7870, %v7872
        %v7874 = vrot.slane %v7866, %v7873
        %v7876 = vunpack.c.l.s4 1934713408
        %v7877 = vunpack.c.0.s8 %v7876
        %v7878 = vlaneseq
        %v7879 = vshrl.u32 %v7878, 7
        %v7880 = vsub.s32 %v7877, %v7879
        %v7881 = vrot.slane %v7867, %v7880
        %v7882 = vcombine.low %v7826, %v7858
        %v7883 = vcombine.high %v7826, %v7858
        %v7884 = vcombine.low %v7833, %v7865
        %v7885 = vcombine.high %v7833, %v7865
        %v7886 = vcombine.low %v7842, %v7874
        %v7887 = vcombine.high %v7842, %v7874
        %v7888 = vcombine.low %v7849, %v7881
        %v7889 = vcombine.high %v7849, %v7881
        %v7890 = vcombine.low %v6851, %v6875
        %v7891 = vcombine.high %v6851, %v6875
        %v7893 = vunpack.c.l.s4 1983009808
        %v7894 = vunpack.c.0.s8 %v7893
        %v7895 = vlaneseq
        %v7896 = vshrl.u32 %v7895, 7
        %v7897 = vsub.s32 %v7894, %v7896
        %v7898 = vrot.slane %v7890, %v7897
        %v7900 = vunpack.c.l.s4 1983009808
        %v7901 = vunpack.c.0.s8 %v7900
        %v7902 = vlaneseq
        %v7903 = vshrl.u32 %v7902, 7
        %v7904 = vsub.s32 %v7901, %v7903
        %v7905 = vrot.slane %v7891, %v7904
        %v7906 = vcombine.low %v6863, %v6887
        %v7907 = vcombine.high %v6863, %v6887
        %v7909 = vunpack.c.l.s4 1983009808
        %v7910 = vunpack.c.0.s8 %v7909
        %v7911 = vlaneseq
        %v7912 = vshrl.u32 %v7911, 7
        %v7913 = vsub.s32 %v7910, %v7912
        %v7914 = vrot.slane %v7906, %v7913
        %v7916 = vunpack.c.l.s4 1983009808
        %v7917 = vunpack.c.0.s8 %v7916
        %v7918 = vlaneseq
        %v7919 = vshrl.u32 %v7918, 7
        %v7920 = vsub.s32 %v7917, %v7919
        %v7921 = vrot.slane %v7907, %v7920
        %v7922 = vcombine.low %v6899, %v6923
        %v7923 = vcombine.high %v6899, %v6923
        %v7925 = vunpack.c.l.s4 1983009808
        %v7926 = vunpack.c.0.s8 %v7925
        %v7927 = vlaneseq
        %v7928 = vshrl.u32 %v7927, 7
        %v7929 = vsub.s32 %v7926, %v7928
        %v7930 = vrot.slane %v7922, %v7929
        %v7932 = vunpack.c.l.s4 1983009808
        %v7933 = vunpack.c.0.s8 %v7932
        %v7934 = vlaneseq
        %v7935 = vshrl.u32 %v7934, 7
        %v7936 = vsub.s32 %v7933, %v7935
        %v7937 = vrot.slane %v7923, %v7936
        %v7938 = vcombine.low %v6911, %v6935
        %v7939 = vcombine.high %v6911, %v6935
        %v7941 = vunpack.c.l.s4 1983009808
        %v7942 = vunpack.c.0.s8 %v7941
        %v7943 = vlaneseq
        %v7944 = vshrl.u32 %v7943, 7
        %v7945 = vsub.s32 %v7942, %v7944
        %v7946 = vrot.slane %v7938, %v7945
        %v7948 = vunpack.c.l.s4 1983009808
        %v7949 = vunpack.c.0.s8 %v7948
        %v7950 = vlaneseq
        %v7951 = vshrl.u32 %v7950, 7
        %v7952 = vsub.s32 %v7949, %v7951
        %v7953 = vrot.slane %v7939, %v7952
        %v7954 = vcombine.low %v7898, %v7914
        %v7955 = vcombine.high %v7898, %v7914
        %v7957 = vunpack.c.l.s4 1934713408
        %v7958 = vunpack.c.0.s8 %v7957
        %v7959 = vlaneseq
        %v7960 = vshrl.u32 %v7959, 7
        %v7961 = vsub.s32 %v7958, %v7960
        %v7962 = vrot.slane %v7954, %v7961
        %v7964 = vunpack.c.l.s4 1934713408
        %v7965 = vunpack.c.0.s8 %v7964
        %v7966 = vlaneseq
        %v7967 = vshrl.u32 %v7966, 7
        %v7968 = vsub.s32 %v7965, %v7967
        %v7969 = vrot.slane %v7955, %v7968
        %v7970 = vcombine.low %v7905, %v7921
        %v7971 = vcombine.high %v7905, %v7921
        %v7973 = vunpack.c.l.s4 1934713408
        %v7974 = vunpack.c.0.s8 %v7973
        %v7975 = vlaneseq
        %v7976 = vshrl.u32 %v7975, 7
        %v7977 = vsub.s32 %v7974, %v7976
        %v7978 = vrot.slane %v7970, %v7977
        %v7980 = vunpack.c.l.s4 1934713408
        %v7981 = vunpack.c.0.s8 %v7980
        %v7982 = vlaneseq
        %v7983 = vshrl.u32 %v7982, 7
        %v7984 = vsub.s32 %v7981, %v7983
        %v7985 = vrot.slane %v7971, %v7984
        %v7986 = vcombine.low %v7930, %v7946
        %v7987 = vcombine.high %v7930, %v7946
        %v7989 = vunpack.c.l.s4 1934713408
        %v7990 = vunpack.c.0.s8 %v7989
        %v7991 = vlaneseq
        %v7992 = vshrl.u32 %v7991, 7
        %v7993 = vsub.s32 %v7990, %v7992
        %v7994 = vrot.slane %v7986, %v7993
        %v7996 = vunpack.c.l.s4 1934713408
        %v7997 = vunpack.c.0.s8 %v7996
        %v7998 = vlaneseq
        %v7999 = vshrl.u32 %v7998, 7
        %v8000 = vsub.s32 %v7997, %v7999
        %v8001 = vrot.slane %v7987, %v8000
        %v8002 = vcombine.low %v7937, %v7953
        %v8003 = vcombine.high %v7937, %v7953
        %v8005 = vunpack.c.l.s4 1934713408
        %v8006 = vunpack.c.0.s8 %v8005
        %v8007 = vlaneseq
        %v8008 = vshrl.u32 %v8007, 7
        %v8009 = vsub.s32 %v8006, %v8008
        %v8010 = vrot.slane %v8002, %v8009
        %v8012 = vunpack.c.l.s4 1934713408
        %v8013 = vunpack.c.0.s8 %v8012
        %v8014 = vlaneseq
        %v8015 = vshrl.u32 %v8014, 7
        %v8016 = vsub.s32 %v8013, %v8015
        %v8017 = vrot.slane %v8003, %v8016
        %v8018 = vcombine.low %v7962, %v7994
        %v8019 = vcombine.high %v7962, %v7994
        %v8020 = vcombine.low %v7969, %v8001
        %v8021 = vcombine.high %v7969, %v8001
        %v8022 = vcombine.low %v7978, %v8010
        %v8023 = vcombine.high %v7978, %v8010
        %v8024 = vcombine.low %v7985, %v8017
        %v8025 = vcombine.high %v7985, %v8017
        %v8028 = vpack.i.b16 %v7202, %v7066
        %v8029 = vshrl.u32 %v7066, 16
        %v8030 = vshrl.u32 %v7202, 16
        %v8031 = vpack.i.b16 %v8030, %v8029
        %v8034 = vpack.i.b16 %v7203, %v7067
        %v8035 = vshrl.u32 %v7067, 16
        %v8036 = vshrl.u32 %v7203, 16
        %v8037 = vpack.i.b16 %v8036, %v8035
        %v8040 = vpack.i.b16 %v7204, %v7068
        %v8041 = vshrl.u32 %v7068, 16
        %v8042 = vshrl.u32 %v7204, 16
        %v8043 = vpack.i.b16 %v8042, %v8041
        %v8046 = vpack.i.b16 %v7205, %v7069
        %v8047 = vshrl.u32 %v7069, 16
        %v8048 = vshrl.u32 %v7205, 16
        %v8049 = vpack.i.b16 %v8048, %v8047
        %v8052 = vpack.i.b16 %v7206, %v7070
        %v8053 = vshrl.u32 %v7070, 16
        %v8054 = vshrl.u32 %v7206, 16
        %v8055 = vpack.i.b16 %v8054, %v8053
        %v8058 = vpack.i.b16 %v7207, %v7071
        %v8059 = vshrl.u32 %v7071, 16
        %v8060 = vshrl.u32 %v7207, 16
        %v8061 = vpack.i.b16 %v8060, %v8059
        %v8064 = vpack.i.b16 %v7208, %v7072
        %v8065 = vshrl.u32 %v7072, 16
        %v8066 = vshrl.u32 %v7208, 16
        %v8067 = vpack.i.b16 %v8066, %v8065
        %v8070 = vpack.i.b16 %v7209, %v7073
        %v8071 = vshrl.u32 %v7073, 16
        %v8072 = vshrl.u32 %v7209, 16
        %v8073 = vpack.i.b16 %v8072, %v8071
        %v8076 = vpack.i.b16 %v7746, %v7610
        %v8077 = vshrl.u32 %v7610, 16
        %v8078 = vshrl.u32 %v7746, 16
        %v8079 = vpack.i.b16 %v8078, %v8077
        %v8082 = vpack.i.b16 %v7747, %v7611
        %v8083 = vshrl.u32 %v7611, 16
        %v8084 = vshrl.u32 %v7747, 16
        %v8085 = vpack.i.b16 %v8084, %v8083
        %v8088 = vpack.i.b16 %v7748, %v7612
        %v8089 = vshrl.u32 %v7612, 16
        %v8090 = vshrl.u32 %v7748, 16
        %v8091 = vpack.i.b16 %v8090, %v8089
        %v8094 = vpack.i.b16 %v7749, %v7613
        %v8095 = vshrl.u32 %v7613, 16
        %v8096 = vshrl.u32 %v7749, 16
        %v8097 = vpack.i.b16 %v8096, %v8095
        %v8100 = vpack.i.b16 %v7750, %v7614
        %v8101 = vshrl.u32 %v7614, 16
        %v8102 = vshrl.u32 %v7750, 16
        %v8103 = vpack.i.b16 %v8102, %v8101
        %v8106 = vpack.i.b16 %v7751, %v7615
        %v8107 = vshrl.u32 %v7615, 16
        %v8108 = vshrl.u32 %v7751, 16
        %v8109 = vpack.i.b16 %v8108, %v8107
        %v8112 = vpack.i.b16 %v7752, %v7616
        %v8113 = vshrl.u32 %v7616, 16
        %v8114 = vshrl.u32 %v7752, 16
        %v8115 = vpack.i.b16 %v8114, %v8113
        %v8118 = vpack.i.b16 %v7753, %v7617
        %v8119 = vshrl.u32 %v7617, 16
        %v8120 = vshrl.u32 %v7753, 16
        %v8121 = vpack.i.b16 %v8120, %v8119
        %v8124 = vpack.i.b16 %v7474, %v7338
        %v8125 = vshrl.u32 %v7338, 16
        %v8126 = vshrl.u32 %v7474, 16
        %v8127 = vpack.i.b16 %v8126, %v8125
        %v8130 = vpack.i.b16 %v7475, %v7339
        %v8131 = vshrl.u32 %v7339, 16
        %v8132 = vshrl.u32 %v7475, 16
        %v8133 = vpack.i.b16 %v8132, %v8131
        %v8136 = vpack.i.b16 %v7476, %v7340
        %v8137 = vshrl.u32 %v7340, 16
        %v8138 = vshrl.u32 %v7476, 16
        %v8139 = vpack.i.b16 %v8138, %v8137
        %v8142 = vpack.i.b16 %v7477, %v7341
        %v8143 = vshrl.u32 %v7341, 16
        %v8144 = vshrl.u32 %v7477, 16
        %v8145 = vpack.i.b16 %v8144, %v8143
        %v8148 = vpack.i.b16 %v7478, %v7342
        %v8149 = vshrl.u32 %v7342, 16
        %v8150 = vshrl.u32 %v7478, 16
        %v8151 = vpack.i.b16 %v8150, %v8149
        %v8154 = vpack.i.b16 %v7479, %v7343
        %v8155 = vshrl.u32 %v7343, 16
        %v8156 = vshrl.u32 %v7479, 16
        %v8157 = vpack.i.b16 %v8156, %v8155
        %v8160 = vpack.i.b16 %v7480, %v7344
        %v8161 = vshrl.u32 %v7344, 16
        %v8162 = vshrl.u32 %v7480, 16
        %v8163 = vpack.i.b16 %v8162, %v8161
        %v8166 = vpack.i.b16 %v7481, %v7345
        %v8167 = vshrl.u32 %v7345, 16
        %v8168 = vshrl.u32 %v7481, 16
        %v8169 = vpack.i.b16 %v8168, %v8167
        %v8172 = vpack.i.b16 %v8018, %v7882
        %v8173 = vshrl.u32 %v7882, 16
        %v8174 = vshrl.u32 %v8018, 16
        %v8175 = vpack.i.b16 %v8174, %v8173
        %v8178 = vpack.i.b16 %v8019, %v7883
        %v8179 = vshrl.u32 %v7883, 16
        %v8180 = vshrl.u32 %v8019, 16
        %v8181 = vpack.i.b16 %v8180, %v8179
        %v8184 = vpack.i.b16 %v8020, %v7884
        %v8185 = vshrl.u32 %v7884, 16
        %v8186 = vshrl.u32 %v8020, 16
        %v8187 = vpack.i.b16 %v8186, %v8185
        %v8190 = vpack.i.b16 %v8021, %v7885
        %v8191 = vshrl.u32 %v7885, 16
        %v8192 = vshrl.u32 %v8021, 16
        %v8193 = vpack.i.b16 %v8192, %v8191
        %v8196 = vpack.i.b16 %v8022, %v7886
        %v8197 = vshrl.u32 %v7886, 16
        %v8198 = vshrl.u32 %v8022, 16
        %v8199 = vpack.i.b16 %v8198, %v8197
        %v8202 = vpack.i.b16 %v8023, %v7887
        %v8203 = vshrl.u32 %v7887, 16
        %v8204 = vshrl.u32 %v8023, 16
        %v8205 = vpack.i.b16 %v8204, %v8203
        %v8208 = vpack.i.b16 %v8024, %v7888
        %v8209 = vshrl.u32 %v7888, 16
        %v8210 = vshrl.u32 %v8024, 16
        %v8211 = vpack.i.b16 %v8210, %v8209
        %v8214 = vpack.i.b16 %v8025, %v7889
        %v8215 = vshrl.u32 %v7889, 16
        %v8216 = vshrl.u32 %v8025, 16
        %v8217 = vpack.i.b16 %v8216, %v8215
        %v8218 = vunpack.c.l.b16 %v8028
        %v8219 = vunpack.c.l.b16 %v8031
        %v8220 = vunpack.c.l.b16 %v8034
        %v8221 = vunpack.c.l.b16 %v8037
        %v8222 = vunpack.c.l.b16 %v8040
        %v8223 = vunpack.c.l.b16 %v8043
        %v8224 = vunpack.c.l.b16 %v8046
        %v8225 = vunpack.c.l.b16 %v8049
        %v8226 = vunpack.c.l.b16 %v8052
        %v8227 = vunpack.c.l.b16 %v8055
        %v8228 = vunpack.c.l.b16 %v8058
        %v8229 = vunpack.c.l.b16 %v8061
        %v8230 = vunpack.c.l.b16 %v8064
        %v8231 = vunpack.c.l.b16 %v8067
        %v8232 = vunpack.c.l.b16 %v8070
        %v8233 = vunpack.c.l.b16 %v8073
        %v8234 = vunpack.c.l.b16 %v8076
        %v8235 = vunpack.c.l.b16 %v8079
        %v8236 = vunpack.c.l.b16 %v8082
        %v8237 = vunpack.c.l.b16 %v8085
        %v8238 = vunpack.c.l.b16 %v8088
        %v8239 = vunpack.c.l.b16 %v8091
        %v8240 = vunpack.c.l.b16 %v8094
        %v8241 = vunpack.c.l.b16 %v8097
        %v8242 = vunpack.c.l.b16 %v8100
        %v8243 = vunpack.c.l.b16 %v8103
        %v8244 = vunpack.c.l.b16 %v8106
        %v8245 = vunpack.c.l.b16 %v8109
        %v8246 = vunpack.c.l.b16 %v8112
        %v8247 = vunpack.c.l.b16 %v8115
        %v8248 = vunpack.c.l.b16 %v8118
        %v8249 = vunpack.c.l.b16 %v8121
        %8250 = vset.pattern.permute.xlu0 0
        %8251 = vperm.xlu0 %8250, %v8218
        %v8252 = vpop.permute.xlu0 %8251
        %8253 = vset.pattern.permute.xlu0 0
        %8254 = vperm.xlu0 %8253, %v8219
        %v8255 = vpop.permute.xlu0 %8254
        %8256 = vset.pattern.permute.xlu0 0
        %8257 = vperm.xlu0 %8256, %v8220
        %v8258 = vpop.permute.xlu0 %8257
        %8259 = vset.pattern.permute.xlu0 0
        %8260 = vperm.xlu0 %8259, %v8221
        %v8261 = vpop.permute.xlu0 %8260
        %8262 = vset.pattern.permute.xlu0 0
        %8263 = vperm.xlu0 %8262, %v8222
        %v8264 = vpop.permute.xlu0 %8263
        %8265 = vset.pattern.permute.xlu0 0
        %8266 = vperm.xlu0 %8265, %v8223
        %v8267 = vpop.permute.xlu0 %8266
        %8268 = vset.pattern.permute.xlu0 0
        %8269 = vperm.xlu0 %8268, %v8224
        %v8270 = vpop.permute.xlu0 %8269
        %8271 = vset.pattern.permute.xlu0 0
        %8272 = vperm.xlu0 %8271, %v8225
        %v8273 = vpop.permute.xlu0 %8272
        %8274 = vset.pattern.permute.xlu0 0
        %8275 = vperm.xlu0 %8274, %v8226
        %v8276 = vpop.permute.xlu0 %8275
        %8277 = vset.pattern.permute.xlu0 0
        %8278 = vperm.xlu0 %8277, %v8227
        %v8279 = vpop.permute.xlu0 %8278
        %8280 = vset.pattern.permute.xlu0 0
        %8281 = vperm.xlu0 %8280, %v8228
        %v8282 = vpop.permute.xlu0 %8281
        %8283 = vset.pattern.permute.xlu0 0
        %8284 = vperm.xlu0 %8283, %v8229
        %v8285 = vpop.permute.xlu0 %8284
        %8286 = vset.pattern.permute.xlu0 0
        %8287 = vperm.xlu0 %8286, %v8230
        %v8288 = vpop.permute.xlu0 %8287
        %8289 = vset.pattern.permute.xlu0 0
        %8290 = vperm.xlu0 %8289, %v8231
        %v8291 = vpop.permute.xlu0 %8290
        %8292 = vset.pattern.permute.xlu0 0
        %8293 = vperm.xlu0 %8292, %v8232
        %v8294 = vpop.permute.xlu0 %8293
        %8295 = vset.pattern.permute.xlu0 0
        %8296 = vperm.xlu0 %8295, %v8233
        %v8297 = vpop.permute.xlu0 %8296
        %8298 = vset.pattern.permute.xlu0 0
        %8299 = vperm.xlu0 %8298, %v8234
        %v8300 = vpop.permute.xlu0 %8299
        %8301 = vset.pattern.permute.xlu0 0
        %8302 = vperm.xlu0 %8301, %v8235
        %v8303 = vpop.permute.xlu0 %8302
        %8304 = vset.pattern.permute.xlu0 0
        %8305 = vperm.xlu0 %8304, %v8236
        %v8306 = vpop.permute.xlu0 %8305
        %8307 = vset.pattern.permute.xlu0 0
        %8308 = vperm.xlu0 %8307, %v8237
        %v8309 = vpop.permute.xlu0 %8308
        %8310 = vset.pattern.permute.xlu0 0
        %8311 = vperm.xlu0 %8310, %v8238
        %v8312 = vpop.permute.xlu0 %8311
        %8313 = vset.pattern.permute.xlu0 0
        %8314 = vperm.xlu0 %8313, %v8239
        %v8315 = vpop.permute.xlu0 %8314
        %8316 = vset.pattern.permute.xlu0 0
        %8317 = vperm.xlu0 %8316, %v8240
        %v8318 = vpop.permute.xlu0 %8317
        %8319 = vset.pattern.permute.xlu0 0
        %8320 = vperm.xlu0 %8319, %v8241
        %v8321 = vpop.permute.xlu0 %8320
        %8322 = vset.pattern.permute.xlu0 0
        %8323 = vperm.xlu0 %8322, %v8242
        %v8324 = vpop.permute.xlu0 %8323
        %8325 = vset.pattern.permute.xlu0 0
        %8326 = vperm.xlu0 %8325, %v8243
        %v8327 = vpop.permute.xlu0 %8326
        %8328 = vset.pattern.permute.xlu0 0
        %8329 = vperm.xlu0 %8328, %v8244
        %v8330 = vpop.permute.xlu0 %8329
        %8331 = vset.pattern.permute.xlu0 0
        %8332 = vperm.xlu0 %8331, %v8245
        %v8333 = vpop.permute.xlu0 %8332
        %8334 = vset.pattern.permute.xlu0 0
        %8335 = vperm.xlu0 %8334, %v8246
        %v8336 = vpop.permute.xlu0 %8335
        %8337 = vset.pattern.permute.xlu0 0
        %8338 = vperm.xlu0 %8337, %v8247
        %v8339 = vpop.permute.xlu0 %8338
        %8340 = vset.pattern.permute.xlu0 0
        %8341 = vperm.xlu0 %8340, %v8248
        %v8342 = vpop.permute.xlu0 %8341
        %8343 = vset.pattern.permute.xlu0 0
        %8344 = vperm.xlu0 %8343, %v8249
        %v8345 = vpop.permute.xlu0 %8344
        %v8346 = vlaneseq
        %v8347 = vshrl.u32 %v8346, 7
        %v8348 = vsub.s32 %v191, %v8347
        %v8349 = vrot.slane %v8252, %v8348
        %v8350 = vlaneseq
        %v8351 = vshrl.u32 %v8350, 7
        %v8352 = vsub.s32 %v191, %v8351
        %v8353 = vrot.slane %v8255, %v8352
        %v8354 = vlaneseq
        %v8355 = vshrl.u32 %v8354, 7
        %v8356 = vsub.s32 %v191, %v8355
        %v8357 = vrot.slane %v8258, %v8356
        %v8358 = vlaneseq
        %v8359 = vshrl.u32 %v8358, 7
        %v8360 = vsub.s32 %v191, %v8359
        %v8361 = vrot.slane %v8261, %v8360
        %v8362 = vlaneseq
        %v8363 = vshrl.u32 %v8362, 7
        %v8364 = vsub.s32 %v191, %v8363
        %v8365 = vrot.slane %v8264, %v8364
        %v8366 = vlaneseq
        %v8367 = vshrl.u32 %v8366, 7
        %v8368 = vsub.s32 %v191, %v8367
        %v8369 = vrot.slane %v8267, %v8368
        %v8370 = vlaneseq
        %v8371 = vshrl.u32 %v8370, 7
        %v8372 = vsub.s32 %v191, %v8371
        %v8373 = vrot.slane %v8270, %v8372
        %v8374 = vlaneseq
        %v8375 = vshrl.u32 %v8374, 7
        %v8376 = vsub.s32 %v191, %v8375
        %v8377 = vrot.slane %v8273, %v8376
        %v8378 = vlaneseq
        %v8379 = vshrl.u32 %v8378, 7
        %v8380 = vsub.s32 %v191, %v8379
        %v8381 = vrot.slane %v8276, %v8380
        %v8382 = vlaneseq
        %v8383 = vshrl.u32 %v8382, 7
        %v8384 = vsub.s32 %v191, %v8383
        %v8385 = vrot.slane %v8279, %v8384
        %v8386 = vlaneseq
        %v8387 = vshrl.u32 %v8386, 7
        %v8388 = vsub.s32 %v191, %v8387
        %v8389 = vrot.slane %v8282, %v8388
        %v8390 = vlaneseq
        %v8391 = vshrl.u32 %v8390, 7
        %v8392 = vsub.s32 %v191, %v8391
        %v8393 = vrot.slane %v8285, %v8392
        %v8394 = vlaneseq
        %v8395 = vshrl.u32 %v8394, 7
        %v8396 = vsub.s32 %v191, %v8395
        %v8397 = vrot.slane %v8288, %v8396
        %v8398 = vlaneseq
        %v8399 = vshrl.u32 %v8398, 7
        %v8400 = vsub.s32 %v191, %v8399
        %v8401 = vrot.slane %v8291, %v8400
        %v8402 = vlaneseq
        %v8403 = vshrl.u32 %v8402, 7
        %v8404 = vsub.s32 %v191, %v8403
        %v8405 = vrot.slane %v8294, %v8404
        %v8406 = vlaneseq
        %v8407 = vshrl.u32 %v8406, 7
        %v8408 = vsub.s32 %v191, %v8407
        %v8409 = vrot.slane %v8297, %v8408
        %v8410 = vlaneseq
        %v8411 = vshrl.u32 %v8410, 7
        %v8412 = vsub.s32 %v191, %v8411
        %v8413 = vrot.slane %v8300, %v8412
        %v8414 = vlaneseq
        %v8415 = vshrl.u32 %v8414, 7
        %v8416 = vsub.s32 %v191, %v8415
        %v8417 = vrot.slane %v8303, %v8416
        %v8418 = vlaneseq
        %v8419 = vshrl.u32 %v8418, 7
        %v8420 = vsub.s32 %v191, %v8419
        %v8421 = vrot.slane %v8306, %v8420
        %v8422 = vlaneseq
        %v8423 = vshrl.u32 %v8422, 7
        %v8424 = vsub.s32 %v191, %v8423
        %v8425 = vrot.slane %v8309, %v8424
        %v8426 = vlaneseq
        %v8427 = vshrl.u32 %v8426, 7
        %v8428 = vsub.s32 %v191, %v8427
        %v8429 = vrot.slane %v8312, %v8428
        %v8430 = vlaneseq
        %v8431 = vshrl.u32 %v8430, 7
        %v8432 = vsub.s32 %v191, %v8431
        %v8433 = vrot.slane %v8315, %v8432
        %v8434 = vlaneseq
        %v8435 = vshrl.u32 %v8434, 7
        %v8436 = vsub.s32 %v191, %v8435
        %v8437 = vrot.slane %v8318, %v8436
        %v8438 = vlaneseq
        %v8439 = vshrl.u32 %v8438, 7
        %v8440 = vsub.s32 %v191, %v8439
        %v8441 = vrot.slane %v8321, %v8440
        %v8442 = vlaneseq
        %v8443 = vshrl.u32 %v8442, 7
        %v8444 = vsub.s32 %v191, %v8443
        %v8445 = vrot.slane %v8324, %v8444
        %v8446 = vlaneseq
        %v8447 = vshrl.u32 %v8446, 7
        %v8448 = vsub.s32 %v191, %v8447
        %v8449 = vrot.slane %v8327, %v8448
        %v8450 = vlaneseq
        %v8451 = vshrl.u32 %v8450, 7
        %v8452 = vsub.s32 %v191, %v8451
        %v8453 = vrot.slane %v8330, %v8452
        %v8454 = vlaneseq
        %v8455 = vshrl.u32 %v8454, 7
        %v8456 = vsub.s32 %v191, %v8455
        %v8457 = vrot.slane %v8333, %v8456
        %v8458 = vlaneseq
        %v8459 = vshrl.u32 %v8458, 7
        %v8460 = vsub.s32 %v191, %v8459
        %v8461 = vrot.slane %v8336, %v8460
        %v8462 = vlaneseq
        %v8463 = vshrl.u32 %v8462, 7
        %v8464 = vsub.s32 %v191, %v8463
        %v8465 = vrot.slane %v8339, %v8464
        %v8466 = vlaneseq
        %v8467 = vshrl.u32 %v8466, 7
        %v8468 = vsub.s32 %v191, %v8467
        %v8469 = vrot.slane %v8342, %v8468
        %v8470 = vlaneseq
        %v8471 = vshrl.u32 %v8470, 7
        %v8472 = vsub.s32 %v191, %v8471
        %v8473 = vrot.slane %v8345, %v8472
        %v8474 = vsel %vm4750, %v8353, %v8349
        %v8475 = vsel %vm4752, %v8357, %v8474
        %v8476 = vsel %vm4754, %v8361, %v8475
        %v8477 = vsel %vm4756, %v8365, %v8476
        %v8478 = vsel %vm4758, %v8369, %v8477
        %v8479 = vsel %vm4760, %v8373, %v8478
        %v8480 = vsel %vm4762, %v8377, %v8479
        %v8481 = vsel %vm4750, %v8385, %v8381
        %v8482 = vsel %vm4752, %v8389, %v8481
        %v8483 = vsel %vm4754, %v8393, %v8482
        %v8484 = vsel %vm4756, %v8397, %v8483
        %v8485 = vsel %vm4758, %v8401, %v8484
        %v8486 = vsel %vm4760, %v8405, %v8485
        %v8487 = vsel %vm4762, %v8409, %v8486
        %v8488 = vsel %vm4750, %v8417, %v8413
        %v8489 = vsel %vm4752, %v8421, %v8488
        %v8490 = vsel %vm4754, %v8425, %v8489
        %v8491 = vsel %vm4756, %v8429, %v8490
        %v8492 = vsel %vm4758, %v8433, %v8491
        %v8493 = vsel %vm4760, %v8437, %v8492
        %v8494 = vsel %vm4762, %v8441, %v8493
        %v8495 = vsel %vm4750, %v8449, %v8445
        %v8496 = vsel %vm4752, %v8453, %v8495
        %v8497 = vsel %vm4754, %v8457, %v8496
        %v8498 = vsel %vm4756, %v8461, %v8497
        %v8499 = vsel %vm4758, %v8465, %v8498
        %v8500 = vsel %vm4760, %v8469, %v8499
        %v8501 = vsel %vm4762, %v8473, %v8500
        %v8502 = vpack.c.b16 %v8487, %v8480
        %v8503 = vpack.c.b16 %v8501, %v8494
        %v8504 = vunpack.c.h.b16 %v8028
        %v8505 = vunpack.c.h.b16 %v8031
        %v8506 = vunpack.c.h.b16 %v8034
        %v8507 = vunpack.c.h.b16 %v8037
        %v8508 = vunpack.c.h.b16 %v8040
        %v8509 = vunpack.c.h.b16 %v8043
        %v8510 = vunpack.c.h.b16 %v8046
        %v8511 = vunpack.c.h.b16 %v8049
        %v8512 = vunpack.c.h.b16 %v8052
        %v8513 = vunpack.c.h.b16 %v8055
        %v8514 = vunpack.c.h.b16 %v8058
        %v8515 = vunpack.c.h.b16 %v8061
        %v8516 = vunpack.c.h.b16 %v8064
        %v8517 = vunpack.c.h.b16 %v8067
        %v8518 = vunpack.c.h.b16 %v8070
        %v8519 = vunpack.c.h.b16 %v8073
        %v8520 = vunpack.c.h.b16 %v8076
        %v8521 = vunpack.c.h.b16 %v8079
        %v8522 = vunpack.c.h.b16 %v8082
        %v8523 = vunpack.c.h.b16 %v8085
        %v8524 = vunpack.c.h.b16 %v8088
        %v8525 = vunpack.c.h.b16 %v8091
        %v8526 = vunpack.c.h.b16 %v8094
        %v8527 = vunpack.c.h.b16 %v8097
        %v8528 = vunpack.c.h.b16 %v8100
        %v8529 = vunpack.c.h.b16 %v8103
        %v8530 = vunpack.c.h.b16 %v8106
        %v8531 = vunpack.c.h.b16 %v8109
        %v8532 = vunpack.c.h.b16 %v8112
        %v8533 = vunpack.c.h.b16 %v8115
        %v8534 = vunpack.c.h.b16 %v8118
        %v8535 = vunpack.c.h.b16 %v8121
        %8536 = vset.pattern.permute.xlu0 0
        %8537 = vperm.xlu0 %8536, %v8504
        %v8538 = vpop.permute.xlu0 %8537
        %8539 = vset.pattern.permute.xlu0 0
        %8540 = vperm.xlu0 %8539, %v8505
        %v8541 = vpop.permute.xlu0 %8540
        %8542 = vset.pattern.permute.xlu0 0
        %8543 = vperm.xlu0 %8542, %v8506
        %v8544 = vpop.permute.xlu0 %8543
        %8545 = vset.pattern.permute.xlu0 0
        %8546 = vperm.xlu0 %8545, %v8507
        %v8547 = vpop.permute.xlu0 %8546
        %8548 = vset.pattern.permute.xlu0 0
        %8549 = vperm.xlu0 %8548, %v8508
        %v8550 = vpop.permute.xlu0 %8549
        %8551 = vset.pattern.permute.xlu0 0
        %8552 = vperm.xlu0 %8551, %v8509
        %v8553 = vpop.permute.xlu0 %8552
        %8554 = vset.pattern.permute.xlu0 0
        %8555 = vperm.xlu0 %8554, %v8510
        %v8556 = vpop.permute.xlu0 %8555
        %8557 = vset.pattern.permute.xlu0 0
        %8558 = vperm.xlu0 %8557, %v8511
        %v8559 = vpop.permute.xlu0 %8558
        %8560 = vset.pattern.permute.xlu0 0
        %8561 = vperm.xlu0 %8560, %v8512
        %v8562 = vpop.permute.xlu0 %8561
        %8563 = vset.pattern.permute.xlu0 0
        %8564 = vperm.xlu0 %8563, %v8513
        %v8565 = vpop.permute.xlu0 %8564
        %8566 = vset.pattern.permute.xlu0 0
        %8567 = vperm.xlu0 %8566, %v8514
        %v8568 = vpop.permute.xlu0 %8567
        %8569 = vset.pattern.permute.xlu0 0
        %8570 = vperm.xlu0 %8569, %v8515
        %v8571 = vpop.permute.xlu0 %8570
        %8572 = vset.pattern.permute.xlu0 0
        %8573 = vperm.xlu0 %8572, %v8516
        %v8574 = vpop.permute.xlu0 %8573
        %8575 = vset.pattern.permute.xlu0 0
        %8576 = vperm.xlu0 %8575, %v8517
        %v8577 = vpop.permute.xlu0 %8576
        %8578 = vset.pattern.permute.xlu0 0
        %8579 = vperm.xlu0 %8578, %v8518
        %v8580 = vpop.permute.xlu0 %8579
        %8581 = vset.pattern.permute.xlu0 0
        %8582 = vperm.xlu0 %8581, %v8519
        %v8583 = vpop.permute.xlu0 %8582
        %8584 = vset.pattern.permute.xlu0 0
        %8585 = vperm.xlu0 %8584, %v8520
        %v8586 = vpop.permute.xlu0 %8585
        %8587 = vset.pattern.permute.xlu0 0
        %8588 = vperm.xlu0 %8587, %v8521
        %v8589 = vpop.permute.xlu0 %8588
        %8590 = vset.pattern.permute.xlu0 0
        %8591 = vperm.xlu0 %8590, %v8522
        %v8592 = vpop.permute.xlu0 %8591
        %8593 = vset.pattern.permute.xlu0 0
        %8594 = vperm.xlu0 %8593, %v8523
        %v8595 = vpop.permute.xlu0 %8594
        %8596 = vset.pattern.permute.xlu0 0
        %8597 = vperm.xlu0 %8596, %v8524
        %v8598 = vpop.permute.xlu0 %8597
        %8599 = vset.pattern.permute.xlu0 0
        %8600 = vperm.xlu0 %8599, %v8525
        %v8601 = vpop.permute.xlu0 %8600
        %8602 = vset.pattern.permute.xlu0 0
        %8603 = vperm.xlu0 %8602, %v8526
        %v8604 = vpop.permute.xlu0 %8603
        %8605 = vset.pattern.permute.xlu0 0
        %8606 = vperm.xlu0 %8605, %v8527
        %v8607 = vpop.permute.xlu0 %8606
        %8608 = vset.pattern.permute.xlu0 0
        %8609 = vperm.xlu0 %8608, %v8528
        %v8610 = vpop.permute.xlu0 %8609
        %8611 = vset.pattern.permute.xlu0 0
        %8612 = vperm.xlu0 %8611, %v8529
        %v8613 = vpop.permute.xlu0 %8612
        %8614 = vset.pattern.permute.xlu0 0
        %8615 = vperm.xlu0 %8614, %v8530
        %v8616 = vpop.permute.xlu0 %8615
        %8617 = vset.pattern.permute.xlu0 0
        %8618 = vperm.xlu0 %8617, %v8531
        %v8619 = vpop.permute.xlu0 %8618
        %8620 = vset.pattern.permute.xlu0 0
        %8621 = vperm.xlu0 %8620, %v8532
        %v8622 = vpop.permute.xlu0 %8621
        %8623 = vset.pattern.permute.xlu0 0
        %8624 = vperm.xlu0 %8623, %v8533
        %v8625 = vpop.permute.xlu0 %8624
        %8626 = vset.pattern.permute.xlu0 0
        %8627 = vperm.xlu0 %8626, %v8534
        %v8628 = vpop.permute.xlu0 %8627
        %8629 = vset.pattern.permute.xlu0 0
        %8630 = vperm.xlu0 %8629, %v8535
        %v8631 = vpop.permute.xlu0 %8630
        %v8632 = vadd.s32 %v191, 4294967292
        %v8633 = vlaneseq
        %v8634 = vshrl.u32 %v8633, 7
        %v8635 = vsub.s32 %v8632, %v8634
        %v8636 = vrot.slane %v8538, %v8635
        %v8637 = vlaneseq
        %v8638 = vshrl.u32 %v8637, 7
        %v8639 = vsub.s32 %v8632, %v8638
        %v8640 = vrot.slane %v8541, %v8639
        %v8641 = vlaneseq
        %v8642 = vshrl.u32 %v8641, 7
        %v8643 = vsub.s32 %v8632, %v8642
        %v8644 = vrot.slane %v8544, %v8643
        %v8645 = vlaneseq
        %v8646 = vshrl.u32 %v8645, 7
        %v8647 = vsub.s32 %v8632, %v8646
        %v8648 = vrot.slane %v8547, %v8647
        %v8649 = vlaneseq
        %v8650 = vshrl.u32 %v8649, 7
        %v8651 = vsub.s32 %v8632, %v8650
        %v8652 = vrot.slane %v8550, %v8651
        %v8653 = vlaneseq
        %v8654 = vshrl.u32 %v8653, 7
        %v8655 = vsub.s32 %v8632, %v8654
        %v8656 = vrot.slane %v8553, %v8655
        %v8657 = vlaneseq
        %v8658 = vshrl.u32 %v8657, 7
        %v8659 = vsub.s32 %v8632, %v8658
        %v8660 = vrot.slane %v8556, %v8659
        %v8661 = vlaneseq
        %v8662 = vshrl.u32 %v8661, 7
        %v8663 = vsub.s32 %v8632, %v8662
        %v8664 = vrot.slane %v8559, %v8663
        %v8665 = vlaneseq
        %v8666 = vshrl.u32 %v8665, 7
        %v8667 = vsub.s32 %v8632, %v8666
        %v8668 = vrot.slane %v8562, %v8667
        %v8669 = vlaneseq
        %v8670 = vshrl.u32 %v8669, 7
        %v8671 = vsub.s32 %v8632, %v8670
        %v8672 = vrot.slane %v8565, %v8671
        %v8673 = vlaneseq
        %v8674 = vshrl.u32 %v8673, 7
        %v8675 = vsub.s32 %v8632, %v8674
        %v8676 = vrot.slane %v8568, %v8675
        %v8677 = vlaneseq
        %v8678 = vshrl.u32 %v8677, 7
        %v8679 = vsub.s32 %v8632, %v8678
        %v8680 = vrot.slane %v8571, %v8679
        %v8681 = vlaneseq
        %v8682 = vshrl.u32 %v8681, 7
        %v8683 = vsub.s32 %v8632, %v8682
        %v8684 = vrot.slane %v8574, %v8683
        %v8685 = vlaneseq
        %v8686 = vshrl.u32 %v8685, 7
        %v8687 = vsub.s32 %v8632, %v8686
        %v8688 = vrot.slane %v8577, %v8687
        %v8689 = vlaneseq
        %v8690 = vshrl.u32 %v8689, 7
        %v8691 = vsub.s32 %v8632, %v8690
        %v8692 = vrot.slane %v8580, %v8691
        %v8693 = vlaneseq
        %v8694 = vshrl.u32 %v8693, 7
        %v8695 = vsub.s32 %v8632, %v8694
        %v8696 = vrot.slane %v8583, %v8695
        %v8697 = vlaneseq
        %v8698 = vshrl.u32 %v8697, 7
        %v8699 = vsub.s32 %v8632, %v8698
        %v8700 = vrot.slane %v8586, %v8699
        %v8701 = vlaneseq
        %v8702 = vshrl.u32 %v8701, 7
        %v8703 = vsub.s32 %v8632, %v8702
        %v8704 = vrot.slane %v8589, %v8703
        %v8705 = vlaneseq
        %v8706 = vshrl.u32 %v8705, 7
        %v8707 = vsub.s32 %v8632, %v8706
        %v8708 = vrot.slane %v8592, %v8707
        %v8709 = vlaneseq
        %v8710 = vshrl.u32 %v8709, 7
        %v8711 = vsub.s32 %v8632, %v8710
        %v8712 = vrot.slane %v8595, %v8711
        %v8713 = vlaneseq
        %v8714 = vshrl.u32 %v8713, 7
        %v8715 = vsub.s32 %v8632, %v8714
        %v8716 = vrot.slane %v8598, %v8715
        %v8717 = vlaneseq
        %v8718 = vshrl.u32 %v8717, 7
        %v8719 = vsub.s32 %v8632, %v8718
        %v8720 = vrot.slane %v8601, %v8719
        %v8721 = vlaneseq
        %v8722 = vshrl.u32 %v8721, 7
        %v8723 = vsub.s32 %v8632, %v8722
        %v8724 = vrot.slane %v8604, %v8723
        %v8725 = vlaneseq
        %v8726 = vshrl.u32 %v8725, 7
        %v8727 = vsub.s32 %v8632, %v8726
        %v8728 = vrot.slane %v8607, %v8727
        %v8729 = vlaneseq
        %v8730 = vshrl.u32 %v8729, 7
        %v8731 = vsub.s32 %v8632, %v8730
        %v8732 = vrot.slane %v8610, %v8731
        %v8733 = vlaneseq
        %v8734 = vshrl.u32 %v8733, 7
        %v8735 = vsub.s32 %v8632, %v8734
        %v8736 = vrot.slane %v8613, %v8735
        %v8737 = vlaneseq
        %v8738 = vshrl.u32 %v8737, 7
        %v8739 = vsub.s32 %v8632, %v8738
        %v8740 = vrot.slane %v8616, %v8739
        %v8741 = vlaneseq
        %v8742 = vshrl.u32 %v8741, 7
        %v8743 = vsub.s32 %v8632, %v8742
        %v8744 = vrot.slane %v8619, %v8743
        %v8745 = vlaneseq
        %v8746 = vshrl.u32 %v8745, 7
        %v8747 = vsub.s32 %v8632, %v8746
        %v8748 = vrot.slane %v8622, %v8747
        %v8749 = vlaneseq
        %v8750 = vshrl.u32 %v8749, 7
        %v8751 = vsub.s32 %v8632, %v8750
        %v8752 = vrot.slane %v8625, %v8751
        %v8753 = vlaneseq
        %v8754 = vshrl.u32 %v8753, 7
        %v8755 = vsub.s32 %v8632, %v8754
        %v8756 = vrot.slane %v8628, %v8755
        %v8757 = vlaneseq
        %v8758 = vshrl.u32 %v8757, 7
        %v8759 = vsub.s32 %v8632, %v8758
        %v8760 = vrot.slane %v8631, %v8759
        %v8761 = vsel %vm4750, %v8640, %v8636
        %v8762 = vsel %vm4752, %v8644, %v8761
        %v8763 = vsel %vm4754, %v8648, %v8762
        %v8764 = vsel %vm4756, %v8652, %v8763
        %v8765 = vsel %vm4758, %v8656, %v8764
        %v8766 = vsel %vm4760, %v8660, %v8765
        %v8767 = vsel %vm4762, %v8664, %v8766
        %v8768 = vsel %vm4750, %v8672, %v8668
        %v8769 = vsel %vm4752, %v8676, %v8768
        %v8770 = vsel %vm4754, %v8680, %v8769
        %v8771 = vsel %vm4756, %v8684, %v8770
        %v8772 = vsel %vm4758, %v8688, %v8771
        %v8773 = vsel %vm4760, %v8692, %v8772
        %v8774 = vsel %vm4762, %v8696, %v8773
        %v8775 = vsel %vm4750, %v8704, %v8700
        %v8776 = vsel %vm4752, %v8708, %v8775
        %v8777 = vsel %vm4754, %v8712, %v8776
        %v8778 = vsel %vm4756, %v8716, %v8777
        %v8779 = vsel %vm4758, %v8720, %v8778
        %v8780 = vsel %vm4760, %v8724, %v8779
        %v8781 = vsel %vm4762, %v8728, %v8780
        %v8782 = vsel %vm4750, %v8736, %v8732
        %v8783 = vsel %vm4752, %v8740, %v8782
        %v8784 = vsel %vm4754, %v8744, %v8783
        %v8785 = vsel %vm4756, %v8748, %v8784
        %v8786 = vsel %vm4758, %v8752, %v8785
        %v8787 = vsel %vm4760, %v8756, %v8786
        %v8788 = vsel %vm4762, %v8760, %v8787
        %v8789 = vpack.c.b16 %v8774, %v8767
        %v8790 = vpack.c.b16 %v8788, %v8781
        %v8791 = vunpack.c.l.b16 %v8124
        %v8792 = vunpack.c.l.b16 %v8127
        %v8793 = vunpack.c.l.b16 %v8130
        %v8794 = vunpack.c.l.b16 %v8133
        %v8795 = vunpack.c.l.b16 %v8136
        %v8796 = vunpack.c.l.b16 %v8139
        %v8797 = vunpack.c.l.b16 %v8142
        %v8798 = vunpack.c.l.b16 %v8145
        %v8799 = vunpack.c.l.b16 %v8148
        %v8800 = vunpack.c.l.b16 %v8151
        %v8801 = vunpack.c.l.b16 %v8154
        %v8802 = vunpack.c.l.b16 %v8157
        %v8803 = vunpack.c.l.b16 %v8160
        %v8804 = vunpack.c.l.b16 %v8163
        %v8805 = vunpack.c.l.b16 %v8166
        %v8806 = vunpack.c.l.b16 %v8169
        %v8807 = vunpack.c.l.b16 %v8172
        %v8808 = vunpack.c.l.b16 %v8175
        %v8809 = vunpack.c.l.b16 %v8178
        %v8810 = vunpack.c.l.b16 %v8181
        %v8811 = vunpack.c.l.b16 %v8184
        %v8812 = vunpack.c.l.b16 %v8187
        %v8813 = vunpack.c.l.b16 %v8190
        %v8814 = vunpack.c.l.b16 %v8193
        %v8815 = vunpack.c.l.b16 %v8196
        %v8816 = vunpack.c.l.b16 %v8199
        %v8817 = vunpack.c.l.b16 %v8202
        %v8818 = vunpack.c.l.b16 %v8205
        %v8819 = vunpack.c.l.b16 %v8208
        %v8820 = vunpack.c.l.b16 %v8211
        %v8821 = vunpack.c.l.b16 %v8214
        %v8822 = vunpack.c.l.b16 %v8217
        %8823 = vset.pattern.permute.xlu0 0
        %8824 = vperm.xlu0 %8823, %v8791
        %v8825 = vpop.permute.xlu0 %8824
        %8826 = vset.pattern.permute.xlu0 0
        %8827 = vperm.xlu0 %8826, %v8792
        %v8828 = vpop.permute.xlu0 %8827
        %8829 = vset.pattern.permute.xlu0 0
        %8830 = vperm.xlu0 %8829, %v8793
        %v8831 = vpop.permute.xlu0 %8830
        %8832 = vset.pattern.permute.xlu0 0
        %8833 = vperm.xlu0 %8832, %v8794
        %v8834 = vpop.permute.xlu0 %8833
        %8835 = vset.pattern.permute.xlu0 0
        %8836 = vperm.xlu0 %8835, %v8795
        %v8837 = vpop.permute.xlu0 %8836
        %8838 = vset.pattern.permute.xlu0 0
        %8839 = vperm.xlu0 %8838, %v8796
        %v8840 = vpop.permute.xlu0 %8839
        %8841 = vset.pattern.permute.xlu0 0
        %8842 = vperm.xlu0 %8841, %v8797
        %v8843 = vpop.permute.xlu0 %8842
        %8844 = vset.pattern.permute.xlu0 0
        %8845 = vperm.xlu0 %8844, %v8798
        %v8846 = vpop.permute.xlu0 %8845
        %8847 = vset.pattern.permute.xlu0 0
        %8848 = vperm.xlu0 %8847, %v8799
        %v8849 = vpop.permute.xlu0 %8848
        %8850 = vset.pattern.permute.xlu0 0
        %8851 = vperm.xlu0 %8850, %v8800
        %v8852 = vpop.permute.xlu0 %8851
        %8853 = vset.pattern.permute.xlu0 0
        %8854 = vperm.xlu0 %8853, %v8801
        %v8855 = vpop.permute.xlu0 %8854
        %8856 = vset.pattern.permute.xlu0 0
        %8857 = vperm.xlu0 %8856, %v8802
        %v8858 = vpop.permute.xlu0 %8857
        %8859 = vset.pattern.permute.xlu0 0
        %8860 = vperm.xlu0 %8859, %v8803
        %v8861 = vpop.permute.xlu0 %8860
        %8862 = vset.pattern.permute.xlu0 0
        %8863 = vperm.xlu0 %8862, %v8804
        %v8864 = vpop.permute.xlu0 %8863
        %8865 = vset.pattern.permute.xlu0 0
        %8866 = vperm.xlu0 %8865, %v8805
        %v8867 = vpop.permute.xlu0 %8866
        %8868 = vset.pattern.permute.xlu0 0
        %8869 = vperm.xlu0 %8868, %v8806
        %v8870 = vpop.permute.xlu0 %8869
        %8871 = vset.pattern.permute.xlu0 0
        %8872 = vperm.xlu0 %8871, %v8807
        %v8873 = vpop.permute.xlu0 %8872
        %8874 = vset.pattern.permute.xlu0 0
        %8875 = vperm.xlu0 %8874, %v8808
        %v8876 = vpop.permute.xlu0 %8875
        %8877 = vset.pattern.permute.xlu0 0
        %8878 = vperm.xlu0 %8877, %v8809
        %v8879 = vpop.permute.xlu0 %8878
        %8880 = vset.pattern.permute.xlu0 0
        %8881 = vperm.xlu0 %8880, %v8810
        %v8882 = vpop.permute.xlu0 %8881
        %8883 = vset.pattern.permute.xlu0 0
        %8884 = vperm.xlu0 %8883, %v8811
        %v8885 = vpop.permute.xlu0 %8884
        %8886 = vset.pattern.permute.xlu0 0
        %8887 = vperm.xlu0 %8886, %v8812
        %v8888 = vpop.permute.xlu0 %8887
        %8889 = vset.pattern.permute.xlu0 0
        %8890 = vperm.xlu0 %8889, %v8813
        %v8891 = vpop.permute.xlu0 %8890
        %8892 = vset.pattern.permute.xlu0 0
        %8893 = vperm.xlu0 %8892, %v8814
        %v8894 = vpop.permute.xlu0 %8893
        %8895 = vset.pattern.permute.xlu0 0
        %8896 = vperm.xlu0 %8895, %v8815
        %v8897 = vpop.permute.xlu0 %8896
        %8898 = vset.pattern.permute.xlu0 0
        %8899 = vperm.xlu0 %8898, %v8816
        %v8900 = vpop.permute.xlu0 %8899
        %8901 = vset.pattern.permute.xlu0 0
        %8902 = vperm.xlu0 %8901, %v8817
        %v8903 = vpop.permute.xlu0 %8902
        %8904 = vset.pattern.permute.xlu0 0
        %8905 = vperm.xlu0 %8904, %v8818
        %v8906 = vpop.permute.xlu0 %8905
        %8907 = vset.pattern.permute.xlu0 0
        %8908 = vperm.xlu0 %8907, %v8819
        %v8909 = vpop.permute.xlu0 %8908
        %8910 = vset.pattern.permute.xlu0 0
        %8911 = vperm.xlu0 %8910, %v8820
        %v8912 = vpop.permute.xlu0 %8911
        %8913 = vset.pattern.permute.xlu0 0
        %8914 = vperm.xlu0 %8913, %v8821
        %v8915 = vpop.permute.xlu0 %8914
        %8916 = vset.pattern.permute.xlu0 0
        %8917 = vperm.xlu0 %8916, %v8822
        %v8918 = vpop.permute.xlu0 %8917
        %v8919 = vlaneseq
        %v8920 = vshrl.u32 %v8919, 7
        %v8921 = vsub.s32 %v4836, %v8920
        %v8922 = vrot.slane %v8825, %v8921
        %v8923 = vlaneseq
        %v8924 = vshrl.u32 %v8923, 7
        %v8925 = vsub.s32 %v4836, %v8924
        %v8926 = vrot.slane %v8828, %v8925
        %v8927 = vlaneseq
        %v8928 = vshrl.u32 %v8927, 7
        %v8929 = vsub.s32 %v4836, %v8928
        %v8930 = vrot.slane %v8831, %v8929
        %v8931 = vlaneseq
        %v8932 = vshrl.u32 %v8931, 7
        %v8933 = vsub.s32 %v4836, %v8932
        %v8934 = vrot.slane %v8834, %v8933
        %v8935 = vlaneseq
        %v8936 = vshrl.u32 %v8935, 7
        %v8937 = vsub.s32 %v4836, %v8936
        %v8938 = vrot.slane %v8837, %v8937
        %v8939 = vlaneseq
        %v8940 = vshrl.u32 %v8939, 7
        %v8941 = vsub.s32 %v4836, %v8940
        %v8942 = vrot.slane %v8840, %v8941
        %v8943 = vlaneseq
        %v8944 = vshrl.u32 %v8943, 7
        %v8945 = vsub.s32 %v4836, %v8944
        %v8946 = vrot.slane %v8843, %v8945
        %v8947 = vlaneseq
        %v8948 = vshrl.u32 %v8947, 7
        %v8949 = vsub.s32 %v4836, %v8948
        %v8950 = vrot.slane %v8846, %v8949
        %v8951 = vlaneseq
        %v8952 = vshrl.u32 %v8951, 7
        %v8953 = vsub.s32 %v4836, %v8952
        %v8954 = vrot.slane %v8849, %v8953
        %v8955 = vlaneseq
        %v8956 = vshrl.u32 %v8955, 7
        %v8957 = vsub.s32 %v4836, %v8956
        %v8958 = vrot.slane %v8852, %v8957
        %v8959 = vlaneseq
        %v8960 = vshrl.u32 %v8959, 7
        %v8961 = vsub.s32 %v4836, %v8960
        %v8962 = vrot.slane %v8855, %v8961
        %v8963 = vlaneseq
        %v8964 = vshrl.u32 %v8963, 7
        %v8965 = vsub.s32 %v4836, %v8964
        %v8966 = vrot.slane %v8858, %v8965
        %v8967 = vlaneseq
        %v8968 = vshrl.u32 %v8967, 7
        %v8969 = vsub.s32 %v4836, %v8968
        %v8970 = vrot.slane %v8861, %v8969
        %v8971 = vlaneseq
        %v8972 = vshrl.u32 %v8971, 7
        %v8973 = vsub.s32 %v4836, %v8972
        %v8974 = vrot.slane %v8864, %v8973
        %v8975 = vlaneseq
        %v8976 = vshrl.u32 %v8975, 7
        %v8977 = vsub.s32 %v4836, %v8976
        %v8978 = vrot.slane %v8867, %v8977
        %v8979 = vlaneseq
        %v8980 = vshrl.u32 %v8979, 7
        %v8981 = vsub.s32 %v4836, %v8980
        %v8982 = vrot.slane %v8870, %v8981
        %v8983 = vlaneseq
        %v8984 = vshrl.u32 %v8983, 7
        %v8985 = vsub.s32 %v4836, %v8984
        %v8986 = vrot.slane %v8873, %v8985
        %v8987 = vlaneseq
        %v8988 = vshrl.u32 %v8987, 7
        %v8989 = vsub.s32 %v4836, %v8988
        %v8990 = vrot.slane %v8876, %v8989
        %v8991 = vlaneseq
        %v8992 = vshrl.u32 %v8991, 7
        %v8993 = vsub.s32 %v4836, %v8992
        %v8994 = vrot.slane %v8879, %v8993
        %v8995 = vlaneseq
        %v8996 = vshrl.u32 %v8995, 7
        %v8997 = vsub.s32 %v4836, %v8996
        %v8998 = vrot.slane %v8882, %v8997
        %v8999 = vlaneseq
        %v9000 = vshrl.u32 %v8999, 7
        %v9001 = vsub.s32 %v4836, %v9000
        %v9002 = vrot.slane %v8885, %v9001
        %v9003 = vlaneseq
        %v9004 = vshrl.u32 %v9003, 7
        %v9005 = vsub.s32 %v4836, %v9004
        %v9006 = vrot.slane %v8888, %v9005
        %v9007 = vlaneseq
        %v9008 = vshrl.u32 %v9007, 7
        %v9009 = vsub.s32 %v4836, %v9008
        %v9010 = vrot.slane %v8891, %v9009
        %v9011 = vlaneseq
        %v9012 = vshrl.u32 %v9011, 7
        %v9013 = vsub.s32 %v4836, %v9012
        %v9014 = vrot.slane %v8894, %v9013
        %v9015 = vlaneseq
        %v9016 = vshrl.u32 %v9015, 7
        %v9017 = vsub.s32 %v4836, %v9016
        %v9018 = vrot.slane %v8897, %v9017
        %v9019 = vlaneseq
        %v9020 = vshrl.u32 %v9019, 7
        %v9021 = vsub.s32 %v4836, %v9020
        %v9022 = vrot.slane %v8900, %v9021
        %v9023 = vlaneseq
        %v9024 = vshrl.u32 %v9023, 7
        %v9025 = vsub.s32 %v4836, %v9024
        %v9026 = vrot.slane %v8903, %v9025
        %v9027 = vlaneseq
        %v9028 = vshrl.u32 %v9027, 7
        %v9029 = vsub.s32 %v4836, %v9028
        %v9030 = vrot.slane %v8906, %v9029
        %v9031 = vlaneseq
        %v9032 = vshrl.u32 %v9031, 7
        %v9033 = vsub.s32 %v4836, %v9032
        %v9034 = vrot.slane %v8909, %v9033
        %v9035 = vlaneseq
        %v9036 = vshrl.u32 %v9035, 7
        %v9037 = vsub.s32 %v4836, %v9036
        %v9038 = vrot.slane %v8912, %v9037
        %v9039 = vlaneseq
        %v9040 = vshrl.u32 %v9039, 7
        %v9041 = vsub.s32 %v4836, %v9040
        %v9042 = vrot.slane %v8915, %v9041
        %v9043 = vlaneseq
        %v9044 = vshrl.u32 %v9043, 7
        %v9045 = vsub.s32 %v4836, %v9044
        %v9046 = vrot.slane %v8918, %v9045
        %v9047 = vsel %vm4750, %v8926, %v8922
        %v9048 = vsel %vm4752, %v8930, %v9047
        %v9049 = vsel %vm4754, %v8934, %v9048
        %v9050 = vsel %vm4756, %v8938, %v9049
        %v9051 = vsel %vm4758, %v8942, %v9050
        %v9052 = vsel %vm4760, %v8946, %v9051
        %v9053 = vsel %vm4762, %v8950, %v9052
        %v9054 = vsel %vm4750, %v8958, %v8954
        %v9055 = vsel %vm4752, %v8962, %v9054
        %v9056 = vsel %vm4754, %v8966, %v9055
        %v9057 = vsel %vm4756, %v8970, %v9056
        %v9058 = vsel %vm4758, %v8974, %v9057
        %v9059 = vsel %vm4760, %v8978, %v9058
        %v9060 = vsel %vm4762, %v8982, %v9059
        %v9061 = vsel %vm4750, %v8990, %v8986
        %v9062 = vsel %vm4752, %v8994, %v9061
        %v9063 = vsel %vm4754, %v8998, %v9062
        %v9064 = vsel %vm4756, %v9002, %v9063
        %v9065 = vsel %vm4758, %v9006, %v9064
        %v9066 = vsel %vm4760, %v9010, %v9065
        %v9067 = vsel %vm4762, %v9014, %v9066
        %v9068 = vsel %vm4750, %v9022, %v9018
        %v9069 = vsel %vm4752, %v9026, %v9068
        %v9070 = vsel %vm4754, %v9030, %v9069
        %v9071 = vsel %vm4756, %v9034, %v9070
        %v9072 = vsel %vm4758, %v9038, %v9071
        %v9073 = vsel %vm4760, %v9042, %v9072
        %v9074 = vsel %vm4762, %v9046, %v9073
        %v9075 = vpack.c.b16 %v9060, %v9053
        %v9076 = vpack.c.b16 %v9074, %v9067
        %v9077 = vunpack.c.h.b16 %v8124
        %v9078 = vunpack.c.h.b16 %v8127
        %v9079 = vunpack.c.h.b16 %v8130
        %v9080 = vunpack.c.h.b16 %v8133
        %v9081 = vunpack.c.h.b16 %v8136
        %v9082 = vunpack.c.h.b16 %v8139
        %v9083 = vunpack.c.h.b16 %v8142
        %v9084 = vunpack.c.h.b16 %v8145
        %v9085 = vunpack.c.h.b16 %v8148
        %v9086 = vunpack.c.h.b16 %v8151
        %v9087 = vunpack.c.h.b16 %v8154
        %v9088 = vunpack.c.h.b16 %v8157
        %v9089 = vunpack.c.h.b16 %v8160
        %v9090 = vunpack.c.h.b16 %v8163
        %v9091 = vunpack.c.h.b16 %v8166
        %v9092 = vunpack.c.h.b16 %v8169
        %v9093 = vunpack.c.h.b16 %v8172
        %v9094 = vunpack.c.h.b16 %v8175
        %v9095 = vunpack.c.h.b16 %v8178
        %v9096 = vunpack.c.h.b16 %v8181
        %v9097 = vunpack.c.h.b16 %v8184
        %v9098 = vunpack.c.h.b16 %v8187
        %v9099 = vunpack.c.h.b16 %v8190
        %v9100 = vunpack.c.h.b16 %v8193
        %v9101 = vunpack.c.h.b16 %v8196
        %v9102 = vunpack.c.h.b16 %v8199
        %v9103 = vunpack.c.h.b16 %v8202
        %v9104 = vunpack.c.h.b16 %v8205
        %v9105 = vunpack.c.h.b16 %v8208
        %v9106 = vunpack.c.h.b16 %v8211
        %v9107 = vunpack.c.h.b16 %v8214
        %v9108 = vunpack.c.h.b16 %v8217
        %9109 = vset.pattern.permute.xlu0 0
        %9110 = vperm.xlu0 %9109, %v9077
        %v9111 = vpop.permute.xlu0 %9110
        %9112 = vset.pattern.permute.xlu0 0
        %9113 = vperm.xlu0 %9112, %v9078
        %v9114 = vpop.permute.xlu0 %9113
        %9115 = vset.pattern.permute.xlu0 0
        %9116 = vperm.xlu0 %9115, %v9079
        %v9117 = vpop.permute.xlu0 %9116
        %9118 = vset.pattern.permute.xlu0 0
        %9119 = vperm.xlu0 %9118, %v9080
        %v9120 = vpop.permute.xlu0 %9119
        %9121 = vset.pattern.permute.xlu0 0
        %9122 = vperm.xlu0 %9121, %v9081
        %v9123 = vpop.permute.xlu0 %9122
        %9124 = vset.pattern.permute.xlu0 0
        %9125 = vperm.xlu0 %9124, %v9082
        %v9126 = vpop.permute.xlu0 %9125
        %9127 = vset.pattern.permute.xlu0 0
        %9128 = vperm.xlu0 %9127, %v9083
        %v9129 = vpop.permute.xlu0 %9128
        %9130 = vset.pattern.permute.xlu0 0
        %9131 = vperm.xlu0 %9130, %v9084
        %v9132 = vpop.permute.xlu0 %9131
        %9133 = vset.pattern.permute.xlu0 0
        %9134 = vperm.xlu0 %9133, %v9085
        %v9135 = vpop.permute.xlu0 %9134
        %9136 = vset.pattern.permute.xlu0 0
        %9137 = vperm.xlu0 %9136, %v9086
        %v9138 = vpop.permute.xlu0 %9137
        %9139 = vset.pattern.permute.xlu0 0
        %9140 = vperm.xlu0 %9139, %v9087
        %v9141 = vpop.permute.xlu0 %9140
        %9142 = vset.pattern.permute.xlu0 0
        %9143 = vperm.xlu0 %9142, %v9088
        %v9144 = vpop.permute.xlu0 %9143
        %9145 = vset.pattern.permute.xlu0 0
        %9146 = vperm.xlu0 %9145, %v9089
        %v9147 = vpop.permute.xlu0 %9146
        %9148 = vset.pattern.permute.xlu0 0
        %9149 = vperm.xlu0 %9148, %v9090
        %v9150 = vpop.permute.xlu0 %9149
        %9151 = vset.pattern.permute.xlu0 0
        %9152 = vperm.xlu0 %9151, %v9091
        %v9153 = vpop.permute.xlu0 %9152
        %9154 = vset.pattern.permute.xlu0 0
        %9155 = vperm.xlu0 %9154, %v9092
        %v9156 = vpop.permute.xlu0 %9155
        %9157 = vset.pattern.permute.xlu0 0
        %9158 = vperm.xlu0 %9157, %v9093
        %v9159 = vpop.permute.xlu0 %9158
        %9160 = vset.pattern.permute.xlu0 0
        %9161 = vperm.xlu0 %9160, %v9094
        %v9162 = vpop.permute.xlu0 %9161
        %9163 = vset.pattern.permute.xlu0 0
        %9164 = vperm.xlu0 %9163, %v9095
        %v9165 = vpop.permute.xlu0 %9164
        %9166 = vset.pattern.permute.xlu0 0
        %9167 = vperm.xlu0 %9166, %v9096
        %v9168 = vpop.permute.xlu0 %9167
        %9169 = vset.pattern.permute.xlu0 0
        %9170 = vperm.xlu0 %9169, %v9097
        %v9171 = vpop.permute.xlu0 %9170
        %9172 = vset.pattern.permute.xlu0 0
        %9173 = vperm.xlu0 %9172, %v9098
        %v9174 = vpop.permute.xlu0 %9173
        %9175 = vset.pattern.permute.xlu0 0
        %9176 = vperm.xlu0 %9175, %v9099
        %v9177 = vpop.permute.xlu0 %9176
        %9178 = vset.pattern.permute.xlu0 0
        %9179 = vperm.xlu0 %9178, %v9100
        %v9180 = vpop.permute.xlu0 %9179
        %9181 = vset.pattern.permute.xlu0 0
        %9182 = vperm.xlu0 %9181, %v9101
        %v9183 = vpop.permute.xlu0 %9182
        %9184 = vset.pattern.permute.xlu0 0
        %9185 = vperm.xlu0 %9184, %v9102
        %v9186 = vpop.permute.xlu0 %9185
        %9187 = vset.pattern.permute.xlu0 0
        %9188 = vperm.xlu0 %9187, %v9103
        %v9189 = vpop.permute.xlu0 %9188
        %9190 = vset.pattern.permute.xlu0 0
        %9191 = vperm.xlu0 %9190, %v9104
        %v9192 = vpop.permute.xlu0 %9191
        %9193 = vset.pattern.permute.xlu0 0
        %9194 = vperm.xlu0 %9193, %v9105
        %v9195 = vpop.permute.xlu0 %9194
        %9196 = vset.pattern.permute.xlu0 0
        %9197 = vperm.xlu0 %9196, %v9106
        %v9198 = vpop.permute.xlu0 %9197
        %9199 = vset.pattern.permute.xlu0 0
        %9200 = vperm.xlu0 %9199, %v9107
        %v9201 = vpop.permute.xlu0 %9200
        %9202 = vset.pattern.permute.xlu0 0
        %9203 = vperm.xlu0 %9202, %v9108
        %v9204 = vpop.permute.xlu0 %9203
        %v9205 = vadd.s32 %v191, 4294967284
        %v9206 = vlaneseq
        %v9207 = vshrl.u32 %v9206, 7
        %v9208 = vsub.s32 %v9205, %v9207
        %v9209 = vrot.slane %v9111, %v9208
        %v9210 = vlaneseq
        %v9211 = vshrl.u32 %v9210, 7
        %v9212 = vsub.s32 %v9205, %v9211
        %v9213 = vrot.slane %v9114, %v9212
        %v9214 = vlaneseq
        %v9215 = vshrl.u32 %v9214, 7
        %v9216 = vsub.s32 %v9205, %v9215
        %v9217 = vrot.slane %v9117, %v9216
        %v9218 = vlaneseq
        %v9219 = vshrl.u32 %v9218, 7
        %v9220 = vsub.s32 %v9205, %v9219
        %v9221 = vrot.slane %v9120, %v9220
        %v9222 = vlaneseq
        %v9223 = vshrl.u32 %v9222, 7
        %v9224 = vsub.s32 %v9205, %v9223
        %v9225 = vrot.slane %v9123, %v9224
        %v9226 = vlaneseq
        %v9227 = vshrl.u32 %v9226, 7
        %v9228 = vsub.s32 %v9205, %v9227
        %v9229 = vrot.slane %v9126, %v9228
        %v9230 = vlaneseq
        %v9231 = vshrl.u32 %v9230, 7
        %v9232 = vsub.s32 %v9205, %v9231
        %v9233 = vrot.slane %v9129, %v9232
        %v9234 = vlaneseq
        %v9235 = vshrl.u32 %v9234, 7
        %v9236 = vsub.s32 %v9205, %v9235
        %v9237 = vrot.slane %v9132, %v9236
        %v9238 = vlaneseq
        %v9239 = vshrl.u32 %v9238, 7
        %v9240 = vsub.s32 %v9205, %v9239
        %v9241 = vrot.slane %v9135, %v9240
        %v9242 = vlaneseq
        %v9243 = vshrl.u32 %v9242, 7
        %v9244 = vsub.s32 %v9205, %v9243
        %v9245 = vrot.slane %v9138, %v9244
        %v9246 = vlaneseq
        %v9247 = vshrl.u32 %v9246, 7
        %v9248 = vsub.s32 %v9205, %v9247
        %v9249 = vrot.slane %v9141, %v9248
        %v9250 = vlaneseq
        %v9251 = vshrl.u32 %v9250, 7
        %v9252 = vsub.s32 %v9205, %v9251
        %v9253 = vrot.slane %v9144, %v9252
        %v9254 = vlaneseq
        %v9255 = vshrl.u32 %v9254, 7
        %v9256 = vsub.s32 %v9205, %v9255
        %v9257 = vrot.slane %v9147, %v9256
        %v9258 = vlaneseq
        %v9259 = vshrl.u32 %v9258, 7
        %v9260 = vsub.s32 %v9205, %v9259
        %v9261 = vrot.slane %v9150, %v9260
        %v9262 = vlaneseq
        %v9263 = vshrl.u32 %v9262, 7
        %v9264 = vsub.s32 %v9205, %v9263
        %v9265 = vrot.slane %v9153, %v9264
        %v9266 = vlaneseq
        %v9267 = vshrl.u32 %v9266, 7
        %v9268 = vsub.s32 %v9205, %v9267
        %v9269 = vrot.slane %v9156, %v9268
        %v9270 = vlaneseq
        %v9271 = vshrl.u32 %v9270, 7
        %v9272 = vsub.s32 %v9205, %v9271
        %v9273 = vrot.slane %v9159, %v9272
        %v9274 = vlaneseq
        %v9275 = vshrl.u32 %v9274, 7
        %v9276 = vsub.s32 %v9205, %v9275
        %v9277 = vrot.slane %v9162, %v9276
        %v9278 = vlaneseq
        %v9279 = vshrl.u32 %v9278, 7
        %v9280 = vsub.s32 %v9205, %v9279
        %v9281 = vrot.slane %v9165, %v9280
        %v9282 = vlaneseq
        %v9283 = vshrl.u32 %v9282, 7
        %v9284 = vsub.s32 %v9205, %v9283
        %v9285 = vrot.slane %v9168, %v9284
        %v9286 = vlaneseq
        %v9287 = vshrl.u32 %v9286, 7
        %v9288 = vsub.s32 %v9205, %v9287
        %v9289 = vrot.slane %v9171, %v9288
        %v9290 = vlaneseq
        %v9291 = vshrl.u32 %v9290, 7
        %v9292 = vsub.s32 %v9205, %v9291
        %v9293 = vrot.slane %v9174, %v9292
        %v9294 = vlaneseq
        %v9295 = vshrl.u32 %v9294, 7
        %v9296 = vsub.s32 %v9205, %v9295
        %v9297 = vrot.slane %v9177, %v9296
        %v9298 = vlaneseq
        %v9299 = vshrl.u32 %v9298, 7
        %v9300 = vsub.s32 %v9205, %v9299
        %v9301 = vrot.slane %v9180, %v9300
        %v9302 = vlaneseq
        %v9303 = vshrl.u32 %v9302, 7
        %v9304 = vsub.s32 %v9205, %v9303
        %v9305 = vrot.slane %v9183, %v9304
        %v9306 = vlaneseq
        %v9307 = vshrl.u32 %v9306, 7
        %v9308 = vsub.s32 %v9205, %v9307
        %v9309 = vrot.slane %v9186, %v9308
        %v9310 = vlaneseq
        %v9311 = vshrl.u32 %v9310, 7
        %v9312 = vsub.s32 %v9205, %v9311
        %v9313 = vrot.slane %v9189, %v9312
        %v9314 = vlaneseq
        %v9315 = vshrl.u32 %v9314, 7
        %v9316 = vsub.s32 %v9205, %v9315
        %v9317 = vrot.slane %v9192, %v9316
        %v9318 = vlaneseq
        %v9319 = vshrl.u32 %v9318, 7
        %v9320 = vsub.s32 %v9205, %v9319
        %v9321 = vrot.slane %v9195, %v9320
        %v9322 = vlaneseq
        %v9323 = vshrl.u32 %v9322, 7
        %v9324 = vsub.s32 %v9205, %v9323
        %v9325 = vrot.slane %v9198, %v9324
        %v9326 = vlaneseq
        %v9327 = vshrl.u32 %v9326, 7
        %v9328 = vsub.s32 %v9205, %v9327
        %v9329 = vrot.slane %v9201, %v9328
        %v9330 = vlaneseq
        %v9331 = vshrl.u32 %v9330, 7
        %v9332 = vsub.s32 %v9205, %v9331
        %v9333 = vrot.slane %v9204, %v9332
        %v9334 = vsel %vm4750, %v9213, %v9209
        %v9335 = vsel %vm4752, %v9217, %v9334
        %v9336 = vsel %vm4754, %v9221, %v9335
        %v9337 = vsel %vm4756, %v9225, %v9336
        %v9338 = vsel %vm4758, %v9229, %v9337
        %v9339 = vsel %vm4760, %v9233, %v9338
        %v9340 = vsel %vm4762, %v9237, %v9339
        %v9341 = vsel %vm4750, %v9245, %v9241
        %v9342 = vsel %vm4752, %v9249, %v9341
        %v9343 = vsel %vm4754, %v9253, %v9342
        %v9344 = vsel %vm4756, %v9257, %v9343
        %v9345 = vsel %vm4758, %v9261, %v9344
        %v9346 = vsel %vm4760, %v9265, %v9345
        %v9347 = vsel %vm4762, %v9269, %v9346
        %v9348 = vsel %vm4750, %v9277, %v9273
        %v9349 = vsel %vm4752, %v9281, %v9348
        %v9350 = vsel %vm4754, %v9285, %v9349
        %v9351 = vsel %vm4756, %v9289, %v9350
        %v9352 = vsel %vm4758, %v9293, %v9351
        %v9353 = vsel %vm4760, %v9297, %v9352
        %v9354 = vsel %vm4762, %v9301, %v9353
        %v9355 = vsel %vm4750, %v9309, %v9305
        %v9356 = vsel %vm4752, %v9313, %v9355
        %v9357 = vsel %vm4754, %v9317, %v9356
        %v9358 = vsel %vm4756, %v9321, %v9357
        %v9359 = vsel %vm4758, %v9325, %v9358
        %v9360 = vsel %vm4760, %v9329, %v9359
        %v9361 = vsel %vm4762, %v9333, %v9360
        %v9362 = vpack.c.b16 %v9347, %v9340
        %v9363 = vpack.c.b16 %v9361, %v9354
        %vm9364 = vcmask 31744
        %v9367 = vsel %vm9364, %v8502, %v8789
        %v9370 = vsel %vm9364, %v8503, %v8790
        %v9372 = vsel %vm5780, %v9367, %v9075
        %v9374 = vsel %vm5780, %v9370, %v9076
        %vm9375 = vcmask 97280
        %v9377 = vsel %vm9375, %v9372, %v9362
        %v9380 = vsel %vm9375, %v9374, %v9363
        %v9382 = vshra.s32 %v191, 2
        %v9383 = vand.u32 %v191, 3
        %vm9384 = vcmp.ge.s32.totalorder %v9382, 1
        %vm9385 = vcmp.lt.s32.totalorder %v9382, 5
        %vm9386 = vmand %vm9384, %vm9385
        %vm9387 = vcmp.ge.s32.totalorder %v9382, 0
        %vm9388 = vcmp.lt.s32.totalorder %v9382, 4
        %vm9389 = vmand %vm9387, %vm9388
        %vm9390 = vcmp.ge.s32.totalorder %v9382, 4294967295
        %vm9391 = vcmp.lt.s32.totalorder %v9382, 3
        %vm9392 = vmand %vm9390, %vm9391
        %vm9393 = vcmp.ge.s32.totalorder %v9383, 1
        %vm9394 = vcmp.lt.s32.totalorder %v9383, 5
        %vm9395 = vmand %vm9393, %vm9394
        %vm9396 = vcmp.ge.s32.totalorder %v9383, 0
        %vm9397 = vcmp.lt.s32.totalorder %v9383, 4
        %vm9398 = vmand %vm9396, %vm9397
        %vm9399 = vcmp.ge.s32.totalorder %v9383, 4294967295
        %vm9400 = vcmp.lt.s32.totalorder %v9383, 3
        %vm9401 = vmand %vm9399, %vm9400
        %9404 = vrot.lane.b32.xlu0 %v9377, 117
        %v9405 = vpop.permute.xlu0 %9404
        %9406 = vrot.lane.b32.xlu0 %v9380, 117
        %v9407 = vpop.permute.xlu0 %9406
        %9408 = vrot.lane.b32.xlu0 %v9377, 5
        %v9409 = vpop.permute.xlu0 %9408
        %9410 = vrot.lane.b32.xlu0 %v9380, 5
        %v9411 = vpop.permute.xlu0 %9410
        %vm9412 = vcmask 39936
        %v9415 = vsel %vm9412, %v9405, %v9409
        %v9419 = vsel %vm9412, %v9407, %v9411
        %vm9421 = vmand %vm9386, %vm9395
        %v9422 = vsel %vm9421, 1, 0
        %vm9423 = vcmp.eq.s32.totalorder %v9422, 1
        %vm9424 = vmpackc.low %vm9423, %vm9423
        %v9425 = vsel %vm9424, 65537, 0
        %v9426 = vlaneseq
        %v9427 = vshrl.u32 %v9426, 7
        %v9428 = vsub.s32 0, %v9427
        %v9429 = vrot.slane %v9425, %v9428
        %vm9430 = vcmp.ne.s16.totalorder %v9429, 0
        %v9431 = vsel %vm9430, %v9415, 0
        %v9432 = vsel %vm9430, %v9419, 0
        %9433 = vrot.lane.b32.xlu0 %v9377, 116
        %v9434 = vpop.permute.xlu0 %9433
        %9435 = vrot.lane.b32.xlu0 %v9380, 116
        %v9436 = vpop.permute.xlu0 %9435
        %9437 = vrot.lane.b32.xlu0 %v9377, 4
        %v9438 = vpop.permute.xlu0 %9437
        %9439 = vrot.lane.b32.xlu0 %v9380, 4
        %v9440 = vpop.permute.xlu0 %9439
        %v9443 = vsel %vm9364, %v9434, %v9438
        %v9447 = vsel %vm9364, %v9436, %v9440
        %vm9449 = vmand %vm9386, %vm9398
        %v9450 = vsel %vm9449, 1, 0
        %vm9451 = vcmp.eq.s32.totalorder %v9450, 1
        %vm9452 = vmpackc.low %vm9451, %vm9451
        %v9453 = vsel %vm9452, 65537, 0
        %v9454 = vlaneseq
        %v9455 = vshrl.u32 %v9454, 7
        %v9456 = vsub.s32 0, %v9455
        %v9457 = vrot.slane %v9453, %v9456
        %vm9458 = vcmp.ne.s16.totalorder %v9457, 0
        %v9459 = vsel %vm9458, %v9443, 0
        %v9460 = vsel %vm9458, %v9447, 0
        %9461 = vrot.lane.b32.xlu0 %v9377, 115
        %v9462 = vpop.permute.xlu0 %9461
        %9463 = vrot.lane.b32.xlu0 %v9380, 115
        %v9464 = vpop.permute.xlu0 %9463
        %9465 = vrot.lane.b32.xlu0 %v9377, 3
        %v9466 = vpop.permute.xlu0 %9465
        %9467 = vrot.lane.b32.xlu0 %v9380, 3
        %v9468 = vpop.permute.xlu0 %9467
        %vm9469 = vcmask 23552
        %v9472 = vsel %vm9469, %v9462, %v9466
        %v9476 = vsel %vm9469, %v9464, %v9468
        %vm9478 = vmand %vm9386, %vm9401
        %v9479 = vsel %vm9478, 1, 0
        %vm9480 = vcmp.eq.s32.totalorder %v9479, 1
        %vm9481 = vmpackc.low %vm9480, %vm9480
        %v9482 = vsel %vm9481, 65537, 0
        %v9483 = vlaneseq
        %v9484 = vshrl.u32 %v9483, 7
        %v9485 = vsub.s32 0, %v9484
        %v9486 = vrot.slane %v9482, %v9485
        %vm9487 = vcmp.ne.s16.totalorder %v9486, 0
        %v9488 = vsel %vm9487, %v9472, 0
        %v9489 = vsel %vm9487, %v9476, 0
        %9490 = vrot.lane.b32.xlu0 %v9377, 113
        %v9491 = vpop.permute.xlu0 %9490
        %9492 = vrot.lane.b32.xlu0 %v9380, 113
        %v9493 = vpop.permute.xlu0 %9492
        %9494 = vrot.lane.b32.xlu0 %v9377, 1
        %v9495 = vpop.permute.xlu0 %9494
        %9496 = vrot.lane.b32.xlu0 %v9380, 1
        %v9497 = vpop.permute.xlu0 %9496
        %v9500 = vsel %vm341, %v9491, %v9495
        %v9504 = vsel %vm341, %v9493, %v9497
        %vm9506 = vmand %vm9389, %vm9395
        %v9507 = vsel %vm9506, 1, 0
        %vm9508 = vcmp.eq.s32.totalorder %v9507, 1
        %vm9509 = vmpackc.low %vm9508, %vm9508
        %v9510 = vsel %vm9509, 65537, 0
        %v9511 = vlaneseq
        %v9512 = vshrl.u32 %v9511, 7
        %v9513 = vsub.s32 0, %v9512
        %v9514 = vrot.slane %v9510, %v9513
        %vm9515 = vcmp.ne.s16.totalorder %v9514, 0
        %v9516 = vsel %vm9515, %v9500, 0
        %v9517 = vsel %vm9515, %v9504, 0
        %9518 = vrot.lane.b32.xlu0 %v9377, 127
        %v9519 = vpop.permute.xlu0 %9518
        %9520 = vrot.lane.b32.xlu0 %v9380, 127
        %v9521 = vpop.permute.xlu0 %9520
        %9522 = vrot.lane.b32.xlu0 %v9377, 15
        %v9523 = vpop.permute.xlu0 %9522
        %9524 = vrot.lane.b32.xlu0 %v9380, 15
        %v9525 = vpop.permute.xlu0 %9524
        %v9528 = vsel %vm309, %v9519, %v9523
        %v9532 = vsel %vm309, %v9521, %v9525
        %vm9534 = vmand %vm9389, %vm9401
        %v9535 = vsel %vm9534, 1, 0
        %vm9536 = vcmp.eq.s32.totalorder %v9535, 1
        %vm9537 = vmpackc.low %vm9536, %vm9536
        %v9538 = vsel %vm9537, 65537, 0
        %v9539 = vlaneseq
        %v9540 = vshrl.u32 %v9539, 7
        %v9541 = vsub.s32 0, %v9540
        %v9542 = vrot.slane %v9538, %v9541
        %vm9543 = vcmp.ne.s16.totalorder %v9542, 0
        %v9544 = vsel %vm9543, %v9528, 0
        %v9545 = vsel %vm9543, %v9532, 0
        %9546 = vrot.lane.b32.xlu0 %v9377, 125
        %v9547 = vpop.permute.xlu0 %9546
        %9548 = vrot.lane.b32.xlu0 %v9380, 125
        %v9549 = vpop.permute.xlu0 %9548
        %9550 = vrot.lane.b32.xlu0 %v9377, 13
        %v9551 = vpop.permute.xlu0 %9550
        %9552 = vrot.lane.b32.xlu0 %v9380, 13
        %v9553 = vpop.permute.xlu0 %9552
        %vm9554 = vcmask 105472
        %v9557 = vsel %vm9554, %v9547, %v9551
        %v9561 = vsel %vm9554, %v9549, %v9553
        %vm9563 = vmand %vm9392, %vm9395
        %v9564 = vsel %vm9563, 1, 0
        %vm9565 = vcmp.eq.s32.totalorder %v9564, 1
        %vm9566 = vmpackc.low %vm9565, %vm9565
        %v9567 = vsel %vm9566, 65537, 0
        %v9568 = vlaneseq
        %v9569 = vshrl.u32 %v9568, 7
        %v9570 = vsub.s32 0, %v9569
        %v9571 = vrot.slane %v9567, %v9570
        %vm9572 = vcmp.ne.s16.totalorder %v9571, 0
        %v9573 = vsel %vm9572, %v9557, 0
        %v9574 = vsel %vm9572, %v9561, 0
        %9575 = vrot.lane.b32.xlu0 %v9377, 124
        %v9576 = vpop.permute.xlu0 %9575
        %9577 = vrot.lane.b32.xlu0 %v9380, 124
        %v9578 = vpop.permute.xlu0 %9577
        %9579 = vrot.lane.b32.xlu0 %v9377, 12
        %v9580 = vpop.permute.xlu0 %9579
        %9581 = vrot.lane.b32.xlu0 %v9380, 12
        %v9582 = vpop.permute.xlu0 %9581
        %v9585 = vsel %vm9375, %v9576, %v9580
        %v9589 = vsel %vm9375, %v9578, %v9582
        %vm9591 = vmand %vm9392, %vm9398
        %v9592 = vsel %vm9591, 1, 0
        %vm9593 = vcmp.eq.s32.totalorder %v9592, 1
        %vm9594 = vmpackc.low %vm9593, %vm9593
        %v9595 = vsel %vm9594, 65537, 0
        %v9596 = vlaneseq
        %v9597 = vshrl.u32 %v9596, 7
        %v9598 = vsub.s32 0, %v9597
        %v9599 = vrot.slane %v9595, %v9598
        %vm9600 = vcmp.ne.s16.totalorder %v9599, 0
        %v9601 = vsel %vm9600, %v9585, 0
        %v9602 = vsel %vm9600, %v9589, 0
        %9603 = vrot.lane.b32.xlu0 %v9377, 123
        %v9604 = vpop.permute.xlu0 %9603
        %9605 = vrot.lane.b32.xlu0 %v9380, 123
        %v9606 = vpop.permute.xlu0 %9605
        %9607 = vrot.lane.b32.xlu0 %v9377, 11
        %v9608 = vpop.permute.xlu0 %9607
        %9609 = vrot.lane.b32.xlu0 %v9380, 11
        %v9610 = vpop.permute.xlu0 %9609
        %vm9611 = vcmask 89088
        %v9614 = vsel %vm9611, %v9604, %v9608
        %v9618 = vsel %vm9611, %v9606, %v9610
        %vm9620 = vmand %vm9392, %vm9401
        %v9621 = vsel %vm9620, 1, 0
        %vm9622 = vcmp.eq.s32.totalorder %v9621, 1
        %vm9623 = vmpackc.low %vm9622, %vm9622
        %v9624 = vsel %vm9623, 65537, 0
        %v9625 = vlaneseq
        %v9626 = vshrl.u32 %v9625, 7
        %v9627 = vsub.s32 0, %v9626
        %v9628 = vrot.slane %v9624, %v9627
        %vm9629 = vcmp.ne.s16.totalorder %v9628, 0
        %v9630 = vsel %vm9629, %v9614, 0
        %v9631 = vsel %vm9629, %v9618, 0
        %v9632 = vld [vmem:[#allocation2 + $0x180] sm:$0xff]
        %v9633 = vld [vmem:[#allocation2 + $0x188] sm:$0xff]
        %v9634 = vld [vmem:[#allocation2 + $0x190] sm:$0xff]
        %v9635 = vld [vmem:[#allocation2 + $0x1a0] sm:$0xff]
        %v9636 = vld [vmem:[#allocation2 + $0x1a8] sm:$0xff]
        %v9637 = vld [vmem:[#allocation2 + $0x1b0] sm:$0xff]
        %v9638 = vld [vmem:[#allocation2 + $0x1c0] sm:$0xff]
        %v9639 = vld [vmem:[#allocation2 + $0x1c8] sm:$0xff]
        %v9640 = vld [vmem:[#allocation2 + $0x1d0] sm:$0xff]
        %v9641 = vld [vmem:[#allocation2 + $0x1e0] sm:$0xff]
        %v9642 = vld [vmem:[#allocation2 + $0x1e8] sm:$0xff]
        %v9643 = vld [vmem:[#allocation2 + $0x1f0] sm:$0xff]
        %v9644 = vpack.c.bf16 %v9635, %v9632
        %v9645 = vpack.c.bf16 %v9636, %v9633
        %v9646 = vpack.c.bf16 %v9637, %v9634
        %v9647 = vpack.c.bf16 %v9641, %v9638
        %v9648 = vpack.c.bf16 %v9642, %v9639
        %v9649 = vpack.c.bf16 %v9643, %v9640
        %v9650 = vld [vmem:[%s2] sm:$0xff]
        %v9651 = vld [vmem:[%s2 + $0x8] sm:$0xff]
        %v9652 = vld [vmem:[%s2 + $0x10] sm:$0xff]
        %v9653 = vld [vmem:[%s2 + $0x18] sm:$0xff]
        %9655 = vset.pattern.permute.xlu0 6
        %9656 = vperm.xlu0 %9655, %v9650
        %v9657 = vpop.permute.xlu0 %9656
        %9660 = vset.pattern.permute.xlu0 6
        %9661 = vperm.xlu0 %9660, %v9651
        %v9662 = vpop.permute.xlu0 %9661
        %9665 = vset.pattern.permute.xlu0 6
        %9666 = vperm.xlu0 %9665, %v9652
        %v9667 = vpop.permute.xlu0 %9666
        %9670 = vset.pattern.permute.xlu0 6
        %9671 = vperm.xlu0 %9670, %v9653
        %v9672 = vpop.permute.xlu0 %9671
        %v9675 = vsel %vm917, %v9646, 0
        %v9678 = vsel %vm917, %v9649, 0
        %9680 = vmatprep.subr.bf16.mxu0 0
        %9681 = vmatpush1.bf16.msra.mxu0 %v9431
        %9682 = vmatprep.subr.bf16.mxu0 0
        %9683 = vmatpush1.bf16.msra.mxu0 %v9432
        %9684 = vmatprep.subr.bf16.mxu0 0
        %9685 = vmatpush1.bf16.msra.mxu0 %v9459
        %9686 = vmatprep.subr.bf16.mxu0 0
        %9687 = vmatpush1.bf16.msra.mxu0 %v9460
        %9688 = vmatprep.subr.bf16.mxu0 0
        %9689 = vmatpush1.bf16.msra.mxu0 %v9488
        %9690 = vmatprep.subr.bf16.mxu0 0
        %9691 = vmatpush1.bf16.msra.mxu0 %v9489
        %9692 = vmatprep.subr.bf16.mxu0 0
        %9693 = vmatpush1.bf16.msra.mxu0 %v9516
        %9694 = vmatprep.subr.bf16.mxu0 0
        %9695 = vmatpush1.bf16.msra.mxu0 %v9517
        %9696 = vmatprep.subr.bf16.mxu0 0
        %9697 = vmatpush1.bf16.msra.mxu0 %v9377
        %9698 = vmatprep.subr.bf16.mxu0 0
        %9699 = vmatpush1.bf16.msra.mxu0 %v9380
        %9700 = vmatprep.subr.bf16.mxu0 0
        %9701 = vmatpush1.bf16.msra.mxu0 %v9544
        %9702 = vmatprep.subr.bf16.mxu0 0
        %9703 = vmatpush1.bf16.msra.mxu0 %v9545
        %9704 = vmatprep.subr.bf16.mxu0 0
        %9705 = vmatpush1.bf16.msra.mxu0 %v9573
        %9706 = vmatprep.subr.bf16.mxu0 0
        %9707 = vmatpush1.bf16.msra.mxu0 %v9574
        %9708 = vmatprep.subr.bf16.mxu0 0
        %9709 = vmatpush1.bf16.msra.mxu0 %v9601
        %9710 = vmatprep.subr.bf16.mxu0 0
        %9711 = vmatpush1.bf16.msra.mxu0 %v9602
        %9712 = vmatprep.mubr.bf16.mxu0 %v9645
        %9713 = vmatmul.mubr.bf16.gmra.mrb[0].mxu0 %v9644
        %v9714 = vpop.f32.mrb[0].mxu0
        %v9715 = vadd.f32 %v9657, %v9714
        %v9716 = vpop.f32.mrb[0].mxu0
        %v9717 = vpop.f32.mrb[0].mxu0
        %v9718 = vadd.f32 %v9662, %v9717
        %v9719 = vpop.f32.mrb[0].mxu0
        %9720 = vmatprep.mubr.bf16.mxu0 %v9648
        %9721 = vmatmul.mubr.bf16.gmra.mrb[0].mxu0 %v9647
        %v9722 = vpop.f32.mrb[0].mxu0
        %v9723 = vadd.f32 %v9667, %v9722
        %v9724 = vpop.f32.mrb[0].mxu0
        %v9725 = vpop.f32.mrb[0].mxu0
        %v9726 = vadd.f32 %v9672, %v9725
        %v9727 = vpop.f32.mrb[0].mxu0
        %9728 = vdwg.mxu0
        %9729 = vmatprep.subr.bf16.mxu0 0
        %9730 = vmatpush1.bf16.msra.mxu0 %v9630
        %9731 = vmatprep.subr.bf16.mxu0 0
        %9732 = vmatpush1.bf16.msra.mxu0 %v9631
        %9733 = vmatprep.subr.bf16.mxu0 0
        %9734 = vmatpush1.bf16.msra.mxu0 0
        %9735 = vmatprep.subr.bf16.mxu0 0
        %9736 = vmatpush1.bf16.msra.mxu0 0
        %9737 = vmatprep.subr.bf16.mxu0 0
        %9738 = vmatpush1.bf16.msra.mxu0 0
        %9739 = vmatprep.subr.bf16.mxu0 0
        %9740 = vmatpush1.bf16.msra.mxu0 0
        %9741 = vmatprep.subr.bf16.mxu0 0
        %9742 = vmatpush1.bf16.msra.mxu0 0
        %9743 = vmatprep.subr.bf16.mxu0 0
        %9744 = vmatpush1.bf16.msra.mxu0 0
        %9745 = vmatprep.subr.bf16.mxu0 0
        %9746 = vmatpush1.bf16.msra.mxu0 0
        %9747 = vmatprep.subr.bf16.mxu0 0
        %9748 = vmatpush1.bf16.msra.mxu0 0
        %9749 = vmatprep.subr.bf16.mxu0 0
        %9750 = vmatpush1.bf16.msra.mxu0 0
        %9751 = vmatprep.subr.bf16.mxu0 0
        %9752 = vmatpush1.bf16.msra.mxu0 0
        %9753 = vmatprep.subr.bf16.mxu0 0
        %9754 = vmatpush1.bf16.msra.mxu0 0
        %9755 = vmatprep.subr.bf16.mxu0 0
        %9756 = vmatpush1.bf16.msra.mxu0 0
        %9757 = vmatprep.subr.bf16.mxu0 0
        %9758 = vmatpush1.bf16.msra.mxu0 0
        %9759 = vmatprep.subr.bf16.mxu0 0
        %9760 = vmatpush1.bf16.msra.mxu0 0
        %9761 = vmatprep.mubr.bf16.mxu0 0
        %9762 = vmatmul.mubr.bf16.gmra.mrb[0].mxu0 %v9675
        %v9763 = vpop.f32.mrb[0].mxu0
        %v9764 = vadd.f32 %v9715, %v9763
        %v9765 = vpop.f32.mrb[0].mxu0
        %v9766 = vpop.f32.mrb[0].mxu0
        %v9767 = vadd.f32 %v9718, %v9766
        %v9768 = vpop.f32.mrb[0].mxu0
        %9769 = vmatprep.mubr.bf16.mxu0 0
        %9770 = vmatmul.mubr.bf16.gmra.mrb[0].mxu0 %v9678
        %v9771 = vpop.f32.mrb[0].mxu0
        %v9772 = vadd.f32 %v9723, %v9771
        %v9773 = vpop.f32.mrb[0].mxu0
        %v9774 = vpop.f32.mrb[0].mxu0
        %v9775 = vadd.f32 %v9726, %v9774
        %v9776 = vpop.f32.mrb[0].mxu0
        %9777 = vdwg.mxu0
        %vm9778 = vcmp.ge.f32.partialorder %v9764, 0.0
        %vm9779 = vcmp.ge.f32.partialorder %v9767, 0.0
        %vm9780 = vcmp.ge.f32.partialorder %v9772, 0.0
        %vm9781 = vcmp.ge.f32.partialorder %v9775, 0.0
        %v9782 = vmul.f32 %v9764, 0.01
        %v9783 = vmul.f32 %v9767, 0.01
        %v9784 = vmul.f32 %v9772, 0.01
        %v9785 = vmul.f32 %v9775, 0.01
        %v9786 = vsel %vm9778, %v9764, %v9782
        %v9787 = vsel %vm9779, %v9767, %v9783
        %v9788 = vsel %vm9780, %v9772, %v9784
        %v9789 = vsel %vm9781, %v9775, %v9785
        %v9790 = vpack.c.bf16 %v9787, %v9786
        %v9791 = vpack.c.bf16 %v9789, %v9788
        %9794 = vrot.lane.b32.xlu0 %v9790, 117
        %v9795 = vpop.permute.xlu0 %9794
        %9796 = vrot.lane.b32.xlu0 %v9791, 117
        %v9797 = vpop.permute.xlu0 %9796
        %9798 = vrot.lane.b32.xlu0 %v9790, 5
        %v9799 = vpop.permute.xlu0 %9798
        %9800 = vrot.lane.b32.xlu0 %v9791, 5
        %v9801 = vpop.permute.xlu0 %9800
        %v9804 = vsel %vm9412, %v9795, %v9799
        %v9808 = vsel %vm9412, %v9797, %v9801
        %v9810 = vsel %vm9430, %v9804, 0
        %v9811 = vsel %vm9430, %v9808, 0
        %9812 = vrot.lane.b32.xlu0 %v9790, 116
        %v9813 = vpop.permute.xlu0 %9812
        %9814 = vrot.lane.b32.xlu0 %v9791, 116
        %v9815 = vpop.permute.xlu0 %9814
        %9816 = vrot.lane.b32.xlu0 %v9790, 4
        %v9817 = vpop.permute.xlu0 %9816
        %9818 = vrot.lane.b32.xlu0 %v9791, 4
        %v9819 = vpop.permute.xlu0 %9818
        %v9822 = vsel %vm9364, %v9813, %v9817
        %v9826 = vsel %vm9364, %v9815, %v9819
        %v9828 = vsel %vm9458, %v9822, 0
        %v9829 = vsel %vm9458, %v9826, 0
        %9830 = vrot.lane.b32.xlu0 %v9790, 115
        %v9831 = vpop.permute.xlu0 %9830
        %9832 = vrot.lane.b32.xlu0 %v9791, 115
        %v9833 = vpop.permute.xlu0 %9832
        %9834 = vrot.lane.b32.xlu0 %v9790, 3
        %v9835 = vpop.permute.xlu0 %9834
        %9836 = vrot.lane.b32.xlu0 %v9791, 3
        %v9837 = vpop.permute.xlu0 %9836
        %v9840 = vsel %vm9469, %v9831, %v9835
        %v9844 = vsel %vm9469, %v9833, %v9837
        %v9846 = vsel %vm9487, %v9840, 0
        %v9847 = vsel %vm9487, %v9844, 0
        %9848 = vrot.lane.b32.xlu0 %v9790, 113
        %v9849 = vpop.permute.xlu0 %9848
        %9850 = vrot.lane.b32.xlu0 %v9791, 113
        %v9851 = vpop.permute.xlu0 %9850
        %9852 = vrot.lane.b32.xlu0 %v9790, 1
        %v9853 = vpop.permute.xlu0 %9852
        %9854 = vrot.lane.b32.xlu0 %v9791, 1
        %v9855 = vpop.permute.xlu0 %9854
        %v9858 = vsel %vm341, %v9849, %v9853
        %v9862 = vsel %vm341, %v9851, %v9855
        %v9864 = vsel %vm9515, %v9858, 0
        %v9865 = vsel %vm9515, %v9862, 0
        %9866 = vrot.lane.b32.xlu0 %v9790, 127
        %v9867 = vpop.permute.xlu0 %9866
        %9868 = vrot.lane.b32.xlu0 %v9791, 127
        %v9869 = vpop.permute.xlu0 %9868
        %9870 = vrot.lane.b32.xlu0 %v9790, 15
        %v9871 = vpop.permute.xlu0 %9870
        %9872 = vrot.lane.b32.xlu0 %v9791, 15
        %v9873 = vpop.permute.xlu0 %9872
        %v9876 = vsel %vm309, %v9867, %v9871
        %v9880 = vsel %vm309, %v9869, %v9873
        %v9882 = vsel %vm9543, %v9876, 0
        %v9883 = vsel %vm9543, %v9880, 0
        %9884 = vrot.lane.b32.xlu0 %v9790, 125
        %v9885 = vpop.permute.xlu0 %9884
        %9886 = vrot.lane.b32.xlu0 %v9791, 125
        %v9887 = vpop.permute.xlu0 %9886
        %9888 = vrot.lane.b32.xlu0 %v9790, 13
        %v9889 = vpop.permute.xlu0 %9888
        %9890 = vrot.lane.b32.xlu0 %v9791, 13
        %v9891 = vpop.permute.xlu0 %9890
        %v9894 = vsel %vm9554, %v9885, %v9889
        %v9898 = vsel %vm9554, %v9887, %v9891
        %v9900 = vsel %vm9572, %v9894, 0
        %v9901 = vsel %vm9572, %v9898, 0
        %9902 = vrot.lane.b32.xlu0 %v9790, 124
        %v9903 = vpop.permute.xlu0 %9902
        %9904 = vrot.lane.b32.xlu0 %v9791, 124
        %v9905 = vpop.permute.xlu0 %9904
        %9906 = vrot.lane.b32.xlu0 %v9790, 12
        %v9907 = vpop.permute.xlu0 %9906
        %9908 = vrot.lane.b32.xlu0 %v9791, 12
        %v9909 = vpop.permute.xlu0 %9908
        %v9912 = vsel %vm9375, %v9903, %v9907
        %v9916 = vsel %vm9375, %v9905, %v9909
        %v9918 = vsel %vm9600, %v9912, 0
        %v9919 = vsel %vm9600, %v9916, 0
        %9920 = vrot.lane.b32.xlu0 %v9790, 123
        %v9921 = vpop.permute.xlu0 %9920
        %9922 = vrot.lane.b32.xlu0 %v9791, 123
        %v9923 = vpop.permute.xlu0 %9922
        %9924 = vrot.lane.b32.xlu0 %v9790, 11
        %v9925 = vpop.permute.xlu0 %9924
        %9926 = vrot.lane.b32.xlu0 %v9791, 11
        %v9927 = vpop.permute.xlu0 %9926
        %v9930 = vsel %vm9611, %v9921, %v9925
        %v9934 = vsel %vm9611, %v9923, %v9927
        %v9936 = vsel %vm9629, %v9930, 0
        %v9937 = vsel %vm9629, %v9934, 0
        %v9938 = vld [vmem:[#allocation2 + $0x200] sm:$0xff]
        %v9939 = vld [vmem:[#allocation2 + $0x208] sm:$0xff]
        %v9940 = vld [vmem:[#allocation2 + $0x210] sm:$0xff]
        %v9941 = vld [vmem:[#allocation2 + $0x220] sm:$0xff]
        %v9942 = vld [vmem:[#allocation2 + $0x228] sm:$0xff]
        %v9943 = vld [vmem:[#allocation2 + $0x230] sm:$0xff]
        %v9944 = vld [vmem:[#allocation2 + $0x240] sm:$0xff]
        %v9945 = vld [vmem:[#allocation2 + $0x248] sm:$0xff]
        %v9946 = vld [vmem:[#allocation2 + $0x250] sm:$0xff]
        %v9947 = vld [vmem:[#allocation2 + $0x260] sm:$0xff]
        %v9948 = vld [vmem:[#allocation2 + $0x268] sm:$0xff]
        %v9949 = vld [vmem:[#allocation2 + $0x270] sm:$0xff]
        %v9950 = vpack.c.bf16 %v9941, %v9938
        %v9951 = vpack.c.bf16 %v9942, %v9939
        %v9952 = vpack.c.bf16 %v9943, %v9940
        %v9953 = vpack.c.bf16 %v9947, %v9944
        %v9954 = vpack.c.bf16 %v9948, %v9945
        %v9955 = vpack.c.bf16 %v9949, %v9946
        %9956 = vset.pattern.permute.xlu0 7
        %9957 = vperm.xlu0 %9956, %v9650
        %v9958 = vpop.permute.xlu0 %9957
        %9960 = vset.pattern.permute.xlu0 7
        %9961 = vperm.xlu0 %9960, %v9651
        %v9962 = vpop.permute.xlu0 %9961
        %9964 = vset.pattern.permute.xlu0 7
        %9965 = vperm.xlu0 %9964, %v9652
        %v9966 = vpop.permute.xlu0 %9965
        %9968 = vset.pattern.permute.xlu0 7
        %9969 = vperm.xlu0 %9968, %v9653
        %v9970 = vpop.permute.xlu0 %9969
        %v9973 = vsel %vm917, %v9952, 0
        %v9976 = vsel %vm917, %v9955, 0
        %9978 = vmatprep.subr.bf16.mxu0 0
        %9979 = vmatpush1.bf16.msra.mxu0 %v9810
        %9980 = vmatprep.subr.bf16.mxu0 0
        %9981 = vmatpush1.bf16.msra.mxu0 %v9811
        %9982 = vmatprep.subr.bf16.mxu0 0
        %9983 = vmatpush1.bf16.msra.mxu0 %v9828
        %9984 = vmatprep.subr.bf16.mxu0 0
        %9985 = vmatpush1.bf16.msra.mxu0 %v9829
        %9986 = vmatprep.subr.bf16.mxu0 0
        %9987 = vmatpush1.bf16.msra.mxu0 %v9846
        %9988 = vmatprep.subr.bf16.mxu0 0
        %9989 = vmatpush1.bf16.msra.mxu0 %v9847
        %9990 = vmatprep.subr.bf16.mxu0 0
        %9991 = vmatpush1.bf16.msra.mxu0 %v9864
        %9992 = vmatprep.subr.bf16.mxu0 0
        %9993 = vmatpush1.bf16.msra.mxu0 %v9865
        %9994 = vmatprep.subr.bf16.mxu0 0
        %9995 = vmatpush1.bf16.msra.mxu0 %v9790
        %9996 = vmatprep.subr.bf16.mxu0 0
        %9997 = vmatpush1.bf16.msra.mxu0 %v9791
        %9998 = vmatprep.subr.bf16.mxu0 0
        %9999 = vmatpush1.bf16.msra.mxu0 %v9882
        %10000 = vmatprep.subr.bf16.mxu0 0
        %10001 = vmatpush1.bf16.msra.mxu0 %v9883
        %10002 = vmatprep.subr.bf16.mxu0 0
        %10003 = vmatpush1.bf16.msra.mxu0 %v9900
        %10004 = vmatprep.subr.bf16.mxu0 0
        %10005 = vmatpush1.bf16.msra.mxu0 %v9901
        %10006 = vmatprep.subr.bf16.mxu0 0
        %10007 = vmatpush1.bf16.msra.mxu0 %v9918
        %10008 = vmatprep.subr.bf16.mxu0 0
        %10009 = vmatpush1.bf16.msra.mxu0 %v9919
        %10010 = vmatprep.mubr.bf16.mxu0 %v9951
        %10011 = vmatmul.mubr.bf16.gmra.mrb[0].mxu0 %v9950
        %v10012 = vpop.f32.mrb[0].mxu0
        %v10013 = vadd.f32 %v9958, %v10012
        %v10014 = vpop.f32.mrb[0].mxu0
        %v10015 = vpop.f32.mrb[0].mxu0
        %v10016 = vadd.f32 %v9962, %v10015
        %v10017 = vpop.f32.mrb[0].mxu0
        %10018 = vmatprep.mubr.bf16.mxu0 %v9954
        %10019 = vmatmul.mubr.bf16.gmra.mrb[0].mxu0 %v9953
        %v10020 = vpop.f32.mrb[0].mxu0
        %v10021 = vadd.f32 %v9966, %v10020
        %v10022 = vpop.f32.mrb[0].mxu0
        %v10023 = vpop.f32.mrb[0].mxu0
        %v10024 = vadd.f32 %v9970, %v10023
        %v10025 = vpop.f32.mrb[0].mxu0
        %10026 = vdwg.mxu0
        %10027 = vmatprep.subr.bf16.mxu0 0
        %10028 = vmatpush1.bf16.msra.mxu0 %v9936
        %10029 = vmatprep.subr.bf16.mxu0 0
        %10030 = vmatpush1.bf16.msra.mxu0 %v9937
        %10031 = vmatprep.subr.bf16.mxu0 0
        %10032 = vmatpush1.bf16.msra.mxu0 0
        %10033 = vmatprep.subr.bf16.mxu0 0
        %10034 = vmatpush1.bf16.msra.mxu0 0
        %10035 = vmatprep.subr.bf16.mxu0 0
        %10036 = vmatpush1.bf16.msra.mxu0 0
        %10037 = vmatprep.subr.bf16.mxu0 0
        %10038 = vmatpush1.bf16.msra.mxu0 0
        %10039 = vmatprep.subr.bf16.mxu0 0
        %10040 = vmatpush1.bf16.msra.mxu0 0
        %10041 = vmatprep.subr.bf16.mxu0 0
        %10042 = vmatpush1.bf16.msra.mxu0 0
        %10043 = vmatprep.subr.bf16.mxu0 0
        %10044 = vmatpush1.bf16.msra.mxu0 0
        %10045 = vmatprep.subr.bf16.mxu0 0
        %10046 = vmatpush1.bf16.msra.mxu0 0
        %10047 = vmatprep.subr.bf16.mxu0 0
        %10048 = vmatpush1.bf16.msra.mxu0 0
        %10049 = vmatprep.subr.bf16.mxu0 0
        %10050 = vmatpush1.bf16.msra.mxu0 0
        %10051 = vmatprep.subr.bf16.mxu0 0
        %10052 = vmatpush1.bf16.msra.mxu0 0
        %10053 = vmatprep.subr.bf16.mxu0 0
        %10054 = vmatpush1.bf16.msra.mxu0 0
        %10055 = vmatprep.subr.bf16.mxu0 0
        %10056 = vmatpush1.bf16.msra.mxu0 0
        %10057 = vmatprep.subr.bf16.mxu0 0
        %10058 = vmatpush1.bf16.msra.mxu0 0
        %10059 = vmatprep.mubr.bf16.mxu0 0
        %10060 = vmatmul.mubr.bf16.gmra.mrb[0].mxu0 %v9973
        %v10061 = vpop.f32.mrb[0].mxu0
        %v10062 = vadd.f32 %v10013, %v10061
        %v10063 = vpop.f32.mrb[0].mxu0
        %v10064 = vpop.f32.mrb[0].mxu0
        %v10065 = vadd.f32 %v10016, %v10064
        %v10066 = vpop.f32.mrb[0].mxu0
        %10067 = vmatprep.mubr.bf16.mxu0 0
        %10068 = vmatmul.mubr.bf16.gmra.mrb[0].mxu0 %v9976
        %v10069 = vpop.f32.mrb[0].mxu0
        %v10070 = vadd.f32 %v10021, %v10069
        %v10071 = vpop.f32.mrb[0].mxu0
        %v10072 = vpop.f32.mrb[0].mxu0
        %v10073 = vadd.f32 %v10024, %v10072
        %v10074 = vpop.f32.mrb[0].mxu0
        %10075 = vdwg.mxu0
        %10076 = vst.msk [vmem:[%s185] sm:$0xff] %vm277, %v10062
        %10077 = vst.msk [vmem:[%s185 + $0x8] sm:$0xff] %vm277, %v10065
        %10078 = vst.msk [vmem:[%s185 + $0x10] sm:$0xff] %vm277, %v10070
        %10079 = vst.msk [vmem:[%s185 + $0x18] sm:$0xff] %vm277, %v10073
        %p10080 = scmp.lt.s32.totalorder %s15, 1
        %s10081 = scalar_select %p10080, %s15, 1
        %s10082 = smul.addr %s10081, 4
        %s10083 = smul.addr %s10082, 8
        %s10084 = scalar_lea.vmem %s3, %s10083
        // Predicated region
        $region37: #{feature_net.1} parent=31 // pred_check
          %p10085 = pneg %p101
        $region38: #{feature_net.1} parent=31 // pred_check_branch
          %10087 = sbr.rel (%p10085) target = $region40
        $region39: #{feature_net.1} parent=31 // pred_region
          _
        $region40: #{feature_net.1} parent=31 // pred_fallthru
          _
      $region32: #{feature_net.1} parent=5 // pred_fallthru
        _
      %p10088 = scmp.le.s32.totalorder 2, %s10
      // Predicated region
      $region41: #{feature_net.1} parent=5 // pred_check
        %p10089 = pneg %p10088
      $region42: #{feature_net.1} parent=5 // pred_check_branch
        %10091 = sbr.rel (%p10089) target = $region44
      $region43: #{feature_net.1} parent=5 // pred_region
        %s10092 = ssub.s32 %s10, 2
        // Predicated region
        $region45: #{feature_net.1} parent=43 // pred_check
          %p10093 = pneg %p107
        $region46: #{feature_net.1} parent=43 // pred_check_branch
          %10095 = sbr.rel (%p10093) target = $region48
        $region47: #{feature_net.1} parent=43 // pred_region
          %p10096 = scmp.lt.s32.totalorder %s16, 1
          %s10097 = scalar_select %p10096, %s16, 1
          %s10098 = smul.addr %s10097, 4
          %s10099 = smul.addr %s10098, 8
          %s10100 = scalar_lea.vmem %s3, %s10099
        $region48: #{feature_net.1} parent=43 // pred_fallthru
          _
      $region44: #{feature_net.1} parent=5 // pred_fallthru
        _
    $region6: #{feature_net.1} parent=1 // loop_footer
      %s14 = sadd.s32 1, %s10
    $region7: #{feature_net.1} parent=1 // loop_footer_branch
      %9 = sbr.rel target = $region3
    $region8: #{feature_net.1} parent=1 // loop_exit
      _
    %10101 = vsyncpa [#allocation3], 1
    %s10102 = scalar_lea.sflag [#allocation3], 1
    %10103 = vsyncpa %s10102, 1

</llo_original>
